<compile_context>
chip_gen: v7x
topology: tpu7x:2x2x1
jax: 0.10.0
libtpu: 0.0.40
codegen_flags: <defaults>
</compile_context>

<pallas_src>
import jax
import jax.numpy as jnp
from jax import lax
from jax.experimental import pallas as pl
from jax.experimental.pallas import tpu as pltpu

HIDDEN = 512
FC_OUT = 128


def _pick_row_tile(rows):
    """Largest MXU-friendly row tile (<=256) that divides the row count."""
    for tm in (256, 128, 64, 32, 16, 8):
        if rows % tm == 0:
            return tm
    return rows


def _pick_time_tile(K, B):
    """Timesteps per GRU grid step; bounded so the streamed gi block stays small."""
    budget = max(1, (4 << 20) // (2 * 3 * HIDDEN * 4 * max(B, 1)))
    for tk in (8, 4, 2, 1):
        if K % tk == 0 and tk <= budget:
            return tk
    return 1


# --------------------------------------------------------------------------
# Kernel 1 (fused frontend, gridded over B*K row tiles):
#   InstanceNorm2d(affine) + AdaptiveMaxPool2d((1,1)) + ReLU
#   + fc(x.view(B,K,-1))                            -> early (B*K, 128)
#   + hoisted GRU input gates gi = pooled@W_ih'+b   -> gi    (B*K, 1536)
# --------------------------------------------------------------------------
def _frontend_kernel(x4_ref, x2_ref, g_ref, b_ref, fcw_ref, fcb_ref,
                     wih_ref, bih_ref, early_ref, gi_ref):
    x3 = x4_ref[...]                                         # (TM, C, HW) f32
    mean = jnp.mean(x3, axis=-1, keepdims=True)
    var = jnp.mean(jnp.square(x3 - mean), axis=-1, keepdims=True)   # biased
    xn = (x3 - mean) * lax.rsqrt(var + 1e-5)
    y = xn * g_ref[...] + b_ref[...]                         # (C,1) broadcast
    pooled = jnp.maximum(jnp.max(y, axis=-1), 0.0)           # (TM, C) pool+relu

    early_ref[...] = (jnp.dot(x2_ref[...].astype(jnp.bfloat16), fcw_ref[...],
                              preferred_element_type=jnp.float32)
                      + fcb_ref[...])
    gi_ref[...] = (jnp.dot(pooled.astype(jnp.bfloat16), wih_ref[...],
                           preferred_element_type=jnp.float32)
                   + bih_ref[...])


def frontend(x4, x2, gamma, beta, fc_wT, fc_b, wih_c, b_ih):
    R, C, HW = x4.shape
    F_in = x2.shape[-1]
    TM = _pick_row_tile(R)
    return pl.pallas_call(
        _frontend_kernel,
        out_shape=(jax.ShapeDtypeStruct((R, FC_OUT), jnp.float32),
                   jax.ShapeDtypeStruct((R, 3 * HIDDEN), jnp.float32)),
        grid=(R // TM,),
        in_specs=[pl.BlockSpec((TM, C, HW), lambda r: (r, 0, 0)),
                  pl.BlockSpec((TM, F_in), lambda r: (r, 0)),
                  pl.BlockSpec((C, 1), lambda r: (0, 0)),
                  pl.BlockSpec((C, 1), lambda r: (0, 0)),
                  pl.BlockSpec((F_in, FC_OUT), lambda r: (0, 0)),
                  pl.BlockSpec((1, FC_OUT), lambda r: (0, 0)),
                  pl.BlockSpec((C, 3 * HIDDEN), lambda r: (0, 0)),
                  pl.BlockSpec((1, 3 * HIDDEN), lambda r: (0, 0))],
        out_specs=(pl.BlockSpec((TM, FC_OUT), lambda r: (r, 0)),
                   pl.BlockSpec((TM, 3 * HIDDEN), lambda r: (r, 0))),
        compiler_params=pltpu.CompilerParams(
            dimension_semantics=("parallel",)),
    )(x4, x2, gamma, beta, fc_wT, fc_b, wih_c, b_ih)


# --------------------------------------------------------------------------
# Kernel 2: GRU recurrence, streamed over time.
#   grid=(K/TK,) "arbitrary"; gi / output blocks streamed per step; W_hh
#   resident in VMEM (constant block index -> single DMA); hidden state h
#   carried across grid steps in a VMEM scratch.
# --------------------------------------------------------------------------
def _sigmoid(v):
    # exact sigmoid, one EUP push (tanh) instead of exp + reciprocal
    return 0.5 * (jnp.tanh(0.5 * v) + 1.0)


def _gru_kernel(gi_ref, whh_ref, bhh_ref, o_ref, h_ref):
    @pl.when(pl.program_id(0) == 0)
    def _():
        h_ref[...] = jnp.zeros_like(h_ref)

    H = h_ref.shape[-1]
    G3 = 3 * H
    TK = gi_ref.shape[-1] // G3
    bhh = bhh_ref[...]                                        # (1, 3H) f32

    h = h_ref[...]                                            # (B, H) f32
    for tk in range(TK):                                      # static unroll
        gi = gi_ref[:, tk * G3:(tk + 1) * G3]                 # (B, 3H) f32
        h_bf = h.astype(jnp.bfloat16)
        # r/z gate matmul first; the two sigmoids (EUP) overlap the MXU
        # streaming of the n-gate weight columns issued right after.
        gh_rz = (jnp.dot(h_bf, whh_ref[:, :2 * H],
                         preferred_element_type=jnp.float32) + bhh[:, :2 * H])
        r = _sigmoid(gi[:, :H] + gh_rz[:, :H])
        z = _sigmoid(gi[:, H:2 * H] + gh_rz[:, H:2 * H])
        gh_n = (jnp.dot(h_bf, whh_ref[:, 2 * H:],
                        preferred_element_type=jnp.float32) + bhh[:, 2 * H:])
        n = jnp.tanh(gi[:, 2 * H:] + r * gh_n)
        h = (1.0 - z) * n + z * h
        o_ref[:, tk * H:(tk + 1) * H] = h
    h_ref[...] = h


def gru_recurrence(gi_flat, whh_T, b_hh_row, *, K):
    # gi_flat: (B, K*3H) f32 -- a free view of the frontend's (B*K, 3H) output.
    B = gi_flat.shape[0]
    G3 = 3 * HIDDEN
    TK = _pick_time_tile(K, B)
    return pl.pallas_call(
        _gru_kernel,
        out_shape=jax.ShapeDtypeStruct((B, K * HIDDEN), jnp.float32),
        grid=(K // TK,),
        in_specs=[pl.BlockSpec((B, TK * G3), lambda s: (0, s)),
                  pl.BlockSpec((HIDDEN, G3), lambda s: (0, 0)),
                  pl.BlockSpec((1, G3), lambda s: (0, 0))],
        out_specs=pl.BlockSpec((B, TK * HIDDEN), lambda s: (0, s)),
        scratch_shapes=[pltpu.VMEM((B, HIDDEN), jnp.float32)],
        compiler_params=pltpu.CompilerParams(
            dimension_semantics=("arbitrary",)),
    )(gi_flat, whh_T, b_hh_row)


# --------------------------------------------------------------------------
# MotionEncoder forward (Pallas)
# --------------------------------------------------------------------------
def motion_encoder_forward(x, params):
    B, K, C, H, W = x.shape
    F_in = C * H * W                      # must equal 512 (fc in_features)
    R = B * K

    # TODO(synk): conv1..conv4 (ResidualBlockDown, undefined in the provided source)
    # and in1_e..in3_e results are discarded by the reference forward (every call
    # re-consumes x), so they are skipped; only in4_e feeds the pooling/GRU path.
    # TODO(synk): in4_e carries 512 affine params but receives a C-channel tensor in
    # the reference forward; the first C affine params are used here.
    gamma = params["in4_gamma"][:C].reshape(C, 1)
    beta = params["in4_beta"][:C].reshape(C, 1)

    fc_wT = params["fc_w"].T.astype(jnp.bfloat16)             # (512, 128)
    fc_b = params["fc_b"].reshape(1, FC_OUT)
    # TODO(synk): the reference hands the 4-D pooled tensor straight to nn.GRU (which
    # rejects 4-D input); we treat it as (B,K,C) features.  Instead of zero-padding to
    # input_size=512, only the first C input rows of W_ih are used (identical result).
    wih_c = params["gru_w_ih"][:, :C].T.astype(jnp.bfloat16)  # (C, 3*512)
    b_ih = params["gru_b_ih"].reshape(1, 3 * HIDDEN)

    # Free row-major views of the same x buffer (norm path / fc path).
    x4 = x.reshape(R, C, H * W)
    x2 = x.reshape(R, F_in)

    early, gi = frontend(x4, x2, gamma, beta, fc_wT, fc_b, wih_c, b_ih)
    early = early.reshape(B, K, FC_OUT)                       # free view

    # (B*K, 3H) row-major == (B, K*3H): free view, no transpose/relayout.
    gi_flat = gi.reshape(B, K * 3 * HIDDEN)
    out_flat = gru_recurrence(gi_flat,
                              params["gru_w_hh"].T.astype(jnp.bfloat16),
                              params["gru_b_hh"].reshape(1, 3 * HIDDEN),
                              K=K)
    gru_out = out_flat.reshape(B, K, HIDDEN)                  # free view
    h_n = gru_out[:, -1, :][None]                             # (1, B, H)

    static = (gru_out, h_n)
    return static, early


# --------------------------------------------------------------------------
# Deterministic parameter init (shapes from MotionEncoder.__init__)
# --------------------------------------------------------------------------
def init_params(key):
    ks = jax.random.split(key, 8)
    s = 1.0 / jnp.sqrt(jnp.float32(HIDDEN))
    return {
        "in4_gamma": 1.0 + 0.1 * jax.random.normal(ks[0], (HIDDEN,), jnp.float32),
        "in4_beta": 0.1 * jax.random.normal(ks[1], (HIDDEN,), jnp.float32),
        "fc_w": jax.random.uniform(ks[2], (FC_OUT, HIDDEN), jnp.float32, -s, s),
        "fc_b": jax.random.uniform(ks[3], (FC_OUT,), jnp.float32, -s, s),
        "gru_w_ih": jax.random.uniform(ks[4], (3 * HIDDEN, HIDDEN), jnp.float32, -s, s),
        "gru_w_hh": jax.random.uniform(ks[5], (3 * HIDDEN, HIDDEN), jnp.float32, -s, s),
        "gru_b_ih": jax.random.uniform(ks[6], (3 * HIDDEN,), jnp.float32, -s, s),
        "gru_b_hh": jax.random.uniform(ks[7], (3 * HIDDEN,), jnp.float32, -s, s),
    }


# --------------------------------------------------------------------------
# Pure-JAX f32 reference (same effective dataflow) for a correctness smoke-test
# --------------------------------------------------------------------------
def ref_forward(x, params):
    B, K, C, H, W = x.shape
    hp = lax.Precision.HIGHEST
    xf = x.reshape(B * K, C, H * W)
    mean = xf.mean(-1, keepdims=True)
    var = ((xf - mean) ** 2).mean(-1, keepdims=True)
    y = (xf - mean) / jnp.sqrt(var + 1e-5)
    y = y * params["in4_gamma"][:C][None, :, None] + params["in4_beta"][:C][None, :, None]
    pooled = jnp.maximum(y.max(-1), 0.0)                                   # (B*K, C)

    early = jnp.dot(x.reshape(B, K, -1), params["fc_w"].T, precision=hp) + params["fc_b"]

    gin = jnp.zeros((B, K, HIDDEN), jnp.float32).at[:, :, :C].set(pooled.reshape(B, K, C))

    def step(h, xt):
        gi = jnp.dot(xt, params["gru_w_ih"].T, precision=hp) + params["gru_b_ih"]
        gh = jnp.dot(h, params["gru_w_hh"].T, precision=hp) + params["gru_b_hh"]
        r = jax.nn.sigmoid(gi[:, :HIDDEN] + gh[:, :HIDDEN])
        z = jax.nn.sigmoid(gi[:, HIDDEN:2 * HIDDEN] + gh[:, HIDDEN:2 * HIDDEN])
        n = jnp.tanh(gi[:, 2 * HIDDEN:] + r * gh[:, 2 * HIDDEN:])
        hn = (1.0 - z) * n + z * h
        return hn, hn

    h_last, outs = lax.scan(step, jnp.zeros((B, HIDDEN), jnp.float32),
                            jnp.transpose(gin, (1, 0, 2)))
    return (jnp.transpose(outs, (1, 0, 2)), h_last[None]), early


if __name__ == "__main__":
    key = jax.random.PRNGKey(0)
    kx, kp = jax.random.split(key)

    # small shapes consistent with the effective forward: C*H*W == 512 (fc in_features)
    B, K, C, H, W = 2, 4, 8, 8, 8
    x = jax.random.normal(kx, (B, K, C, H, W), jnp.float32)
    params = init_params(kp)

    fwd = jax.jit(motion_encoder_forward)
    (static_out, h_n), early = jax.block_until_ready(fwd(x, params))

    (ref_static, ref_hn), ref_early = ref_forward(x, params)
    assert static_out.shape == (B, K, HIDDEN)
    assert h_n.shape == (1, B, HIDDEN)
    assert early.shape == (B, K, FC_OUT)
    # Pallas matmuls use bf16 MXU operands with f32 accumulation; reference is f32
    # HIGHEST, hence the slightly loose tolerances.
    assert jnp.allclose(early, ref_early, atol=2e-2, rtol=2e-2)
    assert jnp.allclose(static_out, ref_static, atol=3e-2, rtol=3e-2)
    assert jnp.allclose(h_n, ref_hn, atol=3e-2, rtol=3e-2)

    print("KERNEL_OK")
</pallas_src>

<mosaic_0001>
module attributes {stable_mosaic.version = 11 : i64} {
  func.func @_frontend_kernel(%arg0: i32, %arg1: memref<8x8x64xf32, #tpu.memory_space<vmem>>, %arg2: memref<8x512xf32, #tpu.memory_space<vmem>>, %arg3: memref<8x1xf32, #tpu.memory_space<vmem>>, %arg4: memref<8x1xf32, #tpu.memory_space<vmem>>, %arg5: memref<512x128xbf16, #tpu.memory_space<vmem>>, %arg6: memref<1x128xf32, #tpu.memory_space<vmem>>, %arg7: memref<8x1536xbf16, #tpu.memory_space<vmem>>, %arg8: memref<1x1536xf32, #tpu.memory_space<vmem>>, %arg9: memref<8x128xf32, #tpu.memory_space<vmem>>, %arg10: memref<8x1536xf32, #tpu.memory_space<vmem>>) attributes {dimension_semantics = [#tpu.dimension_semantics<parallel>], iteration_bounds = array<i64: 1>, scalar_prefetch = 0 : i64, scratch_operands = 0 : i64, tpu.core_type = #tpu.core_type<tc>, window_params = [{transform_indices = @transform_0, window_bounds = array<i64: 8, 8, 64>}, {transform_indices = @transform_1, window_bounds = array<i64: 8, 512>}, {pipeline_mode = #tpu.pipeline_mode<synchronous>, transform_indices = @transform_2, window_bounds = array<i64: 8, 1>}, {pipeline_mode = #tpu.pipeline_mode<synchronous>, transform_indices = @transform_3, window_bounds = array<i64: 8, 1>}, {pipeline_mode = #tpu.pipeline_mode<synchronous>, transform_indices = @transform_4, window_bounds = array<i64: 512, 128>}, {pipeline_mode = #tpu.pipeline_mode<synchronous>, transform_indices = @transform_5, window_bounds = array<i64: 1, 128>}, {pipeline_mode = #tpu.pipeline_mode<synchronous>, transform_indices = @transform_6, window_bounds = array<i64: 8, 1536>}, {pipeline_mode = #tpu.pipeline_mode<synchronous>, transform_indices = @transform_7, window_bounds = array<i64: 1, 1536>}, {transform_indices = @transform_8, window_bounds = array<i64: 8, 128>}, {transform_indices = @transform_9, window_bounds = array<i64: 8, 1536>}]} {
    %c0 = arith.constant 0 : index
    %c0_0 = arith.constant 0 : index
    %c0_1 = arith.constant 0 : index
    %0 = vector.load %arg1[%c0, %c0_0, %c0_1] : memref<8x8x64xf32, #tpu.memory_space<vmem>>, vector<8x8x64xf32>
    %cst = arith.constant dense<0.000000e+00> : vector<8x8xf32>
    %1 = vector.multi_reduction <add>, %0, %cst [2] : vector<8x8x64xf32> to vector<8x8xf32>
    %2 = vector.shape_cast %1 : vector<8x8xf32> to vector<8x8x1xf32>
    %cst_2 = arith.constant 6.400000e+01 : f32
    %3 = vector.broadcast %cst_2 : f32 to vector<8x8x1xf32>
    %4 = arith.divf %2, %3 : vector<8x8x1xf32>
    %5 = vector.broadcast %4 : vector<8x8x1xf32> to vector<8x8x64xf32>
    %6 = arith.subf %0, %5 : vector<8x8x64xf32>
    %7 = arith.mulf %6, %6 : vector<8x8x64xf32>
    %cst_3 = arith.constant dense<0.000000e+00> : vector<8x8xf32>
    %8 = vector.multi_reduction <add>, %7, %cst_3 [2] : vector<8x8x64xf32> to vector<8x8xf32>
    %9 = vector.shape_cast %8 : vector<8x8xf32> to vector<8x8x1xf32>
    %cst_4 = arith.constant 6.400000e+01 : f32
    %10 = vector.broadcast %cst_4 : f32 to vector<8x8x1xf32>
    %11 = arith.divf %9, %10 : vector<8x8x1xf32>
    %12 = vector.broadcast %4 : vector<8x8x1xf32> to vector<8x8x64xf32>
    %13 = arith.subf %0, %12 : vector<8x8x64xf32>
    %cst_5 = arith.constant 9.99999974E-6 : f32
    %14 = vector.broadcast %cst_5 : f32 to vector<8x8x1xf32>
    %15 = arith.addf %11, %14 : vector<8x8x1xf32>
    %16 = math.rsqrt %15 : vector<8x8x1xf32>
    %17 = vector.broadcast %16 : vector<8x8x1xf32> to vector<8x8x64xf32>
    %18 = arith.mulf %13, %17 : vector<8x8x64xf32>
    %c0_6 = arith.constant 0 : index
    %c0_7 = arith.constant 0 : index
    %19 = vector.load %arg3[%c0_6, %c0_7] : memref<8x1xf32, #tpu.memory_space<vmem>>, vector<8x1xf32>
    %20 = vector.shape_cast %19 : vector<8x1xf32> to vector<1x8x1xf32>
    %21 = vector.broadcast %20 : vector<1x8x1xf32> to vector<8x8x64xf32>
    %22 = arith.mulf %18, %21 : vector<8x8x64xf32>
    %c0_8 = arith.constant 0 : index
    %c0_9 = arith.constant 0 : index
    %23 = vector.load %arg4[%c0_8, %c0_9] : memref<8x1xf32, #tpu.memory_space<vmem>>, vector<8x1xf32>
    %24 = vector.shape_cast %23 : vector<8x1xf32> to vector<1x8x1xf32>
    %25 = vector.broadcast %24 : vector<1x8x1xf32> to vector<8x8x64xf32>
    %26 = arith.addf %22, %25 : vector<8x8x64xf32>
    %cst_10 = arith.constant dense<0xFF800000> : vector<8x8xf32>
    %27 = vector.multi_reduction <maximumf>, %26, %cst_10 [2] : vector<8x8x64xf32> to vector<8x8xf32>
    %cst_11 = arith.constant 0.000000e+00 : f32
    %28 = vector.broadcast %cst_11 : f32 to vector<8x8xf32>
    %29 = arith.maximumf %27, %28 : vector<8x8xf32>
    %c0_12 = arith.constant 0 : index
    %c0_13 = arith.constant 0 : index
    %30 = vector.load %arg2[%c0_12, %c0_13] : memref<8x512xf32, #tpu.memory_space<vmem>>, vector<8x512xf32>
    %31 = arith.truncf %30 : vector<8x512xf32> to vector<8x512xbf16>
    %c0_14 = arith.constant 0 : index
    %c0_15 = arith.constant 0 : index
    %32 = vector.load %arg5[%c0_14, %c0_15] : memref<512x128xbf16, #tpu.memory_space<vmem>>, vector<512x128xbf16>
    %cst_16 = arith.constant dense<0.000000e+00> : vector<8x128xf32>
    %33 = tpu.matmul %31, %32, %cst_16 {dimension_numbers = #tpu.dot_dimension_numbers<[1], [0], [0], [1], [0, 0, 1, 1], [], []>} : vector<8x512xbf16>, vector<512x128xbf16>, vector<8x128xf32> -> vector<8x128xf32>
    %c0_17 = arith.constant 0 : index
    %c0_18 = arith.constant 0 : index
    %34 = vector.load %arg6[%c0_17, %c0_18] : memref<1x128xf32, #tpu.memory_space<vmem>>, vector<1x128xf32>
    %35 = vector.broadcast %34 : vector<1x128xf32> to vector<8x128xf32>
    %36 = arith.addf %33, %35 : vector<8x128xf32>
    %c0_19 = arith.constant 0 : index
    %c0_20 = arith.constant 0 : index
    %37 = vector.load %arg9[%c0_19, %c0_20] : memref<8x128xf32, #tpu.memory_space<vmem>>, vector<8x128xf32>
    tpu.vector_store %arg9[%c0_19, %c0_20], %36 {strides = array<i32>} : memref<8x128xf32, #tpu.memory_space<vmem>>, vector<8x128xf32>,
    %38 = arith.truncf %29 : vector<8x8xf32> to vector<8x8xbf16>
    %c0_21 = arith.constant 0 : index
    %c0_22 = arith.constant 0 : index
    %39 = vector.load %arg7[%c0_21, %c0_22] : memref<8x1536xbf16, #tpu.memory_space<vmem>>, vector<8x1536xbf16>
    %cst_23 = arith.constant dense<0.000000e+00> : vector<8x1536xf32>
    %40 = tpu.matmul %38, %39, %cst_23 {dimension_numbers = #tpu.dot_dimension_numbers<[1], [0], [0], [1], [0, 0, 1, 1], [], []>} : vector<8x8xbf16>, vector<8x1536xbf16>, vector<8x1536xf32> -> vector<8x1536xf32>
    %c0_24 = arith.constant 0 : index
    %c0_25 = arith.constant 0 : index
    %41 = vector.load %arg8[%c0_24, %c0_25] : memref<1x1536xf32, #tpu.memory_space<vmem>>, vector<1x1536xf32>
    %42 = vector.broadcast %41 : vector<1x1536xf32> to vector<8x1536xf32>
    %43 = arith.addf %40, %42 : vector<8x1536xf32>
    %c0_26 = arith.constant 0 : index
    %c0_27 = arith.constant 0 : index
    %44 = vector.load %arg10[%c0_26, %c0_27] : memref<8x1536xf32, #tpu.memory_space<vmem>>, vector<8x1536xf32>
    tpu.vector_store %arg10[%c0_26, %c0_27], %43 {strides = array<i32>} : memref<8x1536xf32, #tpu.memory_space<vmem>>, vector<8x1536xf32>,
    return
  }
  func.func @transform_0(%arg0: i32) -> (i32, i32, i32) {
    %c0_i32 = arith.constant 0 : i32
    %c0_i32_0 = arith.constant 0 : i32
    %c0_i32_1 = arith.constant 0 : i32
    return %arg0, %c0_i32, %c0_i32_0 : i32, i32, i32
  }
  func.func @transform_1(%arg0: i32) -> (i32, i32) {
    %c0_i32 = arith.constant 0 : i32
    %c0_i32_0 = arith.constant 0 : i32
    return %arg0, %c0_i32 : i32, i32
  }
  func.func @transform_2(%arg0: i32) -> (i32, i32) {
    %c0_i32 = arith.constant 0 : i32
    %c0_i32_0 = arith.constant 0 : i32
    %c0_i32_1 = arith.constant 0 : i32
    return %c0_i32, %c0_i32_0 : i32, i32
  }
  func.func @transform_3(%arg0: i32) -> (i32, i32) {
    %c0_i32 = arith.constant 0 : i32
    %c0_i32_0 = arith.constant 0 : i32
    %c0_i32_1 = arith.constant 0 : i32
    return %c0_i32, %c0_i32_0 : i32, i32
  }
  func.func @transform_4(%arg0: i32) -> (i32, i32) {
    %c0_i32 = arith.constant 0 : i32
    %c0_i32_0 = arith.constant 0 : i32
    %c0_i32_1 = arith.constant 0 : i32
    return %c0_i32, %c0_i32_0 : i32, i32
  }
  func.func @transform_5(%arg0: i32) -> (i32, i32) {
    %c0_i32 = arith.constant 0 : i32
    %c0_i32_0 = arith.constant 0 : i32
    %c0_i32_1 = arith.constant 0 : i32
    return %c0_i32, %c0_i32_0 : i32, i32
  }
  func.func @transform_6(%arg0: i32) -> (i32, i32) {
    %c0_i32 = arith.constant 0 : i32
    %c0_i32_0 = arith.constant 0 : i32
    %c0_i32_1 = arith.constant 0 : i32
    return %c0_i32, %c0_i32_0 : i32, i32
  }
  func.func @transform_7(%arg0: i32) -> (i32, i32) {
    %c0_i32 = arith.constant 0 : i32
    %c0_i32_0 = arith.constant 0 : i32
    %c0_i32_1 = arith.constant 0 : i32
    return %c0_i32, %c0_i32_0 : i32, i32
  }
  func.func @transform_8(%arg0: i32) -> (i32, i32) {
    %c0_i32 = arith.constant 0 : i32
    %c0_i32_0 = arith.constant 0 : i32
    return %arg0, %c0_i32 : i32, i32
  }
  func.func @transform_9(%arg0: i32) -> (i32, i32) {
    %c0_i32 = arith.constant 0 : i32
    %c0_i32_0 = arith.constant 0 : i32
    return %arg0, %c0_i32 : i32, i32
  }
}

module attributes {stable_mosaic.version = 11 : i64} {
  func.func @_gru_kernel(%arg0: i32, %arg1: memref<2x6144xf32, #tpu.memory_space<vmem>>, %arg2: memref<512x1536xbf16, #tpu.memory_space<vmem>>, %arg3: memref<1x1536xf32, #tpu.memory_space<vmem>>, %arg4: memref<2x2048xf32, #tpu.memory_space<vmem>>, %arg5: memref<2x512xf32, #tpu.memory_space<vmem>>) attributes {dimension_semantics = [#tpu.dimension_semantics<arbitrary>], iteration_bounds = array<i64: 1>, scalar_prefetch = 0 : i64, scratch_operands = 1 : i64, tpu.core_type = #tpu.core_type<tc>, window_params = [{transform_indices = @transform_0, window_bounds = array<i64: 2, 6144>}, {pipeline_mode = #tpu.pipeline_mode<synchronous>, transform_indices = @transform_1, window_bounds = array<i64: 512, 1536>}, {pipeline_mode = #tpu.pipeline_mode<synchronous>, transform_indices = @transform_2, window_bounds = array<i64: 1, 1536>}, {transform_indices = @transform_3, window_bounds = array<i64: 2, 2048>}]} {
    %c0_i32 = arith.constant 0 : i32
    %0 = arith.cmpi eq, %arg0, %c0_i32 : i32
    %1 = arith.extui %0 : i1 to i32
    %c0_i32_0 = arith.constant 0 : i32
    %2 = arith.cmpi ne, %1, %c0_i32_0 : i32
    scf.if %2 {
      %cst_68 = arith.constant 0.000000e+00 : f32
      %174 = vector.broadcast %cst_68 : f32 to vector<2x512xf32>
      %c0_69 = arith.constant 0 : index
      %c0_70 = arith.constant 0 : index
      %175 = vector.load %arg5[%c0_69, %c0_70] : memref<2x512xf32, #tpu.memory_space<vmem>>, vector<2x512xf32>
      tpu.vector_store %arg5[%c0_69, %c0_70], %174 {strides = array<i32>} : memref<2x512xf32, #tpu.memory_space<vmem>>, vector<2x512xf32>,
    } else {
    }
    %c0 = arith.constant 0 : index
    %c0_1 = arith.constant 0 : index
    %3 = vector.load %arg3[%c0, %c0_1] : memref<1x1536xf32, #tpu.memory_space<vmem>>, vector<1x1536xf32>
    %c0_2 = arith.constant 0 : index
    %c0_3 = arith.constant 0 : index
    %4 = vector.load %arg5[%c0_2, %c0_3] : memref<2x512xf32, #tpu.memory_space<vmem>>, vector<2x512xf32>
    %c0_4 = arith.constant 0 : index
    %c0_5 = arith.constant 0 : index
    %5 = vector.load %arg1[%c0_4, %c0_5] : memref<2x6144xf32, #tpu.memory_space<vmem>>, vector<2x1536xf32>
    %6 = arith.truncf %4 : vector<2x512xf32> to vector<2x512xbf16>
    %c0_6 = arith.constant 0 : index
    %c0_7 = arith.constant 0 : index
    %7 = vector.load %arg2[%c0_6, %c0_7] : memref<512x1536xbf16, #tpu.memory_space<vmem>>, vector<512x1024xbf16>
    %cst = arith.constant dense<0.000000e+00> : vector<2x1024xf32>
    %8 = tpu.matmul %6, %7, %cst {dimension_numbers = #tpu.dot_dimension_numbers<[1], [0], [0], [1], [0, 0, 1, 1], [], []>} : vector<2x512xbf16>, vector<512x1024xbf16>, vector<2x1024xf32> -> vector<2x1024xf32>
    %9 = vector.extract_strided_slice %3 {offsets = [0, 0], sizes = [1, 1024], strides = [1, 1]} : vector<1x1536xf32> to vector<1x1024xf32>
    %10 = vector.broadcast %9 : vector<1x1024xf32> to vector<2x1024xf32>
    %11 = arith.addf %8, %10 : vector<2x1024xf32>
    %12 = vector.extract_strided_slice %5 {offsets = [0, 0], sizes = [2, 512], strides = [1, 1]} : vector<2x1536xf32> to vector<2x512xf32>
    %13 = vector.extract_strided_slice %11 {offsets = [0, 0], sizes = [2, 512], strides = [1, 1]} : vector<2x1024xf32> to vector<2x512xf32>
    %14 = arith.addf %12, %13 : vector<2x512xf32>
    %cst_8 = arith.constant 5.000000e-01 : f32
    %15 = vector.broadcast %cst_8 : f32 to vector<2x512xf32>
    %16 = arith.mulf %15, %14 : vector<2x512xf32>
    %17 = math.tanh %16 : vector<2x512xf32>
    %cst_9 = arith.constant 1.000000e+00 : f32
    %18 = vector.broadcast %cst_9 : f32 to vector<2x512xf32>
    %19 = arith.addf %17, %18 : vector<2x512xf32>
    %cst_10 = arith.constant 5.000000e-01 : f32
    %20 = vector.broadcast %cst_10 : f32 to vector<2x512xf32>
    %21 = arith.mulf %20, %19 : vector<2x512xf32>
    %22 = vector.extract_strided_slice %5 {offsets = [0, 512], sizes = [2, 512], strides = [1, 1]} : vector<2x1536xf32> to vector<2x512xf32>
    %23 = vector.extract_strided_slice %11 {offsets = [0, 512], sizes = [2, 512], strides = [1, 1]} : vector<2x1024xf32> to vector<2x512xf32>
    %24 = arith.addf %22, %23 : vector<2x512xf32>
    %cst_11 = arith.constant 5.000000e-01 : f32
    %25 = vector.broadcast %cst_11 : f32 to vector<2x512xf32>
    %26 = arith.mulf %25, %24 : vector<2x512xf32>
    %27 = math.tanh %26 : vector<2x512xf32>
    %cst_12 = arith.constant 1.000000e+00 : f32
    %28 = vector.broadcast %cst_12 : f32 to vector<2x512xf32>
    %29 = arith.addf %27, %28 : vector<2x512xf32>
    %cst_13 = arith.constant 5.000000e-01 : f32
    %30 = vector.broadcast %cst_13 : f32 to vector<2x512xf32>
    %31 = arith.mulf %30, %29 : vector<2x512xf32>
    %c0_14 = arith.constant 0 : index
    %c1024 = arith.constant 1024 : index
    %32 = vector.load %arg2[%c0_14, %c1024] : memref<512x1536xbf16, #tpu.memory_space<vmem>>, vector<512x512xbf16>
    %cst_15 = arith.constant dense<0.000000e+00> : vector<2x512xf32>
    %33 = tpu.matmul %6, %32, %cst_15 {dimension_numbers = #tpu.dot_dimension_numbers<[1], [0], [0], [1], [0, 0, 1, 1], [], []>} : vector<2x512xbf16>, vector<512x512xbf16>, vector<2x512xf32> -> vector<2x512xf32>
    %34 = vector.extract_strided_slice %3 {offsets = [0, 1024], sizes = [1, 512], strides = [1, 1]} : vector<1x1536xf32> to vector<1x512xf32>
    %35 = vector.broadcast %34 : vector<1x512xf32> to vector<2x512xf32>
    %36 = arith.addf %33, %35 : vector<2x512xf32>
    %37 = vector.extract_strided_slice %5 {offsets = [0, 1024], sizes = [2, 512], strides = [1, 1]} : vector<2x1536xf32> to vector<2x512xf32>
    %38 = arith.mulf %21, %36 : vector<2x512xf32>
    %39 = arith.addf %37, %38 : vector<2x512xf32>
    %40 = math.tanh %39 : vector<2x512xf32>
    %cst_16 = arith.constant 1.000000e+00 : f32
    %41 = vector.broadcast %cst_16 : f32 to vector<2x512xf32>
    %42 = arith.subf %41, %31 : vector<2x512xf32>
    %43 = arith.mulf %42, %40 : vector<2x512xf32>
    %44 = arith.mulf %31, %4 : vector<2x512xf32>
    %45 = arith.addf %43, %44 : vector<2x512xf32>
    %c0_17 = arith.constant 0 : index
    %c0_18 = arith.constant 0 : index
    %46 = vector.load %arg4[%c0_17, %c0_18] : memref<2x2048xf32, #tpu.memory_space<vmem>>, vector<2x512xf32>
    tpu.vector_store %arg4[%c0_17, %c0_18], %45 {strides = array<i32>} : memref<2x2048xf32, #tpu.memory_space<vmem>>, vector<2x512xf32>,
    %c0_19 = arith.constant 0 : index
    %c1536 = arith.constant 1536 : index
    %47 = vector.load %arg1[%c0_19, %c1536] : memref<2x6144xf32, #tpu.memory_space<vmem>>, vector<2x1536xf32>
    %48 = arith.truncf %45 : vector<2x512xf32> to vector<2x512xbf16>
    %c0_20 = arith.constant 0 : index
    %c0_21 = arith.constant 0 : index
    %49 = vector.load %arg2[%c0_20, %c0_21] : memref<512x1536xbf16, #tpu.memory_space<vmem>>, vector<512x1024xbf16>
    %cst_22 = arith.constant dense<0.000000e+00> : vector<2x1024xf32>
    %50 = tpu.matmul %48, %49, %cst_22 {dimension_numbers = #tpu.dot_dimension_numbers<[1], [0], [0], [1], [0, 0, 1, 1], [], []>} : vector<2x512xbf16>, vector<512x1024xbf16>, vector<2x1024xf32> -> vector<2x1024xf32>
    %51 = vector.extract_strided_slice %3 {offsets = [0, 0], sizes = [1, 1024], strides = [1, 1]} : vector<1x1536xf32> to vector<1x1024xf32>
    %52 = vector.broadcast %51 : vector<1x1024xf32> to vector<2x1024xf32>
    %53 = arith.addf %50, %52 : vector<2x1024xf32>
    %54 = vector.extract_strided_slice %47 {offsets = [0, 0], sizes = [2, 512], strides = [1, 1]} : vector<2x1536xf32> to vector<2x512xf32>
    %55 = vector.extract_strided_slice %53 {offsets = [0, 0], sizes = [2, 512], strides = [1, 1]} : vector<2x1024xf32> to vector<2x512xf32>
    %56 = arith.addf %54, %55 : vector<2x512xf32>
    %cst_23 = arith.constant 5.000000e-01 : f32
    %57 = vector.broadcast %cst_23 : f32 to vector<2x512xf32>
    %58 = arith.mulf %57, %56 : vector<2x512xf32>
    %59 = math.tanh %58 : vector<2x512xf32>
    %cst_24 = arith.constant 1.000000e+00 : f32
    %60 = vector.broadcast %cst_24 : f32 to vector<2x512xf32>
    %61 = arith.addf %59, %60 : vector<2x512xf32>
    %cst_25 = arith.constant 5.000000e-01 : f32
    %62 = vector.broadcast %cst_25 : f32 to vector<2x512xf32>
    %63 = arith.mulf %62, %61 : vector<2x512xf32>
    %64 = vector.extract_strided_slice %47 {offsets = [0, 512], sizes = [2, 512], strides = [1, 1]} : vector<2x1536xf32> to vector<2x512xf32>
    %65 = vector.extract_strided_slice %53 {offsets = [0, 512], sizes = [2, 512], strides = [1, 1]} : vector<2x1024xf32> to vector<2x512xf32>
    %66 = arith.addf %64, %65 : vector<2x512xf32>
    %cst_26 = arith.constant 5.000000e-01 : f32
    %67 = vector.broadcast %cst_26 : f32 to vector<2x512xf32>
    %68 = arith.mulf %67, %66 : vector<2x512xf32>
    %69 = math.tanh %68 : vector<2x512xf32>
    %cst_27 = arith.constant 1.000000e+00 : f32
    %70 = vector.broadcast %cst_27 : f32 to vector<2x512xf32>
    %71 = arith.addf %69, %70 : vector<2x512xf32>
    %cst_28 = arith.constant 5.000000e-01 : f32
    %72 = vector.broadcast %cst_28 : f32 to vector<2x512xf32>
    %73 = arith.mulf %72, %71 : vector<2x512xf32>
    %c0_29 = arith.constant 0 : index
    %c1024_30 = arith.constant 1024 : index
    %74 = vector.load %arg2[%c0_29, %c1024_30] : memref<512x1536xbf16, #tpu.memory_space<vmem>>, vector<512x512xbf16>
    %cst_31 = arith.constant dense<0.000000e+00> : vector<2x512xf32>
    %75 = tpu.matmul %48, %74, %cst_31 {dimension_numbers = #tpu.dot_dimension_numbers<[1], [0], [0], [1], [0, 0, 1, 1], [], []>} : vector<2x512xbf16>, vector<512x512xbf16>, vector<2x512xf32> -> vector<2x512xf32>
    %76 = vector.extract_strided_slice %3 {offsets = [0, 1024], sizes = [1, 512], strides = [1, 1]} : vector<1x1536xf32> to vector<1x512xf32>
    %77 = vector.broadcast %76 : vector<1x512xf32> to vector<2x512xf32>
    %78 = arith.addf %75, %77 : vector<2x512xf32>
    %79 = vector.extract_strided_slice %47 {offsets = [0, 1024], sizes = [2, 512], strides = [1, 1]} : vector<2x1536xf32> to vector<2x512xf32>
    %80 = arith.mulf %63, %78 : vector<2x512xf32>
    %81 = arith.addf %79, %80 : vector<2x512xf32>
    %82 = math.tanh %81 : vector<2x512xf32>
    %cst_32 = arith.constant 1.000000e+00 : f32
    %83 = vector.broadcast %cst_32 : f32 to vector<2x512xf32>
    %84 = arith.subf %83, %73 : vector<2x512xf32>
    %85 = arith.mulf %84, %82 : vector<2x512xf32>
    %86 = arith.mulf %73, %45 : vector<2x512xf32>
    %87 = arith.addf %85, %86 : vector<2x512xf32>
    %c0_33 = arith.constant 0 : index
    %c512 = arith.constant 512 : index
    %88 = vector.load %arg4[%c0_33, %c512] : memref<2x2048xf32, #tpu.memory_space<vmem>>, vector<2x512xf32>
    tpu.vector_store %arg4[%c0_33, %c512], %87 {strides = array<i32>} : memref<2x2048xf32, #tpu.memory_space<vmem>>, vector<2x512xf32>,
    %c0_34 = arith.constant 0 : index
    %c3072 = arith.constant 3072 : index
    %89 = vector.load %arg1[%c0_34, %c3072] : memref<2x6144xf32, #tpu.memory_space<vmem>>, vector<2x1536xf32>
    %90 = arith.truncf %87 : vector<2x512xf32> to vector<2x512xbf16>
    %c0_35 = arith.constant 0 : index
    %c0_36 = arith.constant 0 : index
    %91 = vector.load %arg2[%c0_35, %c0_36] : memref<512x1536xbf16, #tpu.memory_space<vmem>>, vector<512x1024xbf16>
    %cst_37 = arith.constant dense<0.000000e+00> : vector<2x1024xf32>
    %92 = tpu.matmul %90, %91, %cst_37 {dimension_numbers = #tpu.dot_dimension_numbers<[1], [0], [0], [1], [0, 0, 1, 1], [], []>} : vector<2x512xbf16>, vector<512x1024xbf16>, vector<2x1024xf32> -> vector<2x1024xf32>
    %93 = vector.extract_strided_slice %3 {offsets = [0, 0], sizes = [1, 1024], strides = [1, 1]} : vector<1x1536xf32> to vector<1x1024xf32>
    %94 = vector.broadcast %93 : vector<1x1024xf32> to vector<2x1024xf32>
    %95 = arith.addf %92, %94 : vector<2x1024xf32>
    %96 = vector.extract_strided_slice %89 {offsets = [0, 0], sizes = [2, 512], strides = [1, 1]} : vector<2x1536xf32> to vector<2x512xf32>
    %97 = vector.extract_strided_slice %95 {offsets = [0, 0], sizes = [2, 512], strides = [1, 1]} : vector<2x1024xf32> to vector<2x512xf32>
    %98 = arith.addf %96, %97 : vector<2x512xf32>
    %cst_38 = arith.constant 5.000000e-01 : f32
    %99 = vector.broadcast %cst_38 : f32 to vector<2x512xf32>
    %100 = arith.mulf %99, %98 : vector<2x512xf32>
    %101 = math.tanh %100 : vector<2x512xf32>
    %cst_39 = arith.constant 1.000000e+00 : f32
    %102 = vector.broadcast %cst_39 : f32 to vector<2x512xf32>
    %103 = arith.addf %101, %102 : vector<2x512xf32>
    %cst_40 = arith.constant 5.000000e-01 : f32
    %104 = vector.broadcast %cst_40 : f32 to vector<2x512xf32>
    %105 = arith.mulf %104, %103 : vector<2x512xf32>
    %106 = vector.extract_strided_slice %89 {offsets = [0, 512], sizes = [2, 512], strides = [1, 1]} : vector<2x1536xf32> to vector<2x512xf32>
    %107 = vector.extract_strided_slice %95 {offsets = [0, 512], sizes = [2, 512], strides = [1, 1]} : vector<2x1024xf32> to vector<2x512xf32>
    %108 = arith.addf %106, %107 : vector<2x512xf32>
    %cst_41 = arith.constant 5.000000e-01 : f32
    %109 = vector.broadcast %cst_41 : f32 to vector<2x512xf32>
    %110 = arith.mulf %109, %108 : vector<2x512xf32>
    %111 = math.tanh %110 : vector<2x512xf32>
    %cst_42 = arith.constant 1.000000e+00 : f32
    %112 = vector.broadcast %cst_42 : f32 to vector<2x512xf32>
    %113 = arith.addf %111, %112 : vector<2x512xf32>
    %cst_43 = arith.constant 5.000000e-01 : f32
    %114 = vector.broadcast %cst_43 : f32 to vector<2x512xf32>
    %115 = arith.mulf %114, %113 : vector<2x512xf32>
    %c0_44 = arith.constant 0 : index
    %c1024_45 = arith.constant 1024 : index
    %116 = vector.load %arg2[%c0_44, %c1024_45] : memref<512x1536xbf16, #tpu.memory_space<vmem>>, vector<512x512xbf16>
    %cst_46 = arith.constant dense<0.000000e+00> : vector<2x512xf32>
    %117 = tpu.matmul %90, %116, %cst_46 {dimension_numbers = #tpu.dot_dimension_numbers<[1], [0], [0], [1], [0, 0, 1, 1], [], []>} : vector<2x512xbf16>, vector<512x512xbf16>, vector<2x512xf32> -> vector<2x512xf32>
    %118 = vector.extract_strided_slice %3 {offsets = [0, 1024], sizes = [1, 512], strides = [1, 1]} : vector<1x1536xf32> to vector<1x512xf32>
    %119 = vector.broadcast %118 : vector<1x512xf32> to vector<2x512xf32>
    %120 = arith.addf %117, %119 : vector<2x512xf32>
    %121 = vector.extract_strided_slice %89 {offsets = [0, 1024], sizes = [2, 512], strides = [1, 1]} : vector<2x1536xf32> to vector<2x512xf32>
    %122 = arith.mulf %105, %120 : vector<2x512xf32>
    %123 = arith.addf %121, %122 : vector<2x512xf32>
    %124 = math.tanh %123 : vector<2x512xf32>
    %cst_47 = arith.constant 1.000000e+00 : f32
    %125 = vector.broadcast %cst_47 : f32 to vector<2x512xf32>
    %126 = arith.subf %125, %115 : vector<2x512xf32>
    %127 = arith.mulf %126, %124 : vector<2x512xf32>
    %128 = arith.mulf %115, %87 : vector<2x512xf32>
    %129 = arith.addf %127, %128 : vector<2x512xf32>
    %c0_48 = arith.constant 0 : index
    %c1024_49 = arith.constant 1024 : index
    %130 = vector.load %arg4[%c0_48, %c1024_49] : memref<2x2048xf32, #tpu.memory_space<vmem>>, vector<2x512xf32>
    tpu.vector_store %arg4[%c0_48, %c1024_49], %129 {strides = array<i32>} : memref<2x2048xf32, #tpu.memory_space<vmem>>, vector<2x512xf32>,
    %c0_50 = arith.constant 0 : index
    %c4608 = arith.constant 4608 : index
    %131 = vector.load %arg1[%c0_50, %c4608] : memref<2x6144xf32, #tpu.memory_space<vmem>>, vector<2x1536xf32>
    %132 = arith.truncf %129 : vector<2x512xf32> to vector<2x512xbf16>
    %c0_51 = arith.constant 0 : index
    %c0_52 = arith.constant 0 : index
    %133 = vector.load %arg2[%c0_51, %c0_52] : memref<512x1536xbf16, #tpu.memory_space<vmem>>, vector<512x1024xbf16>
    %cst_53 = arith.constant dense<0.000000e+00> : vector<2x1024xf32>
    %134 = tpu.matmul %132, %133, %cst_53 {dimension_numbers = #tpu.dot_dimension_numbers<[1], [0], [0], [1], [0, 0, 1, 1], [], []>} : vector<2x512xbf16>, vector<512x1024xbf16>, vector<2x1024xf32> -> vector<2x1024xf32>
    %135 = vector.extract_strided_slice %3 {offsets = [0, 0], sizes = [1, 1024], strides = [1, 1]} : vector<1x1536xf32> to vector<1x1024xf32>
    %136 = vector.broadcast %135 : vector<1x1024xf32> to vector<2x1024xf32>
    %137 = arith.addf %134, %136 : vector<2x1024xf32>
    %138 = vector.extract_strided_slice %131 {offsets = [0, 0], sizes = [2, 512], strides = [1, 1]} : vector<2x1536xf32> to vector<2x512xf32>
    %139 = vector.extract_strided_slice %137 {offsets = [0, 0], sizes = [2, 512], strides = [1, 1]} : vector<2x1024xf32> to vector<2x512xf32>
    %140 = arith.addf %138, %139 : vector<2x512xf32>
    %cst_54 = arith.constant 5.000000e-01 : f32
    %141 = vector.broadcast %cst_54 : f32 to vector<2x512xf32>
    %142 = arith.mulf %141, %140 : vector<2x512xf32>
    %143 = math.tanh %142 : vector<2x512xf32>
    %cst_55 = arith.constant 1.000000e+00 : f32
    %144 = vector.broadcast %cst_55 : f32 to vector<2x512xf32>
    %145 = arith.addf %143, %144 : vector<2x512xf32>
    %cst_56 = arith.constant 5.000000e-01 : f32
    %146 = vector.broadcast %cst_56 : f32 to vector<2x512xf32>
    %147 = arith.mulf %146, %145 : vector<2x512xf32>
    %148 = vector.extract_strided_slice %131 {offsets = [0, 512], sizes = [2, 512], strides = [1, 1]} : vector<2x1536xf32> to vector<2x512xf32>
    %149 = vector.extract_strided_slice %137 {offsets = [0, 512], sizes = [2, 512], strides = [1, 1]} : vector<2x1024xf32> to vector<2x512xf32>
    %150 = arith.addf %148, %149 : vector<2x512xf32>
    %cst_57 = arith.constant 5.000000e-01 : f32
    %151 = vector.broadcast %cst_57 : f32 to vector<2x512xf32>
    %152 = arith.mulf %151, %150 : vector<2x512xf32>
    %153 = math.tanh %152 : vector<2x512xf32>
    %cst_58 = arith.constant 1.000000e+00 : f32
    %154 = vector.broadcast %cst_58 : f32 to vector<2x512xf32>
    %155 = arith.addf %153, %154 : vector<2x512xf32>
    %cst_59 = arith.constant 5.000000e-01 : f32
    %156 = vector.broadcast %cst_59 : f32 to vector<2x512xf32>
    %157 = arith.mulf %156, %155 : vector<2x512xf32>
    %c0_60 = arith.constant 0 : index
    %c1024_61 = arith.constant 1024 : index
    %158 = vector.load %arg2[%c0_60, %c1024_61] : memref<512x1536xbf16, #tpu.memory_space<vmem>>, vector<512x512xbf16>
    %cst_62 = arith.constant dense<0.000000e+00> : vector<2x512xf32>
    %159 = tpu.matmul %132, %158, %cst_62 {dimension_numbers = #tpu.dot_dimension_numbers<[1], [0], [0], [1], [0, 0, 1, 1], [], []>} : vector<2x512xbf16>, vector<512x512xbf16>, vector<2x512xf32> -> vector<2x512xf32>
    %160 = vector.extract_strided_slice %3 {offsets = [0, 1024], sizes = [1, 512], strides = [1, 1]} : vector<1x1536xf32> to vector<1x512xf32>
    %161 = vector.broadcast %160 : vector<1x512xf32> to vector<2x512xf32>
    %162 = arith.addf %159, %161 : vector<2x512xf32>
    %163 = vector.extract_strided_slice %131 {offsets = [0, 1024], sizes = [2, 512], strides = [1, 1]} : vector<2x1536xf32> to vector<2x512xf32>
    %164 = arith.mulf %147, %162 : vector<2x512xf32>
    %165 = arith.addf %163, %164 : vector<2x512xf32>
    %166 = math.tanh %165 : vector<2x512xf32>
    %cst_63 = arith.constant 1.000000e+00 : f32
    %167 = vector.broadcast %cst_63 : f32 to vector<2x512xf32>
    %168 = arith.subf %167, %157 : vector<2x512xf32>
    %169 = arith.mulf %168, %166 : vector<2x512xf32>
    %170 = arith.mulf %157, %129 : vector<2x512xf32>
    %171 = arith.addf %169, %170 : vector<2x512xf32>
    %c0_64 = arith.constant 0 : index
    %c1536_65 = arith.constant 1536 : index
    %172 = vector.load %arg4[%c0_64, %c1536_65] : memref<2x2048xf32, #tpu.memory_space<vmem>>, vector<2x512xf32>
    tpu.vector_store %arg4[%c0_64, %c1536_65], %171 {strides = array<i32>} : memref<2x2048xf32, #tpu.memory_space<vmem>>, vector<2x512xf32>,
    %c0_66 = arith.constant 0 : index
    %c0_67 = arith.constant 0 : index
    %173 = vector.load %arg5[%c0_66, %c0_67] : memref<2x512xf32, #tpu.memory_space<vmem>>, vector<2x512xf32>
    tpu.vector_store %arg5[%c0_66, %c0_67], %171 {strides = array<i32>} : memref<2x512xf32, #tpu.memory_space<vmem>>, vector<2x512xf32>,
    return
  }
  func.func @transform_0(%arg0: i32) -> (i32, i32) {
    %c0_i32 = arith.constant 0 : i32
    %c0_i32_0 = arith.constant 0 : i32
    return %c0_i32, %arg0 : i32, i32
  }
  func.func @transform_1(%arg0: i32) -> (i32, i32) {
    %c0_i32 = arith.constant 0 : i32
    %c0_i32_0 = arith.constant 0 : i32
    %c0_i32_1 = arith.constant 0 : i32
    return %c0_i32, %c0_i32_0 : i32, i32
  }
  func.func @transform_2(%arg0: i32) -> (i32, i32) {
    %c0_i32 = arith.constant 0 : i32
    %c0_i32_0 = arith.constant 0 : i32
    %c0_i32_1 = arith.constant 0 : i32
    return %c0_i32, %c0_i32_0 : i32, i32
  }
  func.func @transform_3(%arg0: i32) -> (i32, i32) {
    %c0_i32 = arith.constant 0 : i32
    %c0_i32_0 = arith.constant 0 : i32
    return %c0_i32, %arg0 : i32, i32
  }
}

</mosaic_0001>

<llo_original>
// kernel: motion_encoder_forward.2
$region0: #{motion_encoder_forward.2}
  #allocation0 [shape = 'u32[]', space=smem, size = 0x4, offset = 0x4, fixed_abs, tag = 'smem constant byte address 0x4 - core index']
  #allocation1 [shape = 'u32[144,128]{1,0:T(1,128)}', space=vmem, size = 0x12000, scoped, tag = 'internal scratch']
  %s0 = inlined_call_operand.vmem [shape: f32[8,8,64], index: 0, kind: input, shape index: {}]
  %s1 = inlined_call_operand.vmem [shape: f32[8,512], index: 1, kind: input, shape index: {}]
  %s2 = inlined_call_operand.vmem [shape: f32[8,1], index: 2, kind: input, shape index: {}]
  %s3 = inlined_call_operand.vmem [shape: f32[8,1], index: 3, kind: input, shape index: {}]
  %s4 = inlined_call_operand.vmem [shape: bf16[512,128], index: 4, kind: input, shape index: {}]
  %s5 = inlined_call_operand.hbm [shape: f32[1,128], index: 5, kind: input, shape index: {}]
  %s6 = inlined_call_operand.vmem [shape: bf16[8,1536], index: 6, kind: input, shape index: {}]
  %s7 = inlined_call_operand.vmem [shape: f32[1,1536], index: 7, kind: input, shape index: {}]
  %s8 = inlined_call_operand.hbm [shape: f32[8,128], index: 8, kind: output, shape index: {0}]
  %s9 = inlined_call_operand.vmem [shape: f32[8,1536], index: 9, kind: output, shape index: {1}]
  %10 = xla_tuple %s8, %s9
  %s11 = sld [smem:[#allocation0]]
  $region54: #{motion_encoder_forward.2} parent=0
    _
  %s13 = ssub.s32 1, %s11
  %s14 = scalar_select 0, %s13, %s11
  $region1: #{motion_encoder_forward.2} parent=0
    #allocation2 [shape = 'u8[512]{0}', space=vmem, size = 0x400, scoped, tag = 'input window, operand 5, single buffered']
    #allocation3 [shape = 's32[1]{0}', space=sflag, size = 0x4, scoped, tag = 'scoped memory for motion_encoder_forward.2']
    #allocation4 [shape = 's32[1]{0}', space=sflag, size = 0x4, scoped, tag = 'scoped memory for motion_encoder_forward.2']
    #allocation5 [shape = 'u8[4096]{0}', space=vmem, size = 0x1000, scoped, tag = 'output window, operand 0, single buffered']
    %15 = vsyncpa [#allocation3], 0
    %16 = vsyncpa [#allocation4], 0
    // Predicated region
    $region2: #{motion_encoder_forward.2} parent=1 // pred_check
      _
    $region3: #{motion_encoder_forward.2} parent=1 // pred_check_branch
      %18 = sbr.rel (0) target = $region5
    $region4: #{motion_encoder_forward.2} parent=1 // pred_region
      _
    $region5: #{motion_encoder_forward.2} parent=1 // pred_fallthru
      _
    // Predicated region
    $region6: #{motion_encoder_forward.2} parent=1 // pred_check
      _
    $region7: #{motion_encoder_forward.2} parent=1 // pred_check_branch
      %20 = sbr.rel (0) target = $region9
    $region8: #{motion_encoder_forward.2} parent=1 // pred_region
      _
    $region9: #{motion_encoder_forward.2} parent=1 // pred_fallthru
      _
    // Predicated region
    $region10: #{motion_encoder_forward.2} parent=1 // pred_check
      _
    $region11: #{motion_encoder_forward.2} parent=1 // pred_check_branch
      %22 = sbr.rel (0) target = $region13
    $region12: #{motion_encoder_forward.2} parent=1 // pred_region
      _
    $region13: #{motion_encoder_forward.2} parent=1 // pred_fallthru
      _
    // Predicated region
    $region14: #{motion_encoder_forward.2} parent=1 // pred_check
      _
    $region15: #{motion_encoder_forward.2} parent=1 // pred_check_branch
      %24 = sbr.rel (0) target = $region17
    $region16: #{motion_encoder_forward.2} parent=1 // pred_region
      _
    $region17: #{motion_encoder_forward.2} parent=1 // pred_fallthru
      _
    // Predicated region
    $region18: #{motion_encoder_forward.2} parent=1 // pred_check
      _
    $region19: #{motion_encoder_forward.2} parent=1 // pred_check_branch
      %26 = sbr.rel (0) target = $region21
    $region20: #{motion_encoder_forward.2} parent=1 // pred_region
      _
    $region21: #{motion_encoder_forward.2} parent=1 // pred_fallthru
      _
    // Predicated region
    $region22: #{motion_encoder_forward.2} parent=1 // pred_check
      _
    $region23: #{motion_encoder_forward.2} parent=1 // pred_check_branch
      %28 = sbr.rel (0) target = $region25
    $region24: #{motion_encoder_forward.2} parent=1 // pred_region
      %s30 = ssub.s32 16, 16
      %31 = vsyncadd [#allocation3], %s30
      %s33 = sshll.u32 [#allocation2], 4
      %s34 = int_to_ptr.vmem [resolvable:$true] %s33
      %36 = dma.hbm_to_vmem [thread:$0]  %s5, 16, %s34, [#allocation3]
    $region25: #{motion_encoder_forward.2} parent=1 // pred_fallthru
      _
    // Predicated region
    $region26: #{motion_encoder_forward.2} parent=1 // pred_check
      _
    $region27: #{motion_encoder_forward.2} parent=1 // pred_check_branch
      %38 = sbr.rel (0) target = $region29
    $region28: #{motion_encoder_forward.2} parent=1 // pred_region
      _
    $region29: #{motion_encoder_forward.2} parent=1 // pred_fallthru
      _
    // Predicated region
    $region30: #{motion_encoder_forward.2} parent=1 // pred_check
      _
    $region31: #{motion_encoder_forward.2} parent=1 // pred_check_branch
      %40 = sbr.rel (0) target = $region33
    $region32: #{motion_encoder_forward.2} parent=1 // pred_region
      _
    $region33: #{motion_encoder_forward.2} parent=1 // pred_fallthru
      _
    // Predicated region
    $region34: #{motion_encoder_forward.2} parent=1 // pred_check
      _
    $region35: #{motion_encoder_forward.2} parent=1 // pred_check_branch
      %42 = sbr.rel (0) target = $region37
    $region36: #{motion_encoder_forward.2} parent=1 // pred_region
      %43 = dma.done [#allocation3], 16
    $region37: #{motion_encoder_forward.2} parent=1 // pred_fallthru
      _
    %v45 = vld [vmem:[%s0] sm:$0xff]
    %v46 = vld [vmem:[%s0 + $0x8] sm:$0xff]
    %v47 = vld [vmem:[%s0 + $0x10] sm:$0xff]
    %v48 = vld [vmem:[%s0 + $0x18] sm:$0xff]
    %v49 = vld [vmem:[%s0 + $0x20] sm:$0xff]
    %v50 = vld [vmem:[%s0 + $0x28] sm:$0xff]
    %v51 = vld [vmem:[%s0 + $0x30] sm:$0xff]
    %v52 = vld [vmem:[%s0 + $0x38] sm:$0xff]
    %vm53 = vcmask 523264
    %v54 = vsel %vm53, %v45, 0.0
    %55 = vadd.xlane.f32.xlu0 %v54
    %v56 = vpop.xlane.xlu0 %55
    %v57 = vsel %vm53, %v46, 0.0
    %58 = vadd.xlane.f32.xlu0 %v57
    %v59 = vpop.xlane.xlu0 %58
    %v60 = vsel %vm53, %v47, 0.0
    %61 = vadd.xlane.f32.xlu0 %v60
    %v62 = vpop.xlane.xlu0 %61
    %v63 = vsel %vm53, %v48, 0.0
    %64 = vadd.xlane.f32.xlu0 %v63
    %v65 = vpop.xlane.xlu0 %64
    %v66 = vsel %vm53, %v49, 0.0
    %67 = vadd.xlane.f32.xlu0 %v66
    %v68 = vpop.xlane.xlu0 %67
    %v69 = vsel %vm53, %v50, 0.0
    %70 = vadd.xlane.f32.xlu0 %v69
    %v71 = vpop.xlane.xlu0 %70
    %v72 = vsel %vm53, %v51, 0.0
    %73 = vadd.xlane.f32.xlu0 %v72
    %v74 = vpop.xlane.xlu0 %73
    %v75 = vsel %vm53, %v52, 0.0
    %76 = vadd.xlane.f32.xlu0 %v75
    %v77 = vpop.xlane.xlu0 %76
    %v78 = vrcp.pop 64.0
    %v79 = vmul.f32 %v56, %v78
    %v80 = vmul.f32 %v59, %v78
    %v81 = vmul.f32 %v62, %v78
    %v82 = vmul.f32 %v65, %v78
    %v83 = vmul.f32 %v68, %v78
    %v84 = vmul.f32 %v71, %v78
    %v85 = vmul.f32 %v74, %v78
    %v86 = vmul.f32 %v77, %v78
    %v87 = vsub.f32 %v45, %v79
    %v88 = vsub.f32 %v46, %v80
    %v89 = vsub.f32 %v47, %v81
    %v90 = vsub.f32 %v48, %v82
    %v91 = vsub.f32 %v49, %v83
    %v92 = vsub.f32 %v50, %v84
    %v93 = vsub.f32 %v51, %v85
    %v94 = vsub.f32 %v52, %v86
    %v95 = vmul.f32 %v87, %v87
    %v96 = vmul.f32 %v88, %v88
    %v97 = vmul.f32 %v89, %v89
    %v98 = vmul.f32 %v90, %v90
    %v99 = vmul.f32 %v91, %v91
    %v100 = vmul.f32 %v92, %v92
    %v101 = vmul.f32 %v93, %v93
    %v102 = vmul.f32 %v94, %v94
    %v103 = vsel %vm53, %v95, 0.0
    %104 = vadd.xlane.f32.xlu0 %v103
    %v105 = vpop.xlane.xlu0 %104
    %v106 = vsel %vm53, %v96, 0.0
    %107 = vadd.xlane.f32.xlu0 %v106
    %v108 = vpop.xlane.xlu0 %107
    %v109 = vsel %vm53, %v97, 0.0
    %110 = vadd.xlane.f32.xlu0 %v109
    %v111 = vpop.xlane.xlu0 %110
    %v112 = vsel %vm53, %v98, 0.0
    %113 = vadd.xlane.f32.xlu0 %v112
    %v114 = vpop.xlane.xlu0 %113
    %v115 = vsel %vm53, %v99, 0.0
    %116 = vadd.xlane.f32.xlu0 %v115
    %v117 = vpop.xlane.xlu0 %116
    %v118 = vsel %vm53, %v100, 0.0
    %119 = vadd.xlane.f32.xlu0 %v118
    %v120 = vpop.xlane.xlu0 %119
    %v121 = vsel %vm53, %v101, 0.0
    %122 = vadd.xlane.f32.xlu0 %v121
    %v123 = vpop.xlane.xlu0 %122
    %v124 = vsel %vm53, %v102, 0.0
    %125 = vadd.xlane.f32.xlu0 %v124
    %v126 = vpop.xlane.xlu0 %125
    %v127 = vmul.f32 %v105, %v78
    %v128 = vmul.f32 %v108, %v78
    %v129 = vmul.f32 %v111, %v78
    %v130 = vmul.f32 %v114, %v78
    %v131 = vmul.f32 %v117, %v78
    %v132 = vmul.f32 %v120, %v78
    %v133 = vmul.f32 %v123, %v78
    %v134 = vmul.f32 %v126, %v78
    %v135 = vadd.f32 %v127, 1e-05
    %v136 = vadd.f32 %v128, 1e-05
    %v137 = vadd.f32 %v129, 1e-05
    %v138 = vadd.f32 %v130, 1e-05
    %v139 = vadd.f32 %v131, 1e-05
    %v140 = vadd.f32 %v132, 1e-05
    %v141 = vadd.f32 %v133, 1e-05
    %v142 = vadd.f32 %v134, 1e-05
    %v143 = vrsqrt.pop %v135
    %v144 = vrsqrt.pop %v136
    %v145 = vrsqrt.pop %v137
    %v146 = vrsqrt.pop %v138
    %v147 = vrsqrt.pop %v139
    %v148 = vrsqrt.pop %v140
    %v149 = vrsqrt.pop %v141
    %v150 = vrsqrt.pop %v142
    %v151 = vmul.f32 %v87, %v143
    %v152 = vmul.f32 %v88, %v144
    %v153 = vmul.f32 %v89, %v145
    %v154 = vmul.f32 %v90, %v146
    %v155 = vmul.f32 %v91, %v147
    %v156 = vmul.f32 %v92, %v148
    %v157 = vmul.f32 %v93, %v149
    %v158 = vmul.f32 %v94, %v150
    %v159 = vld [vmem:[%s2] sm:$0xff]
    %161 = vset.pattern.permute.xlu0 0
    %162 = vperm.xlu0 %161, %v159
    %v163 = vpop.permute.xlu0 %162
    %v165 = vmul.f32 %v151, %v163
    %v166 = vmul.f32 %v152, %v163
    %v167 = vmul.f32 %v153, %v163
    %v168 = vmul.f32 %v154, %v163
    %v169 = vmul.f32 %v155, %v163
    %v170 = vmul.f32 %v156, %v163
    %v171 = vmul.f32 %v157, %v163
    %v172 = vmul.f32 %v158, %v163
    %v173 = vld [vmem:[%s3] sm:$0xff]
    %175 = vset.pattern.permute.xlu0 0
    %176 = vperm.xlu0 %175, %v173
    %v177 = vpop.permute.xlu0 %176
    %v179 = vadd.f32 %v165, %v177
    %v180 = vadd.f32 %v166, %v177
    %v181 = vadd.f32 %v167, %v177
    %v182 = vadd.f32 %v168, %v177
    %v183 = vadd.f32 %v169, %v177
    %v184 = vadd.f32 %v170, %v177
    %v185 = vadd.f32 %v171, %v177
    %v186 = vadd.f32 %v172, %v177
    %v187 = vsel %vm53, %v179, -inf
    %188 = vmax.xlane.f32.xlu0 %v187
    %v189 = vpop.xlane.xlu0 %188
    %v190 = vsel %vm53, %v180, -inf
    %191 = vmax.xlane.f32.xlu0 %v190
    %v192 = vpop.xlane.xlu0 %191
    %v193 = vsel %vm53, %v181, -inf
    %194 = vmax.xlane.f32.xlu0 %v193
    %v195 = vpop.xlane.xlu0 %194
    %v196 = vsel %vm53, %v182, -inf
    %197 = vmax.xlane.f32.xlu0 %v196
    %v198 = vpop.xlane.xlu0 %197
    %v199 = vsel %vm53, %v183, -inf
    %200 = vmax.xlane.f32.xlu0 %v199
    %v201 = vpop.xlane.xlu0 %200
    %v202 = vsel %vm53, %v184, -inf
    %203 = vmax.xlane.f32.xlu0 %v202
    %v204 = vpop.xlane.xlu0 %203
    %v205 = vsel %vm53, %v185, -inf
    %206 = vmax.xlane.f32.xlu0 %v205
    %v207 = vpop.xlane.xlu0 %206
    %v208 = vsel %vm53, %v186, -inf
    %209 = vmax.xlane.f32.xlu0 %v208
    %v210 = vpop.xlane.xlu0 %209
    %v211 = vmax.f32 %v189, 0.0
    %v212 = vmax.f32 %v192, 0.0
    %v213 = vmax.f32 %v195, 0.0
    %v214 = vmax.f32 %v198, 0.0
    %v215 = vmax.f32 %v201, 0.0
    %v216 = vmax.f32 %v204, 0.0
    %v217 = vmax.f32 %v207, 0.0
    %v218 = vmax.f32 %v210, 0.0
    %v219 = vld [vmem:[%s1] sm:$0xff]
    %v220 = vld [vmem:[%s1 + $0x8] sm:$0xff]
    %v221 = vld [vmem:[%s1 + $0x10] sm:$0xff]
    %v222 = vld [vmem:[%s1 + $0x18] sm:$0xff]
    %v223 = vpack.c.bf16 %v219, %v219
    %v224 = vpack.c.bf16 %v220, %v220
    %v225 = vpack.c.bf16 %v221, %v221
    %v226 = vpack.c.bf16 %v222, %v222
    %v227 = vld [vmem:[%s4] sm:$0xf]
    %v228 = vld [vmem:[%s4 + $0x4] sm:$0xf]
    %v229 = vld [vmem:[%s4 + $0x8] sm:$0xf]
    %v230 = vld [vmem:[%s4 + $0xc] sm:$0xf]
    %v231 = vld [vmem:[%s4 + $0x10] sm:$0xf]
    %v232 = vld [vmem:[%s4 + $0x14] sm:$0xf]
    %v233 = vld [vmem:[%s4 + $0x18] sm:$0xf]
    %v234 = vld [vmem:[%s4 + $0x1c] sm:$0xf]
    %v235 = vld [vmem:[%s4 + $0x20] sm:$0xf]
    %v236 = vld [vmem:[%s4 + $0x24] sm:$0xf]
    %v237 = vld [vmem:[%s4 + $0x28] sm:$0xf]
    %v238 = vld [vmem:[%s4 + $0x2c] sm:$0xf]
    %v239 = vld [vmem:[%s4 + $0x30] sm:$0xf]
    %v240 = vld [vmem:[%s4 + $0x34] sm:$0xf]
    %v241 = vld [vmem:[%s4 + $0x38] sm:$0xf]
    %v242 = vld [vmem:[%s4 + $0x3c] sm:$0xf]
    %v243 = vld [vmem:[%s4 + $0x40] sm:$0xf]
    %v244 = vld [vmem:[%s4 + $0x44] sm:$0xf]
    %v245 = vld [vmem:[%s4 + $0x48] sm:$0xf]
    %v246 = vld [vmem:[%s4 + $0x4c] sm:$0xf]
    %v247 = vld [vmem:[%s4 + $0x50] sm:$0xf]
    %v248 = vld [vmem:[%s4 + $0x54] sm:$0xf]
    %v249 = vld [vmem:[%s4 + $0x58] sm:$0xf]
    %v250 = vld [vmem:[%s4 + $0x5c] sm:$0xf]
    %v251 = vld [vmem:[%s4 + $0x60] sm:$0xf]
    %v252 = vld [vmem:[%s4 + $0x64] sm:$0xf]
    %v253 = vld [vmem:[%s4 + $0x68] sm:$0xf]
    %v254 = vld [vmem:[%s4 + $0x6c] sm:$0xf]
    %v255 = vld [vmem:[%s4 + $0x70] sm:$0xf]
    %v256 = vld [vmem:[%s4 + $0x74] sm:$0xf]
    %v257 = vld [vmem:[%s4 + $0x78] sm:$0xf]
    %v258 = vld [vmem:[%s4 + $0x7c] sm:$0xf]
    %v259 = vld [vmem:[%s4 + $0x80] sm:$0xf]
    %v260 = vld [vmem:[%s4 + $0x84] sm:$0xf]
    %v261 = vld [vmem:[%s4 + $0x88] sm:$0xf]
    %v262 = vld [vmem:[%s4 + $0x8c] sm:$0xf]
    %v263 = vld [vmem:[%s4 + $0x90] sm:$0xf]
    %v264 = vld [vmem:[%s4 + $0x94] sm:$0xf]
    %v265 = vld [vmem:[%s4 + $0x98] sm:$0xf]
    %v266 = vld [vmem:[%s4 + $0x9c] sm:$0xf]
    %v267 = vld [vmem:[%s4 + $0xa0] sm:$0xf]
    %v268 = vld [vmem:[%s4 + $0xa4] sm:$0xf]
    %v269 = vld [vmem:[%s4 + $0xa8] sm:$0xf]
    %v270 = vld [vmem:[%s4 + $0xac] sm:$0xf]
    %v271 = vld [vmem:[%s4 + $0xb0] sm:$0xf]
    %v272 = vld [vmem:[%s4 + $0xb4] sm:$0xf]
    %v273 = vld [vmem:[%s4 + $0xb8] sm:$0xf]
    %v274 = vld [vmem:[%s4 + $0xbc] sm:$0xf]
    %v275 = vld [vmem:[%s4 + $0xc0] sm:$0xf]
    %v276 = vld [vmem:[%s4 + $0xc4] sm:$0xf]
    %v277 = vld [vmem:[%s4 + $0xc8] sm:$0xf]
    %v278 = vld [vmem:[%s4 + $0xcc] sm:$0xf]
    %v279 = vld [vmem:[%s4 + $0xd0] sm:$0xf]
    %v280 = vld [vmem:[%s4 + $0xd4] sm:$0xf]
    %v281 = vld [vmem:[%s4 + $0xd8] sm:$0xf]
    %v282 = vld [vmem:[%s4 + $0xdc] sm:$0xf]
    %v283 = vld [vmem:[%s4 + $0xe0] sm:$0xf]
    %v284 = vld [vmem:[%s4 + $0xe4] sm:$0xf]
    %v285 = vld [vmem:[%s4 + $0xe8] sm:$0xf]
    %v286 = vld [vmem:[%s4 + $0xec] sm:$0xf]
    %v287 = vld [vmem:[%s4 + $0xf0] sm:$0xf]
    %v288 = vld [vmem:[%s4 + $0xf4] sm:$0xf]
    %v289 = vld [vmem:[%s4 + $0xf8] sm:$0xf]
    %v290 = vld [vmem:[%s4 + $0xfc] sm:$0xf]
    %v291 = vld [vmem:[#allocation2] sm:$0x1]
    %v293 = vlaneseq
    %v294 = vshrl.u32 %v293, 7
    %v295 = vsub.s32 0, %v294
    %v296 = vrot.slane %v291, %v295
    %v362 = vunpack.c.l.b16 %v227
    %v363 = vunpack.c.l.b16 %v228
    %v364 = vunpack.c.l.b16 %v229
    %v365 = vunpack.c.l.b16 %v230
    %v366 = vunpack.c.l.b16 %v231
    %v367 = vunpack.c.l.b16 %v232
    %v368 = vunpack.c.l.b16 %v233
    %v369 = vunpack.c.l.b16 %v234
    %v370 = vunpack.c.l.b16 %v235
    %v371 = vunpack.c.l.b16 %v236
    %v372 = vunpack.c.l.b16 %v237
    %v373 = vunpack.c.l.b16 %v238
    %v374 = vunpack.c.l.b16 %v239
    %v375 = vunpack.c.l.b16 %v240
    %v376 = vunpack.c.l.b16 %v241
    %v377 = vunpack.c.l.b16 %v242
    %v378 = vunpack.c.l.b16 %v243
    %v379 = vunpack.c.l.b16 %v244
    %v380 = vunpack.c.l.b16 %v245
    %v381 = vunpack.c.l.b16 %v246
    %v382 = vunpack.c.l.b16 %v247
    %v383 = vunpack.c.l.b16 %v248
    %v384 = vunpack.c.l.b16 %v249
    %v385 = vunpack.c.l.b16 %v250
    %v386 = vunpack.c.l.b16 %v251
    %v387 = vunpack.c.l.b16 %v252
    %v388 = vunpack.c.l.b16 %v253
    %v389 = vunpack.c.l.b16 %v254
    %v390 = vunpack.c.l.b16 %v255
    %v391 = vunpack.c.l.b16 %v256
    %v392 = vunpack.c.l.b16 %v257
    %v393 = vunpack.c.l.b16 %v258
    %v394 = vunpack.c.l.b16 %v259
    %v395 = vunpack.c.l.b16 %v260
    %v396 = vunpack.c.l.b16 %v261
    %v397 = vunpack.c.l.b16 %v262
    %v398 = vunpack.c.l.b16 %v263
    %v399 = vunpack.c.l.b16 %v264
    %v400 = vunpack.c.l.b16 %v265
    %v401 = vunpack.c.l.b16 %v266
    %v402 = vunpack.c.l.b16 %v267
    %v403 = vunpack.c.l.b16 %v268
    %v404 = vunpack.c.l.b16 %v269
    %v405 = vunpack.c.l.b16 %v270
    %v406 = vunpack.c.l.b16 %v271
    %v407 = vunpack.c.l.b16 %v272
    %v408 = vunpack.c.l.b16 %v273
    %v409 = vunpack.c.l.b16 %v274
    %v410 = vunpack.c.l.b16 %v275
    %v411 = vunpack.c.l.b16 %v276
    %v412 = vunpack.c.l.b16 %v277
    %v413 = vunpack.c.l.b16 %v278
    %v414 = vunpack.c.l.b16 %v279
    %v415 = vunpack.c.l.b16 %v280
    %v416 = vunpack.c.l.b16 %v281
    %v417 = vunpack.c.l.b16 %v282
    %v418 = vunpack.c.l.b16 %v283
    %v419 = vunpack.c.l.b16 %v284
    %v420 = vunpack.c.l.b16 %v285
    %v421 = vunpack.c.l.b16 %v286
    %v422 = vunpack.c.l.b16 %v287
    %v423 = vunpack.c.l.b16 %v288
    %v424 = vunpack.c.l.b16 %v289
    %v425 = vunpack.c.l.b16 %v290
    %v426 = vpack.c.b16 %v363, %v362
    %v427 = vpack.c.b16 %v365, %v364
    %v428 = vpack.c.b16 %v367, %v366
    %v429 = vpack.c.b16 %v369, %v368
    %v430 = vpack.c.b16 %v371, %v370
    %v431 = vpack.c.b16 %v373, %v372
    %v432 = vpack.c.b16 %v375, %v374
    %v433 = vpack.c.b16 %v377, %v376
    %v434 = vpack.c.b16 %v379, %v378
    %v435 = vpack.c.b16 %v381, %v380
    %v436 = vpack.c.b16 %v383, %v382
    %v437 = vpack.c.b16 %v385, %v384
    %v438 = vpack.c.b16 %v387, %v386
    %v439 = vpack.c.b16 %v389, %v388
    %v440 = vpack.c.b16 %v391, %v390
    %v441 = vpack.c.b16 %v393, %v392
    %v442 = vpack.c.b16 %v395, %v394
    %v443 = vpack.c.b16 %v397, %v396
    %v444 = vpack.c.b16 %v399, %v398
    %v445 = vpack.c.b16 %v401, %v400
    %v446 = vpack.c.b16 %v403, %v402
    %v447 = vpack.c.b16 %v405, %v404
    %v448 = vpack.c.b16 %v407, %v406
    %v449 = vpack.c.b16 %v409, %v408
    %v450 = vpack.c.b16 %v411, %v410
    %v451 = vpack.c.b16 %v413, %v412
    %v452 = vpack.c.b16 %v415, %v414
    %v453 = vpack.c.b16 %v417, %v416
    %v454 = vpack.c.b16 %v419, %v418
    %v455 = vpack.c.b16 %v421, %v420
    %v456 = vpack.c.b16 %v423, %v422
    %v457 = vpack.c.b16 %v425, %v424
    %490 = vmatprep.subr.bf16.mxu0 0
    %491 = vmatpush1.bf16.msra.mxu0 %v426
    %492 = vmatprep.subr.bf16.mxu0 0
    %493 = vmatpush1.bf16.msra.mxu0 %v427
    %494 = vmatprep.subr.bf16.mxu0 0
    %495 = vmatpush1.bf16.msra.mxu0 %v428
    %496 = vmatprep.subr.bf16.mxu0 0
    %497 = vmatpush1.bf16.msra.mxu0 %v429
    %498 = vmatprep.subr.bf16.mxu0 0
    %499 = vmatpush1.bf16.msra.mxu0 %v430
    %500 = vmatprep.subr.bf16.mxu0 0
    %501 = vmatpush1.bf16.msra.mxu0 %v431
    %502 = vmatprep.subr.bf16.mxu0 0
    %503 = vmatpush1.bf16.msra.mxu0 %v432
    %504 = vmatprep.subr.bf16.mxu0 0
    %505 = vmatpush1.bf16.msra.mxu0 %v433
    %506 = vmatprep.subr.bf16.mxu0 0
    %507 = vmatpush1.bf16.msra.mxu0 %v434
    %508 = vmatprep.subr.bf16.mxu0 0
    %509 = vmatpush1.bf16.msra.mxu0 %v435
    %510 = vmatprep.subr.bf16.mxu0 0
    %511 = vmatpush1.bf16.msra.mxu0 %v436
    %512 = vmatprep.subr.bf16.mxu0 0
    %513 = vmatpush1.bf16.msra.mxu0 %v437
    %514 = vmatprep.subr.bf16.mxu0 0
    %515 = vmatpush1.bf16.msra.mxu0 %v438
    %516 = vmatprep.subr.bf16.mxu0 0
    %517 = vmatpush1.bf16.msra.mxu0 %v439
    %518 = vmatprep.subr.bf16.mxu0 0
    %519 = vmatpush1.bf16.msra.mxu0 %v440
    %520 = vmatprep.subr.bf16.mxu0 0
    %521 = vmatpush1.bf16.msra.mxu0 %v441
    %522 = vmatprep.mubr.bf16.mxu0 %v224
    %523 = vmatmul.mubr.bf16.gmra.mrb[0].mxu0 %v223
    %v524 = vpop.f32.mrb[0].mxu0
    %v525 = vadd.f32 %v296, %v524
    %v526 = vpop.f32.mrb[0].mxu0
    %v527 = vpop.f32.mrb[0].mxu0
    %v528 = vpop.f32.mrb[0].mxu0
    %529 = vdwg.mxu0
    %530 = vmatprep.subr.bf16.mxu0 0
    %531 = vmatpush1.bf16.msra.mxu0 %v442
    %532 = vmatprep.subr.bf16.mxu0 0
    %533 = vmatpush1.bf16.msra.mxu0 %v443
    %534 = vmatprep.subr.bf16.mxu0 0
    %535 = vmatpush1.bf16.msra.mxu0 %v444
    %536 = vmatprep.subr.bf16.mxu0 0
    %537 = vmatpush1.bf16.msra.mxu0 %v445
    %538 = vmatprep.subr.bf16.mxu0 0
    %539 = vmatpush1.bf16.msra.mxu0 %v446
    %540 = vmatprep.subr.bf16.mxu0 0
    %541 = vmatpush1.bf16.msra.mxu0 %v447
    %542 = vmatprep.subr.bf16.mxu0 0
    %543 = vmatpush1.bf16.msra.mxu0 %v448
    %544 = vmatprep.subr.bf16.mxu0 0
    %545 = vmatpush1.bf16.msra.mxu0 %v449
    %546 = vmatprep.subr.bf16.mxu0 0
    %547 = vmatpush1.bf16.msra.mxu0 %v450
    %548 = vmatprep.subr.bf16.mxu0 0
    %549 = vmatpush1.bf16.msra.mxu0 %v451
    %550 = vmatprep.subr.bf16.mxu0 0
    %551 = vmatpush1.bf16.msra.mxu0 %v452
    %552 = vmatprep.subr.bf16.mxu0 0
    %553 = vmatpush1.bf16.msra.mxu0 %v453
    %554 = vmatprep.subr.bf16.mxu0 0
    %555 = vmatpush1.bf16.msra.mxu0 %v454
    %556 = vmatprep.subr.bf16.mxu0 0
    %557 = vmatpush1.bf16.msra.mxu0 %v455
    %558 = vmatprep.subr.bf16.mxu0 0
    %559 = vmatpush1.bf16.msra.mxu0 %v456
    %560 = vmatprep.subr.bf16.mxu0 0
    %561 = vmatpush1.bf16.msra.mxu0 %v457
    %562 = vmatprep.mubr.bf16.mxu0 %v226
    %563 = vmatmul.mubr.bf16.gmra.mrb[0].mxu0 %v225
    %v564 = vpop.f32.mrb[0].mxu0
    %v565 = vadd.f32 %v525, %v564
    %v566 = vpop.f32.mrb[0].mxu0
    %v567 = vpop.f32.mrb[0].mxu0
    %v568 = vpop.f32.mrb[0].mxu0
    %569 = vdwg.mxu0
    %570 = vst [vmem:[#allocation5] sm:$0xff] %v565
    %v571 = vpack.c.bf16 %v211, %v211
    %v572 = vpack.c.bf16 %v212, %v212
    %v573 = vpack.c.bf16 %v213, %v213
    %v574 = vpack.c.bf16 %v214, %v214
    %v575 = vpack.c.bf16 %v215, %v215
    %v576 = vpack.c.bf16 %v216, %v216
    %v577 = vpack.c.bf16 %v217, %v217
    %v578 = vpack.c.bf16 %v218, %v218
    %v579 = vld [vmem:[%s6] sm:$0xff]
    %v580 = vld [vmem:[%s6 + $0x8] sm:$0xff]
    %v581 = vld [vmem:[%s6 + $0x10] sm:$0xff]
    %v582 = vld [vmem:[%s6 + $0x18] sm:$0xff]
    %v583 = vld [vmem:[%s6 + $0x20] sm:$0xff]
    %v584 = vld [vmem:[%s6 + $0x28] sm:$0xff]
    %v585 = vld [vmem:[%s7] sm:$0xff]
    %v586 = vld [vmem:[%s7 + $0x8] sm:$0xf]
    %v589 = vlaneseq
    %v590 = vshrl.u32 %v589, 7
    %v591 = vsub.s32 0, %v590
    %v592 = vrot.slane %v585, %v591
    %v593 = vlaneseq
    %v594 = vshrl.u32 %v593, 7
    %v595 = vsub.s32 1, %v594
    %v596 = vrot.slane %v585, %v595
    %v597 = vlaneseq
    %v598 = vshrl.u32 %v597, 7
    %v599 = vsub.s32 2, %v598
    %v600 = vrot.slane %v585, %v599
    %v601 = vlaneseq
    %v602 = vshrl.u32 %v601, 7
    %v603 = vsub.s32 3, %v602
    %v604 = vrot.slane %v585, %v603
    %v605 = vlaneseq
    %v606 = vshrl.u32 %v605, 7
    %v607 = vsub.s32 4, %v606
    %v608 = vrot.slane %v585, %v607
    %v609 = vlaneseq
    %v610 = vshrl.u32 %v609, 7
    %v611 = vsub.s32 5, %v610
    %v612 = vrot.slane %v585, %v611
    %v613 = vlaneseq
    %v614 = vshrl.u32 %v613, 7
    %v615 = vsub.s32 6, %v614
    %v616 = vrot.slane %v585, %v615
    %v617 = vlaneseq
    %v618 = vshrl.u32 %v617, 7
    %v619 = vsub.s32 7, %v618
    %v620 = vrot.slane %v585, %v619
    %v621 = vlaneseq
    %v622 = vshrl.u32 %v621, 7
    %v623 = vsub.s32 0, %v622
    %v624 = vrot.slane %v586, %v623
    %v625 = vlaneseq
    %v626 = vshrl.u32 %v625, 7
    %v627 = vsub.s32 1, %v626
    %v628 = vrot.slane %v586, %v627
    %v629 = vlaneseq
    %v630 = vshrl.u32 %v629, 7
    %v631 = vsub.s32 2, %v630
    %v632 = vrot.slane %v586, %v631
    %v633 = vlaneseq
    %v634 = vshrl.u32 %v633, 7
    %v635 = vsub.s32 3, %v634
    %v636 = vrot.slane %v586, %v635
    %v657 = vunpack.c.l.b16 %v571
    %v658 = vunpack.c.l.b16 %v572
    %v659 = vunpack.c.l.b16 %v573
    %v660 = vunpack.c.l.b16 %v574
    %v661 = vunpack.c.l.b16 %v575
    %v662 = vunpack.c.l.b16 %v576
    %v663 = vunpack.c.l.b16 %v577
    %v664 = vunpack.c.l.b16 %v578
    %v665 = vlaneseq
    %v666 = vand.u32 %v665, 127
    %v667 = vlaneseq
    %v668 = vshrl.u32 %v667, 7
    %v669 = vsub.s32 %v666, %v668
    %v670 = vrot.slane %v657, %v669
    %v671 = vlaneseq
    %v672 = vshrl.u32 %v671, 7
    %v673 = vsub.s32 %v666, %v672
    %v674 = vrot.slane %v658, %v673
    %v675 = vlaneseq
    %v676 = vshrl.u32 %v675, 7
    %v677 = vsub.s32 %v666, %v676
    %v678 = vrot.slane %v659, %v677
    %v679 = vlaneseq
    %v680 = vshrl.u32 %v679, 7
    %v681 = vsub.s32 %v666, %v680
    %v682 = vrot.slane %v660, %v681
    %v683 = vlaneseq
    %v684 = vshrl.u32 %v683, 7
    %v685 = vsub.s32 %v666, %v684
    %v686 = vrot.slane %v661, %v685
    %v687 = vlaneseq
    %v688 = vshrl.u32 %v687, 7
    %v689 = vsub.s32 %v666, %v688
    %v690 = vrot.slane %v662, %v689
    %v691 = vlaneseq
    %v692 = vshrl.u32 %v691, 7
    %v693 = vsub.s32 %v666, %v692
    %v694 = vrot.slane %v663, %v693
    %v695 = vlaneseq
    %v696 = vshrl.u32 %v695, 7
    %v697 = vsub.s32 %v666, %v696
    %v698 = vrot.slane %v664, %v697
    %vm699 = vcmask 1041409
    %v700 = vsel %vm699, %v674, %v670
    %vm701 = vcmask 1042434
    %v702 = vsel %vm701, %v678, %v700
    %vm703 = vcmask 1043459
    %v704 = vsel %vm703, %v682, %v702
    %vm705 = vcmask 1044484
    %v706 = vsel %vm705, %v686, %v704
    %vm707 = vcmask 1045509
    %v708 = vsel %vm707, %v690, %v706
    %vm709 = vcmask 1046534
    %v710 = vsel %vm709, %v694, %v708
    %vm711 = vcmask 1047559
    %v712 = vsel %vm711, %v698, %v710
    %v713 = vpack.c.b16 %v712, %v712
    %v720 = vunpack.c.l.b16 %v579
    %v721 = vunpack.c.h.b16 %v579
    %v722 = vunpack.c.l.b16 %v580
    %v723 = vunpack.c.h.b16 %v580
    %v724 = vunpack.c.l.b16 %v581
    %v725 = vunpack.c.h.b16 %v581
    %v726 = vunpack.c.l.b16 %v582
    %v727 = vunpack.c.h.b16 %v582
    %v728 = vunpack.c.l.b16 %v583
    %v729 = vunpack.c.h.b16 %v583
    %v730 = vunpack.c.l.b16 %v584
    %v731 = vunpack.c.h.b16 %v584
    %v732 = vpack.c.b16 %v720, %v720
    %v733 = vpack.c.b16 %v721, %v721
    %v734 = vpack.c.b16 %v722, %v722
    %v735 = vpack.c.b16 %v723, %v723
    %v736 = vpack.c.b16 %v724, %v724
    %v737 = vpack.c.b16 %v725, %v725
    %v738 = vpack.c.b16 %v726, %v726
    %v739 = vpack.c.b16 %v727, %v727
    %v740 = vpack.c.b16 %v728, %v728
    %v741 = vpack.c.b16 %v729, %v729
    %v742 = vpack.c.b16 %v730, %v730
    %v743 = vpack.c.b16 %v731, %v731
    %vm744 = vcmask 64512
    %v746 = vsel %vm744, %v713, 0
    %vm748 = vcmask 1043456
    %v750 = vsel %vm748, %v732, 0
    %v753 = vsel %vm748, %v733, 0
    %v756 = vsel %vm748, %v734, 0
    %v759 = vsel %vm748, %v735, 0
    %v762 = vsel %vm748, %v736, 0
    %v765 = vsel %vm748, %v737, 0
    %v768 = vsel %vm748, %v738, 0
    %v771 = vsel %vm748, %v739, 0
    %v774 = vsel %vm748, %v740, 0
    %v777 = vsel %vm748, %v741, 0
    %v780 = vsel %vm748, %v742, 0
    %v783 = vsel %vm748, %v743, 0
    %785 = vmatprep.subr.bf16.mxu0 %v753
    %786 = vmatpush1.bf16.msra.mxu0 %v750
    %787 = vmatprep.subr.bf16.mxu0 0
    %788 = vmatpush1.bf16.msra.mxu0 0
    %789 = vmatprep.subr.bf16.mxu0 0
    %790 = vmatpush1.bf16.msra.mxu0 0
    %791 = vmatprep.subr.bf16.mxu0 0
    %792 = vmatpush1.bf16.msra.mxu0 0
    %793 = vmatprep.subr.bf16.mxu0 0
    %794 = vmatpush1.bf16.msra.mxu0 0
    %795 = vmatprep.subr.bf16.mxu0 0
    %796 = vmatpush1.bf16.msra.mxu0 0
    %797 = vmatprep.subr.bf16.mxu0 0
    %798 = vmatpush1.bf16.msra.mxu0 0
    %799 = vmatprep.subr.bf16.mxu0 0
    %800 = vmatpush1.bf16.msra.mxu0 0
    %801 = vmatprep.subr.bf16.mxu0 0
    %802 = vmatpush1.bf16.msra.mxu0 0
    %803 = vmatprep.subr.bf16.mxu0 0
    %804 = vmatpush1.bf16.msra.mxu0 0
    %805 = vmatprep.subr.bf16.mxu0 0
    %806 = vmatpush1.bf16.msra.mxu0 0
    %807 = vmatprep.subr.bf16.mxu0 0
    %808 = vmatpush1.bf16.msra.mxu0 0
    %809 = vmatprep.subr.bf16.mxu0 0
    %810 = vmatpush1.bf16.msra.mxu0 0
    %811 = vmatprep.subr.bf16.mxu0 0
    %812 = vmatpush1.bf16.msra.mxu0 0
    %813 = vmatprep.subr.bf16.mxu0 0
    %814 = vmatpush1.bf16.msra.mxu0 0
    %815 = vmatprep.subr.bf16.mxu0 0
    %816 = vmatpush1.bf16.msra.mxu0 0
    %817 = vmatprep.mubr.bf16.mxu0 0
    %818 = vmatmul.mubr.bf16.gmra.mrb[0].mxu0 %v746
    %v819 = vpop.f32.mrb[0].mxu0
    %v820 = vadd.f32 %v592, %v819
    %v821 = vpop.f32.mrb[0].mxu0
    %v822 = vadd.f32 %v596, %v821
    %v823 = vpop.f32.mrb[0].mxu0
    %v824 = vpop.f32.mrb[0].mxu0
    %825 = vdwg.mxu0
    %826 = vmatprep.subr.bf16.mxu0 %v759
    %827 = vmatpush1.bf16.msra.mxu0 %v756
    %828 = vmatprep.subr.bf16.mxu0 0
    %829 = vmatpush1.bf16.msra.mxu0 0
    %830 = vmatprep.subr.bf16.mxu0 0
    %831 = vmatpush1.bf16.msra.mxu0 0
    %832 = vmatprep.subr.bf16.mxu0 0
    %833 = vmatpush1.bf16.msra.mxu0 0
    %834 = vmatprep.subr.bf16.mxu0 0
    %835 = vmatpush1.bf16.msra.mxu0 0
    %836 = vmatprep.subr.bf16.mxu0 0
    %837 = vmatpush1.bf16.msra.mxu0 0
    %838 = vmatprep.subr.bf16.mxu0 0
    %839 = vmatpush1.bf16.msra.mxu0 0
    %840 = vmatprep.subr.bf16.mxu0 0
    %841 = vmatpush1.bf16.msra.mxu0 0
    %842 = vmatprep.subr.bf16.mxu0 0
    %843 = vmatpush1.bf16.msra.mxu0 0
    %844 = vmatprep.subr.bf16.mxu0 0
    %845 = vmatpush1.bf16.msra.mxu0 0
    %846 = vmatprep.subr.bf16.mxu0 0
    %847 = vmatpush1.bf16.msra.mxu0 0
    %848 = vmatprep.subr.bf16.mxu0 0
    %849 = vmatpush1.bf16.msra.mxu0 0
    %850 = vmatprep.subr.bf16.mxu0 0
    %851 = vmatpush1.bf16.msra.mxu0 0
    %852 = vmatprep.subr.bf16.mxu0 0
    %853 = vmatpush1.bf16.msra.mxu0 0
    %854 = vmatprep.subr.bf16.mxu0 0
    %855 = vmatpush1.bf16.msra.mxu0 0
    %856 = vmatprep.subr.bf16.mxu0 0
    %857 = vmatpush1.bf16.msra.mxu0 0
    %858 = vmatprep.mubr.bf16.mxu0 0
    %859 = vmatmul.mubr.bf16.gmra.mrb[0].mxu0 %v746
    %v860 = vpop.f32.mrb[0].mxu0
    %v861 = vadd.f32 %v600, %v860
    %v862 = vpop.f32.mrb[0].mxu0
    %v863 = vadd.f32 %v604, %v862
    %v864 = vpop.f32.mrb[0].mxu0
    %v865 = vpop.f32.mrb[0].mxu0
    %866 = vdwg.mxu0
    %867 = vmatprep.subr.bf16.mxu0 %v765
    %868 = vmatpush1.bf16.msra.mxu0 %v762
    %869 = vmatprep.subr.bf16.mxu0 0
    %870 = vmatpush1.bf16.msra.mxu0 0
    %871 = vmatprep.subr.bf16.mxu0 0
    %872 = vmatpush1.bf16.msra.mxu0 0
    %873 = vmatprep.subr.bf16.mxu0 0
    %874 = vmatpush1.bf16.msra.mxu0 0
    %875 = vmatprep.subr.bf16.mxu0 0
    %876 = vmatpush1.bf16.msra.mxu0 0
    %877 = vmatprep.subr.bf16.mxu0 0
    %878 = vmatpush1.bf16.msra.mxu0 0
    %879 = vmatprep.subr.bf16.mxu0 0
    %880 = vmatpush1.bf16.msra.mxu0 0
    %881 = vmatprep.subr.bf16.mxu0 0
    %882 = vmatpush1.bf16.msra.mxu0 0
    %883 = vmatprep.subr.bf16.mxu0 0
    %884 = vmatpush1.bf16.msra.mxu0 0
    %885 = vmatprep.subr.bf16.mxu0 0
    %886 = vmatpush1.bf16.msra.mxu0 0
    %887 = vmatprep.subr.bf16.mxu0 0
    %888 = vmatpush1.bf16.msra.mxu0 0
    %889 = vmatprep.subr.bf16.mxu0 0
    %890 = vmatpush1.bf16.msra.mxu0 0
    %891 = vmatprep.subr.bf16.mxu0 0
    %892 = vmatpush1.bf16.msra.mxu0 0
    %893 = vmatprep.subr.bf16.mxu0 0
    %894 = vmatpush1.bf16.msra.mxu0 0
    %895 = vmatprep.subr.bf16.mxu0 0
    %896 = vmatpush1.bf16.msra.mxu0 0
    %897 = vmatprep.subr.bf16.mxu0 0
    %898 = vmatpush1.bf16.msra.mxu0 0
    %899 = vmatprep.mubr.bf16.mxu0 0
    %900 = vmatmul.mubr.bf16.gmra.mrb[0].mxu0 %v746
    %v901 = vpop.f32.mrb[0].mxu0
    %v902 = vadd.f32 %v608, %v901
    %v903 = vpop.f32.mrb[0].mxu0
    %v904 = vadd.f32 %v612, %v903
    %v905 = vpop.f32.mrb[0].mxu0
    %v906 = vpop.f32.mrb[0].mxu0
    %907 = vdwg.mxu0
    %908 = vmatprep.subr.bf16.mxu0 %v771
    %909 = vmatpush1.bf16.msra.mxu0 %v768
    %910 = vmatprep.subr.bf16.mxu0 0
    %911 = vmatpush1.bf16.msra.mxu0 0
    %912 = vmatprep.subr.bf16.mxu0 0
    %913 = vmatpush1.bf16.msra.mxu0 0
    %914 = vmatprep.subr.bf16.mxu0 0
    %915 = vmatpush1.bf16.msra.mxu0 0
    %916 = vmatprep.subr.bf16.mxu0 0
    %917 = vmatpush1.bf16.msra.mxu0 0
    %918 = vmatprep.subr.bf16.mxu0 0
    %919 = vmatpush1.bf16.msra.mxu0 0
    %920 = vmatprep.subr.bf16.mxu0 0
    %921 = vmatpush1.bf16.msra.mxu0 0
    %922 = vmatprep.subr.bf16.mxu0 0
    %923 = vmatpush1.bf16.msra.mxu0 0
    %924 = vmatprep.subr.bf16.mxu0 0
    %925 = vmatpush1.bf16.msra.mxu0 0
    %926 = vmatprep.subr.bf16.mxu0 0
    %927 = vmatpush1.bf16.msra.mxu0 0
    %928 = vmatprep.subr.bf16.mxu0 0
    %929 = vmatpush1.bf16.msra.mxu0 0
    %930 = vmatprep.subr.bf16.mxu0 0
    %931 = vmatpush1.bf16.msra.mxu0 0
    %932 = vmatprep.subr.bf16.mxu0 0
    %933 = vmatpush1.bf16.msra.mxu0 0
    %934 = vmatprep.subr.bf16.mxu0 0
    %935 = vmatpush1.bf16.msra.mxu0 0
    %936 = vmatprep.subr.bf16.mxu0 0
    %937 = vmatpush1.bf16.msra.mxu0 0
    %938 = vmatprep.subr.bf16.mxu0 0
    %939 = vmatpush1.bf16.msra.mxu0 0
    %940 = vmatprep.mubr.bf16.mxu0 0
    %941 = vmatmul.mubr.bf16.gmra.mrb[0].mxu0 %v746
    %v942 = vpop.f32.mrb[0].mxu0
    %v943 = vadd.f32 %v616, %v942
    %v944 = vpop.f32.mrb[0].mxu0
    %v945 = vadd.f32 %v620, %v944
    %v946 = vpop.f32.mrb[0].mxu0
    %v947 = vpop.f32.mrb[0].mxu0
    %948 = vdwg.mxu0
    %949 = vmatprep.subr.bf16.mxu0 %v777
    %950 = vmatpush1.bf16.msra.mxu0 %v774
    %951 = vmatprep.subr.bf16.mxu0 0
    %952 = vmatpush1.bf16.msra.mxu0 0
    %953 = vmatprep.subr.bf16.mxu0 0
    %954 = vmatpush1.bf16.msra.mxu0 0
    %955 = vmatprep.subr.bf16.mxu0 0
    %956 = vmatpush1.bf16.msra.mxu0 0
    %957 = vmatprep.subr.bf16.mxu0 0
    %958 = vmatpush1.bf16.msra.mxu0 0
    %959 = vmatprep.subr.bf16.mxu0 0
    %960 = vmatpush1.bf16.msra.mxu0 0
    %961 = vmatprep.subr.bf16.mxu0 0
    %962 = vmatpush1.bf16.msra.mxu0 0
    %963 = vmatprep.subr.bf16.mxu0 0
    %964 = vmatpush1.bf16.msra.mxu0 0
    %965 = vmatprep.subr.bf16.mxu0 0
    %966 = vmatpush1.bf16.msra.mxu0 0
    %967 = vmatprep.subr.bf16.mxu0 0
    %968 = vmatpush1.bf16.msra.mxu0 0
    %969 = vmatprep.subr.bf16.mxu0 0
    %970 = vmatpush1.bf16.msra.mxu0 0
    %971 = vmatprep.subr.bf16.mxu0 0
    %972 = vmatpush1.bf16.msra.mxu0 0
    %973 = vmatprep.subr.bf16.mxu0 0
    %974 = vmatpush1.bf16.msra.mxu0 0
    %975 = vmatprep.subr.bf16.mxu0 0
    %976 = vmatpush1.bf16.msra.mxu0 0
    %977 = vmatprep.subr.bf16.mxu0 0
    %978 = vmatpush1.bf16.msra.mxu0 0
    %979 = vmatprep.subr.bf16.mxu0 0
    %980 = vmatpush1.bf16.msra.mxu0 0
    %981 = vmatprep.mubr.bf16.mxu0 0
    %982 = vmatmul.mubr.bf16.gmra.mrb[0].mxu0 %v746
    %v983 = vpop.f32.mrb[0].mxu0
    %v984 = vadd.f32 %v624, %v983
    %v985 = vpop.f32.mrb[0].mxu0
    %v986 = vadd.f32 %v628, %v985
    %v987 = vpop.f32.mrb[0].mxu0
    %v988 = vpop.f32.mrb[0].mxu0
    %989 = vdwg.mxu0
    %990 = vmatprep.subr.bf16.mxu0 %v783
    %991 = vmatpush1.bf16.msra.mxu0 %v780
    %992 = vmatprep.subr.bf16.mxu0 0
    %993 = vmatpush1.bf16.msra.mxu0 0
    %994 = vmatprep.subr.bf16.mxu0 0
    %995 = vmatpush1.bf16.msra.mxu0 0
    %996 = vmatprep.subr.bf16.mxu0 0
    %997 = vmatpush1.bf16.msra.mxu0 0
    %998 = vmatprep.subr.bf16.mxu0 0
    %999 = vmatpush1.bf16.msra.mxu0 0
    %1000 = vmatprep.subr.bf16.mxu0 0
    %1001 = vmatpush1.bf16.msra.mxu0 0
    %1002 = vmatprep.subr.bf16.mxu0 0
    %1003 = vmatpush1.bf16.msra.mxu0 0
    %1004 = vmatprep.subr.bf16.mxu0 0
    %1005 = vmatpush1.bf16.msra.mxu0 0
    %1006 = vmatprep.subr.bf16.mxu0 0
    %1007 = vmatpush1.bf16.msra.mxu0 0
    %1008 = vmatprep.subr.bf16.mxu0 0
    %1009 = vmatpush1.bf16.msra.mxu0 0
    %1010 = vmatprep.subr.bf16.mxu0 0
    %1011 = vmatpush1.bf16.msra.mxu0 0
    %1012 = vmatprep.subr.bf16.mxu0 0
    %1013 = vmatpush1.bf16.msra.mxu0 0
    %1014 = vmatprep.subr.bf16.mxu0 0
    %1015 = vmatpush1.bf16.msra.mxu0 0
    %1016 = vmatprep.subr.bf16.mxu0 0
    %1017 = vmatpush1.bf16.msra.mxu0 0
    %1018 = vmatprep.subr.bf16.mxu0 0
    %1019 = vmatpush1.bf16.msra.mxu0 0
    %1020 = vmatprep.subr.bf16.mxu0 0
    %1021 = vmatpush1.bf16.msra.mxu0 0
    %1022 = vmatprep.mubr.bf16.mxu0 0
    %1023 = vmatmul.mubr.bf16.gmra.mrb[0].mxu0 %v746
    %v1024 = vpop.f32.mrb[0].mxu0
    %v1025 = vadd.f32 %v632, %v1024
    %v1026 = vpop.f32.mrb[0].mxu0
    %v1027 = vadd.f32 %v636, %v1026
    %v1028 = vpop.f32.mrb[0].mxu0
    %v1029 = vpop.f32.mrb[0].mxu0
    %1030 = vdwg.mxu0
    %1031 = vst [vmem:[%s9] sm:$0xff] %v820
    %1032 = vst [vmem:[%s9 + $0x8] sm:$0xff] %v822
    %1033 = vst [vmem:[%s9 + $0x10] sm:$0xff] %v861
    %1034 = vst [vmem:[%s9 + $0x18] sm:$0xff] %v863
    %1035 = vst [vmem:[%s9 + $0x20] sm:$0xff] %v902
    %1036 = vst [vmem:[%s9 + $0x28] sm:$0xff] %v904
    %1037 = vst [vmem:[%s9 + $0x30] sm:$0xff] %v943
    %1038 = vst [vmem:[%s9 + $0x38] sm:$0xff] %v945
    %1039 = vst [vmem:[%s9 + $0x40] sm:$0xff] %v984
    %1040 = vst [vmem:[%s9 + $0x48] sm:$0xff] %v986
    %1041 = vst [vmem:[%s9 + $0x50] sm:$0xff] %v1025
    %1042 = vst [vmem:[%s9 + $0x58] sm:$0xff] %v1027
    // Predicated region
    $region38: #{motion_encoder_forward.2} parent=1 // pred_check
      _
    $region39: #{motion_encoder_forward.2} parent=1 // pred_check_branch
      %1044 = sbr.rel (0) target = $region41
    $region40: #{motion_encoder_forward.2} parent=1 // pred_region
      %s1046 = ssub.s32 128, 128
      %1047 = vsyncadd [#allocation4], %s1046
      %s1049 = sshll.u32 [#allocation5], 4
      %s1050 = int_to_ptr.vmem [resolvable:$true] %s1049
      %1052 = dma.vmem_to_hbm [thread:$0]  %s1050, 128, %s8, [#allocation4]
    $region41: #{motion_encoder_forward.2} parent=1 // pred_fallthru
      _
    // Predicated region
    $region42: #{motion_encoder_forward.2} parent=1 // pred_check
      _
    $region43: #{motion_encoder_forward.2} parent=1 // pred_check_branch
      %1054 = sbr.rel (0) target = $region45
    $region44: #{motion_encoder_forward.2} parent=1 // pred_region
      _
    $region45: #{motion_encoder_forward.2} parent=1 // pred_fallthru
      _
    // Predicated region
    $region46: #{motion_encoder_forward.2} parent=1 // pred_check
      _
    $region47: #{motion_encoder_forward.2} parent=1 // pred_check_branch
      %1056 = sbr.rel (0) target = $region49
    $region48: #{motion_encoder_forward.2} parent=1 // pred_region
      %1057 = dma.done [#allocation4], 128
    $region49: #{motion_encoder_forward.2} parent=1 // pred_fallthru
      _
    // Predicated region
    $region50: #{motion_encoder_forward.2} parent=1 // pred_check
      _
    $region51: #{motion_encoder_forward.2} parent=1 // pred_check_branch
      %1059 = sbr.rel (0) target = $region53
    $region52: #{motion_encoder_forward.2} parent=1 // pred_region
      _
    $region53: #{motion_encoder_forward.2} parent=1 // pred_fallthru
      _
    %1060 = vsyncpa [#allocation3], 1
    %1061 = vsyncpa [#allocation4], 1

// kernel: motion_encoder_forward.3
$region0: #{motion_encoder_forward.3}
  #allocation0 [shape = 'u32[]', space=smem, size = 0x4, offset = 0x4, fixed_abs, tag = 'smem constant byte address 0x4 - core index']
  #allocation1 [shape = 'u32[144,128]{1,0:T(1,128)}', space=vmem, size = 0x12000, scoped, tag = 'internal scratch']
  #allocation2 [shape = 'f32[2,512]{1,0:T(2,128)}', space=vmem, size = 0x1000, scoped, tag = 'scratch operand']
  %s0 = inlined_call_operand.vmem [shape: f32[2,6144], index: 0, kind: input, shape index: {}]
  %s1 = inlined_call_operand.vmem [shape: bf16[512,1536], index: 1, kind: input, shape index: {}]
  %s2 = inlined_call_operand.vmem [shape: f32[1,1536], index: 2, kind: input, shape index: {}]
  %s3 = inlined_call_operand.vmem [shape: f32[2,2048], index: 3, kind: output, shape index: {}]
  %s4 = sld [smem:[#allocation0]]
  $region26: #{motion_encoder_forward.3} parent=0
    _
  %s6 = ssub.s32 1, %s4
  %s7 = scalar_select 0, %s6, %s4
  // Predicated region
  $region2: #{motion_encoder_forward.3} parent=0 // pred_check
    _
  $region3: #{motion_encoder_forward.3} parent=0 // pred_check_branch
    %9 = sbr.rel (0) target = $region5
  $region4: #{motion_encoder_forward.3} parent=0 // pred_region
    _
  $region5: #{motion_encoder_forward.3} parent=0 // pred_fallthru
    _
  // Predicated region
  $region6: #{motion_encoder_forward.3} parent=0 // pred_check
    _
  $region7: #{motion_encoder_forward.3} parent=0 // pred_check_branch
    %11 = sbr.rel (0) target = $region9
  $region8: #{motion_encoder_forward.3} parent=0 // pred_region
    _
  $region9: #{motion_encoder_forward.3} parent=0 // pred_fallthru
    _
  // Predicated region
  $region10: #{motion_encoder_forward.3} parent=0 // pred_check
    _
  $region11: #{motion_encoder_forward.3} parent=0 // pred_check_branch
    %13 = sbr.rel (0) target = $region13
  $region12: #{motion_encoder_forward.3} parent=0 // pred_region
    _
  $region13: #{motion_encoder_forward.3} parent=0 // pred_fallthru
    _
  %p14 = scmp.eq.s32.totalorder 0, 0
  // Predicated region
  $region14: #{motion_encoder_forward.3} parent=0 // pred_check
    %p15 = pneg %p14
  $region15: #{motion_encoder_forward.3} parent=0 // pred_check_branch
    %17 = sbr.rel (%p15) target = $region17
  $region16: #{motion_encoder_forward.3} parent=0 // pred_region
    %18 = vst [vmem:[#allocation2] sm:$0xff] 0.0
  $region17: #{motion_encoder_forward.3} parent=0 // pred_fallthru
    _
  %v19 = vld [vmem:[%s2] sm:$0xff]
  %v20 = vld [vmem:[%s2 + $0x8] sm:$0xf]
  %v21 = vld [vmem:[#allocation2] sm:$0xff]
  %v22 = vld [vmem:[%s0] sm:$0xff]
  %v23 = vld [vmem:[%s0 + $0x8] sm:$0xff]
  %v24 = vld [vmem:[%s0 + $0x10] sm:$0xff]
  %v26 = vcombine.high %v21, %v21
  %v28 = vunpack.c.l.s4 1983009808
  %v29 = vunpack.c.0.s8 %v28
  %v30 = vlaneseq
  %v31 = vshrl.u32 %v30, 7
  %v32 = vsub.s32 %v29, %v31
  %v33 = vrot.slane %v21, %v32
  %v35 = vunpack.c.l.s4 1983009808
  %v36 = vunpack.c.0.s8 %v35
  %v37 = vlaneseq
  %v38 = vshrl.u32 %v37, 7
  %v39 = vsub.s32 %v36, %v38
  %v40 = vrot.slane %v26, %v39
  %v41 = vcombine.high %v33, %v33
  %v42 = vcombine.high %v40, %v40
  %v47 = vpack.c.bf16 %v33, %v33
  %v48 = vpack.c.bf16 %v41, %v41
  %v49 = vpack.c.bf16 %v40, %v40
  %v50 = vpack.c.bf16 %v42, %v42
  %v51 = vld [vmem:[%s1] sm:$0xff]
  %v52 = vld [vmem:[%s1 + $0x8] sm:$0xff]
  %v53 = vld [vmem:[%s1 + $0x10] sm:$0xff]
  %v54 = vld [vmem:[%s1 + $0x18] sm:$0xff]
  %v55 = vld [vmem:[%s1 + $0x30] sm:$0xff]
  %v56 = vld [vmem:[%s1 + $0x38] sm:$0xff]
  %v57 = vld [vmem:[%s1 + $0x40] sm:$0xff]
  %v58 = vld [vmem:[%s1 + $0x48] sm:$0xff]
  %v59 = vld [vmem:[%s1 + $0x60] sm:$0xff]
  %v60 = vld [vmem:[%s1 + $0x68] sm:$0xff]
  %v61 = vld [vmem:[%s1 + $0x70] sm:$0xff]
  %v62 = vld [vmem:[%s1 + $0x78] sm:$0xff]
  %v63 = vld [vmem:[%s1 + $0x90] sm:$0xff]
  %v64 = vld [vmem:[%s1 + $0x98] sm:$0xff]
  %v65 = vld [vmem:[%s1 + $0xa0] sm:$0xff]
  %v66 = vld [vmem:[%s1 + $0xa8] sm:$0xff]
  %v67 = vld [vmem:[%s1 + $0xc0] sm:$0xff]
  %v68 = vld [vmem:[%s1 + $0xc8] sm:$0xff]
  %v69 = vld [vmem:[%s1 + $0xd0] sm:$0xff]
  %v70 = vld [vmem:[%s1 + $0xd8] sm:$0xff]
  %v71 = vld [vmem:[%s1 + $0xf0] sm:$0xff]
  %v72 = vld [vmem:[%s1 + $0xf8] sm:$0xff]
  %v73 = vld [vmem:[%s1 + $0x100] sm:$0xff]
  %v74 = vld [vmem:[%s1 + $0x108] sm:$0xff]
  %v75 = vld [vmem:[%s1 + $0x120] sm:$0xff]
  %v76 = vld [vmem:[%s1 + $0x128] sm:$0xff]
  %v77 = vld [vmem:[%s1 + $0x130] sm:$0xff]
  %v78 = vld [vmem:[%s1 + $0x138] sm:$0xff]
  %v79 = vld [vmem:[%s1 + $0x150] sm:$0xff]
  %v80 = vld [vmem:[%s1 + $0x158] sm:$0xff]
  %v81 = vld [vmem:[%s1 + $0x160] sm:$0xff]
  %v82 = vld [vmem:[%s1 + $0x168] sm:$0xff]
  %v83 = vld [vmem:[%s1 + $0x180] sm:$0xff]
  %v84 = vld [vmem:[%s1 + $0x188] sm:$0xff]
  %v85 = vld [vmem:[%s1 + $0x190] sm:$0xff]
  %v86 = vld [vmem:[%s1 + $0x198] sm:$0xff]
  %v87 = vld [vmem:[%s1 + $0x1b0] sm:$0xff]
  %v88 = vld [vmem:[%s1 + $0x1b8] sm:$0xff]
  %v89 = vld [vmem:[%s1 + $0x1c0] sm:$0xff]
  %v90 = vld [vmem:[%s1 + $0x1c8] sm:$0xff]
  %v91 = vld [vmem:[%s1 + $0x1e0] sm:$0xff]
  %v92 = vld [vmem:[%s1 + $0x1e8] sm:$0xff]
  %v93 = vld [vmem:[%s1 + $0x1f0] sm:$0xff]
  %v94 = vld [vmem:[%s1 + $0x1f8] sm:$0xff]
  %v95 = vld [vmem:[%s1 + $0x210] sm:$0xff]
  %v96 = vld [vmem:[%s1 + $0x218] sm:$0xff]
  %v97 = vld [vmem:[%s1 + $0x220] sm:$0xff]
  %v98 = vld [vmem:[%s1 + $0x228] sm:$0xff]
  %v99 = vld [vmem:[%s1 + $0x240] sm:$0xff]
  %v100 = vld [vmem:[%s1 + $0x248] sm:$0xff]
  %v101 = vld [vmem:[%s1 + $0x250] sm:$0xff]
  %v102 = vld [vmem:[%s1 + $0x258] sm:$0xff]
  %v103 = vld [vmem:[%s1 + $0x270] sm:$0xff]
  %v104 = vld [vmem:[%s1 + $0x278] sm:$0xff]
  %v105 = vld [vmem:[%s1 + $0x280] sm:$0xff]
  %v106 = vld [vmem:[%s1 + $0x288] sm:$0xff]
  %v107 = vld [vmem:[%s1 + $0x2a0] sm:$0xff]
  %v108 = vld [vmem:[%s1 + $0x2a8] sm:$0xff]
  %v109 = vld [vmem:[%s1 + $0x2b0] sm:$0xff]
  %v110 = vld [vmem:[%s1 + $0x2b8] sm:$0xff]
  %v111 = vld [vmem:[%s1 + $0x2d0] sm:$0xff]
  %v112 = vld [vmem:[%s1 + $0x2d8] sm:$0xff]
  %v113 = vld [vmem:[%s1 + $0x2e0] sm:$0xff]
  %v114 = vld [vmem:[%s1 + $0x2e8] sm:$0xff]
  %v115 = vld [vmem:[%s1 + $0x300] sm:$0xff]
  %v116 = vld [vmem:[%s1 + $0x308] sm:$0xff]
  %v117 = vld [vmem:[%s1 + $0x310] sm:$0xff]
  %v118 = vld [vmem:[%s1 + $0x318] sm:$0xff]
  %v119 = vld [vmem:[%s1 + $0x330] sm:$0xff]
  %v120 = vld [vmem:[%s1 + $0x338] sm:$0xff]
  %v121 = vld [vmem:[%s1 + $0x340] sm:$0xff]
  %v122 = vld [vmem:[%s1 + $0x348] sm:$0xff]
  %v123 = vld [vmem:[%s1 + $0x360] sm:$0xff]
  %v124 = vld [vmem:[%s1 + $0x368] sm:$0xff]
  %v125 = vld [vmem:[%s1 + $0x370] sm:$0xff]
  %v126 = vld [vmem:[%s1 + $0x378] sm:$0xff]
  %v127 = vld [vmem:[%s1 + $0x390] sm:$0xff]
  %v128 = vld [vmem:[%s1 + $0x398] sm:$0xff]
  %v129 = vld [vmem:[%s1 + $0x3a0] sm:$0xff]
  %v130 = vld [vmem:[%s1 + $0x3a8] sm:$0xff]
  %v131 = vld [vmem:[%s1 + $0x3c0] sm:$0xff]
  %v132 = vld [vmem:[%s1 + $0x3c8] sm:$0xff]
  %v133 = vld [vmem:[%s1 + $0x3d0] sm:$0xff]
  %v134 = vld [vmem:[%s1 + $0x3d8] sm:$0xff]
  %v135 = vld [vmem:[%s1 + $0x3f0] sm:$0xff]
  %v136 = vld [vmem:[%s1 + $0x3f8] sm:$0xff]
  %v137 = vld [vmem:[%s1 + $0x400] sm:$0xff]
  %v138 = vld [vmem:[%s1 + $0x408] sm:$0xff]
  %v139 = vld [vmem:[%s1 + $0x420] sm:$0xff]
  %v140 = vld [vmem:[%s1 + $0x428] sm:$0xff]
  %v141 = vld [vmem:[%s1 + $0x430] sm:$0xff]
  %v142 = vld [vmem:[%s1 + $0x438] sm:$0xff]
  %v143 = vld [vmem:[%s1 + $0x450] sm:$0xff]
  %v144 = vld [vmem:[%s1 + $0x458] sm:$0xff]
  %v145 = vld [vmem:[%s1 + $0x460] sm:$0xff]
  %v146 = vld [vmem:[%s1 + $0x468] sm:$0xff]
  %v147 = vld [vmem:[%s1 + $0x480] sm:$0xff]
  %v148 = vld [vmem:[%s1 + $0x488] sm:$0xff]
  %v149 = vld [vmem:[%s1 + $0x490] sm:$0xff]
  %v150 = vld [vmem:[%s1 + $0x498] sm:$0xff]
  %v151 = vld [vmem:[%s1 + $0x4b0] sm:$0xff]
  %v152 = vld [vmem:[%s1 + $0x4b8] sm:$0xff]
  %v153 = vld [vmem:[%s1 + $0x4c0] sm:$0xff]
  %v154 = vld [vmem:[%s1 + $0x4c8] sm:$0xff]
  %v155 = vld [vmem:[%s1 + $0x4e0] sm:$0xff]
  %v156 = vld [vmem:[%s1 + $0x4e8] sm:$0xff]
  %v157 = vld [vmem:[%s1 + $0x4f0] sm:$0xff]
  %v158 = vld [vmem:[%s1 + $0x4f8] sm:$0xff]
  %v159 = vld [vmem:[%s1 + $0x510] sm:$0xff]
  %v160 = vld [vmem:[%s1 + $0x518] sm:$0xff]
  %v161 = vld [vmem:[%s1 + $0x520] sm:$0xff]
  %v162 = vld [vmem:[%s1 + $0x528] sm:$0xff]
  %v163 = vld [vmem:[%s1 + $0x540] sm:$0xff]
  %v164 = vld [vmem:[%s1 + $0x548] sm:$0xff]
  %v165 = vld [vmem:[%s1 + $0x550] sm:$0xff]
  %v166 = vld [vmem:[%s1 + $0x558] sm:$0xff]
  %v167 = vld [vmem:[%s1 + $0x570] sm:$0xff]
  %v168 = vld [vmem:[%s1 + $0x578] sm:$0xff]
  %v169 = vld [vmem:[%s1 + $0x580] sm:$0xff]
  %v170 = vld [vmem:[%s1 + $0x588] sm:$0xff]
  %v171 = vld [vmem:[%s1 + $0x5a0] sm:$0xff]
  %v172 = vld [vmem:[%s1 + $0x5a8] sm:$0xff]
  %v173 = vld [vmem:[%s1 + $0x5b0] sm:$0xff]
  %v174 = vld [vmem:[%s1 + $0x5b8] sm:$0xff]
  %v175 = vld [vmem:[%s1 + $0x5d0] sm:$0xff]
  %v176 = vld [vmem:[%s1 + $0x5d8] sm:$0xff]
  %v177 = vld [vmem:[%s1 + $0x5e0] sm:$0xff]
  %v178 = vld [vmem:[%s1 + $0x5e8] sm:$0xff]
  %v179 = vld [vmem:[%s1 + $0x600] sm:$0xff]
  %v180 = vld [vmem:[%s1 + $0x608] sm:$0xff]
  %v181 = vld [vmem:[%s1 + $0x610] sm:$0xff]
  %v182 = vld [vmem:[%s1 + $0x618] sm:$0xff]
  %v183 = vld [vmem:[%s1 + $0x630] sm:$0xff]
  %v184 = vld [vmem:[%s1 + $0x638] sm:$0xff]
  %v185 = vld [vmem:[%s1 + $0x640] sm:$0xff]
  %v186 = vld [vmem:[%s1 + $0x648] sm:$0xff]
  %v187 = vld [vmem:[%s1 + $0x660] sm:$0xff]
  %v188 = vld [vmem:[%s1 + $0x668] sm:$0xff]
  %v189 = vld [vmem:[%s1 + $0x670] sm:$0xff]
  %v190 = vld [vmem:[%s1 + $0x678] sm:$0xff]
  %v191 = vld [vmem:[%s1 + $0x690] sm:$0xff]
  %v192 = vld [vmem:[%s1 + $0x698] sm:$0xff]
  %v193 = vld [vmem:[%s1 + $0x6a0] sm:$0xff]
  %v194 = vld [vmem:[%s1 + $0x6a8] sm:$0xff]
  %v195 = vld [vmem:[%s1 + $0x6c0] sm:$0xff]
  %v196 = vld [vmem:[%s1 + $0x6c8] sm:$0xff]
  %v197 = vld [vmem:[%s1 + $0x6d0] sm:$0xff]
  %v198 = vld [vmem:[%s1 + $0x6d8] sm:$0xff]
  %v199 = vld [vmem:[%s1 + $0x6f0] sm:$0xff]
  %v200 = vld [vmem:[%s1 + $0x6f8] sm:$0xff]
  %v201 = vld [vmem:[%s1 + $0x700] sm:$0xff]
  %v202 = vld [vmem:[%s1 + $0x708] sm:$0xff]
  %v203 = vld [vmem:[%s1 + $0x720] sm:$0xff]
  %v204 = vld [vmem:[%s1 + $0x728] sm:$0xff]
  %v205 = vld [vmem:[%s1 + $0x730] sm:$0xff]
  %v206 = vld [vmem:[%s1 + $0x738] sm:$0xff]
  %v207 = vld [vmem:[%s1 + $0x750] sm:$0xff]
  %v208 = vld [vmem:[%s1 + $0x758] sm:$0xff]
  %v209 = vld [vmem:[%s1 + $0x760] sm:$0xff]
  %v210 = vld [vmem:[%s1 + $0x768] sm:$0xff]
  %v211 = vld [vmem:[%s1 + $0x780] sm:$0xff]
  %v212 = vld [vmem:[%s1 + $0x788] sm:$0xff]
  %v213 = vld [vmem:[%s1 + $0x790] sm:$0xff]
  %v214 = vld [vmem:[%s1 + $0x798] sm:$0xff]
  %v215 = vld [vmem:[%s1 + $0x7b0] sm:$0xff]
  %v216 = vld [vmem:[%s1 + $0x7b8] sm:$0xff]
  %v217 = vld [vmem:[%s1 + $0x7c0] sm:$0xff]
  %v218 = vld [vmem:[%s1 + $0x7c8] sm:$0xff]
  %v219 = vld [vmem:[%s1 + $0x7e0] sm:$0xff]
  %v220 = vld [vmem:[%s1 + $0x7e8] sm:$0xff]
  %v221 = vld [vmem:[%s1 + $0x7f0] sm:$0xff]
  %v222 = vld [vmem:[%s1 + $0x7f8] sm:$0xff]
  %v223 = vld [vmem:[%s1 + $0x810] sm:$0xff]
  %v224 = vld [vmem:[%s1 + $0x818] sm:$0xff]
  %v225 = vld [vmem:[%s1 + $0x820] sm:$0xff]
  %v226 = vld [vmem:[%s1 + $0x828] sm:$0xff]
  %v227 = vld [vmem:[%s1 + $0x840] sm:$0xff]
  %v228 = vld [vmem:[%s1 + $0x848] sm:$0xff]
  %v229 = vld [vmem:[%s1 + $0x850] sm:$0xff]
  %v230 = vld [vmem:[%s1 + $0x858] sm:$0xff]
  %v231 = vld [vmem:[%s1 + $0x870] sm:$0xff]
  %v232 = vld [vmem:[%s1 + $0x878] sm:$0xff]
  %v233 = vld [vmem:[%s1 + $0x880] sm:$0xff]
  %v234 = vld [vmem:[%s1 + $0x888] sm:$0xff]
  %v235 = vld [vmem:[%s1 + $0x8a0] sm:$0xff]
  %v236 = vld [vmem:[%s1 + $0x8a8] sm:$0xff]
  %v237 = vld [vmem:[%s1 + $0x8b0] sm:$0xff]
  %v238 = vld [vmem:[%s1 + $0x8b8] sm:$0xff]
  %v239 = vld [vmem:[%s1 + $0x8d0] sm:$0xff]
  %v240 = vld [vmem:[%s1 + $0x8d8] sm:$0xff]
  %v241 = vld [vmem:[%s1 + $0x8e0] sm:$0xff]
  %v242 = vld [vmem:[%s1 + $0x8e8] sm:$0xff]
  %v243 = vld [vmem:[%s1 + $0x900] sm:$0xff]
  %v244 = vld [vmem:[%s1 + $0x908] sm:$0xff]
  %v245 = vld [vmem:[%s1 + $0x910] sm:$0xff]
  %v246 = vld [vmem:[%s1 + $0x918] sm:$0xff]
  %v247 = vld [vmem:[%s1 + $0x930] sm:$0xff]
  %v248 = vld [vmem:[%s1 + $0x938] sm:$0xff]
  %v249 = vld [vmem:[%s1 + $0x940] sm:$0xff]
  %v250 = vld [vmem:[%s1 + $0x948] sm:$0xff]
  %v251 = vld [vmem:[%s1 + $0x960] sm:$0xff]
  %v252 = vld [vmem:[%s1 + $0x968] sm:$0xff]
  %v253 = vld [vmem:[%s1 + $0x970] sm:$0xff]
  %v254 = vld [vmem:[%s1 + $0x978] sm:$0xff]
  %v255 = vld [vmem:[%s1 + $0x990] sm:$0xff]
  %v256 = vld [vmem:[%s1 + $0x998] sm:$0xff]
  %v257 = vld [vmem:[%s1 + $0x9a0] sm:$0xff]
  %v258 = vld [vmem:[%s1 + $0x9a8] sm:$0xff]
  %v259 = vld [vmem:[%s1 + $0x9c0] sm:$0xff]
  %v260 = vld [vmem:[%s1 + $0x9c8] sm:$0xff]
  %v261 = vld [vmem:[%s1 + $0x9d0] sm:$0xff]
  %v262 = vld [vmem:[%s1 + $0x9d8] sm:$0xff]
  %v263 = vld [vmem:[%s1 + $0x9f0] sm:$0xff]
  %v264 = vld [vmem:[%s1 + $0x9f8] sm:$0xff]
  %v265 = vld [vmem:[%s1 + $0xa00] sm:$0xff]
  %v266 = vld [vmem:[%s1 + $0xa08] sm:$0xff]
  %v267 = vld [vmem:[%s1 + $0xa20] sm:$0xff]
  %v268 = vld [vmem:[%s1 + $0xa28] sm:$0xff]
  %v269 = vld [vmem:[%s1 + $0xa30] sm:$0xff]
  %v270 = vld [vmem:[%s1 + $0xa38] sm:$0xff]
  %v271 = vld [vmem:[%s1 + $0xa50] sm:$0xff]
  %v272 = vld [vmem:[%s1 + $0xa58] sm:$0xff]
  %v273 = vld [vmem:[%s1 + $0xa60] sm:$0xff]
  %v274 = vld [vmem:[%s1 + $0xa68] sm:$0xff]
  %v275 = vld [vmem:[%s1 + $0xa80] sm:$0xff]
  %v276 = vld [vmem:[%s1 + $0xa88] sm:$0xff]
  %v277 = vld [vmem:[%s1 + $0xa90] sm:$0xff]
  %v278 = vld [vmem:[%s1 + $0xa98] sm:$0xff]
  %v279 = vld [vmem:[%s1 + $0xab0] sm:$0xff]
  %v280 = vld [vmem:[%s1 + $0xab8] sm:$0xff]
  %v281 = vld [vmem:[%s1 + $0xac0] sm:$0xff]
  %v282 = vld [vmem:[%s1 + $0xac8] sm:$0xff]
  %v283 = vld [vmem:[%s1 + $0xae0] sm:$0xff]
  %v284 = vld [vmem:[%s1 + $0xae8] sm:$0xff]
  %v285 = vld [vmem:[%s1 + $0xaf0] sm:$0xff]
  %v286 = vld [vmem:[%s1 + $0xaf8] sm:$0xff]
  %v287 = vld [vmem:[%s1 + $0xb10] sm:$0xff]
  %v288 = vld [vmem:[%s1 + $0xb18] sm:$0xff]
  %v289 = vld [vmem:[%s1 + $0xb20] sm:$0xff]
  %v290 = vld [vmem:[%s1 + $0xb28] sm:$0xff]
  %v291 = vld [vmem:[%s1 + $0xb40] sm:$0xff]
  %v292 = vld [vmem:[%s1 + $0xb48] sm:$0xff]
  %v293 = vld [vmem:[%s1 + $0xb50] sm:$0xff]
  %v294 = vld [vmem:[%s1 + $0xb58] sm:$0xff]
  %v295 = vld [vmem:[%s1 + $0xb70] sm:$0xff]
  %v296 = vld [vmem:[%s1 + $0xb78] sm:$0xff]
  %v297 = vld [vmem:[%s1 + $0xb80] sm:$0xff]
  %v298 = vld [vmem:[%s1 + $0xb88] sm:$0xff]
  %v299 = vld [vmem:[%s1 + $0xba0] sm:$0xff]
  %v300 = vld [vmem:[%s1 + $0xba8] sm:$0xff]
  %v301 = vld [vmem:[%s1 + $0xbb0] sm:$0xff]
  %v302 = vld [vmem:[%s1 + $0xbb8] sm:$0xff]
  %v303 = vld [vmem:[%s1 + $0xbd0] sm:$0xff]
  %v304 = vld [vmem:[%s1 + $0xbd8] sm:$0xff]
  %v305 = vld [vmem:[%s1 + $0xbe0] sm:$0xff]
  %v306 = vld [vmem:[%s1 + $0xbe8] sm:$0xff]
  %v308 = vlaneseq
  %v309 = vshrl.u32 %v308, 7
  %v310 = vsub.s32 0, %v309
  %v311 = vrot.slane %v19, %v310
  %v312 = vlaneseq
  %v313 = vshrl.u32 %v312, 7
  %v314 = vsub.s32 1, %v313
  %v315 = vrot.slane %v19, %v314
  %v316 = vlaneseq
  %v317 = vshrl.u32 %v316, 7
  %v318 = vsub.s32 2, %v317
  %v319 = vrot.slane %v19, %v318
  %v320 = vlaneseq
  %v321 = vshrl.u32 %v320, 7
  %v322 = vsub.s32 3, %v321
  %v323 = vrot.slane %v19, %v322
  %v324 = vlaneseq
  %v325 = vshrl.u32 %v324, 7
  %v326 = vsub.s32 4, %v325
  %v327 = vrot.slane %v19, %v326
  %v328 = vlaneseq
  %v329 = vshrl.u32 %v328, 7
  %v330 = vsub.s32 5, %v329
  %v331 = vrot.slane %v19, %v330
  %v332 = vlaneseq
  %v333 = vshrl.u32 %v332, 7
  %v334 = vsub.s32 6, %v333
  %v335 = vrot.slane %v19, %v334
  %v336 = vlaneseq
  %v337 = vshrl.u32 %v336, 7
  %v338 = vsub.s32 7, %v337
  %v339 = vrot.slane %v19, %v338
  %v604 = vunpack.c.l.b16 %v51
  %v605 = vunpack.c.h.b16 %v51
  %v606 = vunpack.c.l.b16 %v52
  %v607 = vunpack.c.h.b16 %v52
  %v608 = vunpack.c.l.b16 %v53
  %v609 = vunpack.c.h.b16 %v53
  %v610 = vunpack.c.l.b16 %v54
  %v611 = vunpack.c.h.b16 %v54
  %v612 = vunpack.c.l.b16 %v55
  %v613 = vunpack.c.h.b16 %v55
  %v614 = vunpack.c.l.b16 %v56
  %v615 = vunpack.c.h.b16 %v56
  %v616 = vunpack.c.l.b16 %v57
  %v617 = vunpack.c.h.b16 %v57
  %v618 = vunpack.c.l.b16 %v58
  %v619 = vunpack.c.h.b16 %v58
  %v620 = vunpack.c.l.b16 %v59
  %v621 = vunpack.c.h.b16 %v59
  %v622 = vunpack.c.l.b16 %v60
  %v623 = vunpack.c.h.b16 %v60
  %v624 = vunpack.c.l.b16 %v61
  %v625 = vunpack.c.h.b16 %v61
  %v626 = vunpack.c.l.b16 %v62
  %v627 = vunpack.c.h.b16 %v62
  %v628 = vunpack.c.l.b16 %v63
  %v629 = vunpack.c.h.b16 %v63
  %v630 = vunpack.c.l.b16 %v64
  %v631 = vunpack.c.h.b16 %v64
  %v632 = vunpack.c.l.b16 %v65
  %v633 = vunpack.c.h.b16 %v65
  %v634 = vunpack.c.l.b16 %v66
  %v635 = vunpack.c.h.b16 %v66
  %v636 = vunpack.c.l.b16 %v67
  %v637 = vunpack.c.h.b16 %v67
  %v638 = vunpack.c.l.b16 %v68
  %v639 = vunpack.c.h.b16 %v68
  %v640 = vunpack.c.l.b16 %v69
  %v641 = vunpack.c.h.b16 %v69
  %v642 = vunpack.c.l.b16 %v70
  %v643 = vunpack.c.h.b16 %v70
  %v644 = vunpack.c.l.b16 %v71
  %v645 = vunpack.c.h.b16 %v71
  %v646 = vunpack.c.l.b16 %v72
  %v647 = vunpack.c.h.b16 %v72
  %v648 = vunpack.c.l.b16 %v73
  %v649 = vunpack.c.h.b16 %v73
  %v650 = vunpack.c.l.b16 %v74
  %v651 = vunpack.c.h.b16 %v74
  %v652 = vunpack.c.l.b16 %v75
  %v653 = vunpack.c.h.b16 %v75
  %v654 = vunpack.c.l.b16 %v76
  %v655 = vunpack.c.h.b16 %v76
  %v656 = vunpack.c.l.b16 %v77
  %v657 = vunpack.c.h.b16 %v77
  %v658 = vunpack.c.l.b16 %v78
  %v659 = vunpack.c.h.b16 %v78
  %v660 = vunpack.c.l.b16 %v79
  %v661 = vunpack.c.h.b16 %v79
  %v662 = vunpack.c.l.b16 %v80
  %v663 = vunpack.c.h.b16 %v80
  %v664 = vunpack.c.l.b16 %v81
  %v665 = vunpack.c.h.b16 %v81
  %v666 = vunpack.c.l.b16 %v82
  %v667 = vunpack.c.h.b16 %v82
  %v668 = vunpack.c.l.b16 %v83
  %v669 = vunpack.c.h.b16 %v83
  %v670 = vunpack.c.l.b16 %v84
  %v671 = vunpack.c.h.b16 %v84
  %v672 = vunpack.c.l.b16 %v85
  %v673 = vunpack.c.h.b16 %v85
  %v674 = vunpack.c.l.b16 %v86
  %v675 = vunpack.c.h.b16 %v86
  %v676 = vunpack.c.l.b16 %v87
  %v677 = vunpack.c.h.b16 %v87
  %v678 = vunpack.c.l.b16 %v88
  %v679 = vunpack.c.h.b16 %v88
  %v680 = vunpack.c.l.b16 %v89
  %v681 = vunpack.c.h.b16 %v89
  %v682 = vunpack.c.l.b16 %v90
  %v683 = vunpack.c.h.b16 %v90
  %v684 = vunpack.c.l.b16 %v91
  %v685 = vunpack.c.h.b16 %v91
  %v686 = vunpack.c.l.b16 %v92
  %v687 = vunpack.c.h.b16 %v92
  %v688 = vunpack.c.l.b16 %v93
  %v689 = vunpack.c.h.b16 %v93
  %v690 = vunpack.c.l.b16 %v94
  %v691 = vunpack.c.h.b16 %v94
  %v692 = vunpack.c.l.b16 %v95
  %v693 = vunpack.c.h.b16 %v95
  %v694 = vunpack.c.l.b16 %v96
  %v695 = vunpack.c.h.b16 %v96
  %v696 = vunpack.c.l.b16 %v97
  %v697 = vunpack.c.h.b16 %v97
  %v698 = vunpack.c.l.b16 %v98
  %v699 = vunpack.c.h.b16 %v98
  %v700 = vunpack.c.l.b16 %v99
  %v701 = vunpack.c.h.b16 %v99
  %v702 = vunpack.c.l.b16 %v100
  %v703 = vunpack.c.h.b16 %v100
  %v704 = vunpack.c.l.b16 %v101
  %v705 = vunpack.c.h.b16 %v101
  %v706 = vunpack.c.l.b16 %v102
  %v707 = vunpack.c.h.b16 %v102
  %v708 = vunpack.c.l.b16 %v103
  %v709 = vunpack.c.h.b16 %v103
  %v710 = vunpack.c.l.b16 %v104
  %v711 = vunpack.c.h.b16 %v104
  %v712 = vunpack.c.l.b16 %v105
  %v713 = vunpack.c.h.b16 %v105
  %v714 = vunpack.c.l.b16 %v106
  %v715 = vunpack.c.h.b16 %v106
  %v716 = vunpack.c.l.b16 %v107
  %v717 = vunpack.c.h.b16 %v107
  %v718 = vunpack.c.l.b16 %v108
  %v719 = vunpack.c.h.b16 %v108
  %v720 = vunpack.c.l.b16 %v109
  %v721 = vunpack.c.h.b16 %v109
  %v722 = vunpack.c.l.b16 %v110
  %v723 = vunpack.c.h.b16 %v110
  %v724 = vunpack.c.l.b16 %v111
  %v725 = vunpack.c.h.b16 %v111
  %v726 = vunpack.c.l.b16 %v112
  %v727 = vunpack.c.h.b16 %v112
  %v728 = vunpack.c.l.b16 %v113
  %v729 = vunpack.c.h.b16 %v113
  %v730 = vunpack.c.l.b16 %v114
  %v731 = vunpack.c.h.b16 %v114
  %v732 = vunpack.c.l.b16 %v115
  %v733 = vunpack.c.h.b16 %v115
  %v734 = vunpack.c.l.b16 %v116
  %v735 = vunpack.c.h.b16 %v116
  %v736 = vunpack.c.l.b16 %v117
  %v737 = vunpack.c.h.b16 %v117
  %v738 = vunpack.c.l.b16 %v118
  %v739 = vunpack.c.h.b16 %v118
  %v740 = vunpack.c.l.b16 %v119
  %v741 = vunpack.c.h.b16 %v119
  %v742 = vunpack.c.l.b16 %v120
  %v743 = vunpack.c.h.b16 %v120
  %v744 = vunpack.c.l.b16 %v121
  %v745 = vunpack.c.h.b16 %v121
  %v746 = vunpack.c.l.b16 %v122
  %v747 = vunpack.c.h.b16 %v122
  %v748 = vunpack.c.l.b16 %v123
  %v749 = vunpack.c.h.b16 %v123
  %v750 = vunpack.c.l.b16 %v124
  %v751 = vunpack.c.h.b16 %v124
  %v752 = vunpack.c.l.b16 %v125
  %v753 = vunpack.c.h.b16 %v125
  %v754 = vunpack.c.l.b16 %v126
  %v755 = vunpack.c.h.b16 %v126
  %v756 = vunpack.c.l.b16 %v127
  %v757 = vunpack.c.h.b16 %v127
  %v758 = vunpack.c.l.b16 %v128
  %v759 = vunpack.c.h.b16 %v128
  %v760 = vunpack.c.l.b16 %v129
  %v761 = vunpack.c.h.b16 %v129
  %v762 = vunpack.c.l.b16 %v130
  %v763 = vunpack.c.h.b16 %v130
  %v764 = vunpack.c.l.b16 %v131
  %v765 = vunpack.c.h.b16 %v131
  %v766 = vunpack.c.l.b16 %v132
  %v767 = vunpack.c.h.b16 %v132
  %v768 = vunpack.c.l.b16 %v133
  %v769 = vunpack.c.h.b16 %v133
  %v770 = vunpack.c.l.b16 %v134
  %v771 = vunpack.c.h.b16 %v134
  %v772 = vunpack.c.l.b16 %v135
  %v773 = vunpack.c.h.b16 %v135
  %v774 = vunpack.c.l.b16 %v136
  %v775 = vunpack.c.h.b16 %v136
  %v776 = vunpack.c.l.b16 %v137
  %v777 = vunpack.c.h.b16 %v137
  %v778 = vunpack.c.l.b16 %v138
  %v779 = vunpack.c.h.b16 %v138
  %v780 = vunpack.c.l.b16 %v139
  %v781 = vunpack.c.h.b16 %v139
  %v782 = vunpack.c.l.b16 %v140
  %v783 = vunpack.c.h.b16 %v140
  %v784 = vunpack.c.l.b16 %v141
  %v785 = vunpack.c.h.b16 %v141
  %v786 = vunpack.c.l.b16 %v142
  %v787 = vunpack.c.h.b16 %v142
  %v788 = vunpack.c.l.b16 %v143
  %v789 = vunpack.c.h.b16 %v143
  %v790 = vunpack.c.l.b16 %v144
  %v791 = vunpack.c.h.b16 %v144
  %v792 = vunpack.c.l.b16 %v145
  %v793 = vunpack.c.h.b16 %v145
  %v794 = vunpack.c.l.b16 %v146
  %v795 = vunpack.c.h.b16 %v146
  %v796 = vunpack.c.l.b16 %v147
  %v797 = vunpack.c.h.b16 %v147
  %v798 = vunpack.c.l.b16 %v148
  %v799 = vunpack.c.h.b16 %v148
  %v800 = vunpack.c.l.b16 %v149
  %v801 = vunpack.c.h.b16 %v149
  %v802 = vunpack.c.l.b16 %v150
  %v803 = vunpack.c.h.b16 %v150
  %v804 = vunpack.c.l.b16 %v151
  %v805 = vunpack.c.h.b16 %v151
  %v806 = vunpack.c.l.b16 %v152
  %v807 = vunpack.c.h.b16 %v152
  %v808 = vunpack.c.l.b16 %v153
  %v809 = vunpack.c.h.b16 %v153
  %v810 = vunpack.c.l.b16 %v154
  %v811 = vunpack.c.h.b16 %v154
  %v812 = vunpack.c.l.b16 %v155
  %v813 = vunpack.c.h.b16 %v155
  %v814 = vunpack.c.l.b16 %v156
  %v815 = vunpack.c.h.b16 %v156
  %v816 = vunpack.c.l.b16 %v157
  %v817 = vunpack.c.h.b16 %v157
  %v818 = vunpack.c.l.b16 %v158
  %v819 = vunpack.c.h.b16 %v158
  %v820 = vunpack.c.l.b16 %v159
  %v821 = vunpack.c.h.b16 %v159
  %v822 = vunpack.c.l.b16 %v160
  %v823 = vunpack.c.h.b16 %v160
  %v824 = vunpack.c.l.b16 %v161
  %v825 = vunpack.c.h.b16 %v161
  %v826 = vunpack.c.l.b16 %v162
  %v827 = vunpack.c.h.b16 %v162
  %v828 = vunpack.c.l.b16 %v163
  %v829 = vunpack.c.h.b16 %v163
  %v830 = vunpack.c.l.b16 %v164
  %v831 = vunpack.c.h.b16 %v164
  %v832 = vunpack.c.l.b16 %v165
  %v833 = vunpack.c.h.b16 %v165
  %v834 = vunpack.c.l.b16 %v166
  %v835 = vunpack.c.h.b16 %v166
  %v836 = vunpack.c.l.b16 %v167
  %v837 = vunpack.c.h.b16 %v167
  %v838 = vunpack.c.l.b16 %v168
  %v839 = vunpack.c.h.b16 %v168
  %v840 = vunpack.c.l.b16 %v169
  %v841 = vunpack.c.h.b16 %v169
  %v842 = vunpack.c.l.b16 %v170
  %v843 = vunpack.c.h.b16 %v170
  %v844 = vunpack.c.l.b16 %v171
  %v845 = vunpack.c.h.b16 %v171
  %v846 = vunpack.c.l.b16 %v172
  %v847 = vunpack.c.h.b16 %v172
  %v848 = vunpack.c.l.b16 %v173
  %v849 = vunpack.c.h.b16 %v173
  %v850 = vunpack.c.l.b16 %v174
  %v851 = vunpack.c.h.b16 %v174
  %v852 = vunpack.c.l.b16 %v175
  %v853 = vunpack.c.h.b16 %v175
  %v854 = vunpack.c.l.b16 %v176
  %v855 = vunpack.c.h.b16 %v176
  %v856 = vunpack.c.l.b16 %v177
  %v857 = vunpack.c.h.b16 %v177
  %v858 = vunpack.c.l.b16 %v178
  %v859 = vunpack.c.h.b16 %v178
  %v860 = vunpack.c.l.b16 %v179
  %v861 = vunpack.c.h.b16 %v179
  %v862 = vunpack.c.l.b16 %v180
  %v863 = vunpack.c.h.b16 %v180
  %v864 = vunpack.c.l.b16 %v181
  %v865 = vunpack.c.h.b16 %v181
  %v866 = vunpack.c.l.b16 %v182
  %v867 = vunpack.c.h.b16 %v182
  %v868 = vunpack.c.l.b16 %v183
  %v869 = vunpack.c.h.b16 %v183
  %v870 = vunpack.c.l.b16 %v184
  %v871 = vunpack.c.h.b16 %v184
  %v872 = vunpack.c.l.b16 %v185
  %v873 = vunpack.c.h.b16 %v185
  %v874 = vunpack.c.l.b16 %v186
  %v875 = vunpack.c.h.b16 %v186
  %v876 = vunpack.c.l.b16 %v187
  %v877 = vunpack.c.h.b16 %v187
  %v878 = vunpack.c.l.b16 %v188
  %v879 = vunpack.c.h.b16 %v188
  %v880 = vunpack.c.l.b16 %v189
  %v881 = vunpack.c.h.b16 %v189
  %v882 = vunpack.c.l.b16 %v190
  %v883 = vunpack.c.h.b16 %v190
  %v884 = vunpack.c.l.b16 %v191
  %v885 = vunpack.c.h.b16 %v191
  %v886 = vunpack.c.l.b16 %v192
  %v887 = vunpack.c.h.b16 %v192
  %v888 = vunpack.c.l.b16 %v193
  %v889 = vunpack.c.h.b16 %v193
  %v890 = vunpack.c.l.b16 %v194
  %v891 = vunpack.c.h.b16 %v194
  %v892 = vunpack.c.l.b16 %v195
  %v893 = vunpack.c.h.b16 %v195
  %v894 = vunpack.c.l.b16 %v196
  %v895 = vunpack.c.h.b16 %v196
  %v896 = vunpack.c.l.b16 %v197
  %v897 = vunpack.c.h.b16 %v197
  %v898 = vunpack.c.l.b16 %v198
  %v899 = vunpack.c.h.b16 %v198
  %v900 = vunpack.c.l.b16 %v199
  %v901 = vunpack.c.h.b16 %v199
  %v902 = vunpack.c.l.b16 %v200
  %v903 = vunpack.c.h.b16 %v200
  %v904 = vunpack.c.l.b16 %v201
  %v905 = vunpack.c.h.b16 %v201
  %v906 = vunpack.c.l.b16 %v202
  %v907 = vunpack.c.h.b16 %v202
  %v908 = vunpack.c.l.b16 %v203
  %v909 = vunpack.c.h.b16 %v203
  %v910 = vunpack.c.l.b16 %v204
  %v911 = vunpack.c.h.b16 %v204
  %v912 = vunpack.c.l.b16 %v205
  %v913 = vunpack.c.h.b16 %v205
  %v914 = vunpack.c.l.b16 %v206
  %v915 = vunpack.c.h.b16 %v206
  %v916 = vunpack.c.l.b16 %v207
  %v917 = vunpack.c.h.b16 %v207
  %v918 = vunpack.c.l.b16 %v208
  %v919 = vunpack.c.h.b16 %v208
  %v920 = vunpack.c.l.b16 %v209
  %v921 = vunpack.c.h.b16 %v209
  %v922 = vunpack.c.l.b16 %v210
  %v923 = vunpack.c.h.b16 %v210
  %v924 = vunpack.c.l.b16 %v211
  %v925 = vunpack.c.h.b16 %v211
  %v926 = vunpack.c.l.b16 %v212
  %v927 = vunpack.c.h.b16 %v212
  %v928 = vunpack.c.l.b16 %v213
  %v929 = vunpack.c.h.b16 %v213
  %v930 = vunpack.c.l.b16 %v214
  %v931 = vunpack.c.h.b16 %v214
  %v932 = vunpack.c.l.b16 %v215
  %v933 = vunpack.c.h.b16 %v215
  %v934 = vunpack.c.l.b16 %v216
  %v935 = vunpack.c.h.b16 %v216
  %v936 = vunpack.c.l.b16 %v217
  %v937 = vunpack.c.h.b16 %v217
  %v938 = vunpack.c.l.b16 %v218
  %v939 = vunpack.c.h.b16 %v218
  %v940 = vunpack.c.l.b16 %v219
  %v941 = vunpack.c.h.b16 %v219
  %v942 = vunpack.c.l.b16 %v220
  %v943 = vunpack.c.h.b16 %v220
  %v944 = vunpack.c.l.b16 %v221
  %v945 = vunpack.c.h.b16 %v221
  %v946 = vunpack.c.l.b16 %v222
  %v947 = vunpack.c.h.b16 %v222
  %v948 = vunpack.c.l.b16 %v223
  %v949 = vunpack.c.h.b16 %v223
  %v950 = vunpack.c.l.b16 %v224
  %v951 = vunpack.c.h.b16 %v224
  %v952 = vunpack.c.l.b16 %v225
  %v953 = vunpack.c.h.b16 %v225
  %v954 = vunpack.c.l.b16 %v226
  %v955 = vunpack.c.h.b16 %v226
  %v956 = vunpack.c.l.b16 %v227
  %v957 = vunpack.c.h.b16 %v227
  %v958 = vunpack.c.l.b16 %v228
  %v959 = vunpack.c.h.b16 %v228
  %v960 = vunpack.c.l.b16 %v229
  %v961 = vunpack.c.h.b16 %v229
  %v962 = vunpack.c.l.b16 %v230
  %v963 = vunpack.c.h.b16 %v230
  %v964 = vunpack.c.l.b16 %v231
  %v965 = vunpack.c.h.b16 %v231
  %v966 = vunpack.c.l.b16 %v232
  %v967 = vunpack.c.h.b16 %v232
  %v968 = vunpack.c.l.b16 %v233
  %v969 = vunpack.c.h.b16 %v233
  %v970 = vunpack.c.l.b16 %v234
  %v971 = vunpack.c.h.b16 %v234
  %v972 = vunpack.c.l.b16 %v235
  %v973 = vunpack.c.h.b16 %v235
  %v974 = vunpack.c.l.b16 %v236
  %v975 = vunpack.c.h.b16 %v236
  %v976 = vunpack.c.l.b16 %v237
  %v977 = vunpack.c.h.b16 %v237
  %v978 = vunpack.c.l.b16 %v238
  %v979 = vunpack.c.h.b16 %v238
  %v980 = vunpack.c.l.b16 %v239
  %v981 = vunpack.c.h.b16 %v239
  %v982 = vunpack.c.l.b16 %v240
  %v983 = vunpack.c.h.b16 %v240
  %v984 = vunpack.c.l.b16 %v241
  %v985 = vunpack.c.h.b16 %v241
  %v986 = vunpack.c.l.b16 %v242
  %v987 = vunpack.c.h.b16 %v242
  %v988 = vunpack.c.l.b16 %v243
  %v989 = vunpack.c.h.b16 %v243
  %v990 = vunpack.c.l.b16 %v244
  %v991 = vunpack.c.h.b16 %v244
  %v992 = vunpack.c.l.b16 %v245
  %v993 = vunpack.c.h.b16 %v245
  %v994 = vunpack.c.l.b16 %v246
  %v995 = vunpack.c.h.b16 %v246
  %v996 = vunpack.c.l.b16 %v247
  %v997 = vunpack.c.h.b16 %v247
  %v998 = vunpack.c.l.b16 %v248
  %v999 = vunpack.c.h.b16 %v248
  %v1000 = vunpack.c.l.b16 %v249
  %v1001 = vunpack.c.h.b16 %v249
  %v1002 = vunpack.c.l.b16 %v250
  %v1003 = vunpack.c.h.b16 %v250
  %v1004 = vunpack.c.l.b16 %v251
  %v1005 = vunpack.c.h.b16 %v251
  %v1006 = vunpack.c.l.b16 %v252
  %v1007 = vunpack.c.h.b16 %v252
  %v1008 = vunpack.c.l.b16 %v253
  %v1009 = vunpack.c.h.b16 %v253
  %v1010 = vunpack.c.l.b16 %v254
  %v1011 = vunpack.c.h.b16 %v254
  %v1012 = vunpack.c.l.b16 %v255
  %v1013 = vunpack.c.h.b16 %v255
  %v1014 = vunpack.c.l.b16 %v256
  %v1015 = vunpack.c.h.b16 %v256
  %v1016 = vunpack.c.l.b16 %v257
  %v1017 = vunpack.c.h.b16 %v257
  %v1018 = vunpack.c.l.b16 %v258
  %v1019 = vunpack.c.h.b16 %v258
  %v1020 = vunpack.c.l.b16 %v259
  %v1021 = vunpack.c.h.b16 %v259
  %v1022 = vunpack.c.l.b16 %v260
  %v1023 = vunpack.c.h.b16 %v260
  %v1024 = vunpack.c.l.b16 %v261
  %v1025 = vunpack.c.h.b16 %v261
  %v1026 = vunpack.c.l.b16 %v262
  %v1027 = vunpack.c.h.b16 %v262
  %v1028 = vunpack.c.l.b16 %v263
  %v1029 = vunpack.c.h.b16 %v263
  %v1030 = vunpack.c.l.b16 %v264
  %v1031 = vunpack.c.h.b16 %v264
  %v1032 = vunpack.c.l.b16 %v265
  %v1033 = vunpack.c.h.b16 %v265
  %v1034 = vunpack.c.l.b16 %v266
  %v1035 = vunpack.c.h.b16 %v266
  %v1036 = vunpack.c.l.b16 %v267
  %v1037 = vunpack.c.h.b16 %v267
  %v1038 = vunpack.c.l.b16 %v268
  %v1039 = vunpack.c.h.b16 %v268
  %v1040 = vunpack.c.l.b16 %v269
  %v1041 = vunpack.c.h.b16 %v269
  %v1042 = vunpack.c.l.b16 %v270
  %v1043 = vunpack.c.h.b16 %v270
  %v1044 = vunpack.c.l.b16 %v271
  %v1045 = vunpack.c.h.b16 %v271
  %v1046 = vunpack.c.l.b16 %v272
  %v1047 = vunpack.c.h.b16 %v272
  %v1048 = vunpack.c.l.b16 %v273
  %v1049 = vunpack.c.h.b16 %v273
  %v1050 = vunpack.c.l.b16 %v274
  %v1051 = vunpack.c.h.b16 %v274
  %v1052 = vunpack.c.l.b16 %v275
  %v1053 = vunpack.c.h.b16 %v275
  %v1054 = vunpack.c.l.b16 %v276
  %v1055 = vunpack.c.h.b16 %v276
  %v1056 = vunpack.c.l.b16 %v277
  %v1057 = vunpack.c.h.b16 %v277
  %v1058 = vunpack.c.l.b16 %v278
  %v1059 = vunpack.c.h.b16 %v278
  %v1060 = vunpack.c.l.b16 %v279
  %v1061 = vunpack.c.h.b16 %v279
  %v1062 = vunpack.c.l.b16 %v280
  %v1063 = vunpack.c.h.b16 %v280
  %v1064 = vunpack.c.l.b16 %v281
  %v1065 = vunpack.c.h.b16 %v281
  %v1066 = vunpack.c.l.b16 %v282
  %v1067 = vunpack.c.h.b16 %v282
  %v1068 = vunpack.c.l.b16 %v283
  %v1069 = vunpack.c.h.b16 %v283
  %v1070 = vunpack.c.l.b16 %v284
  %v1071 = vunpack.c.h.b16 %v284
  %v1072 = vunpack.c.l.b16 %v285
  %v1073 = vunpack.c.h.b16 %v285
  %v1074 = vunpack.c.l.b16 %v286
  %v1075 = vunpack.c.h.b16 %v286
  %v1076 = vunpack.c.l.b16 %v287
  %v1077 = vunpack.c.h.b16 %v287
  %v1078 = vunpack.c.l.b16 %v288
  %v1079 = vunpack.c.h.b16 %v288
  %v1080 = vunpack.c.l.b16 %v289
  %v1081 = vunpack.c.h.b16 %v289
  %v1082 = vunpack.c.l.b16 %v290
  %v1083 = vunpack.c.h.b16 %v290
  %v1084 = vunpack.c.l.b16 %v291
  %v1085 = vunpack.c.h.b16 %v291
  %v1086 = vunpack.c.l.b16 %v292
  %v1087 = vunpack.c.h.b16 %v292
  %v1088 = vunpack.c.l.b16 %v293
  %v1089 = vunpack.c.h.b16 %v293
  %v1090 = vunpack.c.l.b16 %v294
  %v1091 = vunpack.c.h.b16 %v294
  %v1092 = vunpack.c.l.b16 %v295
  %v1093 = vunpack.c.h.b16 %v295
  %v1094 = vunpack.c.l.b16 %v296
  %v1095 = vunpack.c.h.b16 %v296
  %v1096 = vunpack.c.l.b16 %v297
  %v1097 = vunpack.c.h.b16 %v297
  %v1098 = vunpack.c.l.b16 %v298
  %v1099 = vunpack.c.h.b16 %v298
  %v1100 = vunpack.c.l.b16 %v299
  %v1101 = vunpack.c.h.b16 %v299
  %v1102 = vunpack.c.l.b16 %v300
  %v1103 = vunpack.c.h.b16 %v300
  %v1104 = vunpack.c.l.b16 %v301
  %v1105 = vunpack.c.h.b16 %v301
  %v1106 = vunpack.c.l.b16 %v302
  %v1107 = vunpack.c.h.b16 %v302
  %v1108 = vunpack.c.l.b16 %v303
  %v1109 = vunpack.c.h.b16 %v303
  %v1110 = vunpack.c.l.b16 %v304
  %v1111 = vunpack.c.h.b16 %v304
  %v1112 = vunpack.c.l.b16 %v305
  %v1113 = vunpack.c.h.b16 %v305
  %v1114 = vunpack.c.l.b16 %v306
  %v1115 = vunpack.c.h.b16 %v306
  %v1116 = vpack.c.b16 %v612, %v604
  %v1117 = vpack.c.b16 %v613, %v605
  %v1118 = vpack.c.b16 %v614, %v606
  %v1119 = vpack.c.b16 %v615, %v607
  %v1120 = vpack.c.b16 %v616, %v608
  %v1121 = vpack.c.b16 %v617, %v609
  %v1122 = vpack.c.b16 %v618, %v610
  %v1123 = vpack.c.b16 %v619, %v611
  %v1124 = vpack.c.b16 %v628, %v620
  %v1125 = vpack.c.b16 %v629, %v621
  %v1126 = vpack.c.b16 %v630, %v622
  %v1127 = vpack.c.b16 %v631, %v623
  %v1128 = vpack.c.b16 %v632, %v624
  %v1129 = vpack.c.b16 %v633, %v625
  %v1130 = vpack.c.b16 %v634, %v626
  %v1131 = vpack.c.b16 %v635, %v627
  %v1132 = vpack.c.b16 %v644, %v636
  %v1133 = vpack.c.b16 %v645, %v637
  %v1134 = vpack.c.b16 %v646, %v638
  %v1135 = vpack.c.b16 %v647, %v639
  %v1136 = vpack.c.b16 %v648, %v640
  %v1137 = vpack.c.b16 %v649, %v641
  %v1138 = vpack.c.b16 %v650, %v642
  %v1139 = vpack.c.b16 %v651, %v643
  %v1140 = vpack.c.b16 %v660, %v652
  %v1141 = vpack.c.b16 %v661, %v653
  %v1142 = vpack.c.b16 %v662, %v654
  %v1143 = vpack.c.b16 %v663, %v655
  %v1144 = vpack.c.b16 %v664, %v656
  %v1145 = vpack.c.b16 %v665, %v657
  %v1146 = vpack.c.b16 %v666, %v658
  %v1147 = vpack.c.b16 %v667, %v659
  %v1148 = vpack.c.b16 %v676, %v668
  %v1149 = vpack.c.b16 %v677, %v669
  %v1150 = vpack.c.b16 %v678, %v670
  %v1151 = vpack.c.b16 %v679, %v671
  %v1152 = vpack.c.b16 %v680, %v672
  %v1153 = vpack.c.b16 %v681, %v673
  %v1154 = vpack.c.b16 %v682, %v674
  %v1155 = vpack.c.b16 %v683, %v675
  %v1156 = vpack.c.b16 %v692, %v684
  %v1157 = vpack.c.b16 %v693, %v685
  %v1158 = vpack.c.b16 %v694, %v686
  %v1159 = vpack.c.b16 %v695, %v687
  %v1160 = vpack.c.b16 %v696, %v688
  %v1161 = vpack.c.b16 %v697, %v689
  %v1162 = vpack.c.b16 %v698, %v690
  %v1163 = vpack.c.b16 %v699, %v691
  %v1164 = vpack.c.b16 %v708, %v700
  %v1165 = vpack.c.b16 %v709, %v701
  %v1166 = vpack.c.b16 %v710, %v702
  %v1167 = vpack.c.b16 %v711, %v703
  %v1168 = vpack.c.b16 %v712, %v704
  %v1169 = vpack.c.b16 %v713, %v705
  %v1170 = vpack.c.b16 %v714, %v706
  %v1171 = vpack.c.b16 %v715, %v707
  %v1172 = vpack.c.b16 %v724, %v716
  %v1173 = vpack.c.b16 %v725, %v717
  %v1174 = vpack.c.b16 %v726, %v718
  %v1175 = vpack.c.b16 %v727, %v719
  %v1176 = vpack.c.b16 %v728, %v720
  %v1177 = vpack.c.b16 %v729, %v721
  %v1178 = vpack.c.b16 %v730, %v722
  %v1179 = vpack.c.b16 %v731, %v723
  %v1180 = vpack.c.b16 %v740, %v732
  %v1181 = vpack.c.b16 %v741, %v733
  %v1182 = vpack.c.b16 %v742, %v734
  %v1183 = vpack.c.b16 %v743, %v735
  %v1184 = vpack.c.b16 %v744, %v736
  %v1185 = vpack.c.b16 %v745, %v737
  %v1186 = vpack.c.b16 %v746, %v738
  %v1187 = vpack.c.b16 %v747, %v739
  %v1188 = vpack.c.b16 %v756, %v748
  %v1189 = vpack.c.b16 %v757, %v749
  %v1190 = vpack.c.b16 %v758, %v750
  %v1191 = vpack.c.b16 %v759, %v751
  %v1192 = vpack.c.b16 %v760, %v752
  %v1193 = vpack.c.b16 %v761, %v753
  %v1194 = vpack.c.b16 %v762, %v754
  %v1195 = vpack.c.b16 %v763, %v755
  %v1196 = vpack.c.b16 %v772, %v764
  %v1197 = vpack.c.b16 %v773, %v765
  %v1198 = vpack.c.b16 %v774, %v766
  %v1199 = vpack.c.b16 %v775, %v767
  %v1200 = vpack.c.b16 %v776, %v768
  %v1201 = vpack.c.b16 %v777, %v769
  %v1202 = vpack.c.b16 %v778, %v770
  %v1203 = vpack.c.b16 %v779, %v771
  %v1204 = vpack.c.b16 %v788, %v780
  %v1205 = vpack.c.b16 %v789, %v781
  %v1206 = vpack.c.b16 %v790, %v782
  %v1207 = vpack.c.b16 %v791, %v783
  %v1208 = vpack.c.b16 %v792, %v784
  %v1209 = vpack.c.b16 %v793, %v785
  %v1210 = vpack.c.b16 %v794, %v786
  %v1211 = vpack.c.b16 %v795, %v787
  %v1212 = vpack.c.b16 %v804, %v796
  %v1213 = vpack.c.b16 %v805, %v797
  %v1214 = vpack.c.b16 %v806, %v798
  %v1215 = vpack.c.b16 %v807, %v799
  %v1216 = vpack.c.b16 %v808, %v800
  %v1217 = vpack.c.b16 %v809, %v801
  %v1218 = vpack.c.b16 %v810, %v802
  %v1219 = vpack.c.b16 %v811, %v803
  %v1220 = vpack.c.b16 %v820, %v812
  %v1221 = vpack.c.b16 %v821, %v813
  %v1222 = vpack.c.b16 %v822, %v814
  %v1223 = vpack.c.b16 %v823, %v815
  %v1224 = vpack.c.b16 %v824, %v816
  %v1225 = vpack.c.b16 %v825, %v817
  %v1226 = vpack.c.b16 %v826, %v818
  %v1227 = vpack.c.b16 %v827, %v819
  %v1228 = vpack.c.b16 %v836, %v828
  %v1229 = vpack.c.b16 %v837, %v829
  %v1230 = vpack.c.b16 %v838, %v830
  %v1231 = vpack.c.b16 %v839, %v831
  %v1232 = vpack.c.b16 %v840, %v832
  %v1233 = vpack.c.b16 %v841, %v833
  %v1234 = vpack.c.b16 %v842, %v834
  %v1235 = vpack.c.b16 %v843, %v835
  %v1236 = vpack.c.b16 %v852, %v844
  %v1237 = vpack.c.b16 %v853, %v845
  %v1238 = vpack.c.b16 %v854, %v846
  %v1239 = vpack.c.b16 %v855, %v847
  %v1240 = vpack.c.b16 %v856, %v848
  %v1241 = vpack.c.b16 %v857, %v849
  %v1242 = vpack.c.b16 %v858, %v850
  %v1243 = vpack.c.b16 %v859, %v851
  %v1244 = vpack.c.b16 %v868, %v860
  %v1245 = vpack.c.b16 %v869, %v861
  %v1246 = vpack.c.b16 %v870, %v862
  %v1247 = vpack.c.b16 %v871, %v863
  %v1248 = vpack.c.b16 %v872, %v864
  %v1249 = vpack.c.b16 %v873, %v865
  %v1250 = vpack.c.b16 %v874, %v866
  %v1251 = vpack.c.b16 %v875, %v867
  %v1252 = vpack.c.b16 %v884, %v876
  %v1253 = vpack.c.b16 %v885, %v877
  %v1254 = vpack.c.b16 %v886, %v878
  %v1255 = vpack.c.b16 %v887, %v879
  %v1256 = vpack.c.b16 %v888, %v880
  %v1257 = vpack.c.b16 %v889, %v881
  %v1258 = vpack.c.b16 %v890, %v882
  %v1259 = vpack.c.b16 %v891, %v883
  %v1260 = vpack.c.b16 %v900, %v892
  %v1261 = vpack.c.b16 %v901, %v893
  %v1262 = vpack.c.b16 %v902, %v894
  %v1263 = vpack.c.b16 %v903, %v895
  %v1264 = vpack.c.b16 %v904, %v896
  %v1265 = vpack.c.b16 %v905, %v897
  %v1266 = vpack.c.b16 %v906, %v898
  %v1267 = vpack.c.b16 %v907, %v899
  %v1268 = vpack.c.b16 %v916, %v908
  %v1269 = vpack.c.b16 %v917, %v909
  %v1270 = vpack.c.b16 %v918, %v910
  %v1271 = vpack.c.b16 %v919, %v911
  %v1272 = vpack.c.b16 %v920, %v912
  %v1273 = vpack.c.b16 %v921, %v913
  %v1274 = vpack.c.b16 %v922, %v914
  %v1275 = vpack.c.b16 %v923, %v915
  %v1276 = vpack.c.b16 %v932, %v924
  %v1277 = vpack.c.b16 %v933, %v925
  %v1278 = vpack.c.b16 %v934, %v926
  %v1279 = vpack.c.b16 %v935, %v927
  %v1280 = vpack.c.b16 %v936, %v928
  %v1281 = vpack.c.b16 %v937, %v929
  %v1282 = vpack.c.b16 %v938, %v930
  %v1283 = vpack.c.b16 %v939, %v931
  %v1284 = vpack.c.b16 %v948, %v940
  %v1285 = vpack.c.b16 %v949, %v941
  %v1286 = vpack.c.b16 %v950, %v942
  %v1287 = vpack.c.b16 %v951, %v943
  %v1288 = vpack.c.b16 %v952, %v944
  %v1289 = vpack.c.b16 %v953, %v945
  %v1290 = vpack.c.b16 %v954, %v946
  %v1291 = vpack.c.b16 %v955, %v947
  %v1292 = vpack.c.b16 %v964, %v956
  %v1293 = vpack.c.b16 %v965, %v957
  %v1294 = vpack.c.b16 %v966, %v958
  %v1295 = vpack.c.b16 %v967, %v959
  %v1296 = vpack.c.b16 %v968, %v960
  %v1297 = vpack.c.b16 %v969, %v961
  %v1298 = vpack.c.b16 %v970, %v962
  %v1299 = vpack.c.b16 %v971, %v963
  %v1300 = vpack.c.b16 %v980, %v972
  %v1301 = vpack.c.b16 %v981, %v973
  %v1302 = vpack.c.b16 %v982, %v974
  %v1303 = vpack.c.b16 %v983, %v975
  %v1304 = vpack.c.b16 %v984, %v976
  %v1305 = vpack.c.b16 %v985, %v977
  %v1306 = vpack.c.b16 %v986, %v978
  %v1307 = vpack.c.b16 %v987, %v979
  %v1308 = vpack.c.b16 %v996, %v988
  %v1309 = vpack.c.b16 %v997, %v989
  %v1310 = vpack.c.b16 %v998, %v990
  %v1311 = vpack.c.b16 %v999, %v991
  %v1312 = vpack.c.b16 %v1000, %v992
  %v1313 = vpack.c.b16 %v1001, %v993
  %v1314 = vpack.c.b16 %v1002, %v994
  %v1315 = vpack.c.b16 %v1003, %v995
  %v1316 = vpack.c.b16 %v1012, %v1004
  %v1317 = vpack.c.b16 %v1013, %v1005
  %v1318 = vpack.c.b16 %v1014, %v1006
  %v1319 = vpack.c.b16 %v1015, %v1007
  %v1320 = vpack.c.b16 %v1016, %v1008
  %v1321 = vpack.c.b16 %v1017, %v1009
  %v1322 = vpack.c.b16 %v1018, %v1010
  %v1323 = vpack.c.b16 %v1019, %v1011
  %v1324 = vpack.c.b16 %v1028, %v1020
  %v1325 = vpack.c.b16 %v1029, %v1021
  %v1326 = vpack.c.b16 %v1030, %v1022
  %v1327 = vpack.c.b16 %v1031, %v1023
  %v1328 = vpack.c.b16 %v1032, %v1024
  %v1329 = vpack.c.b16 %v1033, %v1025
  %v1330 = vpack.c.b16 %v1034, %v1026
  %v1331 = vpack.c.b16 %v1035, %v1027
  %v1332 = vpack.c.b16 %v1044, %v1036
  %v1333 = vpack.c.b16 %v1045, %v1037
  %v1334 = vpack.c.b16 %v1046, %v1038
  %v1335 = vpack.c.b16 %v1047, %v1039
  %v1336 = vpack.c.b16 %v1048, %v1040
  %v1337 = vpack.c.b16 %v1049, %v1041
  %v1338 = vpack.c.b16 %v1050, %v1042
  %v1339 = vpack.c.b16 %v1051, %v1043
  %v1340 = vpack.c.b16 %v1060, %v1052
  %v1341 = vpack.c.b16 %v1061, %v1053
  %v1342 = vpack.c.b16 %v1062, %v1054
  %v1343 = vpack.c.b16 %v1063, %v1055
  %v1344 = vpack.c.b16 %v1064, %v1056
  %v1345 = vpack.c.b16 %v1065, %v1057
  %v1346 = vpack.c.b16 %v1066, %v1058
  %v1347 = vpack.c.b16 %v1067, %v1059
  %v1348 = vpack.c.b16 %v1076, %v1068
  %v1349 = vpack.c.b16 %v1077, %v1069
  %v1350 = vpack.c.b16 %v1078, %v1070
  %v1351 = vpack.c.b16 %v1079, %v1071
  %v1352 = vpack.c.b16 %v1080, %v1072
  %v1353 = vpack.c.b16 %v1081, %v1073
  %v1354 = vpack.c.b16 %v1082, %v1074
  %v1355 = vpack.c.b16 %v1083, %v1075
  %v1356 = vpack.c.b16 %v1092, %v1084
  %v1357 = vpack.c.b16 %v1093, %v1085
  %v1358 = vpack.c.b16 %v1094, %v1086
  %v1359 = vpack.c.b16 %v1095, %v1087
  %v1360 = vpack.c.b16 %v1096, %v1088
  %v1361 = vpack.c.b16 %v1097, %v1089
  %v1362 = vpack.c.b16 %v1098, %v1090
  %v1363 = vpack.c.b16 %v1099, %v1091
  %v1364 = vpack.c.b16 %v1108, %v1100
  %v1365 = vpack.c.b16 %v1109, %v1101
  %v1366 = vpack.c.b16 %v1110, %v1102
  %v1367 = vpack.c.b16 %v1111, %v1103
  %v1368 = vpack.c.b16 %v1112, %v1104
  %v1369 = vpack.c.b16 %v1113, %v1105
  %v1370 = vpack.c.b16 %v1114, %v1106
  %v1371 = vpack.c.b16 %v1115, %v1107
  %1628 = vmatprep.subr.bf16.mxu0 %v1117
  %1629 = vmatpush1.bf16.msra.mxu0 %v1116
  %1630 = vmatprep.subr.bf16.mxu0 %v1125
  %1631 = vmatpush1.bf16.msra.mxu0 %v1124
  %1632 = vmatprep.subr.bf16.mxu0 %v1133
  %1633 = vmatpush1.bf16.msra.mxu0 %v1132
  %1634 = vmatprep.subr.bf16.mxu0 %v1141
  %1635 = vmatpush1.bf16.msra.mxu0 %v1140
  %1636 = vmatprep.subr.bf16.mxu0 %v1149
  %1637 = vmatpush1.bf16.msra.mxu0 %v1148
  %1638 = vmatprep.subr.bf16.mxu0 %v1157
  %1639 = vmatpush1.bf16.msra.mxu0 %v1156
  %1640 = vmatprep.subr.bf16.mxu0 %v1165
  %1641 = vmatpush1.bf16.msra.mxu0 %v1164
  %1642 = vmatprep.subr.bf16.mxu0 %v1173
  %1643 = vmatpush1.bf16.msra.mxu0 %v1172
  %1644 = vmatprep.subr.bf16.mxu0 %v1181
  %1645 = vmatpush1.bf16.msra.mxu0 %v1180
  %1646 = vmatprep.subr.bf16.mxu0 %v1189
  %1647 = vmatpush1.bf16.msra.mxu0 %v1188
  %1648 = vmatprep.subr.bf16.mxu0 %v1197
  %1649 = vmatpush1.bf16.msra.mxu0 %v1196
  %1650 = vmatprep.subr.bf16.mxu0 %v1205
  %1651 = vmatpush1.bf16.msra.mxu0 %v1204
  %1652 = vmatprep.subr.bf16.mxu0 %v1213
  %1653 = vmatpush1.bf16.msra.mxu0 %v1212
  %1654 = vmatprep.subr.bf16.mxu0 %v1221
  %1655 = vmatpush1.bf16.msra.mxu0 %v1220
  %1656 = vmatprep.subr.bf16.mxu0 %v1229
  %1657 = vmatpush1.bf16.msra.mxu0 %v1228
  %1658 = vmatprep.subr.bf16.mxu0 %v1237
  %1659 = vmatpush1.bf16.msra.mxu0 %v1236
  %1660 = vmatprep.mubr.bf16.mxu0 %v48
  %1661 = vmatmul.mubr.bf16.gmra.mrb[0].mxu0 %v47
  %v1662 = vpop.f32.mrb[0].mxu0
  %v1663 = vadd.f32 %v311, %v1662
  %v1664 = vpop.f32.mrb[0].mxu0
  %v1665 = vadd.f32 %v315, %v1664
  %v1666 = vpop.f32.mrb[0].mxu0
  %v1667 = vpop.f32.mrb[0].mxu0
  %1668 = vdwg.mxu0
  %1669 = vmatprep.subr.bf16.mxu0 %v1245
  %1670 = vmatpush1.bf16.msra.mxu0 %v1244
  %1671 = vmatprep.subr.bf16.mxu0 %v1253
  %1672 = vmatpush1.bf16.msra.mxu0 %v1252
  %1673 = vmatprep.subr.bf16.mxu0 %v1261
  %1674 = vmatpush1.bf16.msra.mxu0 %v1260
  %1675 = vmatprep.subr.bf16.mxu0 %v1269
  %1676 = vmatpush1.bf16.msra.mxu0 %v1268
  %1677 = vmatprep.subr.bf16.mxu0 %v1277
  %1678 = vmatpush1.bf16.msra.mxu0 %v1276
  %1679 = vmatprep.subr.bf16.mxu0 %v1285
  %1680 = vmatpush1.bf16.msra.mxu0 %v1284
  %1681 = vmatprep.subr.bf16.mxu0 %v1293
  %1682 = vmatpush1.bf16.msra.mxu0 %v1292
  %1683 = vmatprep.subr.bf16.mxu0 %v1301
  %1684 = vmatpush1.bf16.msra.mxu0 %v1300
  %1685 = vmatprep.subr.bf16.mxu0 %v1309
  %1686 = vmatpush1.bf16.msra.mxu0 %v1308
  %1687 = vmatprep.subr.bf16.mxu0 %v1317
  %1688 = vmatpush1.bf16.msra.mxu0 %v1316
  %1689 = vmatprep.subr.bf16.mxu0 %v1325
  %1690 = vmatpush1.bf16.msra.mxu0 %v1324
  %1691 = vmatprep.subr.bf16.mxu0 %v1333
  %1692 = vmatpush1.bf16.msra.mxu0 %v1332
  %1693 = vmatprep.subr.bf16.mxu0 %v1341
  %1694 = vmatpush1.bf16.msra.mxu0 %v1340
  %1695 = vmatprep.subr.bf16.mxu0 %v1349
  %1696 = vmatpush1.bf16.msra.mxu0 %v1348
  %1697 = vmatprep.subr.bf16.mxu0 %v1357
  %1698 = vmatpush1.bf16.msra.mxu0 %v1356
  %1699 = vmatprep.subr.bf16.mxu0 %v1365
  %1700 = vmatpush1.bf16.msra.mxu0 %v1364
  %1701 = vmatprep.mubr.bf16.mxu0 %v50
  %1702 = vmatmul.mubr.bf16.gmra.mrb[0].mxu0 %v49
  %v1703 = vpop.f32.mrb[0].mxu0
  %v1704 = vadd.f32 %v1663, %v1703
  %v1705 = vpop.f32.mrb[0].mxu0
  %v1706 = vadd.f32 %v1665, %v1705
  %v1707 = vpop.f32.mrb[0].mxu0
  %v1708 = vpop.f32.mrb[0].mxu0
  %1709 = vdwg.mxu0
  %1710 = vmatprep.subr.bf16.mxu0 %v1119
  %1711 = vmatpush1.bf16.msra.mxu0 %v1118
  %1712 = vmatprep.subr.bf16.mxu0 %v1127
  %1713 = vmatpush1.bf16.msra.mxu0 %v1126
  %1714 = vmatprep.subr.bf16.mxu0 %v1135
  %1715 = vmatpush1.bf16.msra.mxu0 %v1134
  %1716 = vmatprep.subr.bf16.mxu0 %v1143
  %1717 = vmatpush1.bf16.msra.mxu0 %v1142
  %1718 = vmatprep.subr.bf16.mxu0 %v1151
  %1719 = vmatpush1.bf16.msra.mxu0 %v1150
  %1720 = vmatprep.subr.bf16.mxu0 %v1159
  %1721 = vmatpush1.bf16.msra.mxu0 %v1158
  %1722 = vmatprep.subr.bf16.mxu0 %v1167
  %1723 = vmatpush1.bf16.msra.mxu0 %v1166
  %1724 = vmatprep.subr.bf16.mxu0 %v1175
  %1725 = vmatpush1.bf16.msra.mxu0 %v1174
  %1726 = vmatprep.subr.bf16.mxu0 %v1183
  %1727 = vmatpush1.bf16.msra.mxu0 %v1182
  %1728 = vmatprep.subr.bf16.mxu0 %v1191
  %1729 = vmatpush1.bf16.msra.mxu0 %v1190
  %1730 = vmatprep.subr.bf16.mxu0 %v1199
  %1731 = vmatpush1.bf16.msra.mxu0 %v1198
  %1732 = vmatprep.subr.bf16.mxu0 %v1207
  %1733 = vmatpush1.bf16.msra.mxu0 %v1206
  %1734 = vmatprep.subr.bf16.mxu0 %v1215
  %1735 = vmatpush1.bf16.msra.mxu0 %v1214
  %1736 = vmatprep.subr.bf16.mxu0 %v1223
  %1737 = vmatpush1.bf16.msra.mxu0 %v1222
  %1738 = vmatprep.subr.bf16.mxu0 %v1231
  %1739 = vmatpush1.bf16.msra.mxu0 %v1230
  %1740 = vmatprep.subr.bf16.mxu0 %v1239
  %1741 = vmatpush1.bf16.msra.mxu0 %v1238
  %1742 = vmatprep.mubr.bf16.mxu0 %v48
  %1743 = vmatmul.mubr.bf16.gmra.mrb[0].mxu0 %v47
  %v1744 = vpop.f32.mrb[0].mxu0
  %v1745 = vadd.f32 %v319, %v1744
  %v1746 = vpop.f32.mrb[0].mxu0
  %v1747 = vadd.f32 %v323, %v1746
  %v1748 = vpop.f32.mrb[0].mxu0
  %v1749 = vpop.f32.mrb[0].mxu0
  %1750 = vdwg.mxu0
  %1751 = vmatprep.subr.bf16.mxu0 %v1247
  %1752 = vmatpush1.bf16.msra.mxu0 %v1246
  %1753 = vmatprep.subr.bf16.mxu0 %v1255
  %1754 = vmatpush1.bf16.msra.mxu0 %v1254
  %1755 = vmatprep.subr.bf16.mxu0 %v1263
  %1756 = vmatpush1.bf16.msra.mxu0 %v1262
  %1757 = vmatprep.subr.bf16.mxu0 %v1271
  %1758 = vmatpush1.bf16.msra.mxu0 %v1270
  %1759 = vmatprep.subr.bf16.mxu0 %v1279
  %1760 = vmatpush1.bf16.msra.mxu0 %v1278
  %1761 = vmatprep.subr.bf16.mxu0 %v1287
  %1762 = vmatpush1.bf16.msra.mxu0 %v1286
  %1763 = vmatprep.subr.bf16.mxu0 %v1295
  %1764 = vmatpush1.bf16.msra.mxu0 %v1294
  %1765 = vmatprep.subr.bf16.mxu0 %v1303
  %1766 = vmatpush1.bf16.msra.mxu0 %v1302
  %1767 = vmatprep.subr.bf16.mxu0 %v1311
  %1768 = vmatpush1.bf16.msra.mxu0 %v1310
  %1769 = vmatprep.subr.bf16.mxu0 %v1319
  %1770 = vmatpush1.bf16.msra.mxu0 %v1318
  %1771 = vmatprep.subr.bf16.mxu0 %v1327
  %1772 = vmatpush1.bf16.msra.mxu0 %v1326
  %1773 = vmatprep.subr.bf16.mxu0 %v1335
  %1774 = vmatpush1.bf16.msra.mxu0 %v1334
  %1775 = vmatprep.subr.bf16.mxu0 %v1343
  %1776 = vmatpush1.bf16.msra.mxu0 %v1342
  %1777 = vmatprep.subr.bf16.mxu0 %v1351
  %1778 = vmatpush1.bf16.msra.mxu0 %v1350
  %1779 = vmatprep.subr.bf16.mxu0 %v1359
  %1780 = vmatpush1.bf16.msra.mxu0 %v1358
  %1781 = vmatprep.subr.bf16.mxu0 %v1367
  %1782 = vmatpush1.bf16.msra.mxu0 %v1366
  %1783 = vmatprep.mubr.bf16.mxu0 %v50
  %1784 = vmatmul.mubr.bf16.gmra.mrb[0].mxu0 %v49
  %v1785 = vpop.f32.mrb[0].mxu0
  %v1786 = vadd.f32 %v1745, %v1785
  %v1787 = vpop.f32.mrb[0].mxu0
  %v1788 = vadd.f32 %v1747, %v1787
  %v1789 = vpop.f32.mrb[0].mxu0
  %v1790 = vpop.f32.mrb[0].mxu0
  %1791 = vdwg.mxu0
  %1792 = vmatprep.subr.bf16.mxu0 %v1121
  %1793 = vmatpush1.bf16.msra.mxu0 %v1120
  %1794 = vmatprep.subr.bf16.mxu0 %v1129
  %1795 = vmatpush1.bf16.msra.mxu0 %v1128
  %1796 = vmatprep.subr.bf16.mxu0 %v1137
  %1797 = vmatpush1.bf16.msra.mxu0 %v1136
  %1798 = vmatprep.subr.bf16.mxu0 %v1145
  %1799 = vmatpush1.bf16.msra.mxu0 %v1144
  %1800 = vmatprep.subr.bf16.mxu0 %v1153
  %1801 = vmatpush1.bf16.msra.mxu0 %v1152
  %1802 = vmatprep.subr.bf16.mxu0 %v1161
  %1803 = vmatpush1.bf16.msra.mxu0 %v1160
  %1804 = vmatprep.subr.bf16.mxu0 %v1169
  %1805 = vmatpush1.bf16.msra.mxu0 %v1168
  %1806 = vmatprep.subr.bf16.mxu0 %v1177
  %1807 = vmatpush1.bf16.msra.mxu0 %v1176
  %1808 = vmatprep.subr.bf16.mxu0 %v1185
  %1809 = vmatpush1.bf16.msra.mxu0 %v1184
  %1810 = vmatprep.subr.bf16.mxu0 %v1193
  %1811 = vmatpush1.bf16.msra.mxu0 %v1192
  %1812 = vmatprep.subr.bf16.mxu0 %v1201
  %1813 = vmatpush1.bf16.msra.mxu0 %v1200
  %1814 = vmatprep.subr.bf16.mxu0 %v1209
  %1815 = vmatpush1.bf16.msra.mxu0 %v1208
  %1816 = vmatprep.subr.bf16.mxu0 %v1217
  %1817 = vmatpush1.bf16.msra.mxu0 %v1216
  %1818 = vmatprep.subr.bf16.mxu0 %v1225
  %1819 = vmatpush1.bf16.msra.mxu0 %v1224
  %1820 = vmatprep.subr.bf16.mxu0 %v1233
  %1821 = vmatpush1.bf16.msra.mxu0 %v1232
  %1822 = vmatprep.subr.bf16.mxu0 %v1241
  %1823 = vmatpush1.bf16.msra.mxu0 %v1240
  %1824 = vmatprep.mubr.bf16.mxu0 %v48
  %1825 = vmatmul.mubr.bf16.gmra.mrb[0].mxu0 %v47
  %v1826 = vpop.f32.mrb[0].mxu0
  %v1827 = vadd.f32 %v327, %v1826
  %v1828 = vpop.f32.mrb[0].mxu0
  %v1829 = vadd.f32 %v331, %v1828
  %v1830 = vpop.f32.mrb[0].mxu0
  %v1831 = vpop.f32.mrb[0].mxu0
  %1832 = vdwg.mxu0
  %1833 = vmatprep.subr.bf16.mxu0 %v1249
  %1834 = vmatpush1.bf16.msra.mxu0 %v1248
  %1835 = vmatprep.subr.bf16.mxu0 %v1257
  %1836 = vmatpush1.bf16.msra.mxu0 %v1256
  %1837 = vmatprep.subr.bf16.mxu0 %v1265
  %1838 = vmatpush1.bf16.msra.mxu0 %v1264
  %1839 = vmatprep.subr.bf16.mxu0 %v1273
  %1840 = vmatpush1.bf16.msra.mxu0 %v1272
  %1841 = vmatprep.subr.bf16.mxu0 %v1281
  %1842 = vmatpush1.bf16.msra.mxu0 %v1280
  %1843 = vmatprep.subr.bf16.mxu0 %v1289
  %1844 = vmatpush1.bf16.msra.mxu0 %v1288
  %1845 = vmatprep.subr.bf16.mxu0 %v1297
  %1846 = vmatpush1.bf16.msra.mxu0 %v1296
  %1847 = vmatprep.subr.bf16.mxu0 %v1305
  %1848 = vmatpush1.bf16.msra.mxu0 %v1304
  %1849 = vmatprep.subr.bf16.mxu0 %v1313
  %1850 = vmatpush1.bf16.msra.mxu0 %v1312
  %1851 = vmatprep.subr.bf16.mxu0 %v1321
  %1852 = vmatpush1.bf16.msra.mxu0 %v1320
  %1853 = vmatprep.subr.bf16.mxu0 %v1329
  %1854 = vmatpush1.bf16.msra.mxu0 %v1328
  %1855 = vmatprep.subr.bf16.mxu0 %v1337
  %1856 = vmatpush1.bf16.msra.mxu0 %v1336
  %1857 = vmatprep.subr.bf16.mxu0 %v1345
  %1858 = vmatpush1.bf16.msra.mxu0 %v1344
  %1859 = vmatprep.subr.bf16.mxu0 %v1353
  %1860 = vmatpush1.bf16.msra.mxu0 %v1352
  %1861 = vmatprep.subr.bf16.mxu0 %v1361
  %1862 = vmatpush1.bf16.msra.mxu0 %v1360
  %1863 = vmatprep.subr.bf16.mxu0 %v1369
  %1864 = vmatpush1.bf16.msra.mxu0 %v1368
  %1865 = vmatprep.mubr.bf16.mxu0 %v50
  %1866 = vmatmul.mubr.bf16.gmra.mrb[0].mxu0 %v49
  %v1867 = vpop.f32.mrb[0].mxu0
  %v1868 = vadd.f32 %v1827, %v1867
  %v1869 = vpop.f32.mrb[0].mxu0
  %v1870 = vadd.f32 %v1829, %v1869
  %v1871 = vpop.f32.mrb[0].mxu0
  %v1872 = vpop.f32.mrb[0].mxu0
  %1873 = vdwg.mxu0
  %1874 = vmatprep.subr.bf16.mxu0 %v1123
  %1875 = vmatpush1.bf16.msra.mxu0 %v1122
  %1876 = vmatprep.subr.bf16.mxu0 %v1131
  %1877 = vmatpush1.bf16.msra.mxu0 %v1130
  %1878 = vmatprep.subr.bf16.mxu0 %v1139
  %1879 = vmatpush1.bf16.msra.mxu0 %v1138
  %1880 = vmatprep.subr.bf16.mxu0 %v1147
  %1881 = vmatpush1.bf16.msra.mxu0 %v1146
  %1882 = vmatprep.subr.bf16.mxu0 %v1155
  %1883 = vmatpush1.bf16.msra.mxu0 %v1154
  %1884 = vmatprep.subr.bf16.mxu0 %v1163
  %1885 = vmatpush1.bf16.msra.mxu0 %v1162
  %1886 = vmatprep.subr.bf16.mxu0 %v1171
  %1887 = vmatpush1.bf16.msra.mxu0 %v1170
  %1888 = vmatprep.subr.bf16.mxu0 %v1179
  %1889 = vmatpush1.bf16.msra.mxu0 %v1178
  %1890 = vmatprep.subr.bf16.mxu0 %v1187
  %1891 = vmatpush1.bf16.msra.mxu0 %v1186
  %1892 = vmatprep.subr.bf16.mxu0 %v1195
  %1893 = vmatpush1.bf16.msra.mxu0 %v1194
  %1894 = vmatprep.subr.bf16.mxu0 %v1203
  %1895 = vmatpush1.bf16.msra.mxu0 %v1202
  %1896 = vmatprep.subr.bf16.mxu0 %v1211
  %1897 = vmatpush1.bf16.msra.mxu0 %v1210
  %1898 = vmatprep.subr.bf16.mxu0 %v1219
  %1899 = vmatpush1.bf16.msra.mxu0 %v1218
  %1900 = vmatprep.subr.bf16.mxu0 %v1227
  %1901 = vmatpush1.bf16.msra.mxu0 %v1226
  %1902 = vmatprep.subr.bf16.mxu0 %v1235
  %1903 = vmatpush1.bf16.msra.mxu0 %v1234
  %1904 = vmatprep.subr.bf16.mxu0 %v1243
  %1905 = vmatpush1.bf16.msra.mxu0 %v1242
  %1906 = vmatprep.mubr.bf16.mxu0 %v48
  %1907 = vmatmul.mubr.bf16.gmra.mrb[0].mxu0 %v47
  %v1908 = vpop.f32.mrb[0].mxu0
  %v1909 = vadd.f32 %v335, %v1908
  %v1910 = vpop.f32.mrb[0].mxu0
  %v1911 = vadd.f32 %v339, %v1910
  %v1912 = vpop.f32.mrb[0].mxu0
  %v1913 = vpop.f32.mrb[0].mxu0
  %1914 = vdwg.mxu0
  %1915 = vmatprep.subr.bf16.mxu0 %v1251
  %1916 = vmatpush1.bf16.msra.mxu0 %v1250
  %1917 = vmatprep.subr.bf16.mxu0 %v1259
  %1918 = vmatpush1.bf16.msra.mxu0 %v1258
  %1919 = vmatprep.subr.bf16.mxu0 %v1267
  %1920 = vmatpush1.bf16.msra.mxu0 %v1266
  %1921 = vmatprep.subr.bf16.mxu0 %v1275
  %1922 = vmatpush1.bf16.msra.mxu0 %v1274
  %1923 = vmatprep.subr.bf16.mxu0 %v1283
  %1924 = vmatpush1.bf16.msra.mxu0 %v1282
  %1925 = vmatprep.subr.bf16.mxu0 %v1291
  %1926 = vmatpush1.bf16.msra.mxu0 %v1290
  %1927 = vmatprep.subr.bf16.mxu0 %v1299
  %1928 = vmatpush1.bf16.msra.mxu0 %v1298
  %1929 = vmatprep.subr.bf16.mxu0 %v1307
  %1930 = vmatpush1.bf16.msra.mxu0 %v1306
  %1931 = vmatprep.subr.bf16.mxu0 %v1315
  %1932 = vmatpush1.bf16.msra.mxu0 %v1314
  %1933 = vmatprep.subr.bf16.mxu0 %v1323
  %1934 = vmatpush1.bf16.msra.mxu0 %v1322
  %1935 = vmatprep.subr.bf16.mxu0 %v1331
  %1936 = vmatpush1.bf16.msra.mxu0 %v1330
  %1937 = vmatprep.subr.bf16.mxu0 %v1339
  %1938 = vmatpush1.bf16.msra.mxu0 %v1338
  %1939 = vmatprep.subr.bf16.mxu0 %v1347
  %1940 = vmatpush1.bf16.msra.mxu0 %v1346
  %1941 = vmatprep.subr.bf16.mxu0 %v1355
  %1942 = vmatpush1.bf16.msra.mxu0 %v1354
  %1943 = vmatprep.subr.bf16.mxu0 %v1363
  %1944 = vmatpush1.bf16.msra.mxu0 %v1362
  %1945 = vmatprep.subr.bf16.mxu0 %v1371
  %1946 = vmatpush1.bf16.msra.mxu0 %v1370
  %1947 = vmatprep.mubr.bf16.mxu0 %v50
  %1948 = vmatmul.mubr.bf16.gmra.mrb[0].mxu0 %v49
  %v1949 = vpop.f32.mrb[0].mxu0
  %v1950 = vadd.f32 %v1909, %v1949
  %v1951 = vpop.f32.mrb[0].mxu0
  %v1952 = vadd.f32 %v1911, %v1951
  %v1953 = vpop.f32.mrb[0].mxu0
  %v1954 = vpop.f32.mrb[0].mxu0
  %1955 = vdwg.mxu0
  %v1960 = vcombine.low %v1704, %v1706
  %v1961 = vcombine.low %v1786, %v1788
  %v1963 = vunpack.c.l.s4 1983009808
  %v1964 = vunpack.c.0.s8 %v1963
  %v1965 = vlaneseq
  %v1966 = vshrl.u32 %v1965, 7
  %v1967 = vsub.s32 %v1964, %v1966
  %v1968 = vrot.slane %v1960, %v1967
  %v1970 = vunpack.c.l.s4 1983009808
  %v1971 = vunpack.c.0.s8 %v1970
  %v1972 = vlaneseq
  %v1973 = vshrl.u32 %v1972, 7
  %v1974 = vsub.s32 %v1971, %v1973
  %v1975 = vrot.slane %v1961, %v1974
  %v1976 = vcombine.low %v1968, %v1975
  %v1978 = vadd.f32 %v22, %v1976
  %v1979 = vmul.f32 %v1978, 0.5
  %v1980 = vtanh.pop %v1979
  %v1981 = vadd.f32 %v1980, 1.0
  %v1982 = vmul.f32 %v1981, 0.5
  %v1987 = vcombine.low %v1868, %v1870
  %v1988 = vcombine.low %v1950, %v1952
  %v1990 = vunpack.c.l.s4 1983009808
  %v1991 = vunpack.c.0.s8 %v1990
  %v1992 = vlaneseq
  %v1993 = vshrl.u32 %v1992, 7
  %v1994 = vsub.s32 %v1991, %v1993
  %v1995 = vrot.slane %v1987, %v1994
  %v1997 = vunpack.c.l.s4 1983009808
  %v1998 = vunpack.c.0.s8 %v1997
  %v1999 = vlaneseq
  %v2000 = vshrl.u32 %v1999, 7
  %v2001 = vsub.s32 %v1998, %v2000
  %v2002 = vrot.slane %v1988, %v2001
  %v2003 = vcombine.low %v1995, %v2002
  %v2005 = vadd.f32 %v23, %v2003
  %v2006 = vmul.f32 %v2005, 0.5
  %v2007 = vtanh.pop %v2006
  %v2008 = vadd.f32 %v2007, 1.0
  %v2009 = vmul.f32 %v2008, 0.5
  %v2010 = vld [vmem:[%s1 + $0x20] sm:$0xff]
  %v2011 = vld [vmem:[%s1 + $0x28] sm:$0xff]
  %v2012 = vld [vmem:[%s1 + $0x50] sm:$0xff]
  %v2013 = vld [vmem:[%s1 + $0x58] sm:$0xff]
  %v2014 = vld [vmem:[%s1 + $0x80] sm:$0xff]
  %v2015 = vld [vmem:[%s1 + $0x88] sm:$0xff]
  %v2016 = vld [vmem:[%s1 + $0xb0] sm:$0xff]
  %v2017 = vld [vmem:[%s1 + $0xb8] sm:$0xff]
  %v2018 = vld [vmem:[%s1 + $0xe0] sm:$0xff]
  %v2019 = vld [vmem:[%s1 + $0xe8] sm:$0xff]
  %v2020 = vld [vmem:[%s1 + $0x110] sm:$0xff]
  %v2021 = vld [vmem:[%s1 + $0x118] sm:$0xff]
  %v2022 = vld [vmem:[%s1 + $0x140] sm:$0xff]
  %v2023 = vld [vmem:[%s1 + $0x148] sm:$0xff]
  %v2024 = vld [vmem:[%s1 + $0x170] sm:$0xff]
  %v2025 = vld [vmem:[%s1 + $0x178] sm:$0xff]
  %v2026 = vld [vmem:[%s1 + $0x1a0] sm:$0xff]
  %v2027 = vld [vmem:[%s1 + $0x1a8] sm:$0xff]
  %v2028 = vld [vmem:[%s1 + $0x1d0] sm:$0xff]
  %v2029 = vld [vmem:[%s1 + $0x1d8] sm:$0xff]
  %v2030 = vld [vmem:[%s1 + $0x200] sm:$0xff]
  %v2031 = vld [vmem:[%s1 + $0x208] sm:$0xff]
  %v2032 = vld [vmem:[%s1 + $0x230] sm:$0xff]
  %v2033 = vld [vmem:[%s1 + $0x238] sm:$0xff]
  %v2034 = vld [vmem:[%s1 + $0x260] sm:$0xff]
  %v2035 = vld [vmem:[%s1 + $0x268] sm:$0xff]
  %v2036 = vld [vmem:[%s1 + $0x290] sm:$0xff]
  %v2037 = vld [vmem:[%s1 + $0x298] sm:$0xff]
  %v2038 = vld [vmem:[%s1 + $0x2c0] sm:$0xff]
  %v2039 = vld [vmem:[%s1 + $0x2c8] sm:$0xff]
  %v2040 = vld [vmem:[%s1 + $0x2f0] sm:$0xff]
  %v2041 = vld [vmem:[%s1 + $0x2f8] sm:$0xff]
  %v2042 = vld [vmem:[%s1 + $0x320] sm:$0xff]
  %v2043 = vld [vmem:[%s1 + $0x328] sm:$0xff]
  %v2044 = vld [vmem:[%s1 + $0x350] sm:$0xff]
  %v2045 = vld [vmem:[%s1 + $0x358] sm:$0xff]
  %v2046 = vld [vmem:[%s1 + $0x380] sm:$0xff]
  %v2047 = vld [vmem:[%s1 + $0x388] sm:$0xff]
  %v2048 = vld [vmem:[%s1 + $0x3b0] sm:$0xff]
  %v2049 = vld [vmem:[%s1 + $0x3b8] sm:$0xff]
  %v2050 = vld [vmem:[%s1 + $0x3e0] sm:$0xff]
  %v2051 = vld [vmem:[%s1 + $0x3e8] sm:$0xff]
  %v2052 = vld [vmem:[%s1 + $0x410] sm:$0xff]
  %v2053 = vld [vmem:[%s1 + $0x418] sm:$0xff]
  %v2054 = vld [vmem:[%s1 + $0x440] sm:$0xff]
  %v2055 = vld [vmem:[%s1 + $0x448] sm:$0xff]
  %v2056 = vld [vmem:[%s1 + $0x470] sm:$0xff]
  %v2057 = vld [vmem:[%s1 + $0x478] sm:$0xff]
  %v2058 = vld [vmem:[%s1 + $0x4a0] sm:$0xff]
  %v2059 = vld [vmem:[%s1 + $0x4a8] sm:$0xff]
  %v2060 = vld [vmem:[%s1 + $0x4d0] sm:$0xff]
  %v2061 = vld [vmem:[%s1 + $0x4d8] sm:$0xff]
  %v2062 = vld [vmem:[%s1 + $0x500] sm:$0xff]
  %v2063 = vld [vmem:[%s1 + $0x508] sm:$0xff]
  %v2064 = vld [vmem:[%s1 + $0x530] sm:$0xff]
  %v2065 = vld [vmem:[%s1 + $0x538] sm:$0xff]
  %v2066 = vld [vmem:[%s1 + $0x560] sm:$0xff]
  %v2067 = vld [vmem:[%s1 + $0x568] sm:$0xff]
  %v2068 = vld [vmem:[%s1 + $0x590] sm:$0xff]
  %v2069 = vld [vmem:[%s1 + $0x598] sm:$0xff]
  %v2070 = vld [vmem:[%s1 + $0x5c0] sm:$0xff]
  %v2071 = vld [vmem:[%s1 + $0x5c8] sm:$0xff]
  %v2072 = vld [vmem:[%s1 + $0x5f0] sm:$0xff]
  %v2073 = vld [vmem:[%s1 + $0x5f8] sm:$0xff]
  %v2074 = vld [vmem:[%s1 + $0x620] sm:$0xff]
  %v2075 = vld [vmem:[%s1 + $0x628] sm:$0xff]
  %v2076 = vld [vmem:[%s1 + $0x650] sm:$0xff]
  %v2077 = vld [vmem:[%s1 + $0x658] sm:$0xff]
  %v2078 = vld [vmem:[%s1 + $0x680] sm:$0xff]
  %v2079 = vld [vmem:[%s1 + $0x688] sm:$0xff]
  %v2080 = vld [vmem:[%s1 + $0x6b0] sm:$0xff]
  %v2081 = vld [vmem:[%s1 + $0x6b8] sm:$0xff]
  %v2082 = vld [vmem:[%s1 + $0x6e0] sm:$0xff]
  %v2083 = vld [vmem:[%s1 + $0x6e8] sm:$0xff]
  %v2084 = vld [vmem:[%s1 + $0x710] sm:$0xff]
  %v2085 = vld [vmem:[%s1 + $0x718] sm:$0xff]
  %v2086 = vld [vmem:[%s1 + $0x740] sm:$0xff]
  %v2087 = vld [vmem:[%s1 + $0x748] sm:$0xff]
  %v2088 = vld [vmem:[%s1 + $0x770] sm:$0xff]
  %v2089 = vld [vmem:[%s1 + $0x778] sm:$0xff]
  %v2090 = vld [vmem:[%s1 + $0x7a0] sm:$0xff]
  %v2091 = vld [vmem:[%s1 + $0x7a8] sm:$0xff]
  %v2092 = vld [vmem:[%s1 + $0x7d0] sm:$0xff]
  %v2093 = vld [vmem:[%s1 + $0x7d8] sm:$0xff]
  %v2094 = vld [vmem:[%s1 + $0x800] sm:$0xff]
  %v2095 = vld [vmem:[%s1 + $0x808] sm:$0xff]
  %v2096 = vld [vmem:[%s1 + $0x830] sm:$0xff]
  %v2097 = vld [vmem:[%s1 + $0x838] sm:$0xff]
  %v2098 = vld [vmem:[%s1 + $0x860] sm:$0xff]
  %v2099 = vld [vmem:[%s1 + $0x868] sm:$0xff]
  %v2100 = vld [vmem:[%s1 + $0x890] sm:$0xff]
  %v2101 = vld [vmem:[%s1 + $0x898] sm:$0xff]
  %v2102 = vld [vmem:[%s1 + $0x8c0] sm:$0xff]
  %v2103 = vld [vmem:[%s1 + $0x8c8] sm:$0xff]
  %v2104 = vld [vmem:[%s1 + $0x8f0] sm:$0xff]
  %v2105 = vld [vmem:[%s1 + $0x8f8] sm:$0xff]
  %v2106 = vld [vmem:[%s1 + $0x920] sm:$0xff]
  %v2107 = vld [vmem:[%s1 + $0x928] sm:$0xff]
  %v2108 = vld [vmem:[%s1 + $0x950] sm:$0xff]
  %v2109 = vld [vmem:[%s1 + $0x958] sm:$0xff]
  %v2110 = vld [vmem:[%s1 + $0x980] sm:$0xff]
  %v2111 = vld [vmem:[%s1 + $0x988] sm:$0xff]
  %v2112 = vld [vmem:[%s1 + $0x9b0] sm:$0xff]
  %v2113 = vld [vmem:[%s1 + $0x9b8] sm:$0xff]
  %v2114 = vld [vmem:[%s1 + $0x9e0] sm:$0xff]
  %v2115 = vld [vmem:[%s1 + $0x9e8] sm:$0xff]
  %v2116 = vld [vmem:[%s1 + $0xa10] sm:$0xff]
  %v2117 = vld [vmem:[%s1 + $0xa18] sm:$0xff]
  %v2118 = vld [vmem:[%s1 + $0xa40] sm:$0xff]
  %v2119 = vld [vmem:[%s1 + $0xa48] sm:$0xff]
  %v2120 = vld [vmem:[%s1 + $0xa70] sm:$0xff]
  %v2121 = vld [vmem:[%s1 + $0xa78] sm:$0xff]
  %v2122 = vld [vmem:[%s1 + $0xaa0] sm:$0xff]
  %v2123 = vld [vmem:[%s1 + $0xaa8] sm:$0xff]
  %v2124 = vld [vmem:[%s1 + $0xad0] sm:$0xff]
  %v2125 = vld [vmem:[%s1 + $0xad8] sm:$0xff]
  %v2126 = vld [vmem:[%s1 + $0xb00] sm:$0xff]
  %v2127 = vld [vmem:[%s1 + $0xb08] sm:$0xff]
  %v2128 = vld [vmem:[%s1 + $0xb30] sm:$0xff]
  %v2129 = vld [vmem:[%s1 + $0xb38] sm:$0xff]
  %v2130 = vld [vmem:[%s1 + $0xb60] sm:$0xff]
  %v2131 = vld [vmem:[%s1 + $0xb68] sm:$0xff]
  %v2132 = vld [vmem:[%s1 + $0xb90] sm:$0xff]
  %v2133 = vld [vmem:[%s1 + $0xb98] sm:$0xff]
  %v2134 = vld [vmem:[%s1 + $0xbc0] sm:$0xff]
  %v2135 = vld [vmem:[%s1 + $0xbc8] sm:$0xff]
  %v2136 = vld [vmem:[%s1 + $0xbf0] sm:$0xff]
  %v2137 = vld [vmem:[%s1 + $0xbf8] sm:$0xff]
  %v2139 = vlaneseq
  %v2140 = vshrl.u32 %v2139, 7
  %v2141 = vsub.s32 0, %v2140
  %v2142 = vrot.slane %v20, %v2141
  %v2143 = vlaneseq
  %v2144 = vshrl.u32 %v2143, 7
  %v2145 = vsub.s32 1, %v2144
  %v2146 = vrot.slane %v20, %v2145
  %v2147 = vlaneseq
  %v2148 = vshrl.u32 %v2147, 7
  %v2149 = vsub.s32 2, %v2148
  %v2150 = vrot.slane %v20, %v2149
  %v2151 = vlaneseq
  %v2152 = vshrl.u32 %v2151, 7
  %v2153 = vsub.s32 3, %v2152
  %v2154 = vrot.slane %v20, %v2153
  %v2287 = vunpack.c.l.b16 %v2010
  %v2288 = vunpack.c.h.b16 %v2010
  %v2289 = vunpack.c.l.b16 %v2011
  %v2290 = vunpack.c.h.b16 %v2011
  %v2291 = vunpack.c.l.b16 %v2012
  %v2292 = vunpack.c.h.b16 %v2012
  %v2293 = vunpack.c.l.b16 %v2013
  %v2294 = vunpack.c.h.b16 %v2013
  %v2295 = vunpack.c.l.b16 %v2014
  %v2296 = vunpack.c.h.b16 %v2014
  %v2297 = vunpack.c.l.b16 %v2015
  %v2298 = vunpack.c.h.b16 %v2015
  %v2299 = vunpack.c.l.b16 %v2016
  %v2300 = vunpack.c.h.b16 %v2016
  %v2301 = vunpack.c.l.b16 %v2017
  %v2302 = vunpack.c.h.b16 %v2017
  %v2303 = vunpack.c.l.b16 %v2018
  %v2304 = vunpack.c.h.b16 %v2018
  %v2305 = vunpack.c.l.b16 %v2019
  %v2306 = vunpack.c.h.b16 %v2019
  %v2307 = vunpack.c.l.b16 %v2020
  %v2308 = vunpack.c.h.b16 %v2020
  %v2309 = vunpack.c.l.b16 %v2021
  %v2310 = vunpack.c.h.b16 %v2021
  %v2311 = vunpack.c.l.b16 %v2022
  %v2312 = vunpack.c.h.b16 %v2022
  %v2313 = vunpack.c.l.b16 %v2023
  %v2314 = vunpack.c.h.b16 %v2023
  %v2315 = vunpack.c.l.b16 %v2024
  %v2316 = vunpack.c.h.b16 %v2024
  %v2317 = vunpack.c.l.b16 %v2025
  %v2318 = vunpack.c.h.b16 %v2025
  %v2319 = vunpack.c.l.b16 %v2026
  %v2320 = vunpack.c.h.b16 %v2026
  %v2321 = vunpack.c.l.b16 %v2027
  %v2322 = vunpack.c.h.b16 %v2027
  %v2323 = vunpack.c.l.b16 %v2028
  %v2324 = vunpack.c.h.b16 %v2028
  %v2325 = vunpack.c.l.b16 %v2029
  %v2326 = vunpack.c.h.b16 %v2029
  %v2327 = vunpack.c.l.b16 %v2030
  %v2328 = vunpack.c.h.b16 %v2030
  %v2329 = vunpack.c.l.b16 %v2031
  %v2330 = vunpack.c.h.b16 %v2031
  %v2331 = vunpack.c.l.b16 %v2032
  %v2332 = vunpack.c.h.b16 %v2032
  %v2333 = vunpack.c.l.b16 %v2033
  %v2334 = vunpack.c.h.b16 %v2033
  %v2335 = vunpack.c.l.b16 %v2034
  %v2336 = vunpack.c.h.b16 %v2034
  %v2337 = vunpack.c.l.b16 %v2035
  %v2338 = vunpack.c.h.b16 %v2035
  %v2339 = vunpack.c.l.b16 %v2036
  %v2340 = vunpack.c.h.b16 %v2036
  %v2341 = vunpack.c.l.b16 %v2037
  %v2342 = vunpack.c.h.b16 %v2037
  %v2343 = vunpack.c.l.b16 %v2038
  %v2344 = vunpack.c.h.b16 %v2038
  %v2345 = vunpack.c.l.b16 %v2039
  %v2346 = vunpack.c.h.b16 %v2039
  %v2347 = vunpack.c.l.b16 %v2040
  %v2348 = vunpack.c.h.b16 %v2040
  %v2349 = vunpack.c.l.b16 %v2041
  %v2350 = vunpack.c.h.b16 %v2041
  %v2351 = vunpack.c.l.b16 %v2042
  %v2352 = vunpack.c.h.b16 %v2042
  %v2353 = vunpack.c.l.b16 %v2043
  %v2354 = vunpack.c.h.b16 %v2043
  %v2355 = vunpack.c.l.b16 %v2044
  %v2356 = vunpack.c.h.b16 %v2044
  %v2357 = vunpack.c.l.b16 %v2045
  %v2358 = vunpack.c.h.b16 %v2045
  %v2359 = vunpack.c.l.b16 %v2046
  %v2360 = vunpack.c.h.b16 %v2046
  %v2361 = vunpack.c.l.b16 %v2047
  %v2362 = vunpack.c.h.b16 %v2047
  %v2363 = vunpack.c.l.b16 %v2048
  %v2364 = vunpack.c.h.b16 %v2048
  %v2365 = vunpack.c.l.b16 %v2049
  %v2366 = vunpack.c.h.b16 %v2049
  %v2367 = vunpack.c.l.b16 %v2050
  %v2368 = vunpack.c.h.b16 %v2050
  %v2369 = vunpack.c.l.b16 %v2051
  %v2370 = vunpack.c.h.b16 %v2051
  %v2371 = vunpack.c.l.b16 %v2052
  %v2372 = vunpack.c.h.b16 %v2052
  %v2373 = vunpack.c.l.b16 %v2053
  %v2374 = vunpack.c.h.b16 %v2053
  %v2375 = vunpack.c.l.b16 %v2054
  %v2376 = vunpack.c.h.b16 %v2054
  %v2377 = vunpack.c.l.b16 %v2055
  %v2378 = vunpack.c.h.b16 %v2055
  %v2379 = vunpack.c.l.b16 %v2056
  %v2380 = vunpack.c.h.b16 %v2056
  %v2381 = vunpack.c.l.b16 %v2057
  %v2382 = vunpack.c.h.b16 %v2057
  %v2383 = vunpack.c.l.b16 %v2058
  %v2384 = vunpack.c.h.b16 %v2058
  %v2385 = vunpack.c.l.b16 %v2059
  %v2386 = vunpack.c.h.b16 %v2059
  %v2387 = vunpack.c.l.b16 %v2060
  %v2388 = vunpack.c.h.b16 %v2060
  %v2389 = vunpack.c.l.b16 %v2061
  %v2390 = vunpack.c.h.b16 %v2061
  %v2391 = vunpack.c.l.b16 %v2062
  %v2392 = vunpack.c.h.b16 %v2062
  %v2393 = vunpack.c.l.b16 %v2063
  %v2394 = vunpack.c.h.b16 %v2063
  %v2395 = vunpack.c.l.b16 %v2064
  %v2396 = vunpack.c.h.b16 %v2064
  %v2397 = vunpack.c.l.b16 %v2065
  %v2398 = vunpack.c.h.b16 %v2065
  %v2399 = vunpack.c.l.b16 %v2066
  %v2400 = vunpack.c.h.b16 %v2066
  %v2401 = vunpack.c.l.b16 %v2067
  %v2402 = vunpack.c.h.b16 %v2067
  %v2403 = vunpack.c.l.b16 %v2068
  %v2404 = vunpack.c.h.b16 %v2068
  %v2405 = vunpack.c.l.b16 %v2069
  %v2406 = vunpack.c.h.b16 %v2069
  %v2407 = vunpack.c.l.b16 %v2070
  %v2408 = vunpack.c.h.b16 %v2070
  %v2409 = vunpack.c.l.b16 %v2071
  %v2410 = vunpack.c.h.b16 %v2071
  %v2411 = vunpack.c.l.b16 %v2072
  %v2412 = vunpack.c.h.b16 %v2072
  %v2413 = vunpack.c.l.b16 %v2073
  %v2414 = vunpack.c.h.b16 %v2073
  %v2415 = vunpack.c.l.b16 %v2074
  %v2416 = vunpack.c.h.b16 %v2074
  %v2417 = vunpack.c.l.b16 %v2075
  %v2418 = vunpack.c.h.b16 %v2075
  %v2419 = vunpack.c.l.b16 %v2076
  %v2420 = vunpack.c.h.b16 %v2076
  %v2421 = vunpack.c.l.b16 %v2077
  %v2422 = vunpack.c.h.b16 %v2077
  %v2423 = vunpack.c.l.b16 %v2078
  %v2424 = vunpack.c.h.b16 %v2078
  %v2425 = vunpack.c.l.b16 %v2079
  %v2426 = vunpack.c.h.b16 %v2079
  %v2427 = vunpack.c.l.b16 %v2080
  %v2428 = vunpack.c.h.b16 %v2080
  %v2429 = vunpack.c.l.b16 %v2081
  %v2430 = vunpack.c.h.b16 %v2081
  %v2431 = vunpack.c.l.b16 %v2082
  %v2432 = vunpack.c.h.b16 %v2082
  %v2433 = vunpack.c.l.b16 %v2083
  %v2434 = vunpack.c.h.b16 %v2083
  %v2435 = vunpack.c.l.b16 %v2084
  %v2436 = vunpack.c.h.b16 %v2084
  %v2437 = vunpack.c.l.b16 %v2085
  %v2438 = vunpack.c.h.b16 %v2085
  %v2439 = vunpack.c.l.b16 %v2086
  %v2440 = vunpack.c.h.b16 %v2086
  %v2441 = vunpack.c.l.b16 %v2087
  %v2442 = vunpack.c.h.b16 %v2087
  %v2443 = vunpack.c.l.b16 %v2088
  %v2444 = vunpack.c.h.b16 %v2088
  %v2445 = vunpack.c.l.b16 %v2089
  %v2446 = vunpack.c.h.b16 %v2089
  %v2447 = vunpack.c.l.b16 %v2090
  %v2448 = vunpack.c.h.b16 %v2090
  %v2449 = vunpack.c.l.b16 %v2091
  %v2450 = vunpack.c.h.b16 %v2091
  %v2451 = vunpack.c.l.b16 %v2092
  %v2452 = vunpack.c.h.b16 %v2092
  %v2453 = vunpack.c.l.b16 %v2093
  %v2454 = vunpack.c.h.b16 %v2093
  %v2455 = vunpack.c.l.b16 %v2094
  %v2456 = vunpack.c.h.b16 %v2094
  %v2457 = vunpack.c.l.b16 %v2095
  %v2458 = vunpack.c.h.b16 %v2095
  %v2459 = vunpack.c.l.b16 %v2096
  %v2460 = vunpack.c.h.b16 %v2096
  %v2461 = vunpack.c.l.b16 %v2097
  %v2462 = vunpack.c.h.b16 %v2097
  %v2463 = vunpack.c.l.b16 %v2098
  %v2464 = vunpack.c.h.b16 %v2098
  %v2465 = vunpack.c.l.b16 %v2099
  %v2466 = vunpack.c.h.b16 %v2099
  %v2467 = vunpack.c.l.b16 %v2100
  %v2468 = vunpack.c.h.b16 %v2100
  %v2469 = vunpack.c.l.b16 %v2101
  %v2470 = vunpack.c.h.b16 %v2101
  %v2471 = vunpack.c.l.b16 %v2102
  %v2472 = vunpack.c.h.b16 %v2102
  %v2473 = vunpack.c.l.b16 %v2103
  %v2474 = vunpack.c.h.b16 %v2103
  %v2475 = vunpack.c.l.b16 %v2104
  %v2476 = vunpack.c.h.b16 %v2104
  %v2477 = vunpack.c.l.b16 %v2105
  %v2478 = vunpack.c.h.b16 %v2105
  %v2479 = vunpack.c.l.b16 %v2106
  %v2480 = vunpack.c.h.b16 %v2106
  %v2481 = vunpack.c.l.b16 %v2107
  %v2482 = vunpack.c.h.b16 %v2107
  %v2483 = vunpack.c.l.b16 %v2108
  %v2484 = vunpack.c.h.b16 %v2108
  %v2485 = vunpack.c.l.b16 %v2109
  %v2486 = vunpack.c.h.b16 %v2109
  %v2487 = vunpack.c.l.b16 %v2110
  %v2488 = vunpack.c.h.b16 %v2110
  %v2489 = vunpack.c.l.b16 %v2111
  %v2490 = vunpack.c.h.b16 %v2111
  %v2491 = vunpack.c.l.b16 %v2112
  %v2492 = vunpack.c.h.b16 %v2112
  %v2493 = vunpack.c.l.b16 %v2113
  %v2494 = vunpack.c.h.b16 %v2113
  %v2495 = vunpack.c.l.b16 %v2114
  %v2496 = vunpack.c.h.b16 %v2114
  %v2497 = vunpack.c.l.b16 %v2115
  %v2498 = vunpack.c.h.b16 %v2115
  %v2499 = vunpack.c.l.b16 %v2116
  %v2500 = vunpack.c.h.b16 %v2116
  %v2501 = vunpack.c.l.b16 %v2117
  %v2502 = vunpack.c.h.b16 %v2117
  %v2503 = vunpack.c.l.b16 %v2118
  %v2504 = vunpack.c.h.b16 %v2118
  %v2505 = vunpack.c.l.b16 %v2119
  %v2506 = vunpack.c.h.b16 %v2119
  %v2507 = vunpack.c.l.b16 %v2120
  %v2508 = vunpack.c.h.b16 %v2120
  %v2509 = vunpack.c.l.b16 %v2121
  %v2510 = vunpack.c.h.b16 %v2121
  %v2511 = vunpack.c.l.b16 %v2122
  %v2512 = vunpack.c.h.b16 %v2122
  %v2513 = vunpack.c.l.b16 %v2123
  %v2514 = vunpack.c.h.b16 %v2123
  %v2515 = vunpack.c.l.b16 %v2124
  %v2516 = vunpack.c.h.b16 %v2124
  %v2517 = vunpack.c.l.b16 %v2125
  %v2518 = vunpack.c.h.b16 %v2125
  %v2519 = vunpack.c.l.b16 %v2126
  %v2520 = vunpack.c.h.b16 %v2126
  %v2521 = vunpack.c.l.b16 %v2127
  %v2522 = vunpack.c.h.b16 %v2127
  %v2523 = vunpack.c.l.b16 %v2128
  %v2524 = vunpack.c.h.b16 %v2128
  %v2525 = vunpack.c.l.b16 %v2129
  %v2526 = vunpack.c.h.b16 %v2129
  %v2527 = vunpack.c.l.b16 %v2130
  %v2528 = vunpack.c.h.b16 %v2130
  %v2529 = vunpack.c.l.b16 %v2131
  %v2530 = vunpack.c.h.b16 %v2131
  %v2531 = vunpack.c.l.b16 %v2132
  %v2532 = vunpack.c.h.b16 %v2132
  %v2533 = vunpack.c.l.b16 %v2133
  %v2534 = vunpack.c.h.b16 %v2133
  %v2535 = vunpack.c.l.b16 %v2134
  %v2536 = vunpack.c.h.b16 %v2134
  %v2537 = vunpack.c.l.b16 %v2135
  %v2538 = vunpack.c.h.b16 %v2135
  %v2539 = vunpack.c.l.b16 %v2136
  %v2540 = vunpack.c.h.b16 %v2136
  %v2541 = vunpack.c.l.b16 %v2137
  %v2542 = vunpack.c.h.b16 %v2137
  %v2543 = vpack.c.b16 %v2291, %v2287
  %v2544 = vpack.c.b16 %v2292, %v2288
  %v2545 = vpack.c.b16 %v2293, %v2289
  %v2546 = vpack.c.b16 %v2294, %v2290
  %v2547 = vpack.c.b16 %v2299, %v2295
  %v2548 = vpack.c.b16 %v2300, %v2296
  %v2549 = vpack.c.b16 %v2301, %v2297
  %v2550 = vpack.c.b16 %v2302, %v2298
  %v2551 = vpack.c.b16 %v2307, %v2303
  %v2552 = vpack.c.b16 %v2308, %v2304
  %v2553 = vpack.c.b16 %v2309, %v2305
  %v2554 = vpack.c.b16 %v2310, %v2306
  %v2555 = vpack.c.b16 %v2315, %v2311
  %v2556 = vpack.c.b16 %v2316, %v2312
  %v2557 = vpack.c.b16 %v2317, %v2313
  %v2558 = vpack.c.b16 %v2318, %v2314
  %v2559 = vpack.c.b16 %v2323, %v2319
  %v2560 = vpack.c.b16 %v2324, %v2320
  %v2561 = vpack.c.b16 %v2325, %v2321
  %v2562 = vpack.c.b16 %v2326, %v2322
  %v2563 = vpack.c.b16 %v2331, %v2327
  %v2564 = vpack.c.b16 %v2332, %v2328
  %v2565 = vpack.c.b16 %v2333, %v2329
  %v2566 = vpack.c.b16 %v2334, %v2330
  %v2567 = vpack.c.b16 %v2339, %v2335
  %v2568 = vpack.c.b16 %v2340, %v2336
  %v2569 = vpack.c.b16 %v2341, %v2337
  %v2570 = vpack.c.b16 %v2342, %v2338
  %v2571 = vpack.c.b16 %v2347, %v2343
  %v2572 = vpack.c.b16 %v2348, %v2344
  %v2573 = vpack.c.b16 %v2349, %v2345
  %v2574 = vpack.c.b16 %v2350, %v2346
  %v2575 = vpack.c.b16 %v2355, %v2351
  %v2576 = vpack.c.b16 %v2356, %v2352
  %v2577 = vpack.c.b16 %v2357, %v2353
  %v2578 = vpack.c.b16 %v2358, %v2354
  %v2579 = vpack.c.b16 %v2363, %v2359
  %v2580 = vpack.c.b16 %v2364, %v2360
  %v2581 = vpack.c.b16 %v2365, %v2361
  %v2582 = vpack.c.b16 %v2366, %v2362
  %v2583 = vpack.c.b16 %v2371, %v2367
  %v2584 = vpack.c.b16 %v2372, %v2368
  %v2585 = vpack.c.b16 %v2373, %v2369
  %v2586 = vpack.c.b16 %v2374, %v2370
  %v2587 = vpack.c.b16 %v2379, %v2375
  %v2588 = vpack.c.b16 %v2380, %v2376
  %v2589 = vpack.c.b16 %v2381, %v2377
  %v2590 = vpack.c.b16 %v2382, %v2378
  %v2591 = vpack.c.b16 %v2387, %v2383
  %v2592 = vpack.c.b16 %v2388, %v2384
  %v2593 = vpack.c.b16 %v2389, %v2385
  %v2594 = vpack.c.b16 %v2390, %v2386
  %v2595 = vpack.c.b16 %v2395, %v2391
  %v2596 = vpack.c.b16 %v2396, %v2392
  %v2597 = vpack.c.b16 %v2397, %v2393
  %v2598 = vpack.c.b16 %v2398, %v2394
  %v2599 = vpack.c.b16 %v2403, %v2399
  %v2600 = vpack.c.b16 %v2404, %v2400
  %v2601 = vpack.c.b16 %v2405, %v2401
  %v2602 = vpack.c.b16 %v2406, %v2402
  %v2603 = vpack.c.b16 %v2411, %v2407
  %v2604 = vpack.c.b16 %v2412, %v2408
  %v2605 = vpack.c.b16 %v2413, %v2409
  %v2606 = vpack.c.b16 %v2414, %v2410
  %v2607 = vpack.c.b16 %v2419, %v2415
  %v2608 = vpack.c.b16 %v2420, %v2416
  %v2609 = vpack.c.b16 %v2421, %v2417
  %v2610 = vpack.c.b16 %v2422, %v2418
  %v2611 = vpack.c.b16 %v2427, %v2423
  %v2612 = vpack.c.b16 %v2428, %v2424
  %v2613 = vpack.c.b16 %v2429, %v2425
  %v2614 = vpack.c.b16 %v2430, %v2426
  %v2615 = vpack.c.b16 %v2435, %v2431
  %v2616 = vpack.c.b16 %v2436, %v2432
  %v2617 = vpack.c.b16 %v2437, %v2433
  %v2618 = vpack.c.b16 %v2438, %v2434
  %v2619 = vpack.c.b16 %v2443, %v2439
  %v2620 = vpack.c.b16 %v2444, %v2440
  %v2621 = vpack.c.b16 %v2445, %v2441
  %v2622 = vpack.c.b16 %v2446, %v2442
  %v2623 = vpack.c.b16 %v2451, %v2447
  %v2624 = vpack.c.b16 %v2452, %v2448
  %v2625 = vpack.c.b16 %v2453, %v2449
  %v2626 = vpack.c.b16 %v2454, %v2450
  %v2627 = vpack.c.b16 %v2459, %v2455
  %v2628 = vpack.c.b16 %v2460, %v2456
  %v2629 = vpack.c.b16 %v2461, %v2457
  %v2630 = vpack.c.b16 %v2462, %v2458
  %v2631 = vpack.c.b16 %v2467, %v2463
  %v2632 = vpack.c.b16 %v2468, %v2464
  %v2633 = vpack.c.b16 %v2469, %v2465
  %v2634 = vpack.c.b16 %v2470, %v2466
  %v2635 = vpack.c.b16 %v2475, %v2471
  %v2636 = vpack.c.b16 %v2476, %v2472
  %v2637 = vpack.c.b16 %v2477, %v2473
  %v2638 = vpack.c.b16 %v2478, %v2474
  %v2639 = vpack.c.b16 %v2483, %v2479
  %v2640 = vpack.c.b16 %v2484, %v2480
  %v2641 = vpack.c.b16 %v2485, %v2481
  %v2642 = vpack.c.b16 %v2486, %v2482
  %v2643 = vpack.c.b16 %v2491, %v2487
  %v2644 = vpack.c.b16 %v2492, %v2488
  %v2645 = vpack.c.b16 %v2493, %v2489
  %v2646 = vpack.c.b16 %v2494, %v2490
  %v2647 = vpack.c.b16 %v2499, %v2495
  %v2648 = vpack.c.b16 %v2500, %v2496
  %v2649 = vpack.c.b16 %v2501, %v2497
  %v2650 = vpack.c.b16 %v2502, %v2498
  %v2651 = vpack.c.b16 %v2507, %v2503
  %v2652 = vpack.c.b16 %v2508, %v2504
  %v2653 = vpack.c.b16 %v2509, %v2505
  %v2654 = vpack.c.b16 %v2510, %v2506
  %v2655 = vpack.c.b16 %v2515, %v2511
  %v2656 = vpack.c.b16 %v2516, %v2512
  %v2657 = vpack.c.b16 %v2517, %v2513
  %v2658 = vpack.c.b16 %v2518, %v2514
  %v2659 = vpack.c.b16 %v2523, %v2519
  %v2660 = vpack.c.b16 %v2524, %v2520
  %v2661 = vpack.c.b16 %v2525, %v2521
  %v2662 = vpack.c.b16 %v2526, %v2522
  %v2663 = vpack.c.b16 %v2531, %v2527
  %v2664 = vpack.c.b16 %v2532, %v2528
  %v2665 = vpack.c.b16 %v2533, %v2529
  %v2666 = vpack.c.b16 %v2534, %v2530
  %v2667 = vpack.c.b16 %v2539, %v2535
  %v2668 = vpack.c.b16 %v2540, %v2536
  %v2669 = vpack.c.b16 %v2541, %v2537
  %v2670 = vpack.c.b16 %v2542, %v2538
  %2799 = vmatprep.subr.bf16.mxu0 %v2544
  %2800 = vmatpush1.bf16.msra.mxu0 %v2543
  %2801 = vmatprep.subr.bf16.mxu0 %v2548
  %2802 = vmatpush1.bf16.msra.mxu0 %v2547
  %2803 = vmatprep.subr.bf16.mxu0 %v2552
  %2804 = vmatpush1.bf16.msra.mxu0 %v2551
  %2805 = vmatprep.subr.bf16.mxu0 %v2556
  %2806 = vmatpush1.bf16.msra.mxu0 %v2555
  %2807 = vmatprep.subr.bf16.mxu0 %v2560
  %2808 = vmatpush1.bf16.msra.mxu0 %v2559
  %2809 = vmatprep.subr.bf16.mxu0 %v2564
  %2810 = vmatpush1.bf16.msra.mxu0 %v2563
  %2811 = vmatprep.subr.bf16.mxu0 %v2568
  %2812 = vmatpush1.bf16.msra.mxu0 %v2567
  %2813 = vmatprep.subr.bf16.mxu0 %v2572
  %2814 = vmatpush1.bf16.msra.mxu0 %v2571
  %2815 = vmatprep.subr.bf16.mxu0 %v2576
  %2816 = vmatpush1.bf16.msra.mxu0 %v2575
  %2817 = vmatprep.subr.bf16.mxu0 %v2580
  %2818 = vmatpush1.bf16.msra.mxu0 %v2579
  %2819 = vmatprep.subr.bf16.mxu0 %v2584
  %2820 = vmatpush1.bf16.msra.mxu0 %v2583
  %2821 = vmatprep.subr.bf16.mxu0 %v2588
  %2822 = vmatpush1.bf16.msra.mxu0 %v2587
  %2823 = vmatprep.subr.bf16.mxu0 %v2592
  %2824 = vmatpush1.bf16.msra.mxu0 %v2591
  %2825 = vmatprep.subr.bf16.mxu0 %v2596
  %2826 = vmatpush1.bf16.msra.mxu0 %v2595
  %2827 = vmatprep.subr.bf16.mxu0 %v2600
  %2828 = vmatpush1.bf16.msra.mxu0 %v2599
  %2829 = vmatprep.subr.bf16.mxu0 %v2604
  %2830 = vmatpush1.bf16.msra.mxu0 %v2603
  %2831 = vmatprep.mubr.bf16.mxu0 %v48
  %2832 = vmatmul.mubr.bf16.gmra.mrb[0].mxu0 %v47
  %v2833 = vpop.f32.mrb[0].mxu0
  %v2834 = vadd.f32 %v2142, %v2833
  %v2835 = vpop.f32.mrb[0].mxu0
  %v2836 = vadd.f32 %v2146, %v2835
  %v2837 = vpop.f32.mrb[0].mxu0
  %v2838 = vpop.f32.mrb[0].mxu0
  %2839 = vdwg.mxu0
  %2840 = vmatprep.subr.bf16.mxu0 %v2608
  %2841 = vmatpush1.bf16.msra.mxu0 %v2607
  %2842 = vmatprep.subr.bf16.mxu0 %v2612
  %2843 = vmatpush1.bf16.msra.mxu0 %v2611
  %2844 = vmatprep.subr.bf16.mxu0 %v2616
  %2845 = vmatpush1.bf16.msra.mxu0 %v2615
  %2846 = vmatprep.subr.bf16.mxu0 %v2620
  %2847 = vmatpush1.bf16.msra.mxu0 %v2619
  %2848 = vmatprep.subr.bf16.mxu0 %v2624
  %2849 = vmatpush1.bf16.msra.mxu0 %v2623
  %2850 = vmatprep.subr.bf16.mxu0 %v2628
  %2851 = vmatpush1.bf16.msra.mxu0 %v2627
  %2852 = vmatprep.subr.bf16.mxu0 %v2632
  %2853 = vmatpush1.bf16.msra.mxu0 %v2631
  %2854 = vmatprep.subr.bf16.mxu0 %v2636
  %2855 = vmatpush1.bf16.msra.mxu0 %v2635
  %2856 = vmatprep.subr.bf16.mxu0 %v2640
  %2857 = vmatpush1.bf16.msra.mxu0 %v2639
  %2858 = vmatprep.subr.bf16.mxu0 %v2644
  %2859 = vmatpush1.bf16.msra.mxu0 %v2643
  %2860 = vmatprep.subr.bf16.mxu0 %v2648
  %2861 = vmatpush1.bf16.msra.mxu0 %v2647
  %2862 = vmatprep.subr.bf16.mxu0 %v2652
  %2863 = vmatpush1.bf16.msra.mxu0 %v2651
  %2864 = vmatprep.subr.bf16.mxu0 %v2656
  %2865 = vmatpush1.bf16.msra.mxu0 %v2655
  %2866 = vmatprep.subr.bf16.mxu0 %v2660
  %2867 = vmatpush1.bf16.msra.mxu0 %v2659
  %2868 = vmatprep.subr.bf16.mxu0 %v2664
  %2869 = vmatpush1.bf16.msra.mxu0 %v2663
  %2870 = vmatprep.subr.bf16.mxu0 %v2668
  %2871 = vmatpush1.bf16.msra.mxu0 %v2667
  %2872 = vmatprep.mubr.bf16.mxu0 %v50
  %2873 = vmatmul.mubr.bf16.gmra.mrb[0].mxu0 %v49
  %v2874 = vpop.f32.mrb[0].mxu0
  %v2875 = vadd.f32 %v2834, %v2874
  %v2876 = vpop.f32.mrb[0].mxu0
  %v2877 = vadd.f32 %v2836, %v2876
  %v2878 = vpop.f32.mrb[0].mxu0
  %v2879 = vpop.f32.mrb[0].mxu0
  %2880 = vdwg.mxu0
  %2881 = vmatprep.subr.bf16.mxu0 %v2546
  %2882 = vmatpush1.bf16.msra.mxu0 %v2545
  %2883 = vmatprep.subr.bf16.mxu0 %v2550
  %2884 = vmatpush1.bf16.msra.mxu0 %v2549
  %2885 = vmatprep.subr.bf16.mxu0 %v2554
  %2886 = vmatpush1.bf16.msra.mxu0 %v2553
  %2887 = vmatprep.subr.bf16.mxu0 %v2558
  %2888 = vmatpush1.bf16.msra.mxu0 %v2557
  %2889 = vmatprep.subr.bf16.mxu0 %v2562
  %2890 = vmatpush1.bf16.msra.mxu0 %v2561
  %2891 = vmatprep.subr.bf16.mxu0 %v2566
  %2892 = vmatpush1.bf16.msra.mxu0 %v2565
  %2893 = vmatprep.subr.bf16.mxu0 %v2570
  %2894 = vmatpush1.bf16.msra.mxu0 %v2569
  %2895 = vmatprep.subr.bf16.mxu0 %v2574
  %2896 = vmatpush1.bf16.msra.mxu0 %v2573
  %2897 = vmatprep.subr.bf16.mxu0 %v2578
  %2898 = vmatpush1.bf16.msra.mxu0 %v2577
  %2899 = vmatprep.subr.bf16.mxu0 %v2582
  %2900 = vmatpush1.bf16.msra.mxu0 %v2581
  %2901 = vmatprep.subr.bf16.mxu0 %v2586
  %2902 = vmatpush1.bf16.msra.mxu0 %v2585
  %2903 = vmatprep.subr.bf16.mxu0 %v2590
  %2904 = vmatpush1.bf16.msra.mxu0 %v2589
  %2905 = vmatprep.subr.bf16.mxu0 %v2594
  %2906 = vmatpush1.bf16.msra.mxu0 %v2593
  %2907 = vmatprep.subr.bf16.mxu0 %v2598
  %2908 = vmatpush1.bf16.msra.mxu0 %v2597
  %2909 = vmatprep.subr.bf16.mxu0 %v2602
  %2910 = vmatpush1.bf16.msra.mxu0 %v2601
  %2911 = vmatprep.subr.bf16.mxu0 %v2606
  %2912 = vmatpush1.bf16.msra.mxu0 %v2605
  %2913 = vmatprep.mubr.bf16.mxu0 %v48
  %2914 = vmatmul.mubr.bf16.gmra.mrb[0].mxu0 %v47
  %v2915 = vpop.f32.mrb[0].mxu0
  %v2916 = vadd.f32 %v2150, %v2915
  %v2917 = vpop.f32.mrb[0].mxu0
  %v2918 = vadd.f32 %v2154, %v2917
  %v2919 = vpop.f32.mrb[0].mxu0
  %v2920 = vpop.f32.mrb[0].mxu0
  %2921 = vdwg.mxu0
  %2922 = vmatprep.subr.bf16.mxu0 %v2610
  %2923 = vmatpush1.bf16.msra.mxu0 %v2609
  %2924 = vmatprep.subr.bf16.mxu0 %v2614
  %2925 = vmatpush1.bf16.msra.mxu0 %v2613
  %2926 = vmatprep.subr.bf16.mxu0 %v2618
  %2927 = vmatpush1.bf16.msra.mxu0 %v2617
  %2928 = vmatprep.subr.bf16.mxu0 %v2622
  %2929 = vmatpush1.bf16.msra.mxu0 %v2621
  %2930 = vmatprep.subr.bf16.mxu0 %v2626
  %2931 = vmatpush1.bf16.msra.mxu0 %v2625
  %2932 = vmatprep.subr.bf16.mxu0 %v2630
  %2933 = vmatpush1.bf16.msra.mxu0 %v2629
  %2934 = vmatprep.subr.bf16.mxu0 %v2634
  %2935 = vmatpush1.bf16.msra.mxu0 %v2633
  %2936 = vmatprep.subr.bf16.mxu0 %v2638
  %2937 = vmatpush1.bf16.msra.mxu0 %v2637
  %2938 = vmatprep.subr.bf16.mxu0 %v2642
  %2939 = vmatpush1.bf16.msra.mxu0 %v2641
  %2940 = vmatprep.subr.bf16.mxu0 %v2646
  %2941 = vmatpush1.bf16.msra.mxu0 %v2645
  %2942 = vmatprep.subr.bf16.mxu0 %v2650
  %2943 = vmatpush1.bf16.msra.mxu0 %v2649
  %2944 = vmatprep.subr.bf16.mxu0 %v2654
  %2945 = vmatpush1.bf16.msra.mxu0 %v2653
  %2946 = vmatprep.subr.bf16.mxu0 %v2658
  %2947 = vmatpush1.bf16.msra.mxu0 %v2657
  %2948 = vmatprep.subr.bf16.mxu0 %v2662
  %2949 = vmatpush1.bf16.msra.mxu0 %v2661
  %2950 = vmatprep.subr.bf16.mxu0 %v2666
  %2951 = vmatpush1.bf16.msra.mxu0 %v2665
  %2952 = vmatprep.subr.bf16.mxu0 %v2670
  %2953 = vmatpush1.bf16.msra.mxu0 %v2669
  %2954 = vmatprep.mubr.bf16.mxu0 %v50
  %2955 = vmatmul.mubr.bf16.gmra.mrb[0].mxu0 %v49
  %v2956 = vpop.f32.mrb[0].mxu0
  %v2957 = vadd.f32 %v2916, %v2956
  %v2958 = vpop.f32.mrb[0].mxu0
  %v2959 = vadd.f32 %v2918, %v2958
  %v2960 = vpop.f32.mrb[0].mxu0
  %v2961 = vpop.f32.mrb[0].mxu0
  %2962 = vdwg.mxu0
  %v2967 = vcombine.low %v2875, %v2877
  %v2968 = vcombine.low %v2957, %v2959
  %v2970 = vunpack.c.l.s4 1983009808
  %v2971 = vunpack.c.0.s8 %v2970
  %v2972 = vlaneseq
  %v2973 = vshrl.u32 %v2972, 7
  %v2974 = vsub.s32 %v2971, %v2973
  %v2975 = vrot.slane %v2967, %v2974
  %v2977 = vunpack.c.l.s4 1983009808
  %v2978 = vunpack.c.0.s8 %v2977
  %v2979 = vlaneseq
  %v2980 = vshrl.u32 %v2979, 7
  %v2981 = vsub.s32 %v2978, %v2980
  %v2982 = vrot.slane %v2968, %v2981
  %v2983 = vcombine.low %v2975, %v2982
  %v2985 = vmul.f32 %v1982, %v2983
  %v2986 = vadd.f32 %v24, %v2985
  %v2987 = vtanh.pop %v2986
  %v2988 = vsub.f32 1.0, %v2009
  %v2989 = vmul.f32 %v2988, %v2987
  %v2990 = vmul.f32 %v2009, %v21
  %v2991 = vadd.f32 %v2989, %v2990
  %2992 = vst [vmem:[%s3] sm:$0xff] %v2991
  %v2993 = vld [vmem:[%s0 + $0x18] sm:$0xff]
  %v2994 = vld [vmem:[%s0 + $0x20] sm:$0xff]
  %v2995 = vld [vmem:[%s0 + $0x28] sm:$0xff]
  %v2997 = vcombine.high %v2991, %v2991
  %v2999 = vunpack.c.l.s4 1983009808
  %v3000 = vunpack.c.0.s8 %v2999
  %v3001 = vlaneseq
  %v3002 = vshrl.u32 %v3001, 7
  %v3003 = vsub.s32 %v3000, %v3002
  %v3004 = vrot.slane %v2991, %v3003
  %v3006 = vunpack.c.l.s4 1983009808
  %v3007 = vunpack.c.0.s8 %v3006
  %v3008 = vlaneseq
  %v3009 = vshrl.u32 %v3008, 7
  %v3010 = vsub.s32 %v3007, %v3009
  %v3011 = vrot.slane %v2997, %v3010
  %v3012 = vcombine.high %v3004, %v3004
  %v3013 = vcombine.high %v3011, %v3011
  %v3018 = vpack.c.bf16 %v3004, %v3004
  %v3019 = vpack.c.bf16 %v3012, %v3012
  %v3020 = vpack.c.bf16 %v3011, %v3011
  %v3021 = vpack.c.bf16 %v3013, %v3013
  %v3022 = vld [vmem:[%s1] sm:$0xff]
  %v3023 = vld [vmem:[%s1 + $0x8] sm:$0xff]
  %v3024 = vld [vmem:[%s1 + $0x10] sm:$0xff]
  %v3025 = vld [vmem:[%s1 + $0x18] sm:$0xff]
  %v3026 = vld [vmem:[%s1 + $0x30] sm:$0xff]
  %v3027 = vld [vmem:[%s1 + $0x38] sm:$0xff]
  %v3028 = vld [vmem:[%s1 + $0x40] sm:$0xff]
  %v3029 = vld [vmem:[%s1 + $0x48] sm:$0xff]
  %v3030 = vld [vmem:[%s1 + $0x60] sm:$0xff]
  %v3031 = vld [vmem:[%s1 + $0x68] sm:$0xff]
  %v3032 = vld [vmem:[%s1 + $0x70] sm:$0xff]
  %v3033 = vld [vmem:[%s1 + $0x78] sm:$0xff]
  %v3034 = vld [vmem:[%s1 + $0x90] sm:$0xff]
  %v3035 = vld [vmem:[%s1 + $0x98] sm:$0xff]
  %v3036 = vld [vmem:[%s1 + $0xa0] sm:$0xff]
  %v3037 = vld [vmem:[%s1 + $0xa8] sm:$0xff]
  %v3038 = vld [vmem:[%s1 + $0xc0] sm:$0xff]
  %v3039 = vld [vmem:[%s1 + $0xc8] sm:$0xff]
  %v3040 = vld [vmem:[%s1 + $0xd0] sm:$0xff]
  %v3041 = vld [vmem:[%s1 + $0xd8] sm:$0xff]
  %v3042 = vld [vmem:[%s1 + $0xf0] sm:$0xff]
  %v3043 = vld [vmem:[%s1 + $0xf8] sm:$0xff]
  %v3044 = vld [vmem:[%s1 + $0x100] sm:$0xff]
  %v3045 = vld [vmem:[%s1 + $0x108] sm:$0xff]
  %v3046 = vld [vmem:[%s1 + $0x120] sm:$0xff]
  %v3047 = vld [vmem:[%s1 + $0x128] sm:$0xff]
  %v3048 = vld [vmem:[%s1 + $0x130] sm:$0xff]
  %v3049 = vld [vmem:[%s1 + $0x138] sm:$0xff]
  %v3050 = vld [vmem:[%s1 + $0x150] sm:$0xff]
  %v3051 = vld [vmem:[%s1 + $0x158] sm:$0xff]
  %v3052 = vld [vmem:[%s1 + $0x160] sm:$0xff]
  %v3053 = vld [vmem:[%s1 + $0x168] sm:$0xff]
  %v3054 = vld [vmem:[%s1 + $0x180] sm:$0xff]
  %v3055 = vld [vmem:[%s1 + $0x188] sm:$0xff]
  %v3056 = vld [vmem:[%s1 + $0x190] sm:$0xff]
  %v3057 = vld [vmem:[%s1 + $0x198] sm:$0xff]
  %v3058 = vld [vmem:[%s1 + $0x1b0] sm:$0xff]
  %v3059 = vld [vmem:[%s1 + $0x1b8] sm:$0xff]
  %v3060 = vld [vmem:[%s1 + $0x1c0] sm:$0xff]
  %v3061 = vld [vmem:[%s1 + $0x1c8] sm:$0xff]
  %v3062 = vld [vmem:[%s1 + $0x1e0] sm:$0xff]
  %v3063 = vld [vmem:[%s1 + $0x1e8] sm:$0xff]
  %v3064 = vld [vmem:[%s1 + $0x1f0] sm:$0xff]
  %v3065 = vld [vmem:[%s1 + $0x1f8] sm:$0xff]
  %v3066 = vld [vmem:[%s1 + $0x210] sm:$0xff]
  %v3067 = vld [vmem:[%s1 + $0x218] sm:$0xff]
  %v3068 = vld [vmem:[%s1 + $0x220] sm:$0xff]
  %v3069 = vld [vmem:[%s1 + $0x228] sm:$0xff]
  %v3070 = vld [vmem:[%s1 + $0x240] sm:$0xff]
  %v3071 = vld [vmem:[%s1 + $0x248] sm:$0xff]
  %v3072 = vld [vmem:[%s1 + $0x250] sm:$0xff]
  %v3073 = vld [vmem:[%s1 + $0x258] sm:$0xff]
  %v3074 = vld [vmem:[%s1 + $0x270] sm:$0xff]
  %v3075 = vld [vmem:[%s1 + $0x278] sm:$0xff]
  %v3076 = vld [vmem:[%s1 + $0x280] sm:$0xff]
  %v3077 = vld [vmem:[%s1 + $0x288] sm:$0xff]
  %v3078 = vld [vmem:[%s1 + $0x2a0] sm:$0xff]
  %v3079 = vld [vmem:[%s1 + $0x2a8] sm:$0xff]
  %v3080 = vld [vmem:[%s1 + $0x2b0] sm:$0xff]
  %v3081 = vld [vmem:[%s1 + $0x2b8] sm:$0xff]
  %v3082 = vld [vmem:[%s1 + $0x2d0] sm:$0xff]
  %v3083 = vld [vmem:[%s1 + $0x2d8] sm:$0xff]
  %v3084 = vld [vmem:[%s1 + $0x2e0] sm:$0xff]
  %v3085 = vld [vmem:[%s1 + $0x2e8] sm:$0xff]
  %v3086 = vld [vmem:[%s1 + $0x300] sm:$0xff]
  %v3087 = vld [vmem:[%s1 + $0x308] sm:$0xff]
  %v3088 = vld [vmem:[%s1 + $0x310] sm:$0xff]
  %v3089 = vld [vmem:[%s1 + $0x318] sm:$0xff]
  %v3090 = vld [vmem:[%s1 + $0x330] sm:$0xff]
  %v3091 = vld [vmem:[%s1 + $0x338] sm:$0xff]
  %v3092 = vld [vmem:[%s1 + $0x340] sm:$0xff]
  %v3093 = vld [vmem:[%s1 + $0x348] sm:$0xff]
  %v3094 = vld [vmem:[%s1 + $0x360] sm:$0xff]
  %v3095 = vld [vmem:[%s1 + $0x368] sm:$0xff]
  %v3096 = vld [vmem:[%s1 + $0x370] sm:$0xff]
  %v3097 = vld [vmem:[%s1 + $0x378] sm:$0xff]
  %v3098 = vld [vmem:[%s1 + $0x390] sm:$0xff]
  %v3099 = vld [vmem:[%s1 + $0x398] sm:$0xff]
  %v3100 = vld [vmem:[%s1 + $0x3a0] sm:$0xff]
  %v3101 = vld [vmem:[%s1 + $0x3a8] sm:$0xff]
  %v3102 = vld [vmem:[%s1 + $0x3c0] sm:$0xff]
  %v3103 = vld [vmem:[%s1 + $0x3c8] sm:$0xff]
  %v3104 = vld [vmem:[%s1 + $0x3d0] sm:$0xff]
  %v3105 = vld [vmem:[%s1 + $0x3d8] sm:$0xff]
  %v3106 = vld [vmem:[%s1 + $0x3f0] sm:$0xff]
  %v3107 = vld [vmem:[%s1 + $0x3f8] sm:$0xff]
  %v3108 = vld [vmem:[%s1 + $0x400] sm:$0xff]
  %v3109 = vld [vmem:[%s1 + $0x408] sm:$0xff]
  %v3110 = vld [vmem:[%s1 + $0x420] sm:$0xff]
  %v3111 = vld [vmem:[%s1 + $0x428] sm:$0xff]
  %v3112 = vld [vmem:[%s1 + $0x430] sm:$0xff]
  %v3113 = vld [vmem:[%s1 + $0x438] sm:$0xff]
  %v3114 = vld [vmem:[%s1 + $0x450] sm:$0xff]
  %v3115 = vld [vmem:[%s1 + $0x458] sm:$0xff]
  %v3116 = vld [vmem:[%s1 + $0x460] sm:$0xff]
  %v3117 = vld [vmem:[%s1 + $0x468] sm:$0xff]
  %v3118 = vld [vmem:[%s1 + $0x480] sm:$0xff]
  %v3119 = vld [vmem:[%s1 + $0x488] sm:$0xff]
  %v3120 = vld [vmem:[%s1 + $0x490] sm:$0xff]
  %v3121 = vld [vmem:[%s1 + $0x498] sm:$0xff]
  %v3122 = vld [vmem:[%s1 + $0x4b0] sm:$0xff]
  %v3123 = vld [vmem:[%s1 + $0x4b8] sm:$0xff]
  %v3124 = vld [vmem:[%s1 + $0x4c0] sm:$0xff]
  %v3125 = vld [vmem:[%s1 + $0x4c8] sm:$0xff]
  %v3126 = vld [vmem:[%s1 + $0x4e0] sm:$0xff]
  %v3127 = vld [vmem:[%s1 + $0x4e8] sm:$0xff]
  %v3128 = vld [vmem:[%s1 + $0x4f0] sm:$0xff]
  %v3129 = vld [vmem:[%s1 + $0x4f8] sm:$0xff]
  %v3130 = vld [vmem:[%s1 + $0x510] sm:$0xff]
  %v3131 = vld [vmem:[%s1 + $0x518] sm:$0xff]
  %v3132 = vld [vmem:[%s1 + $0x520] sm:$0xff]
  %v3133 = vld [vmem:[%s1 + $0x528] sm:$0xff]
  %v3134 = vld [vmem:[%s1 + $0x540] sm:$0xff]
  %v3135 = vld [vmem:[%s1 + $0x548] sm:$0xff]
  %v3136 = vld [vmem:[%s1 + $0x550] sm:$0xff]
  %v3137 = vld [vmem:[%s1 + $0x558] sm:$0xff]
  %v3138 = vld [vmem:[%s1 + $0x570] sm:$0xff]
  %v3139 = vld [vmem:[%s1 + $0x578] sm:$0xff]
  %v3140 = vld [vmem:[%s1 + $0x580] sm:$0xff]
  %v3141 = vld [vmem:[%s1 + $0x588] sm:$0xff]
  %v3142 = vld [vmem:[%s1 + $0x5a0] sm:$0xff]
  %v3143 = vld [vmem:[%s1 + $0x5a8] sm:$0xff]
  %v3144 = vld [vmem:[%s1 + $0x5b0] sm:$0xff]
  %v3145 = vld [vmem:[%s1 + $0x5b8] sm:$0xff]
  %v3146 = vld [vmem:[%s1 + $0x5d0] sm:$0xff]
  %v3147 = vld [vmem:[%s1 + $0x5d8] sm:$0xff]
  %v3148 = vld [vmem:[%s1 + $0x5e0] sm:$0xff]
  %v3149 = vld [vmem:[%s1 + $0x5e8] sm:$0xff]
  %v3150 = vld [vmem:[%s1 + $0x600] sm:$0xff]
  %v3151 = vld [vmem:[%s1 + $0x608] sm:$0xff]
  %v3152 = vld [vmem:[%s1 + $0x610] sm:$0xff]
  %v3153 = vld [vmem:[%s1 + $0x618] sm:$0xff]
  %v3154 = vld [vmem:[%s1 + $0x630] sm:$0xff]
  %v3155 = vld [vmem:[%s1 + $0x638] sm:$0xff]
  %v3156 = vld [vmem:[%s1 + $0x640] sm:$0xff]
  %v3157 = vld [vmem:[%s1 + $0x648] sm:$0xff]
  %v3158 = vld [vmem:[%s1 + $0x660] sm:$0xff]
  %v3159 = vld [vmem:[%s1 + $0x668] sm:$0xff]
  %v3160 = vld [vmem:[%s1 + $0x670] sm:$0xff]
  %v3161 = vld [vmem:[%s1 + $0x678] sm:$0xff]
  %v3162 = vld [vmem:[%s1 + $0x690] sm:$0xff]
  %v3163 = vld [vmem:[%s1 + $0x698] sm:$0xff]
  %v3164 = vld [vmem:[%s1 + $0x6a0] sm:$0xff]
  %v3165 = vld [vmem:[%s1 + $0x6a8] sm:$0xff]
  %v3166 = vld [vmem:[%s1 + $0x6c0] sm:$0xff]
  %v3167 = vld [vmem:[%s1 + $0x6c8] sm:$0xff]
  %v3168 = vld [vmem:[%s1 + $0x6d0] sm:$0xff]
  %v3169 = vld [vmem:[%s1 + $0x6d8] sm:$0xff]
  %v3170 = vld [vmem:[%s1 + $0x6f0] sm:$0xff]
  %v3171 = vld [vmem:[%s1 + $0x6f8] sm:$0xff]
  %v3172 = vld [vmem:[%s1 + $0x700] sm:$0xff]
  %v3173 = vld [vmem:[%s1 + $0x708] sm:$0xff]
  %v3174 = vld [vmem:[%s1 + $0x720] sm:$0xff]
  %v3175 = vld [vmem:[%s1 + $0x728] sm:$0xff]
  %v3176 = vld [vmem:[%s1 + $0x730] sm:$0xff]
  %v3177 = vld [vmem:[%s1 + $0x738] sm:$0xff]
  %v3178 = vld [vmem:[%s1 + $0x750] sm:$0xff]
  %v3179 = vld [vmem:[%s1 + $0x758] sm:$0xff]
  %v3180 = vld [vmem:[%s1 + $0x760] sm:$0xff]
  %v3181 = vld [vmem:[%s1 + $0x768] sm:$0xff]
  %v3182 = vld [vmem:[%s1 + $0x780] sm:$0xff]
  %v3183 = vld [vmem:[%s1 + $0x788] sm:$0xff]
  %v3184 = vld [vmem:[%s1 + $0x790] sm:$0xff]
  %v3185 = vld [vmem:[%s1 + $0x798] sm:$0xff]
  %v3186 = vld [vmem:[%s1 + $0x7b0] sm:$0xff]
  %v3187 = vld [vmem:[%s1 + $0x7b8] sm:$0xff]
  %v3188 = vld [vmem:[%s1 + $0x7c0] sm:$0xff]
  %v3189 = vld [vmem:[%s1 + $0x7c8] sm:$0xff]
  %v3190 = vld [vmem:[%s1 + $0x7e0] sm:$0xff]
  %v3191 = vld [vmem:[%s1 + $0x7e8] sm:$0xff]
  %v3192 = vld [vmem:[%s1 + $0x7f0] sm:$0xff]
  %v3193 = vld [vmem:[%s1 + $0x7f8] sm:$0xff]
  %v3194 = vld [vmem:[%s1 + $0x810] sm:$0xff]
  %v3195 = vld [vmem:[%s1 + $0x818] sm:$0xff]
  %v3196 = vld [vmem:[%s1 + $0x820] sm:$0xff]
  %v3197 = vld [vmem:[%s1 + $0x828] sm:$0xff]
  %v3198 = vld [vmem:[%s1 + $0x840] sm:$0xff]
  %v3199 = vld [vmem:[%s1 + $0x848] sm:$0xff]
  %v3200 = vld [vmem:[%s1 + $0x850] sm:$0xff]
  %v3201 = vld [vmem:[%s1 + $0x858] sm:$0xff]
  %v3202 = vld [vmem:[%s1 + $0x870] sm:$0xff]
  %v3203 = vld [vmem:[%s1 + $0x878] sm:$0xff]
  %v3204 = vld [vmem:[%s1 + $0x880] sm:$0xff]
  %v3205 = vld [vmem:[%s1 + $0x888] sm:$0xff]
  %v3206 = vld [vmem:[%s1 + $0x8a0] sm:$0xff]
  %v3207 = vld [vmem:[%s1 + $0x8a8] sm:$0xff]
  %v3208 = vld [vmem:[%s1 + $0x8b0] sm:$0xff]
  %v3209 = vld [vmem:[%s1 + $0x8b8] sm:$0xff]
  %v3210 = vld [vmem:[%s1 + $0x8d0] sm:$0xff]
  %v3211 = vld [vmem:[%s1 + $0x8d8] sm:$0xff]
  %v3212 = vld [vmem:[%s1 + $0x8e0] sm:$0xff]
  %v3213 = vld [vmem:[%s1 + $0x8e8] sm:$0xff]
  %v3214 = vld [vmem:[%s1 + $0x900] sm:$0xff]
  %v3215 = vld [vmem:[%s1 + $0x908] sm:$0xff]
  %v3216 = vld [vmem:[%s1 + $0x910] sm:$0xff]
  %v3217 = vld [vmem:[%s1 + $0x918] sm:$0xff]
  %v3218 = vld [vmem:[%s1 + $0x930] sm:$0xff]
  %v3219 = vld [vmem:[%s1 + $0x938] sm:$0xff]
  %v3220 = vld [vmem:[%s1 + $0x940] sm:$0xff]
  %v3221 = vld [vmem:[%s1 + $0x948] sm:$0xff]
  %v3222 = vld [vmem:[%s1 + $0x960] sm:$0xff]
  %v3223 = vld [vmem:[%s1 + $0x968] sm:$0xff]
  %v3224 = vld [vmem:[%s1 + $0x970] sm:$0xff]
  %v3225 = vld [vmem:[%s1 + $0x978] sm:$0xff]
  %v3226 = vld [vmem:[%s1 + $0x990] sm:$0xff]
  %v3227 = vld [vmem:[%s1 + $0x998] sm:$0xff]
  %v3228 = vld [vmem:[%s1 + $0x9a0] sm:$0xff]
  %v3229 = vld [vmem:[%s1 + $0x9a8] sm:$0xff]
  %v3230 = vld [vmem:[%s1 + $0x9c0] sm:$0xff]
  %v3231 = vld [vmem:[%s1 + $0x9c8] sm:$0xff]
  %v3232 = vld [vmem:[%s1 + $0x9d0] sm:$0xff]
  %v3233 = vld [vmem:[%s1 + $0x9d8] sm:$0xff]
  %v3234 = vld [vmem:[%s1 + $0x9f0] sm:$0xff]
  %v3235 = vld [vmem:[%s1 + $0x9f8] sm:$0xff]
  %v3236 = vld [vmem:[%s1 + $0xa00] sm:$0xff]
  %v3237 = vld [vmem:[%s1 + $0xa08] sm:$0xff]
  %v3238 = vld [vmem:[%s1 + $0xa20] sm:$0xff]
  %v3239 = vld [vmem:[%s1 + $0xa28] sm:$0xff]
  %v3240 = vld [vmem:[%s1 + $0xa30] sm:$0xff]
  %v3241 = vld [vmem:[%s1 + $0xa38] sm:$0xff]
  %v3242 = vld [vmem:[%s1 + $0xa50] sm:$0xff]
  %v3243 = vld [vmem:[%s1 + $0xa58] sm:$0xff]
  %v3244 = vld [vmem:[%s1 + $0xa60] sm:$0xff]
  %v3245 = vld [vmem:[%s1 + $0xa68] sm:$0xff]
  %v3246 = vld [vmem:[%s1 + $0xa80] sm:$0xff]
  %v3247 = vld [vmem:[%s1 + $0xa88] sm:$0xff]
  %v3248 = vld [vmem:[%s1 + $0xa90] sm:$0xff]
  %v3249 = vld [vmem:[%s1 + $0xa98] sm:$0xff]
  %v3250 = vld [vmem:[%s1 + $0xab0] sm:$0xff]
  %v3251 = vld [vmem:[%s1 + $0xab8] sm:$0xff]
  %v3252 = vld [vmem:[%s1 + $0xac0] sm:$0xff]
  %v3253 = vld [vmem:[%s1 + $0xac8] sm:$0xff]
  %v3254 = vld [vmem:[%s1 + $0xae0] sm:$0xff]
  %v3255 = vld [vmem:[%s1 + $0xae8] sm:$0xff]
  %v3256 = vld [vmem:[%s1 + $0xaf0] sm:$0xff]
  %v3257 = vld [vmem:[%s1 + $0xaf8] sm:$0xff]
  %v3258 = vld [vmem:[%s1 + $0xb10] sm:$0xff]
  %v3259 = vld [vmem:[%s1 + $0xb18] sm:$0xff]
  %v3260 = vld [vmem:[%s1 + $0xb20] sm:$0xff]
  %v3261 = vld [vmem:[%s1 + $0xb28] sm:$0xff]
  %v3262 = vld [vmem:[%s1 + $0xb40] sm:$0xff]
  %v3263 = vld [vmem:[%s1 + $0xb48] sm:$0xff]
  %v3264 = vld [vmem:[%s1 + $0xb50] sm:$0xff]
  %v3265 = vld [vmem:[%s1 + $0xb58] sm:$0xff]
  %v3266 = vld [vmem:[%s1 + $0xb70] sm:$0xff]
  %v3267 = vld [vmem:[%s1 + $0xb78] sm:$0xff]
  %v3268 = vld [vmem:[%s1 + $0xb80] sm:$0xff]
  %v3269 = vld [vmem:[%s1 + $0xb88] sm:$0xff]
  %v3270 = vld [vmem:[%s1 + $0xba0] sm:$0xff]
  %v3271 = vld [vmem:[%s1 + $0xba8] sm:$0xff]
  %v3272 = vld [vmem:[%s1 + $0xbb0] sm:$0xff]
  %v3273 = vld [vmem:[%s1 + $0xbb8] sm:$0xff]
  %v3274 = vld [vmem:[%s1 + $0xbd0] sm:$0xff]
  %v3275 = vld [vmem:[%s1 + $0xbd8] sm:$0xff]
  %v3276 = vld [vmem:[%s1 + $0xbe0] sm:$0xff]
  %v3277 = vld [vmem:[%s1 + $0xbe8] sm:$0xff]
  %v3534 = vunpack.c.l.b16 %v3022
  %v3535 = vunpack.c.h.b16 %v3022
  %v3536 = vunpack.c.l.b16 %v3023
  %v3537 = vunpack.c.h.b16 %v3023
  %v3538 = vunpack.c.l.b16 %v3024
  %v3539 = vunpack.c.h.b16 %v3024
  %v3540 = vunpack.c.l.b16 %v3025
  %v3541 = vunpack.c.h.b16 %v3025
  %v3542 = vunpack.c.l.b16 %v3026
  %v3543 = vunpack.c.h.b16 %v3026
  %v3544 = vunpack.c.l.b16 %v3027
  %v3545 = vunpack.c.h.b16 %v3027
  %v3546 = vunpack.c.l.b16 %v3028
  %v3547 = vunpack.c.h.b16 %v3028
  %v3548 = vunpack.c.l.b16 %v3029
  %v3549 = vunpack.c.h.b16 %v3029
  %v3550 = vunpack.c.l.b16 %v3030
  %v3551 = vunpack.c.h.b16 %v3030
  %v3552 = vunpack.c.l.b16 %v3031
  %v3553 = vunpack.c.h.b16 %v3031
  %v3554 = vunpack.c.l.b16 %v3032
  %v3555 = vunpack.c.h.b16 %v3032
  %v3556 = vunpack.c.l.b16 %v3033
  %v3557 = vunpack.c.h.b16 %v3033
  %v3558 = vunpack.c.l.b16 %v3034
  %v3559 = vunpack.c.h.b16 %v3034
  %v3560 = vunpack.c.l.b16 %v3035
  %v3561 = vunpack.c.h.b16 %v3035
  %v3562 = vunpack.c.l.b16 %v3036
  %v3563 = vunpack.c.h.b16 %v3036
  %v3564 = vunpack.c.l.b16 %v3037
  %v3565 = vunpack.c.h.b16 %v3037
  %v3566 = vunpack.c.l.b16 %v3038
  %v3567 = vunpack.c.h.b16 %v3038
  %v3568 = vunpack.c.l.b16 %v3039
  %v3569 = vunpack.c.h.b16 %v3039
  %v3570 = vunpack.c.l.b16 %v3040
  %v3571 = vunpack.c.h.b16 %v3040
  %v3572 = vunpack.c.l.b16 %v3041
  %v3573 = vunpack.c.h.b16 %v3041
  %v3574 = vunpack.c.l.b16 %v3042
  %v3575 = vunpack.c.h.b16 %v3042
  %v3576 = vunpack.c.l.b16 %v3043
  %v3577 = vunpack.c.h.b16 %v3043
  %v3578 = vunpack.c.l.b16 %v3044
  %v3579 = vunpack.c.h.b16 %v3044
  %v3580 = vunpack.c.l.b16 %v3045
  %v3581 = vunpack.c.h.b16 %v3045
  %v3582 = vunpack.c.l.b16 %v3046
  %v3583 = vunpack.c.h.b16 %v3046
  %v3584 = vunpack.c.l.b16 %v3047
  %v3585 = vunpack.c.h.b16 %v3047
  %v3586 = vunpack.c.l.b16 %v3048
  %v3587 = vunpack.c.h.b16 %v3048
  %v3588 = vunpack.c.l.b16 %v3049
  %v3589 = vunpack.c.h.b16 %v3049
  %v3590 = vunpack.c.l.b16 %v3050
  %v3591 = vunpack.c.h.b16 %v3050
  %v3592 = vunpack.c.l.b16 %v3051
  %v3593 = vunpack.c.h.b16 %v3051
  %v3594 = vunpack.c.l.b16 %v3052
  %v3595 = vunpack.c.h.b16 %v3052
  %v3596 = vunpack.c.l.b16 %v3053
  %v3597 = vunpack.c.h.b16 %v3053
  %v3598 = vunpack.c.l.b16 %v3054
  %v3599 = vunpack.c.h.b16 %v3054
  %v3600 = vunpack.c.l.b16 %v3055
  %v3601 = vunpack.c.h.b16 %v3055
  %v3602 = vunpack.c.l.b16 %v3056
  %v3603 = vunpack.c.h.b16 %v3056
  %v3604 = vunpack.c.l.b16 %v3057
  %v3605 = vunpack.c.h.b16 %v3057
  %v3606 = vunpack.c.l.b16 %v3058
  %v3607 = vunpack.c.h.b16 %v3058
  %v3608 = vunpack.c.l.b16 %v3059
  %v3609 = vunpack.c.h.b16 %v3059
  %v3610 = vunpack.c.l.b16 %v3060
  %v3611 = vunpack.c.h.b16 %v3060
  %v3612 = vunpack.c.l.b16 %v3061
  %v3613 = vunpack.c.h.b16 %v3061
  %v3614 = vunpack.c.l.b16 %v3062
  %v3615 = vunpack.c.h.b16 %v3062
  %v3616 = vunpack.c.l.b16 %v3063
  %v3617 = vunpack.c.h.b16 %v3063
  %v3618 = vunpack.c.l.b16 %v3064
  %v3619 = vunpack.c.h.b16 %v3064
  %v3620 = vunpack.c.l.b16 %v3065
  %v3621 = vunpack.c.h.b16 %v3065
  %v3622 = vunpack.c.l.b16 %v3066
  %v3623 = vunpack.c.h.b16 %v3066
  %v3624 = vunpack.c.l.b16 %v3067
  %v3625 = vunpack.c.h.b16 %v3067
  %v3626 = vunpack.c.l.b16 %v3068
  %v3627 = vunpack.c.h.b16 %v3068
  %v3628 = vunpack.c.l.b16 %v3069
  %v3629 = vunpack.c.h.b16 %v3069
  %v3630 = vunpack.c.l.b16 %v3070
  %v3631 = vunpack.c.h.b16 %v3070
  %v3632 = vunpack.c.l.b16 %v3071
  %v3633 = vunpack.c.h.b16 %v3071
  %v3634 = vunpack.c.l.b16 %v3072
  %v3635 = vunpack.c.h.b16 %v3072
  %v3636 = vunpack.c.l.b16 %v3073
  %v3637 = vunpack.c.h.b16 %v3073
  %v3638 = vunpack.c.l.b16 %v3074
  %v3639 = vunpack.c.h.b16 %v3074
  %v3640 = vunpack.c.l.b16 %v3075
  %v3641 = vunpack.c.h.b16 %v3075
  %v3642 = vunpack.c.l.b16 %v3076
  %v3643 = vunpack.c.h.b16 %v3076
  %v3644 = vunpack.c.l.b16 %v3077
  %v3645 = vunpack.c.h.b16 %v3077
  %v3646 = vunpack.c.l.b16 %v3078
  %v3647 = vunpack.c.h.b16 %v3078
  %v3648 = vunpack.c.l.b16 %v3079
  %v3649 = vunpack.c.h.b16 %v3079
  %v3650 = vunpack.c.l.b16 %v3080
  %v3651 = vunpack.c.h.b16 %v3080
  %v3652 = vunpack.c.l.b16 %v3081
  %v3653 = vunpack.c.h.b16 %v3081
  %v3654 = vunpack.c.l.b16 %v3082
  %v3655 = vunpack.c.h.b16 %v3082
  %v3656 = vunpack.c.l.b16 %v3083
  %v3657 = vunpack.c.h.b16 %v3083
  %v3658 = vunpack.c.l.b16 %v3084
  %v3659 = vunpack.c.h.b16 %v3084
  %v3660 = vunpack.c.l.b16 %v3085
  %v3661 = vunpack.c.h.b16 %v3085
  %v3662 = vunpack.c.l.b16 %v3086
  %v3663 = vunpack.c.h.b16 %v3086
  %v3664 = vunpack.c.l.b16 %v3087
  %v3665 = vunpack.c.h.b16 %v3087
  %v3666 = vunpack.c.l.b16 %v3088
  %v3667 = vunpack.c.h.b16 %v3088
  %v3668 = vunpack.c.l.b16 %v3089
  %v3669 = vunpack.c.h.b16 %v3089
  %v3670 = vunpack.c.l.b16 %v3090
  %v3671 = vunpack.c.h.b16 %v3090
  %v3672 = vunpack.c.l.b16 %v3091
  %v3673 = vunpack.c.h.b16 %v3091
  %v3674 = vunpack.c.l.b16 %v3092
  %v3675 = vunpack.c.h.b16 %v3092
  %v3676 = vunpack.c.l.b16 %v3093
  %v3677 = vunpack.c.h.b16 %v3093
  %v3678 = vunpack.c.l.b16 %v3094
  %v3679 = vunpack.c.h.b16 %v3094
  %v3680 = vunpack.c.l.b16 %v3095
  %v3681 = vunpack.c.h.b16 %v3095
  %v3682 = vunpack.c.l.b16 %v3096
  %v3683 = vunpack.c.h.b16 %v3096
  %v3684 = vunpack.c.l.b16 %v3097
  %v3685 = vunpack.c.h.b16 %v3097
  %v3686 = vunpack.c.l.b16 %v3098
  %v3687 = vunpack.c.h.b16 %v3098
  %v3688 = vunpack.c.l.b16 %v3099
  %v3689 = vunpack.c.h.b16 %v3099
  %v3690 = vunpack.c.l.b16 %v3100
  %v3691 = vunpack.c.h.b16 %v3100
  %v3692 = vunpack.c.l.b16 %v3101
  %v3693 = vunpack.c.h.b16 %v3101
  %v3694 = vunpack.c.l.b16 %v3102
  %v3695 = vunpack.c.h.b16 %v3102
  %v3696 = vunpack.c.l.b16 %v3103
  %v3697 = vunpack.c.h.b16 %v3103
  %v3698 = vunpack.c.l.b16 %v3104
  %v3699 = vunpack.c.h.b16 %v3104
  %v3700 = vunpack.c.l.b16 %v3105
  %v3701 = vunpack.c.h.b16 %v3105
  %v3702 = vunpack.c.l.b16 %v3106
  %v3703 = vunpack.c.h.b16 %v3106
  %v3704 = vunpack.c.l.b16 %v3107
  %v3705 = vunpack.c.h.b16 %v3107
  %v3706 = vunpack.c.l.b16 %v3108
  %v3707 = vunpack.c.h.b16 %v3108
  %v3708 = vunpack.c.l.b16 %v3109
  %v3709 = vunpack.c.h.b16 %v3109
  %v3710 = vunpack.c.l.b16 %v3110
  %v3711 = vunpack.c.h.b16 %v3110
  %v3712 = vunpack.c.l.b16 %v3111
  %v3713 = vunpack.c.h.b16 %v3111
  %v3714 = vunpack.c.l.b16 %v3112
  %v3715 = vunpack.c.h.b16 %v3112
  %v3716 = vunpack.c.l.b16 %v3113
  %v3717 = vunpack.c.h.b16 %v3113
  %v3718 = vunpack.c.l.b16 %v3114
  %v3719 = vunpack.c.h.b16 %v3114
  %v3720 = vunpack.c.l.b16 %v3115
  %v3721 = vunpack.c.h.b16 %v3115
  %v3722 = vunpack.c.l.b16 %v3116
  %v3723 = vunpack.c.h.b16 %v3116
  %v3724 = vunpack.c.l.b16 %v3117
  %v3725 = vunpack.c.h.b16 %v3117
  %v3726 = vunpack.c.l.b16 %v3118
  %v3727 = vunpack.c.h.b16 %v3118
  %v3728 = vunpack.c.l.b16 %v3119
  %v3729 = vunpack.c.h.b16 %v3119
  %v3730 = vunpack.c.l.b16 %v3120
  %v3731 = vunpack.c.h.b16 %v3120
  %v3732 = vunpack.c.l.b16 %v3121
  %v3733 = vunpack.c.h.b16 %v3121
  %v3734 = vunpack.c.l.b16 %v3122
  %v3735 = vunpack.c.h.b16 %v3122
  %v3736 = vunpack.c.l.b16 %v3123
  %v3737 = vunpack.c.h.b16 %v3123
  %v3738 = vunpack.c.l.b16 %v3124
  %v3739 = vunpack.c.h.b16 %v3124
  %v3740 = vunpack.c.l.b16 %v3125
  %v3741 = vunpack.c.h.b16 %v3125
  %v3742 = vunpack.c.l.b16 %v3126
  %v3743 = vunpack.c.h.b16 %v3126
  %v3744 = vunpack.c.l.b16 %v3127
  %v3745 = vunpack.c.h.b16 %v3127
  %v3746 = vunpack.c.l.b16 %v3128
  %v3747 = vunpack.c.h.b16 %v3128
  %v3748 = vunpack.c.l.b16 %v3129
  %v3749 = vunpack.c.h.b16 %v3129
  %v3750 = vunpack.c.l.b16 %v3130
  %v3751 = vunpack.c.h.b16 %v3130
  %v3752 = vunpack.c.l.b16 %v3131
  %v3753 = vunpack.c.h.b16 %v3131
  %v3754 = vunpack.c.l.b16 %v3132
  %v3755 = vunpack.c.h.b16 %v3132
  %v3756 = vunpack.c.l.b16 %v3133
  %v3757 = vunpack.c.h.b16 %v3133
  %v3758 = vunpack.c.l.b16 %v3134
  %v3759 = vunpack.c.h.b16 %v3134
  %v3760 = vunpack.c.l.b16 %v3135
  %v3761 = vunpack.c.h.b16 %v3135
  %v3762 = vunpack.c.l.b16 %v3136
  %v3763 = vunpack.c.h.b16 %v3136
  %v3764 = vunpack.c.l.b16 %v3137
  %v3765 = vunpack.c.h.b16 %v3137
  %v3766 = vunpack.c.l.b16 %v3138
  %v3767 = vunpack.c.h.b16 %v3138
  %v3768 = vunpack.c.l.b16 %v3139
  %v3769 = vunpack.c.h.b16 %v3139
  %v3770 = vunpack.c.l.b16 %v3140
  %v3771 = vunpack.c.h.b16 %v3140
  %v3772 = vunpack.c.l.b16 %v3141
  %v3773 = vunpack.c.h.b16 %v3141
  %v3774 = vunpack.c.l.b16 %v3142
  %v3775 = vunpack.c.h.b16 %v3142
  %v3776 = vunpack.c.l.b16 %v3143
  %v3777 = vunpack.c.h.b16 %v3143
  %v3778 = vunpack.c.l.b16 %v3144
  %v3779 = vunpack.c.h.b16 %v3144
  %v3780 = vunpack.c.l.b16 %v3145
  %v3781 = vunpack.c.h.b16 %v3145
  %v3782 = vunpack.c.l.b16 %v3146
  %v3783 = vunpack.c.h.b16 %v3146
  %v3784 = vunpack.c.l.b16 %v3147
  %v3785 = vunpack.c.h.b16 %v3147
  %v3786 = vunpack.c.l.b16 %v3148
  %v3787 = vunpack.c.h.b16 %v3148
  %v3788 = vunpack.c.l.b16 %v3149
  %v3789 = vunpack.c.h.b16 %v3149
  %v3790 = vunpack.c.l.b16 %v3150
  %v3791 = vunpack.c.h.b16 %v3150
  %v3792 = vunpack.c.l.b16 %v3151
  %v3793 = vunpack.c.h.b16 %v3151
  %v3794 = vunpack.c.l.b16 %v3152
  %v3795 = vunpack.c.h.b16 %v3152
  %v3796 = vunpack.c.l.b16 %v3153
  %v3797 = vunpack.c.h.b16 %v3153
  %v3798 = vunpack.c.l.b16 %v3154
  %v3799 = vunpack.c.h.b16 %v3154
  %v3800 = vunpack.c.l.b16 %v3155
  %v3801 = vunpack.c.h.b16 %v3155
  %v3802 = vunpack.c.l.b16 %v3156
  %v3803 = vunpack.c.h.b16 %v3156
  %v3804 = vunpack.c.l.b16 %v3157
  %v3805 = vunpack.c.h.b16 %v3157
  %v3806 = vunpack.c.l.b16 %v3158
  %v3807 = vunpack.c.h.b16 %v3158
  %v3808 = vunpack.c.l.b16 %v3159
  %v3809 = vunpack.c.h.b16 %v3159
  %v3810 = vunpack.c.l.b16 %v3160
  %v3811 = vunpack.c.h.b16 %v3160
  %v3812 = vunpack.c.l.b16 %v3161
  %v3813 = vunpack.c.h.b16 %v3161
  %v3814 = vunpack.c.l.b16 %v3162
  %v3815 = vunpack.c.h.b16 %v3162
  %v3816 = vunpack.c.l.b16 %v3163
  %v3817 = vunpack.c.h.b16 %v3163
  %v3818 = vunpack.c.l.b16 %v3164
  %v3819 = vunpack.c.h.b16 %v3164
  %v3820 = vunpack.c.l.b16 %v3165
  %v3821 = vunpack.c.h.b16 %v3165
  %v3822 = vunpack.c.l.b16 %v3166
  %v3823 = vunpack.c.h.b16 %v3166
  %v3824 = vunpack.c.l.b16 %v3167
  %v3825 = vunpack.c.h.b16 %v3167
  %v3826 = vunpack.c.l.b16 %v3168
  %v3827 = vunpack.c.h.b16 %v3168
  %v3828 = vunpack.c.l.b16 %v3169
  %v3829 = vunpack.c.h.b16 %v3169
  %v3830 = vunpack.c.l.b16 %v3170
  %v3831 = vunpack.c.h.b16 %v3170
  %v3832 = vunpack.c.l.b16 %v3171
  %v3833 = vunpack.c.h.b16 %v3171
  %v3834 = vunpack.c.l.b16 %v3172
  %v3835 = vunpack.c.h.b16 %v3172
  %v3836 = vunpack.c.l.b16 %v3173
  %v3837 = vunpack.c.h.b16 %v3173
  %v3838 = vunpack.c.l.b16 %v3174
  %v3839 = vunpack.c.h.b16 %v3174
  %v3840 = vunpack.c.l.b16 %v3175
  %v3841 = vunpack.c.h.b16 %v3175
  %v3842 = vunpack.c.l.b16 %v3176
  %v3843 = vunpack.c.h.b16 %v3176
  %v3844 = vunpack.c.l.b16 %v3177
  %v3845 = vunpack.c.h.b16 %v3177
  %v3846 = vunpack.c.l.b16 %v3178
  %v3847 = vunpack.c.h.b16 %v3178
  %v3848 = vunpack.c.l.b16 %v3179
  %v3849 = vunpack.c.h.b16 %v3179
  %v3850 = vunpack.c.l.b16 %v3180
  %v3851 = vunpack.c.h.b16 %v3180
  %v3852 = vunpack.c.l.b16 %v3181
  %v3853 = vunpack.c.h.b16 %v3181
  %v3854 = vunpack.c.l.b16 %v3182
  %v3855 = vunpack.c.h.b16 %v3182
  %v3856 = vunpack.c.l.b16 %v3183
  %v3857 = vunpack.c.h.b16 %v3183
  %v3858 = vunpack.c.l.b16 %v3184
  %v3859 = vunpack.c.h.b16 %v3184
  %v3860 = vunpack.c.l.b16 %v3185
  %v3861 = vunpack.c.h.b16 %v3185
  %v3862 = vunpack.c.l.b16 %v3186
  %v3863 = vunpack.c.h.b16 %v3186
  %v3864 = vunpack.c.l.b16 %v3187
  %v3865 = vunpack.c.h.b16 %v3187
  %v3866 = vunpack.c.l.b16 %v3188
  %v3867 = vunpack.c.h.b16 %v3188
  %v3868 = vunpack.c.l.b16 %v3189
  %v3869 = vunpack.c.h.b16 %v3189
  %v3870 = vunpack.c.l.b16 %v3190
  %v3871 = vunpack.c.h.b16 %v3190
  %v3872 = vunpack.c.l.b16 %v3191
  %v3873 = vunpack.c.h.b16 %v3191
  %v3874 = vunpack.c.l.b16 %v3192
  %v3875 = vunpack.c.h.b16 %v3192
  %v3876 = vunpack.c.l.b16 %v3193
  %v3877 = vunpack.c.h.b16 %v3193
  %v3878 = vunpack.c.l.b16 %v3194
  %v3879 = vunpack.c.h.b16 %v3194
  %v3880 = vunpack.c.l.b16 %v3195
  %v3881 = vunpack.c.h.b16 %v3195
  %v3882 = vunpack.c.l.b16 %v3196
  %v3883 = vunpack.c.h.b16 %v3196
  %v3884 = vunpack.c.l.b16 %v3197
  %v3885 = vunpack.c.h.b16 %v3197
  %v3886 = vunpack.c.l.b16 %v3198
  %v3887 = vunpack.c.h.b16 %v3198
  %v3888 = vunpack.c.l.b16 %v3199
  %v3889 = vunpack.c.h.b16 %v3199
  %v3890 = vunpack.c.l.b16 %v3200
  %v3891 = vunpack.c.h.b16 %v3200
  %v3892 = vunpack.c.l.b16 %v3201
  %v3893 = vunpack.c.h.b16 %v3201
  %v3894 = vunpack.c.l.b16 %v3202
  %v3895 = vunpack.c.h.b16 %v3202
  %v3896 = vunpack.c.l.b16 %v3203
  %v3897 = vunpack.c.h.b16 %v3203
  %v3898 = vunpack.c.l.b16 %v3204
  %v3899 = vunpack.c.h.b16 %v3204
  %v3900 = vunpack.c.l.b16 %v3205
  %v3901 = vunpack.c.h.b16 %v3205
  %v3902 = vunpack.c.l.b16 %v3206
  %v3903 = vunpack.c.h.b16 %v3206
  %v3904 = vunpack.c.l.b16 %v3207
  %v3905 = vunpack.c.h.b16 %v3207
  %v3906 = vunpack.c.l.b16 %v3208
  %v3907 = vunpack.c.h.b16 %v3208
  %v3908 = vunpack.c.l.b16 %v3209
  %v3909 = vunpack.c.h.b16 %v3209
  %v3910 = vunpack.c.l.b16 %v3210
  %v3911 = vunpack.c.h.b16 %v3210
  %v3912 = vunpack.c.l.b16 %v3211
  %v3913 = vunpack.c.h.b16 %v3211
  %v3914 = vunpack.c.l.b16 %v3212
  %v3915 = vunpack.c.h.b16 %v3212
  %v3916 = vunpack.c.l.b16 %v3213
  %v3917 = vunpack.c.h.b16 %v3213
  %v3918 = vunpack.c.l.b16 %v3214
  %v3919 = vunpack.c.h.b16 %v3214
  %v3920 = vunpack.c.l.b16 %v3215
  %v3921 = vunpack.c.h.b16 %v3215
  %v3922 = vunpack.c.l.b16 %v3216
  %v3923 = vunpack.c.h.b16 %v3216
  %v3924 = vunpack.c.l.b16 %v3217
  %v3925 = vunpack.c.h.b16 %v3217
  %v3926 = vunpack.c.l.b16 %v3218
  %v3927 = vunpack.c.h.b16 %v3218
  %v3928 = vunpack.c.l.b16 %v3219
  %v3929 = vunpack.c.h.b16 %v3219
  %v3930 = vunpack.c.l.b16 %v3220
  %v3931 = vunpack.c.h.b16 %v3220
  %v3932 = vunpack.c.l.b16 %v3221
  %v3933 = vunpack.c.h.b16 %v3221
  %v3934 = vunpack.c.l.b16 %v3222
  %v3935 = vunpack.c.h.b16 %v3222
  %v3936 = vunpack.c.l.b16 %v3223
  %v3937 = vunpack.c.h.b16 %v3223
  %v3938 = vunpack.c.l.b16 %v3224
  %v3939 = vunpack.c.h.b16 %v3224
  %v3940 = vunpack.c.l.b16 %v3225
  %v3941 = vunpack.c.h.b16 %v3225
  %v3942 = vunpack.c.l.b16 %v3226
  %v3943 = vunpack.c.h.b16 %v3226
  %v3944 = vunpack.c.l.b16 %v3227
  %v3945 = vunpack.c.h.b16 %v3227
  %v3946 = vunpack.c.l.b16 %v3228
  %v3947 = vunpack.c.h.b16 %v3228
  %v3948 = vunpack.c.l.b16 %v3229
  %v3949 = vunpack.c.h.b16 %v3229
  %v3950 = vunpack.c.l.b16 %v3230
  %v3951 = vunpack.c.h.b16 %v3230
  %v3952 = vunpack.c.l.b16 %v3231
  %v3953 = vunpack.c.h.b16 %v3231
  %v3954 = vunpack.c.l.b16 %v3232
  %v3955 = vunpack.c.h.b16 %v3232
  %v3956 = vunpack.c.l.b16 %v3233
  %v3957 = vunpack.c.h.b16 %v3233
  %v3958 = vunpack.c.l.b16 %v3234
  %v3959 = vunpack.c.h.b16 %v3234
  %v3960 = vunpack.c.l.b16 %v3235
  %v3961 = vunpack.c.h.b16 %v3235
  %v3962 = vunpack.c.l.b16 %v3236
  %v3963 = vunpack.c.h.b16 %v3236
  %v3964 = vunpack.c.l.b16 %v3237
  %v3965 = vunpack.c.h.b16 %v3237
  %v3966 = vunpack.c.l.b16 %v3238
  %v3967 = vunpack.c.h.b16 %v3238
  %v3968 = vunpack.c.l.b16 %v3239
  %v3969 = vunpack.c.h.b16 %v3239
  %v3970 = vunpack.c.l.b16 %v3240
  %v3971 = vunpack.c.h.b16 %v3240
  %v3972 = vunpack.c.l.b16 %v3241
  %v3973 = vunpack.c.h.b16 %v3241
  %v3974 = vunpack.c.l.b16 %v3242
  %v3975 = vunpack.c.h.b16 %v3242
  %v3976 = vunpack.c.l.b16 %v3243
  %v3977 = vunpack.c.h.b16 %v3243
  %v3978 = vunpack.c.l.b16 %v3244
  %v3979 = vunpack.c.h.b16 %v3244
  %v3980 = vunpack.c.l.b16 %v3245
  %v3981 = vunpack.c.h.b16 %v3245
  %v3982 = vunpack.c.l.b16 %v3246
  %v3983 = vunpack.c.h.b16 %v3246
  %v3984 = vunpack.c.l.b16 %v3247
  %v3985 = vunpack.c.h.b16 %v3247
  %v3986 = vunpack.c.l.b16 %v3248
  %v3987 = vunpack.c.h.b16 %v3248
  %v3988 = vunpack.c.l.b16 %v3249
  %v3989 = vunpack.c.h.b16 %v3249
  %v3990 = vunpack.c.l.b16 %v3250
  %v3991 = vunpack.c.h.b16 %v3250
  %v3992 = vunpack.c.l.b16 %v3251
  %v3993 = vunpack.c.h.b16 %v3251
  %v3994 = vunpack.c.l.b16 %v3252
  %v3995 = vunpack.c.h.b16 %v3252
  %v3996 = vunpack.c.l.b16 %v3253
  %v3997 = vunpack.c.h.b16 %v3253
  %v3998 = vunpack.c.l.b16 %v3254
  %v3999 = vunpack.c.h.b16 %v3254
  %v4000 = vunpack.c.l.b16 %v3255
  %v4001 = vunpack.c.h.b16 %v3255
  %v4002 = vunpack.c.l.b16 %v3256
  %v4003 = vunpack.c.h.b16 %v3256
  %v4004 = vunpack.c.l.b16 %v3257
  %v4005 = vunpack.c.h.b16 %v3257
  %v4006 = vunpack.c.l.b16 %v3258
  %v4007 = vunpack.c.h.b16 %v3258
  %v4008 = vunpack.c.l.b16 %v3259
  %v4009 = vunpack.c.h.b16 %v3259
  %v4010 = vunpack.c.l.b16 %v3260
  %v4011 = vunpack.c.h.b16 %v3260
  %v4012 = vunpack.c.l.b16 %v3261
  %v4013 = vunpack.c.h.b16 %v3261
  %v4014 = vunpack.c.l.b16 %v3262
  %v4015 = vunpack.c.h.b16 %v3262
  %v4016 = vunpack.c.l.b16 %v3263
  %v4017 = vunpack.c.h.b16 %v3263
  %v4018 = vunpack.c.l.b16 %v3264
  %v4019 = vunpack.c.h.b16 %v3264
  %v4020 = vunpack.c.l.b16 %v3265
  %v4021 = vunpack.c.h.b16 %v3265
  %v4022 = vunpack.c.l.b16 %v3266
  %v4023 = vunpack.c.h.b16 %v3266
  %v4024 = vunpack.c.l.b16 %v3267
  %v4025 = vunpack.c.h.b16 %v3267
  %v4026 = vunpack.c.l.b16 %v3268
  %v4027 = vunpack.c.h.b16 %v3268
  %v4028 = vunpack.c.l.b16 %v3269
  %v4029 = vunpack.c.h.b16 %v3269
  %v4030 = vunpack.c.l.b16 %v3270
  %v4031 = vunpack.c.h.b16 %v3270
  %v4032 = vunpack.c.l.b16 %v3271
  %v4033 = vunpack.c.h.b16 %v3271
  %v4034 = vunpack.c.l.b16 %v3272
  %v4035 = vunpack.c.h.b16 %v3272
  %v4036 = vunpack.c.l.b16 %v3273
  %v4037 = vunpack.c.h.b16 %v3273
  %v4038 = vunpack.c.l.b16 %v3274
  %v4039 = vunpack.c.h.b16 %v3274
  %v4040 = vunpack.c.l.b16 %v3275
  %v4041 = vunpack.c.h.b16 %v3275
  %v4042 = vunpack.c.l.b16 %v3276
  %v4043 = vunpack.c.h.b16 %v3276
  %v4044 = vunpack.c.l.b16 %v3277
  %v4045 = vunpack.c.h.b16 %v3277
  %v4046 = vpack.c.b16 %v3542, %v3534
  %v4047 = vpack.c.b16 %v3543, %v3535
  %v4048 = vpack.c.b16 %v3544, %v3536
  %v4049 = vpack.c.b16 %v3545, %v3537
  %v4050 = vpack.c.b16 %v3546, %v3538
  %v4051 = vpack.c.b16 %v3547, %v3539
  %v4052 = vpack.c.b16 %v3548, %v3540
  %v4053 = vpack.c.b16 %v3549, %v3541
  %v4054 = vpack.c.b16 %v3558, %v3550
  %v4055 = vpack.c.b16 %v3559, %v3551
  %v4056 = vpack.c.b16 %v3560, %v3552
  %v4057 = vpack.c.b16 %v3561, %v3553
  %v4058 = vpack.c.b16 %v3562, %v3554
  %v4059 = vpack.c.b16 %v3563, %v3555
  %v4060 = vpack.c.b16 %v3564, %v3556
  %v4061 = vpack.c.b16 %v3565, %v3557
  %v4062 = vpack.c.b16 %v3574, %v3566
  %v4063 = vpack.c.b16 %v3575, %v3567
  %v4064 = vpack.c.b16 %v3576, %v3568
  %v4065 = vpack.c.b16 %v3577, %v3569
  %v4066 = vpack.c.b16 %v3578, %v3570
  %v4067 = vpack.c.b16 %v3579, %v3571
  %v4068 = vpack.c.b16 %v3580, %v3572
  %v4069 = vpack.c.b16 %v3581, %v3573
  %v4070 = vpack.c.b16 %v3590, %v3582
  %v4071 = vpack.c.b16 %v3591, %v3583
  %v4072 = vpack.c.b16 %v3592, %v3584
  %v4073 = vpack.c.b16 %v3593, %v3585
  %v4074 = vpack.c.b16 %v3594, %v3586
  %v4075 = vpack.c.b16 %v3595, %v3587
  %v4076 = vpack.c.b16 %v3596, %v3588
  %v4077 = vpack.c.b16 %v3597, %v3589
  %v4078 = vpack.c.b16 %v3606, %v3598
  %v4079 = vpack.c.b16 %v3607, %v3599
  %v4080 = vpack.c.b16 %v3608, %v3600
  %v4081 = vpack.c.b16 %v3609, %v3601
  %v4082 = vpack.c.b16 %v3610, %v3602
  %v4083 = vpack.c.b16 %v3611, %v3603
  %v4084 = vpack.c.b16 %v3612, %v3604
  %v4085 = vpack.c.b16 %v3613, %v3605
  %v4086 = vpack.c.b16 %v3622, %v3614
  %v4087 = vpack.c.b16 %v3623, %v3615
  %v4088 = vpack.c.b16 %v3624, %v3616
  %v4089 = vpack.c.b16 %v3625, %v3617
  %v4090 = vpack.c.b16 %v3626, %v3618
  %v4091 = vpack.c.b16 %v3627, %v3619
  %v4092 = vpack.c.b16 %v3628, %v3620
  %v4093 = vpack.c.b16 %v3629, %v3621
  %v4094 = vpack.c.b16 %v3638, %v3630
  %v4095 = vpack.c.b16 %v3639, %v3631
  %v4096 = vpack.c.b16 %v3640, %v3632
  %v4097 = vpack.c.b16 %v3641, %v3633
  %v4098 = vpack.c.b16 %v3642, %v3634
  %v4099 = vpack.c.b16 %v3643, %v3635
  %v4100 = vpack.c.b16 %v3644, %v3636
  %v4101 = vpack.c.b16 %v3645, %v3637
  %v4102 = vpack.c.b16 %v3654, %v3646
  %v4103 = vpack.c.b16 %v3655, %v3647
  %v4104 = vpack.c.b16 %v3656, %v3648
  %v4105 = vpack.c.b16 %v3657, %v3649
  %v4106 = vpack.c.b16 %v3658, %v3650
  %v4107 = vpack.c.b16 %v3659, %v3651
  %v4108 = vpack.c.b16 %v3660, %v3652
  %v4109 = vpack.c.b16 %v3661, %v3653
  %v4110 = vpack.c.b16 %v3670, %v3662
  %v4111 = vpack.c.b16 %v3671, %v3663
  %v4112 = vpack.c.b16 %v3672, %v3664
  %v4113 = vpack.c.b16 %v3673, %v3665
  %v4114 = vpack.c.b16 %v3674, %v3666
  %v4115 = vpack.c.b16 %v3675, %v3667
  %v4116 = vpack.c.b16 %v3676, %v3668
  %v4117 = vpack.c.b16 %v3677, %v3669
  %v4118 = vpack.c.b16 %v3686, %v3678
  %v4119 = vpack.c.b16 %v3687, %v3679
  %v4120 = vpack.c.b16 %v3688, %v3680
  %v4121 = vpack.c.b16 %v3689, %v3681
  %v4122 = vpack.c.b16 %v3690, %v3682
  %v4123 = vpack.c.b16 %v3691, %v3683
  %v4124 = vpack.c.b16 %v3692, %v3684
  %v4125 = vpack.c.b16 %v3693, %v3685
  %v4126 = vpack.c.b16 %v3702, %v3694
  %v4127 = vpack.c.b16 %v3703, %v3695
  %v4128 = vpack.c.b16 %v3704, %v3696
  %v4129 = vpack.c.b16 %v3705, %v3697
  %v4130 = vpack.c.b16 %v3706, %v3698
  %v4131 = vpack.c.b16 %v3707, %v3699
  %v4132 = vpack.c.b16 %v3708, %v3700
  %v4133 = vpack.c.b16 %v3709, %v3701
  %v4134 = vpack.c.b16 %v3718, %v3710
  %v4135 = vpack.c.b16 %v3719, %v3711
  %v4136 = vpack.c.b16 %v3720, %v3712
  %v4137 = vpack.c.b16 %v3721, %v3713
  %v4138 = vpack.c.b16 %v3722, %v3714
  %v4139 = vpack.c.b16 %v3723, %v3715
  %v4140 = vpack.c.b16 %v3724, %v3716
  %v4141 = vpack.c.b16 %v3725, %v3717
  %v4142 = vpack.c.b16 %v3734, %v3726
  %v4143 = vpack.c.b16 %v3735, %v3727
  %v4144 = vpack.c.b16 %v3736, %v3728
  %v4145 = vpack.c.b16 %v3737, %v3729
  %v4146 = vpack.c.b16 %v3738, %v3730
  %v4147 = vpack.c.b16 %v3739, %v3731
  %v4148 = vpack.c.b16 %v3740, %v3732
  %v4149 = vpack.c.b16 %v3741, %v3733
  %v4150 = vpack.c.b16 %v3750, %v3742
  %v4151 = vpack.c.b16 %v3751, %v3743
  %v4152 = vpack.c.b16 %v3752, %v3744
  %v4153 = vpack.c.b16 %v3753, %v3745
  %v4154 = vpack.c.b16 %v3754, %v3746
  %v4155 = vpack.c.b16 %v3755, %v3747
  %v4156 = vpack.c.b16 %v3756, %v3748
  %v4157 = vpack.c.b16 %v3757, %v3749
  %v4158 = vpack.c.b16 %v3766, %v3758
  %v4159 = vpack.c.b16 %v3767, %v3759
  %v4160 = vpack.c.b16 %v3768, %v3760
  %v4161 = vpack.c.b16 %v3769, %v3761
  %v4162 = vpack.c.b16 %v3770, %v3762
  %v4163 = vpack.c.b16 %v3771, %v3763
  %v4164 = vpack.c.b16 %v3772, %v3764
  %v4165 = vpack.c.b16 %v3773, %v3765
  %v4166 = vpack.c.b16 %v3782, %v3774
  %v4167 = vpack.c.b16 %v3783, %v3775
  %v4168 = vpack.c.b16 %v3784, %v3776
  %v4169 = vpack.c.b16 %v3785, %v3777
  %v4170 = vpack.c.b16 %v3786, %v3778
  %v4171 = vpack.c.b16 %v3787, %v3779
  %v4172 = vpack.c.b16 %v3788, %v3780
  %v4173 = vpack.c.b16 %v3789, %v3781
  %v4174 = vpack.c.b16 %v3798, %v3790
  %v4175 = vpack.c.b16 %v3799, %v3791
  %v4176 = vpack.c.b16 %v3800, %v3792
  %v4177 = vpack.c.b16 %v3801, %v3793
  %v4178 = vpack.c.b16 %v3802, %v3794
  %v4179 = vpack.c.b16 %v3803, %v3795
  %v4180 = vpack.c.b16 %v3804, %v3796
  %v4181 = vpack.c.b16 %v3805, %v3797
  %v4182 = vpack.c.b16 %v3814, %v3806
  %v4183 = vpack.c.b16 %v3815, %v3807
  %v4184 = vpack.c.b16 %v3816, %v3808
  %v4185 = vpack.c.b16 %v3817, %v3809
  %v4186 = vpack.c.b16 %v3818, %v3810
  %v4187 = vpack.c.b16 %v3819, %v3811
  %v4188 = vpack.c.b16 %v3820, %v3812
  %v4189 = vpack.c.b16 %v3821, %v3813
  %v4190 = vpack.c.b16 %v3830, %v3822
  %v4191 = vpack.c.b16 %v3831, %v3823
  %v4192 = vpack.c.b16 %v3832, %v3824
  %v4193 = vpack.c.b16 %v3833, %v3825
  %v4194 = vpack.c.b16 %v3834, %v3826
  %v4195 = vpack.c.b16 %v3835, %v3827
  %v4196 = vpack.c.b16 %v3836, %v3828
  %v4197 = vpack.c.b16 %v3837, %v3829
  %v4198 = vpack.c.b16 %v3846, %v3838
  %v4199 = vpack.c.b16 %v3847, %v3839
  %v4200 = vpack.c.b16 %v3848, %v3840
  %v4201 = vpack.c.b16 %v3849, %v3841
  %v4202 = vpack.c.b16 %v3850, %v3842
  %v4203 = vpack.c.b16 %v3851, %v3843
  %v4204 = vpack.c.b16 %v3852, %v3844
  %v4205 = vpack.c.b16 %v3853, %v3845
  %v4206 = vpack.c.b16 %v3862, %v3854
  %v4207 = vpack.c.b16 %v3863, %v3855
  %v4208 = vpack.c.b16 %v3864, %v3856
  %v4209 = vpack.c.b16 %v3865, %v3857
  %v4210 = vpack.c.b16 %v3866, %v3858
  %v4211 = vpack.c.b16 %v3867, %v3859
  %v4212 = vpack.c.b16 %v3868, %v3860
  %v4213 = vpack.c.b16 %v3869, %v3861
  %v4214 = vpack.c.b16 %v3878, %v3870
  %v4215 = vpack.c.b16 %v3879, %v3871
  %v4216 = vpack.c.b16 %v3880, %v3872
  %v4217 = vpack.c.b16 %v3881, %v3873
  %v4218 = vpack.c.b16 %v3882, %v3874
  %v4219 = vpack.c.b16 %v3883, %v3875
  %v4220 = vpack.c.b16 %v3884, %v3876
  %v4221 = vpack.c.b16 %v3885, %v3877
  %v4222 = vpack.c.b16 %v3894, %v3886
  %v4223 = vpack.c.b16 %v3895, %v3887
  %v4224 = vpack.c.b16 %v3896, %v3888
  %v4225 = vpack.c.b16 %v3897, %v3889
  %v4226 = vpack.c.b16 %v3898, %v3890
  %v4227 = vpack.c.b16 %v3899, %v3891
  %v4228 = vpack.c.b16 %v3900, %v3892
  %v4229 = vpack.c.b16 %v3901, %v3893
  %v4230 = vpack.c.b16 %v3910, %v3902
  %v4231 = vpack.c.b16 %v3911, %v3903
  %v4232 = vpack.c.b16 %v3912, %v3904
  %v4233 = vpack.c.b16 %v3913, %v3905
  %v4234 = vpack.c.b16 %v3914, %v3906
  %v4235 = vpack.c.b16 %v3915, %v3907
  %v4236 = vpack.c.b16 %v3916, %v3908
  %v4237 = vpack.c.b16 %v3917, %v3909
  %v4238 = vpack.c.b16 %v3926, %v3918
  %v4239 = vpack.c.b16 %v3927, %v3919
  %v4240 = vpack.c.b16 %v3928, %v3920
  %v4241 = vpack.c.b16 %v3929, %v3921
  %v4242 = vpack.c.b16 %v3930, %v3922
  %v4243 = vpack.c.b16 %v3931, %v3923
  %v4244 = vpack.c.b16 %v3932, %v3924
  %v4245 = vpack.c.b16 %v3933, %v3925
  %v4246 = vpack.c.b16 %v3942, %v3934
  %v4247 = vpack.c.b16 %v3943, %v3935
  %v4248 = vpack.c.b16 %v3944, %v3936
  %v4249 = vpack.c.b16 %v3945, %v3937
  %v4250 = vpack.c.b16 %v3946, %v3938
  %v4251 = vpack.c.b16 %v3947, %v3939
  %v4252 = vpack.c.b16 %v3948, %v3940
  %v4253 = vpack.c.b16 %v3949, %v3941
  %v4254 = vpack.c.b16 %v3958, %v3950
  %v4255 = vpack.c.b16 %v3959, %v3951
  %v4256 = vpack.c.b16 %v3960, %v3952
  %v4257 = vpack.c.b16 %v3961, %v3953
  %v4258 = vpack.c.b16 %v3962, %v3954
  %v4259 = vpack.c.b16 %v3963, %v3955
  %v4260 = vpack.c.b16 %v3964, %v3956
  %v4261 = vpack.c.b16 %v3965, %v3957
  %v4262 = vpack.c.b16 %v3974, %v3966
  %v4263 = vpack.c.b16 %v3975, %v3967
  %v4264 = vpack.c.b16 %v3976, %v3968
  %v4265 = vpack.c.b16 %v3977, %v3969
  %v4266 = vpack.c.b16 %v3978, %v3970
  %v4267 = vpack.c.b16 %v3979, %v3971
  %v4268 = vpack.c.b16 %v3980, %v3972
  %v4269 = vpack.c.b16 %v3981, %v3973
  %v4270 = vpack.c.b16 %v3990, %v3982
  %v4271 = vpack.c.b16 %v3991, %v3983
  %v4272 = vpack.c.b16 %v3992, %v3984
  %v4273 = vpack.c.b16 %v3993, %v3985
  %v4274 = vpack.c.b16 %v3994, %v3986
  %v4275 = vpack.c.b16 %v3995, %v3987
  %v4276 = vpack.c.b16 %v3996, %v3988
  %v4277 = vpack.c.b16 %v3997, %v3989
  %v4278 = vpack.c.b16 %v4006, %v3998
  %v4279 = vpack.c.b16 %v4007, %v3999
  %v4280 = vpack.c.b16 %v4008, %v4000
  %v4281 = vpack.c.b16 %v4009, %v4001
  %v4282 = vpack.c.b16 %v4010, %v4002
  %v4283 = vpack.c.b16 %v4011, %v4003
  %v4284 = vpack.c.b16 %v4012, %v4004
  %v4285 = vpack.c.b16 %v4013, %v4005
  %v4286 = vpack.c.b16 %v4022, %v4014
  %v4287 = vpack.c.b16 %v4023, %v4015
  %v4288 = vpack.c.b16 %v4024, %v4016
  %v4289 = vpack.c.b16 %v4025, %v4017
  %v4290 = vpack.c.b16 %v4026, %v4018
  %v4291 = vpack.c.b16 %v4027, %v4019
  %v4292 = vpack.c.b16 %v4028, %v4020
  %v4293 = vpack.c.b16 %v4029, %v4021
  %v4294 = vpack.c.b16 %v4038, %v4030
  %v4295 = vpack.c.b16 %v4039, %v4031
  %v4296 = vpack.c.b16 %v4040, %v4032
  %v4297 = vpack.c.b16 %v4041, %v4033
  %v4298 = vpack.c.b16 %v4042, %v4034
  %v4299 = vpack.c.b16 %v4043, %v4035
  %v4300 = vpack.c.b16 %v4044, %v4036
  %v4301 = vpack.c.b16 %v4045, %v4037
  %4558 = vmatprep.subr.bf16.mxu0 %v4047
  %4559 = vmatpush1.bf16.msra.mxu0 %v4046
  %4560 = vmatprep.subr.bf16.mxu0 %v4055
  %4561 = vmatpush1.bf16.msra.mxu0 %v4054
  %4562 = vmatprep.subr.bf16.mxu0 %v4063
  %4563 = vmatpush1.bf16.msra.mxu0 %v4062
  %4564 = vmatprep.subr.bf16.mxu0 %v4071
  %4565 = vmatpush1.bf16.msra.mxu0 %v4070
  %4566 = vmatprep.subr.bf16.mxu0 %v4079
  %4567 = vmatpush1.bf16.msra.mxu0 %v4078
  %4568 = vmatprep.subr.bf16.mxu0 %v4087
  %4569 = vmatpush1.bf16.msra.mxu0 %v4086
  %4570 = vmatprep.subr.bf16.mxu0 %v4095
  %4571 = vmatpush1.bf16.msra.mxu0 %v4094
  %4572 = vmatprep.subr.bf16.mxu0 %v4103
  %4573 = vmatpush1.bf16.msra.mxu0 %v4102
  %4574 = vmatprep.subr.bf16.mxu0 %v4111
  %4575 = vmatpush1.bf16.msra.mxu0 %v4110
  %4576 = vmatprep.subr.bf16.mxu0 %v4119
  %4577 = vmatpush1.bf16.msra.mxu0 %v4118
  %4578 = vmatprep.subr.bf16.mxu0 %v4127
  %4579 = vmatpush1.bf16.msra.mxu0 %v4126
  %4580 = vmatprep.subr.bf16.mxu0 %v4135
  %4581 = vmatpush1.bf16.msra.mxu0 %v4134
  %4582 = vmatprep.subr.bf16.mxu0 %v4143
  %4583 = vmatpush1.bf16.msra.mxu0 %v4142
  %4584 = vmatprep.subr.bf16.mxu0 %v4151
  %4585 = vmatpush1.bf16.msra.mxu0 %v4150
  %4586 = vmatprep.subr.bf16.mxu0 %v4159
  %4587 = vmatpush1.bf16.msra.mxu0 %v4158
  %4588 = vmatprep.subr.bf16.mxu0 %v4167
  %4589 = vmatpush1.bf16.msra.mxu0 %v4166
  %4590 = vmatprep.mubr.bf16.mxu0 %v3019
  %4591 = vmatmul.mubr.bf16.gmra.mrb[0].mxu0 %v3018
  %v4592 = vpop.f32.mrb[0].mxu0
  %v4593 = vadd.f32 %v311, %v4592
  %v4594 = vpop.f32.mrb[0].mxu0
  %v4595 = vadd.f32 %v315, %v4594
  %v4596 = vpop.f32.mrb[0].mxu0
  %v4597 = vpop.f32.mrb[0].mxu0
  %4598 = vdwg.mxu0
  %4599 = vmatprep.subr.bf16.mxu0 %v4175
  %4600 = vmatpush1.bf16.msra.mxu0 %v4174
  %4601 = vmatprep.subr.bf16.mxu0 %v4183
  %4602 = vmatpush1.bf16.msra.mxu0 %v4182
  %4603 = vmatprep.subr.bf16.mxu0 %v4191
  %4604 = vmatpush1.bf16.msra.mxu0 %v4190
  %4605 = vmatprep.subr.bf16.mxu0 %v4199
  %4606 = vmatpush1.bf16.msra.mxu0 %v4198
  %4607 = vmatprep.subr.bf16.mxu0 %v4207
  %4608 = vmatpush1.bf16.msra.mxu0 %v4206
  %4609 = vmatprep.subr.bf16.mxu0 %v4215
  %4610 = vmatpush1.bf16.msra.mxu0 %v4214
  %4611 = vmatprep.subr.bf16.mxu0 %v4223
  %4612 = vmatpush1.bf16.msra.mxu0 %v4222
  %4613 = vmatprep.subr.bf16.mxu0 %v4231
  %4614 = vmatpush1.bf16.msra.mxu0 %v4230
  %4615 = vmatprep.subr.bf16.mxu0 %v4239
  %4616 = vmatpush1.bf16.msra.mxu0 %v4238
  %4617 = vmatprep.subr.bf16.mxu0 %v4247
  %4618 = vmatpush1.bf16.msra.mxu0 %v4246
  %4619 = vmatprep.subr.bf16.mxu0 %v4255
  %4620 = vmatpush1.bf16.msra.mxu0 %v4254
  %4621 = vmatprep.subr.bf16.mxu0 %v4263
  %4622 = vmatpush1.bf16.msra.mxu0 %v4262
  %4623 = vmatprep.subr.bf16.mxu0 %v4271
  %4624 = vmatpush1.bf16.msra.mxu0 %v4270
  %4625 = vmatprep.subr.bf16.mxu0 %v4279
  %4626 = vmatpush1.bf16.msra.mxu0 %v4278
  %4627 = vmatprep.subr.bf16.mxu0 %v4287
  %4628 = vmatpush1.bf16.msra.mxu0 %v4286
  %4629 = vmatprep.subr.bf16.mxu0 %v4295
  %4630 = vmatpush1.bf16.msra.mxu0 %v4294
  %4631 = vmatprep.mubr.bf16.mxu0 %v3021
  %4632 = vmatmul.mubr.bf16.gmra.mrb[0].mxu0 %v3020
  %v4633 = vpop.f32.mrb[0].mxu0
  %v4634 = vadd.f32 %v4593, %v4633
  %v4635 = vpop.f32.mrb[0].mxu0
  %v4636 = vadd.f32 %v4595, %v4635
  %v4637 = vpop.f32.mrb[0].mxu0
  %v4638 = vpop.f32.mrb[0].mxu0
  %4639 = vdwg.mxu0
  %4640 = vmatprep.subr.bf16.mxu0 %v4049
  %4641 = vmatpush1.bf16.msra.mxu0 %v4048
  %4642 = vmatprep.subr.bf16.mxu0 %v4057
  %4643 = vmatpush1.bf16.msra.mxu0 %v4056
  %4644 = vmatprep.subr.bf16.mxu0 %v4065
  %4645 = vmatpush1.bf16.msra.mxu0 %v4064
  %4646 = vmatprep.subr.bf16.mxu0 %v4073
  %4647 = vmatpush1.bf16.msra.mxu0 %v4072
  %4648 = vmatprep.subr.bf16.mxu0 %v4081
  %4649 = vmatpush1.bf16.msra.mxu0 %v4080
  %4650 = vmatprep.subr.bf16.mxu0 %v4089
  %4651 = vmatpush1.bf16.msra.mxu0 %v4088
  %4652 = vmatprep.subr.bf16.mxu0 %v4097
  %4653 = vmatpush1.bf16.msra.mxu0 %v4096
  %4654 = vmatprep.subr.bf16.mxu0 %v4105
  %4655 = vmatpush1.bf16.msra.mxu0 %v4104
  %4656 = vmatprep.subr.bf16.mxu0 %v4113
  %4657 = vmatpush1.bf16.msra.mxu0 %v4112
  %4658 = vmatprep.subr.bf16.mxu0 %v4121
  %4659 = vmatpush1.bf16.msra.mxu0 %v4120
  %4660 = vmatprep.subr.bf16.mxu0 %v4129
  %4661 = vmatpush1.bf16.msra.mxu0 %v4128
  %4662 = vmatprep.subr.bf16.mxu0 %v4137
  %4663 = vmatpush1.bf16.msra.mxu0 %v4136
  %4664 = vmatprep.subr.bf16.mxu0 %v4145
  %4665 = vmatpush1.bf16.msra.mxu0 %v4144
  %4666 = vmatprep.subr.bf16.mxu0 %v4153
  %4667 = vmatpush1.bf16.msra.mxu0 %v4152
  %4668 = vmatprep.subr.bf16.mxu0 %v4161
  %4669 = vmatpush1.bf16.msra.mxu0 %v4160
  %4670 = vmatprep.subr.bf16.mxu0 %v4169
  %4671 = vmatpush1.bf16.msra.mxu0 %v4168
  %4672 = vmatprep.mubr.bf16.mxu0 %v3019
  %4673 = vmatmul.mubr.bf16.gmra.mrb[0].mxu0 %v3018
  %v4674 = vpop.f32.mrb[0].mxu0
  %v4675 = vadd.f32 %v319, %v4674
  %v4676 = vpop.f32.mrb[0].mxu0
  %v4677 = vadd.f32 %v323, %v4676
  %v4678 = vpop.f32.mrb[0].mxu0
  %v4679 = vpop.f32.mrb[0].mxu0
  %4680 = vdwg.mxu0
  %4681 = vmatprep.subr.bf16.mxu0 %v4177
  %4682 = vmatpush1.bf16.msra.mxu0 %v4176
  %4683 = vmatprep.subr.bf16.mxu0 %v4185
  %4684 = vmatpush1.bf16.msra.mxu0 %v4184
  %4685 = vmatprep.subr.bf16.mxu0 %v4193
  %4686 = vmatpush1.bf16.msra.mxu0 %v4192
  %4687 = vmatprep.subr.bf16.mxu0 %v4201
  %4688 = vmatpush1.bf16.msra.mxu0 %v4200
  %4689 = vmatprep.subr.bf16.mxu0 %v4209
  %4690 = vmatpush1.bf16.msra.mxu0 %v4208
  %4691 = vmatprep.subr.bf16.mxu0 %v4217
  %4692 = vmatpush1.bf16.msra.mxu0 %v4216
  %4693 = vmatprep.subr.bf16.mxu0 %v4225
  %4694 = vmatpush1.bf16.msra.mxu0 %v4224
  %4695 = vmatprep.subr.bf16.mxu0 %v4233
  %4696 = vmatpush1.bf16.msra.mxu0 %v4232
  %4697 = vmatprep.subr.bf16.mxu0 %v4241
  %4698 = vmatpush1.bf16.msra.mxu0 %v4240
  %4699 = vmatprep.subr.bf16.mxu0 %v4249
  %4700 = vmatpush1.bf16.msra.mxu0 %v4248
  %4701 = vmatprep.subr.bf16.mxu0 %v4257
  %4702 = vmatpush1.bf16.msra.mxu0 %v4256
  %4703 = vmatprep.subr.bf16.mxu0 %v4265
  %4704 = vmatpush1.bf16.msra.mxu0 %v4264
  %4705 = vmatprep.subr.bf16.mxu0 %v4273
  %4706 = vmatpush1.bf16.msra.mxu0 %v4272
  %4707 = vmatprep.subr.bf16.mxu0 %v4281
  %4708 = vmatpush1.bf16.msra.mxu0 %v4280
  %4709 = vmatprep.subr.bf16.mxu0 %v4289
  %4710 = vmatpush1.bf16.msra.mxu0 %v4288
  %4711 = vmatprep.subr.bf16.mxu0 %v4297
  %4712 = vmatpush1.bf16.msra.mxu0 %v4296
  %4713 = vmatprep.mubr.bf16.mxu0 %v3021
  %4714 = vmatmul.mubr.bf16.gmra.mrb[0].mxu0 %v3020
  %v4715 = vpop.f32.mrb[0].mxu0
  %v4716 = vadd.f32 %v4675, %v4715
  %v4717 = vpop.f32.mrb[0].mxu0
  %v4718 = vadd.f32 %v4677, %v4717
  %v4719 = vpop.f32.mrb[0].mxu0
  %v4720 = vpop.f32.mrb[0].mxu0
  %4721 = vdwg.mxu0
  %4722 = vmatprep.subr.bf16.mxu0 %v4051
  %4723 = vmatpush1.bf16.msra.mxu0 %v4050
  %4724 = vmatprep.subr.bf16.mxu0 %v4059
  %4725 = vmatpush1.bf16.msra.mxu0 %v4058
  %4726 = vmatprep.subr.bf16.mxu0 %v4067
  %4727 = vmatpush1.bf16.msra.mxu0 %v4066
  %4728 = vmatprep.subr.bf16.mxu0 %v4075
  %4729 = vmatpush1.bf16.msra.mxu0 %v4074
  %4730 = vmatprep.subr.bf16.mxu0 %v4083
  %4731 = vmatpush1.bf16.msra.mxu0 %v4082
  %4732 = vmatprep.subr.bf16.mxu0 %v4091
  %4733 = vmatpush1.bf16.msra.mxu0 %v4090
  %4734 = vmatprep.subr.bf16.mxu0 %v4099
  %4735 = vmatpush1.bf16.msra.mxu0 %v4098
  %4736 = vmatprep.subr.bf16.mxu0 %v4107
  %4737 = vmatpush1.bf16.msra.mxu0 %v4106
  %4738 = vmatprep.subr.bf16.mxu0 %v4115
  %4739 = vmatpush1.bf16.msra.mxu0 %v4114
  %4740 = vmatprep.subr.bf16.mxu0 %v4123
  %4741 = vmatpush1.bf16.msra.mxu0 %v4122
  %4742 = vmatprep.subr.bf16.mxu0 %v4131
  %4743 = vmatpush1.bf16.msra.mxu0 %v4130
  %4744 = vmatprep.subr.bf16.mxu0 %v4139
  %4745 = vmatpush1.bf16.msra.mxu0 %v4138
  %4746 = vmatprep.subr.bf16.mxu0 %v4147
  %4747 = vmatpush1.bf16.msra.mxu0 %v4146
  %4748 = vmatprep.subr.bf16.mxu0 %v4155
  %4749 = vmatpush1.bf16.msra.mxu0 %v4154
  %4750 = vmatprep.subr.bf16.mxu0 %v4163
  %4751 = vmatpush1.bf16.msra.mxu0 %v4162
  %4752 = vmatprep.subr.bf16.mxu0 %v4171
  %4753 = vmatpush1.bf16.msra.mxu0 %v4170
  %4754 = vmatprep.mubr.bf16.mxu0 %v3019
  %4755 = vmatmul.mubr.bf16.gmra.mrb[0].mxu0 %v3018
  %v4756 = vpop.f32.mrb[0].mxu0
  %v4757 = vadd.f32 %v327, %v4756
  %v4758 = vpop.f32.mrb[0].mxu0
  %v4759 = vadd.f32 %v331, %v4758
  %v4760 = vpop.f32.mrb[0].mxu0
  %v4761 = vpop.f32.mrb[0].mxu0
  %4762 = vdwg.mxu0
  %4763 = vmatprep.subr.bf16.mxu0 %v4179
  %4764 = vmatpush1.bf16.msra.mxu0 %v4178
  %4765 = vmatprep.subr.bf16.mxu0 %v4187
  %4766 = vmatpush1.bf16.msra.mxu0 %v4186
  %4767 = vmatprep.subr.bf16.mxu0 %v4195
  %4768 = vmatpush1.bf16.msra.mxu0 %v4194
  %4769 = vmatprep.subr.bf16.mxu0 %v4203
  %4770 = vmatpush1.bf16.msra.mxu0 %v4202
  %4771 = vmatprep.subr.bf16.mxu0 %v4211
  %4772 = vmatpush1.bf16.msra.mxu0 %v4210
  %4773 = vmatprep.subr.bf16.mxu0 %v4219
  %4774 = vmatpush1.bf16.msra.mxu0 %v4218
  %4775 = vmatprep.subr.bf16.mxu0 %v4227
  %4776 = vmatpush1.bf16.msra.mxu0 %v4226
  %4777 = vmatprep.subr.bf16.mxu0 %v4235
  %4778 = vmatpush1.bf16.msra.mxu0 %v4234
  %4779 = vmatprep.subr.bf16.mxu0 %v4243
  %4780 = vmatpush1.bf16.msra.mxu0 %v4242
  %4781 = vmatprep.subr.bf16.mxu0 %v4251
  %4782 = vmatpush1.bf16.msra.mxu0 %v4250
  %4783 = vmatprep.subr.bf16.mxu0 %v4259
  %4784 = vmatpush1.bf16.msra.mxu0 %v4258
  %4785 = vmatprep.subr.bf16.mxu0 %v4267
  %4786 = vmatpush1.bf16.msra.mxu0 %v4266
  %4787 = vmatprep.subr.bf16.mxu0 %v4275
  %4788 = vmatpush1.bf16.msra.mxu0 %v4274
  %4789 = vmatprep.subr.bf16.mxu0 %v4283
  %4790 = vmatpush1.bf16.msra.mxu0 %v4282
  %4791 = vmatprep.subr.bf16.mxu0 %v4291
  %4792 = vmatpush1.bf16.msra.mxu0 %v4290
  %4793 = vmatprep.subr.bf16.mxu0 %v4299
  %4794 = vmatpush1.bf16.msra.mxu0 %v4298
  %4795 = vmatprep.mubr.bf16.mxu0 %v3021
  %4796 = vmatmul.mubr.bf16.gmra.mrb[0].mxu0 %v3020
  %v4797 = vpop.f32.mrb[0].mxu0
  %v4798 = vadd.f32 %v4757, %v4797
  %v4799 = vpop.f32.mrb[0].mxu0
  %v4800 = vadd.f32 %v4759, %v4799
  %v4801 = vpop.f32.mrb[0].mxu0
  %v4802 = vpop.f32.mrb[0].mxu0
  %4803 = vdwg.mxu0
  %4804 = vmatprep.subr.bf16.mxu0 %v4053
  %4805 = vmatpush1.bf16.msra.mxu0 %v4052
  %4806 = vmatprep.subr.bf16.mxu0 %v4061
  %4807 = vmatpush1.bf16.msra.mxu0 %v4060
  %4808 = vmatprep.subr.bf16.mxu0 %v4069
  %4809 = vmatpush1.bf16.msra.mxu0 %v4068
  %4810 = vmatprep.subr.bf16.mxu0 %v4077
  %4811 = vmatpush1.bf16.msra.mxu0 %v4076
  %4812 = vmatprep.subr.bf16.mxu0 %v4085
  %4813 = vmatpush1.bf16.msra.mxu0 %v4084
  %4814 = vmatprep.subr.bf16.mxu0 %v4093
  %4815 = vmatpush1.bf16.msra.mxu0 %v4092
  %4816 = vmatprep.subr.bf16.mxu0 %v4101
  %4817 = vmatpush1.bf16.msra.mxu0 %v4100
  %4818 = vmatprep.subr.bf16.mxu0 %v4109
  %4819 = vmatpush1.bf16.msra.mxu0 %v4108
  %4820 = vmatprep.subr.bf16.mxu0 %v4117
  %4821 = vmatpush1.bf16.msra.mxu0 %v4116
  %4822 = vmatprep.subr.bf16.mxu0 %v4125
  %4823 = vmatpush1.bf16.msra.mxu0 %v4124
  %4824 = vmatprep.subr.bf16.mxu0 %v4133
  %4825 = vmatpush1.bf16.msra.mxu0 %v4132
  %4826 = vmatprep.subr.bf16.mxu0 %v4141
  %4827 = vmatpush1.bf16.msra.mxu0 %v4140
  %4828 = vmatprep.subr.bf16.mxu0 %v4149
  %4829 = vmatpush1.bf16.msra.mxu0 %v4148
  %4830 = vmatprep.subr.bf16.mxu0 %v4157
  %4831 = vmatpush1.bf16.msra.mxu0 %v4156
  %4832 = vmatprep.subr.bf16.mxu0 %v4165
  %4833 = vmatpush1.bf16.msra.mxu0 %v4164
  %4834 = vmatprep.subr.bf16.mxu0 %v4173
  %4835 = vmatpush1.bf16.msra.mxu0 %v4172
  %4836 = vmatprep.mubr.bf16.mxu0 %v3019
  %4837 = vmatmul.mubr.bf16.gmra.mrb[0].mxu0 %v3018
  %v4838 = vpop.f32.mrb[0].mxu0
  %v4839 = vadd.f32 %v335, %v4838
  %v4840 = vpop.f32.mrb[0].mxu0
  %v4841 = vadd.f32 %v339, %v4840
  %v4842 = vpop.f32.mrb[0].mxu0
  %v4843 = vpop.f32.mrb[0].mxu0
  %4844 = vdwg.mxu0
  %4845 = vmatprep.subr.bf16.mxu0 %v4181
  %4846 = vmatpush1.bf16.msra.mxu0 %v4180
  %4847 = vmatprep.subr.bf16.mxu0 %v4189
  %4848 = vmatpush1.bf16.msra.mxu0 %v4188
  %4849 = vmatprep.subr.bf16.mxu0 %v4197
  %4850 = vmatpush1.bf16.msra.mxu0 %v4196
  %4851 = vmatprep.subr.bf16.mxu0 %v4205
  %4852 = vmatpush1.bf16.msra.mxu0 %v4204
  %4853 = vmatprep.subr.bf16.mxu0 %v4213
  %4854 = vmatpush1.bf16.msra.mxu0 %v4212
  %4855 = vmatprep.subr.bf16.mxu0 %v4221
  %4856 = vmatpush1.bf16.msra.mxu0 %v4220
  %4857 = vmatprep.subr.bf16.mxu0 %v4229
  %4858 = vmatpush1.bf16.msra.mxu0 %v4228
  %4859 = vmatprep.subr.bf16.mxu0 %v4237
  %4860 = vmatpush1.bf16.msra.mxu0 %v4236
  %4861 = vmatprep.subr.bf16.mxu0 %v4245
  %4862 = vmatpush1.bf16.msra.mxu0 %v4244
  %4863 = vmatprep.subr.bf16.mxu0 %v4253
  %4864 = vmatpush1.bf16.msra.mxu0 %v4252
  %4865 = vmatprep.subr.bf16.mxu0 %v4261
  %4866 = vmatpush1.bf16.msra.mxu0 %v4260
  %4867 = vmatprep.subr.bf16.mxu0 %v4269
  %4868 = vmatpush1.bf16.msra.mxu0 %v4268
  %4869 = vmatprep.subr.bf16.mxu0 %v4277
  %4870 = vmatpush1.bf16.msra.mxu0 %v4276
  %4871 = vmatprep.subr.bf16.mxu0 %v4285
  %4872 = vmatpush1.bf16.msra.mxu0 %v4284
  %4873 = vmatprep.subr.bf16.mxu0 %v4293
  %4874 = vmatpush1.bf16.msra.mxu0 %v4292
  %4875 = vmatprep.subr.bf16.mxu0 %v4301
  %4876 = vmatpush1.bf16.msra.mxu0 %v4300
  %4877 = vmatprep.mubr.bf16.mxu0 %v3021
  %4878 = vmatmul.mubr.bf16.gmra.mrb[0].mxu0 %v3020
  %v4879 = vpop.f32.mrb[0].mxu0
  %v4880 = vadd.f32 %v4839, %v4879
  %v4881 = vpop.f32.mrb[0].mxu0
  %v4882 = vadd.f32 %v4841, %v4881
  %v4883 = vpop.f32.mrb[0].mxu0
  %v4884 = vpop.f32.mrb[0].mxu0
  %4885 = vdwg.mxu0
  %v4890 = vcombine.low %v4634, %v4636
  %v4891 = vcombine.low %v4716, %v4718
  %v4893 = vunpack.c.l.s4 1983009808
  %v4894 = vunpack.c.0.s8 %v4893
  %v4895 = vlaneseq
  %v4896 = vshrl.u32 %v4895, 7
  %v4897 = vsub.s32 %v4894, %v4896
  %v4898 = vrot.slane %v4890, %v4897
  %v4900 = vunpack.c.l.s4 1983009808
  %v4901 = vunpack.c.0.s8 %v4900
  %v4902 = vlaneseq
  %v4903 = vshrl.u32 %v4902, 7
  %v4904 = vsub.s32 %v4901, %v4903
  %v4905 = vrot.slane %v4891, %v4904
  %v4906 = vcombine.low %v4898, %v4905
  %v4908 = vadd.f32 %v2993, %v4906
  %v4909 = vmul.f32 %v4908, 0.5
  %v4910 = vtanh.pop %v4909
  %v4911 = vadd.f32 %v4910, 1.0
  %v4912 = vmul.f32 %v4911, 0.5
  %v4917 = vcombine.low %v4798, %v4800
  %v4918 = vcombine.low %v4880, %v4882
  %v4920 = vunpack.c.l.s4 1983009808
  %v4921 = vunpack.c.0.s8 %v4920
  %v4922 = vlaneseq
  %v4923 = vshrl.u32 %v4922, 7
  %v4924 = vsub.s32 %v4921, %v4923
  %v4925 = vrot.slane %v4917, %v4924
  %v4927 = vunpack.c.l.s4 1983009808
  %v4928 = vunpack.c.0.s8 %v4927
  %v4929 = vlaneseq
  %v4930 = vshrl.u32 %v4929, 7
  %v4931 = vsub.s32 %v4928, %v4930
  %v4932 = vrot.slane %v4918, %v4931
  %v4933 = vcombine.low %v4925, %v4932
  %v4935 = vadd.f32 %v2994, %v4933
  %v4936 = vmul.f32 %v4935, 0.5
  %v4937 = vtanh.pop %v4936
  %v4938 = vadd.f32 %v4937, 1.0
  %v4939 = vmul.f32 %v4938, 0.5
  %v4940 = vld [vmem:[%s1 + $0x20] sm:$0xff]
  %v4941 = vld [vmem:[%s1 + $0x28] sm:$0xff]
  %v4942 = vld [vmem:[%s1 + $0x50] sm:$0xff]
  %v4943 = vld [vmem:[%s1 + $0x58] sm:$0xff]
  %v4944 = vld [vmem:[%s1 + $0x80] sm:$0xff]
  %v4945 = vld [vmem:[%s1 + $0x88] sm:$0xff]
  %v4946 = vld [vmem:[%s1 + $0xb0] sm:$0xff]
  %v4947 = vld [vmem:[%s1 + $0xb8] sm:$0xff]
  %v4948 = vld [vmem:[%s1 + $0xe0] sm:$0xff]
  %v4949 = vld [vmem:[%s1 + $0xe8] sm:$0xff]
  %v4950 = vld [vmem:[%s1 + $0x110] sm:$0xff]
  %v4951 = vld [vmem:[%s1 + $0x118] sm:$0xff]
  %v4952 = vld [vmem:[%s1 + $0x140] sm:$0xff]
  %v4953 = vld [vmem:[%s1 + $0x148] sm:$0xff]
  %v4954 = vld [vmem:[%s1 + $0x170] sm:$0xff]
  %v4955 = vld [vmem:[%s1 + $0x178] sm:$0xff]
  %v4956 = vld [vmem:[%s1 + $0x1a0] sm:$0xff]
  %v4957 = vld [vmem:[%s1 + $0x1a8] sm:$0xff]
  %v4958 = vld [vmem:[%s1 + $0x1d0] sm:$0xff]
  %v4959 = vld [vmem:[%s1 + $0x1d8] sm:$0xff]
  %v4960 = vld [vmem:[%s1 + $0x200] sm:$0xff]
  %v4961 = vld [vmem:[%s1 + $0x208] sm:$0xff]
  %v4962 = vld [vmem:[%s1 + $0x230] sm:$0xff]
  %v4963 = vld [vmem:[%s1 + $0x238] sm:$0xff]
  %v4964 = vld [vmem:[%s1 + $0x260] sm:$0xff]
  %v4965 = vld [vmem:[%s1 + $0x268] sm:$0xff]
  %v4966 = vld [vmem:[%s1 + $0x290] sm:$0xff]
  %v4967 = vld [vmem:[%s1 + $0x298] sm:$0xff]
  %v4968 = vld [vmem:[%s1 + $0x2c0] sm:$0xff]
  %v4969 = vld [vmem:[%s1 + $0x2c8] sm:$0xff]
  %v4970 = vld [vmem:[%s1 + $0x2f0] sm:$0xff]
  %v4971 = vld [vmem:[%s1 + $0x2f8] sm:$0xff]
  %v4972 = vld [vmem:[%s1 + $0x320] sm:$0xff]
  %v4973 = vld [vmem:[%s1 + $0x328] sm:$0xff]
  %v4974 = vld [vmem:[%s1 + $0x350] sm:$0xff]
  %v4975 = vld [vmem:[%s1 + $0x358] sm:$0xff]
  %v4976 = vld [vmem:[%s1 + $0x380] sm:$0xff]
  %v4977 = vld [vmem:[%s1 + $0x388] sm:$0xff]
  %v4978 = vld [vmem:[%s1 + $0x3b0] sm:$0xff]
  %v4979 = vld [vmem:[%s1 + $0x3b8] sm:$0xff]
  %v4980 = vld [vmem:[%s1 + $0x3e0] sm:$0xff]
  %v4981 = vld [vmem:[%s1 + $0x3e8] sm:$0xff]
  %v4982 = vld [vmem:[%s1 + $0x410] sm:$0xff]
  %v4983 = vld [vmem:[%s1 + $0x418] sm:$0xff]
  %v4984 = vld [vmem:[%s1 + $0x440] sm:$0xff]
  %v4985 = vld [vmem:[%s1 + $0x448] sm:$0xff]
  %v4986 = vld [vmem:[%s1 + $0x470] sm:$0xff]
  %v4987 = vld [vmem:[%s1 + $0x478] sm:$0xff]
  %v4988 = vld [vmem:[%s1 + $0x4a0] sm:$0xff]
  %v4989 = vld [vmem:[%s1 + $0x4a8] sm:$0xff]
  %v4990 = vld [vmem:[%s1 + $0x4d0] sm:$0xff]
  %v4991 = vld [vmem:[%s1 + $0x4d8] sm:$0xff]
  %v4992 = vld [vmem:[%s1 + $0x500] sm:$0xff]
  %v4993 = vld [vmem:[%s1 + $0x508] sm:$0xff]
  %v4994 = vld [vmem:[%s1 + $0x530] sm:$0xff]
  %v4995 = vld [vmem:[%s1 + $0x538] sm:$0xff]
  %v4996 = vld [vmem:[%s1 + $0x560] sm:$0xff]
  %v4997 = vld [vmem:[%s1 + $0x568] sm:$0xff]
  %v4998 = vld [vmem:[%s1 + $0x590] sm:$0xff]
  %v4999 = vld [vmem:[%s1 + $0x598] sm:$0xff]
  %v5000 = vld [vmem:[%s1 + $0x5c0] sm:$0xff]
  %v5001 = vld [vmem:[%s1 + $0x5c8] sm:$0xff]
  %v5002 = vld [vmem:[%s1 + $0x5f0] sm:$0xff]
  %v5003 = vld [vmem:[%s1 + $0x5f8] sm:$0xff]
  %v5004 = vld [vmem:[%s1 + $0x620] sm:$0xff]
  %v5005 = vld [vmem:[%s1 + $0x628] sm:$0xff]
  %v5006 = vld [vmem:[%s1 + $0x650] sm:$0xff]
  %v5007 = vld [vmem:[%s1 + $0x658] sm:$0xff]
  %v5008 = vld [vmem:[%s1 + $0x680] sm:$0xff]
  %v5009 = vld [vmem:[%s1 + $0x688] sm:$0xff]
  %v5010 = vld [vmem:[%s1 + $0x6b0] sm:$0xff]
  %v5011 = vld [vmem:[%s1 + $0x6b8] sm:$0xff]
  %v5012 = vld [vmem:[%s1 + $0x6e0] sm:$0xff]
  %v5013 = vld [vmem:[%s1 + $0x6e8] sm:$0xff]
  %v5014 = vld [vmem:[%s1 + $0x710] sm:$0xff]
  %v5015 = vld [vmem:[%s1 + $0x718] sm:$0xff]
  %v5016 = vld [vmem:[%s1 + $0x740] sm:$0xff]
  %v5017 = vld [vmem:[%s1 + $0x748] sm:$0xff]
  %v5018 = vld [vmem:[%s1 + $0x770] sm:$0xff]
  %v5019 = vld [vmem:[%s1 + $0x778] sm:$0xff]
  %v5020 = vld [vmem:[%s1 + $0x7a0] sm:$0xff]
  %v5021 = vld [vmem:[%s1 + $0x7a8] sm:$0xff]
  %v5022 = vld [vmem:[%s1 + $0x7d0] sm:$0xff]
  %v5023 = vld [vmem:[%s1 + $0x7d8] sm:$0xff]
  %v5024 = vld [vmem:[%s1 + $0x800] sm:$0xff]
  %v5025 = vld [vmem:[%s1 + $0x808] sm:$0xff]
  %v5026 = vld [vmem:[%s1 + $0x830] sm:$0xff]
  %v5027 = vld [vmem:[%s1 + $0x838] sm:$0xff]
  %v5028 = vld [vmem:[%s1 + $0x860] sm:$0xff]
  %v5029 = vld [vmem:[%s1 + $0x868] sm:$0xff]
  %v5030 = vld [vmem:[%s1 + $0x890] sm:$0xff]
  %v5031 = vld [vmem:[%s1 + $0x898] sm:$0xff]
  %v5032 = vld [vmem:[%s1 + $0x8c0] sm:$0xff]
  %v5033 = vld [vmem:[%s1 + $0x8c8] sm:$0xff]
  %v5034 = vld [vmem:[%s1 + $0x8f0] sm:$0xff]
  %v5035 = vld [vmem:[%s1 + $0x8f8] sm:$0xff]
  %v5036 = vld [vmem:[%s1 + $0x920] sm:$0xff]
  %v5037 = vld [vmem:[%s1 + $0x928] sm:$0xff]
  %v5038 = vld [vmem:[%s1 + $0x950] sm:$0xff]
  %v5039 = vld [vmem:[%s1 + $0x958] sm:$0xff]
  %v5040 = vld [vmem:[%s1 + $0x980] sm:$0xff]
  %v5041 = vld [vmem:[%s1 + $0x988] sm:$0xff]
  %v5042 = vld [vmem:[%s1 + $0x9b0] sm:$0xff]
  %v5043 = vld [vmem:[%s1 + $0x9b8] sm:$0xff]
  %v5044 = vld [vmem:[%s1 + $0x9e0] sm:$0xff]
  %v5045 = vld [vmem:[%s1 + $0x9e8] sm:$0xff]
  %v5046 = vld [vmem:[%s1 + $0xa10] sm:$0xff]
  %v5047 = vld [vmem:[%s1 + $0xa18] sm:$0xff]
  %v5048 = vld [vmem:[%s1 + $0xa40] sm:$0xff]
  %v5049 = vld [vmem:[%s1 + $0xa48] sm:$0xff]
  %v5050 = vld [vmem:[%s1 + $0xa70] sm:$0xff]
  %v5051 = vld [vmem:[%s1 + $0xa78] sm:$0xff]
  %v5052 = vld [vmem:[%s1 + $0xaa0] sm:$0xff]
  %v5053 = vld [vmem:[%s1 + $0xaa8] sm:$0xff]
  %v5054 = vld [vmem:[%s1 + $0xad0] sm:$0xff]
  %v5055 = vld [vmem:[%s1 + $0xad8] sm:$0xff]
  %v5056 = vld [vmem:[%s1 + $0xb00] sm:$0xff]
  %v5057 = vld [vmem:[%s1 + $0xb08] sm:$0xff]
  %v5058 = vld [vmem:[%s1 + $0xb30] sm:$0xff]
  %v5059 = vld [vmem:[%s1 + $0xb38] sm:$0xff]
  %v5060 = vld [vmem:[%s1 + $0xb60] sm:$0xff]
  %v5061 = vld [vmem:[%s1 + $0xb68] sm:$0xff]
  %v5062 = vld [vmem:[%s1 + $0xb90] sm:$0xff]
  %v5063 = vld [vmem:[%s1 + $0xb98] sm:$0xff]
  %v5064 = vld [vmem:[%s1 + $0xbc0] sm:$0xff]
  %v5065 = vld [vmem:[%s1 + $0xbc8] sm:$0xff]
  %v5066 = vld [vmem:[%s1 + $0xbf0] sm:$0xff]
  %v5067 = vld [vmem:[%s1 + $0xbf8] sm:$0xff]
  %v5196 = vunpack.c.l.b16 %v4940
  %v5197 = vunpack.c.h.b16 %v4940
  %v5198 = vunpack.c.l.b16 %v4941
  %v5199 = vunpack.c.h.b16 %v4941
  %v5200 = vunpack.c.l.b16 %v4942
  %v5201 = vunpack.c.h.b16 %v4942
  %v5202 = vunpack.c.l.b16 %v4943
  %v5203 = vunpack.c.h.b16 %v4943
  %v5204 = vunpack.c.l.b16 %v4944
  %v5205 = vunpack.c.h.b16 %v4944
  %v5206 = vunpack.c.l.b16 %v4945
  %v5207 = vunpack.c.h.b16 %v4945
  %v5208 = vunpack.c.l.b16 %v4946
  %v5209 = vunpack.c.h.b16 %v4946
  %v5210 = vunpack.c.l.b16 %v4947
  %v5211 = vunpack.c.h.b16 %v4947
  %v5212 = vunpack.c.l.b16 %v4948
  %v5213 = vunpack.c.h.b16 %v4948
  %v5214 = vunpack.c.l.b16 %v4949
  %v5215 = vunpack.c.h.b16 %v4949
  %v5216 = vunpack.c.l.b16 %v4950
  %v5217 = vunpack.c.h.b16 %v4950
  %v5218 = vunpack.c.l.b16 %v4951
  %v5219 = vunpack.c.h.b16 %v4951
  %v5220 = vunpack.c.l.b16 %v4952
  %v5221 = vunpack.c.h.b16 %v4952
  %v5222 = vunpack.c.l.b16 %v4953
  %v5223 = vunpack.c.h.b16 %v4953
  %v5224 = vunpack.c.l.b16 %v4954
  %v5225 = vunpack.c.h.b16 %v4954
  %v5226 = vunpack.c.l.b16 %v4955
  %v5227 = vunpack.c.h.b16 %v4955
  %v5228 = vunpack.c.l.b16 %v4956
  %v5229 = vunpack.c.h.b16 %v4956
  %v5230 = vunpack.c.l.b16 %v4957
  %v5231 = vunpack.c.h.b16 %v4957
  %v5232 = vunpack.c.l.b16 %v4958
  %v5233 = vunpack.c.h.b16 %v4958
  %v5234 = vunpack.c.l.b16 %v4959
  %v5235 = vunpack.c.h.b16 %v4959
  %v5236 = vunpack.c.l.b16 %v4960
  %v5237 = vunpack.c.h.b16 %v4960
  %v5238 = vunpack.c.l.b16 %v4961
  %v5239 = vunpack.c.h.b16 %v4961
  %v5240 = vunpack.c.l.b16 %v4962
  %v5241 = vunpack.c.h.b16 %v4962
  %v5242 = vunpack.c.l.b16 %v4963
  %v5243 = vunpack.c.h.b16 %v4963
  %v5244 = vunpack.c.l.b16 %v4964
  %v5245 = vunpack.c.h.b16 %v4964
  %v5246 = vunpack.c.l.b16 %v4965
  %v5247 = vunpack.c.h.b16 %v4965
  %v5248 = vunpack.c.l.b16 %v4966
  %v5249 = vunpack.c.h.b16 %v4966
  %v5250 = vunpack.c.l.b16 %v4967
  %v5251 = vunpack.c.h.b16 %v4967
  %v5252 = vunpack.c.l.b16 %v4968
  %v5253 = vunpack.c.h.b16 %v4968
  %v5254 = vunpack.c.l.b16 %v4969
  %v5255 = vunpack.c.h.b16 %v4969
  %v5256 = vunpack.c.l.b16 %v4970
  %v5257 = vunpack.c.h.b16 %v4970
  %v5258 = vunpack.c.l.b16 %v4971
  %v5259 = vunpack.c.h.b16 %v4971
  %v5260 = vunpack.c.l.b16 %v4972
  %v5261 = vunpack.c.h.b16 %v4972
  %v5262 = vunpack.c.l.b16 %v4973
  %v5263 = vunpack.c.h.b16 %v4973
  %v5264 = vunpack.c.l.b16 %v4974
  %v5265 = vunpack.c.h.b16 %v4974
  %v5266 = vunpack.c.l.b16 %v4975
  %v5267 = vunpack.c.h.b16 %v4975
  %v5268 = vunpack.c.l.b16 %v4976
  %v5269 = vunpack.c.h.b16 %v4976
  %v5270 = vunpack.c.l.b16 %v4977
  %v5271 = vunpack.c.h.b16 %v4977
  %v5272 = vunpack.c.l.b16 %v4978
  %v5273 = vunpack.c.h.b16 %v4978
  %v5274 = vunpack.c.l.b16 %v4979
  %v5275 = vunpack.c.h.b16 %v4979
  %v5276 = vunpack.c.l.b16 %v4980
  %v5277 = vunpack.c.h.b16 %v4980
  %v5278 = vunpack.c.l.b16 %v4981
  %v5279 = vunpack.c.h.b16 %v4981
  %v5280 = vunpack.c.l.b16 %v4982
  %v5281 = vunpack.c.h.b16 %v4982
  %v5282 = vunpack.c.l.b16 %v4983
  %v5283 = vunpack.c.h.b16 %v4983
  %v5284 = vunpack.c.l.b16 %v4984
  %v5285 = vunpack.c.h.b16 %v4984
  %v5286 = vunpack.c.l.b16 %v4985
  %v5287 = vunpack.c.h.b16 %v4985
  %v5288 = vunpack.c.l.b16 %v4986
  %v5289 = vunpack.c.h.b16 %v4986
  %v5290 = vunpack.c.l.b16 %v4987
  %v5291 = vunpack.c.h.b16 %v4987
  %v5292 = vunpack.c.l.b16 %v4988
  %v5293 = vunpack.c.h.b16 %v4988
  %v5294 = vunpack.c.l.b16 %v4989
  %v5295 = vunpack.c.h.b16 %v4989
  %v5296 = vunpack.c.l.b16 %v4990
  %v5297 = vunpack.c.h.b16 %v4990
  %v5298 = vunpack.c.l.b16 %v4991
  %v5299 = vunpack.c.h.b16 %v4991
  %v5300 = vunpack.c.l.b16 %v4992
  %v5301 = vunpack.c.h.b16 %v4992
  %v5302 = vunpack.c.l.b16 %v4993
  %v5303 = vunpack.c.h.b16 %v4993
  %v5304 = vunpack.c.l.b16 %v4994
  %v5305 = vunpack.c.h.b16 %v4994
  %v5306 = vunpack.c.l.b16 %v4995
  %v5307 = vunpack.c.h.b16 %v4995
  %v5308 = vunpack.c.l.b16 %v4996
  %v5309 = vunpack.c.h.b16 %v4996
  %v5310 = vunpack.c.l.b16 %v4997
  %v5311 = vunpack.c.h.b16 %v4997
  %v5312 = vunpack.c.l.b16 %v4998
  %v5313 = vunpack.c.h.b16 %v4998
  %v5314 = vunpack.c.l.b16 %v4999
  %v5315 = vunpack.c.h.b16 %v4999
  %v5316 = vunpack.c.l.b16 %v5000
  %v5317 = vunpack.c.h.b16 %v5000
  %v5318 = vunpack.c.l.b16 %v5001
  %v5319 = vunpack.c.h.b16 %v5001
  %v5320 = vunpack.c.l.b16 %v5002
  %v5321 = vunpack.c.h.b16 %v5002
  %v5322 = vunpack.c.l.b16 %v5003
  %v5323 = vunpack.c.h.b16 %v5003
  %v5324 = vunpack.c.l.b16 %v5004
  %v5325 = vunpack.c.h.b16 %v5004
  %v5326 = vunpack.c.l.b16 %v5005
  %v5327 = vunpack.c.h.b16 %v5005
  %v5328 = vunpack.c.l.b16 %v5006
  %v5329 = vunpack.c.h.b16 %v5006
  %v5330 = vunpack.c.l.b16 %v5007
  %v5331 = vunpack.c.h.b16 %v5007
  %v5332 = vunpack.c.l.b16 %v5008
  %v5333 = vunpack.c.h.b16 %v5008
  %v5334 = vunpack.c.l.b16 %v5009
  %v5335 = vunpack.c.h.b16 %v5009
  %v5336 = vunpack.c.l.b16 %v5010
  %v5337 = vunpack.c.h.b16 %v5010
  %v5338 = vunpack.c.l.b16 %v5011
  %v5339 = vunpack.c.h.b16 %v5011
  %v5340 = vunpack.c.l.b16 %v5012
  %v5341 = vunpack.c.h.b16 %v5012
  %v5342 = vunpack.c.l.b16 %v5013
  %v5343 = vunpack.c.h.b16 %v5013
  %v5344 = vunpack.c.l.b16 %v5014
  %v5345 = vunpack.c.h.b16 %v5014
  %v5346 = vunpack.c.l.b16 %v5015
  %v5347 = vunpack.c.h.b16 %v5015
  %v5348 = vunpack.c.l.b16 %v5016
  %v5349 = vunpack.c.h.b16 %v5016
  %v5350 = vunpack.c.l.b16 %v5017
  %v5351 = vunpack.c.h.b16 %v5017
  %v5352 = vunpack.c.l.b16 %v5018
  %v5353 = vunpack.c.h.b16 %v5018
  %v5354 = vunpack.c.l.b16 %v5019
  %v5355 = vunpack.c.h.b16 %v5019
  %v5356 = vunpack.c.l.b16 %v5020
  %v5357 = vunpack.c.h.b16 %v5020
  %v5358 = vunpack.c.l.b16 %v5021
  %v5359 = vunpack.c.h.b16 %v5021
  %v5360 = vunpack.c.l.b16 %v5022
  %v5361 = vunpack.c.h.b16 %v5022
  %v5362 = vunpack.c.l.b16 %v5023
  %v5363 = vunpack.c.h.b16 %v5023
  %v5364 = vunpack.c.l.b16 %v5024
  %v5365 = vunpack.c.h.b16 %v5024
  %v5366 = vunpack.c.l.b16 %v5025
  %v5367 = vunpack.c.h.b16 %v5025
  %v5368 = vunpack.c.l.b16 %v5026
  %v5369 = vunpack.c.h.b16 %v5026
  %v5370 = vunpack.c.l.b16 %v5027
  %v5371 = vunpack.c.h.b16 %v5027
  %v5372 = vunpack.c.l.b16 %v5028
  %v5373 = vunpack.c.h.b16 %v5028
  %v5374 = vunpack.c.l.b16 %v5029
  %v5375 = vunpack.c.h.b16 %v5029
  %v5376 = vunpack.c.l.b16 %v5030
  %v5377 = vunpack.c.h.b16 %v5030
  %v5378 = vunpack.c.l.b16 %v5031
  %v5379 = vunpack.c.h.b16 %v5031
  %v5380 = vunpack.c.l.b16 %v5032
  %v5381 = vunpack.c.h.b16 %v5032
  %v5382 = vunpack.c.l.b16 %v5033
  %v5383 = vunpack.c.h.b16 %v5033
  %v5384 = vunpack.c.l.b16 %v5034
  %v5385 = vunpack.c.h.b16 %v5034
  %v5386 = vunpack.c.l.b16 %v5035
  %v5387 = vunpack.c.h.b16 %v5035
  %v5388 = vunpack.c.l.b16 %v5036
  %v5389 = vunpack.c.h.b16 %v5036
  %v5390 = vunpack.c.l.b16 %v5037
  %v5391 = vunpack.c.h.b16 %v5037
  %v5392 = vunpack.c.l.b16 %v5038
  %v5393 = vunpack.c.h.b16 %v5038
  %v5394 = vunpack.c.l.b16 %v5039
  %v5395 = vunpack.c.h.b16 %v5039
  %v5396 = vunpack.c.l.b16 %v5040
  %v5397 = vunpack.c.h.b16 %v5040
  %v5398 = vunpack.c.l.b16 %v5041
  %v5399 = vunpack.c.h.b16 %v5041
  %v5400 = vunpack.c.l.b16 %v5042
  %v5401 = vunpack.c.h.b16 %v5042
  %v5402 = vunpack.c.l.b16 %v5043
  %v5403 = vunpack.c.h.b16 %v5043
  %v5404 = vunpack.c.l.b16 %v5044
  %v5405 = vunpack.c.h.b16 %v5044
  %v5406 = vunpack.c.l.b16 %v5045
  %v5407 = vunpack.c.h.b16 %v5045
  %v5408 = vunpack.c.l.b16 %v5046
  %v5409 = vunpack.c.h.b16 %v5046
  %v5410 = vunpack.c.l.b16 %v5047
  %v5411 = vunpack.c.h.b16 %v5047
  %v5412 = vunpack.c.l.b16 %v5048
  %v5413 = vunpack.c.h.b16 %v5048
  %v5414 = vunpack.c.l.b16 %v5049
  %v5415 = vunpack.c.h.b16 %v5049
  %v5416 = vunpack.c.l.b16 %v5050
  %v5417 = vunpack.c.h.b16 %v5050
  %v5418 = vunpack.c.l.b16 %v5051
  %v5419 = vunpack.c.h.b16 %v5051
  %v5420 = vunpack.c.l.b16 %v5052
  %v5421 = vunpack.c.h.b16 %v5052
  %v5422 = vunpack.c.l.b16 %v5053
  %v5423 = vunpack.c.h.b16 %v5053
  %v5424 = vunpack.c.l.b16 %v5054
  %v5425 = vunpack.c.h.b16 %v5054
  %v5426 = vunpack.c.l.b16 %v5055
  %v5427 = vunpack.c.h.b16 %v5055
  %v5428 = vunpack.c.l.b16 %v5056
  %v5429 = vunpack.c.h.b16 %v5056
  %v5430 = vunpack.c.l.b16 %v5057
  %v5431 = vunpack.c.h.b16 %v5057
  %v5432 = vunpack.c.l.b16 %v5058
  %v5433 = vunpack.c.h.b16 %v5058
  %v5434 = vunpack.c.l.b16 %v5059
  %v5435 = vunpack.c.h.b16 %v5059
  %v5436 = vunpack.c.l.b16 %v5060
  %v5437 = vunpack.c.h.b16 %v5060
  %v5438 = vunpack.c.l.b16 %v5061
  %v5439 = vunpack.c.h.b16 %v5061
  %v5440 = vunpack.c.l.b16 %v5062
  %v5441 = vunpack.c.h.b16 %v5062
  %v5442 = vunpack.c.l.b16 %v5063
  %v5443 = vunpack.c.h.b16 %v5063
  %v5444 = vunpack.c.l.b16 %v5064
  %v5445 = vunpack.c.h.b16 %v5064
  %v5446 = vunpack.c.l.b16 %v5065
  %v5447 = vunpack.c.h.b16 %v5065
  %v5448 = vunpack.c.l.b16 %v5066
  %v5449 = vunpack.c.h.b16 %v5066
  %v5450 = vunpack.c.l.b16 %v5067
  %v5451 = vunpack.c.h.b16 %v5067
  %v5452 = vpack.c.b16 %v5200, %v5196
  %v5453 = vpack.c.b16 %v5201, %v5197
  %v5454 = vpack.c.b16 %v5202, %v5198
  %v5455 = vpack.c.b16 %v5203, %v5199
  %v5456 = vpack.c.b16 %v5208, %v5204
  %v5457 = vpack.c.b16 %v5209, %v5205
  %v5458 = vpack.c.b16 %v5210, %v5206
  %v5459 = vpack.c.b16 %v5211, %v5207
  %v5460 = vpack.c.b16 %v5216, %v5212
  %v5461 = vpack.c.b16 %v5217, %v5213
  %v5462 = vpack.c.b16 %v5218, %v5214
  %v5463 = vpack.c.b16 %v5219, %v5215
  %v5464 = vpack.c.b16 %v5224, %v5220
  %v5465 = vpack.c.b16 %v5225, %v5221
  %v5466 = vpack.c.b16 %v5226, %v5222
  %v5467 = vpack.c.b16 %v5227, %v5223
  %v5468 = vpack.c.b16 %v5232, %v5228
  %v5469 = vpack.c.b16 %v5233, %v5229
  %v5470 = vpack.c.b16 %v5234, %v5230
  %v5471 = vpack.c.b16 %v5235, %v5231
  %v5472 = vpack.c.b16 %v5240, %v5236
  %v5473 = vpack.c.b16 %v5241, %v5237
  %v5474 = vpack.c.b16 %v5242, %v5238
  %v5475 = vpack.c.b16 %v5243, %v5239
  %v5476 = vpack.c.b16 %v5248, %v5244
  %v5477 = vpack.c.b16 %v5249, %v5245
  %v5478 = vpack.c.b16 %v5250, %v5246
  %v5479 = vpack.c.b16 %v5251, %v5247
  %v5480 = vpack.c.b16 %v5256, %v5252
  %v5481 = vpack.c.b16 %v5257, %v5253
  %v5482 = vpack.c.b16 %v5258, %v5254
  %v5483 = vpack.c.b16 %v5259, %v5255
  %v5484 = vpack.c.b16 %v5264, %v5260
  %v5485 = vpack.c.b16 %v5265, %v5261
  %v5486 = vpack.c.b16 %v5266, %v5262
  %v5487 = vpack.c.b16 %v5267, %v5263
  %v5488 = vpack.c.b16 %v5272, %v5268
  %v5489 = vpack.c.b16 %v5273, %v5269
  %v5490 = vpack.c.b16 %v5274, %v5270
  %v5491 = vpack.c.b16 %v5275, %v5271
  %v5492 = vpack.c.b16 %v5280, %v5276
  %v5493 = vpack.c.b16 %v5281, %v5277
  %v5494 = vpack.c.b16 %v5282, %v5278
  %v5495 = vpack.c.b16 %v5283, %v5279
  %v5496 = vpack.c.b16 %v5288, %v5284
  %v5497 = vpack.c.b16 %v5289, %v5285
  %v5498 = vpack.c.b16 %v5290, %v5286
  %v5499 = vpack.c.b16 %v5291, %v5287
  %v5500 = vpack.c.b16 %v5296, %v5292
  %v5501 = vpack.c.b16 %v5297, %v5293
  %v5502 = vpack.c.b16 %v5298, %v5294
  %v5503 = vpack.c.b16 %v5299, %v5295
  %v5504 = vpack.c.b16 %v5304, %v5300
  %v5505 = vpack.c.b16 %v5305, %v5301
  %v5506 = vpack.c.b16 %v5306, %v5302
  %v5507 = vpack.c.b16 %v5307, %v5303
  %v5508 = vpack.c.b16 %v5312, %v5308
  %v5509 = vpack.c.b16 %v5313, %v5309
  %v5510 = vpack.c.b16 %v5314, %v5310
  %v5511 = vpack.c.b16 %v5315, %v5311
  %v5512 = vpack.c.b16 %v5320, %v5316
  %v5513 = vpack.c.b16 %v5321, %v5317
  %v5514 = vpack.c.b16 %v5322, %v5318
  %v5515 = vpack.c.b16 %v5323, %v5319
  %v5516 = vpack.c.b16 %v5328, %v5324
  %v5517 = vpack.c.b16 %v5329, %v5325
  %v5518 = vpack.c.b16 %v5330, %v5326
  %v5519 = vpack.c.b16 %v5331, %v5327
  %v5520 = vpack.c.b16 %v5336, %v5332
  %v5521 = vpack.c.b16 %v5337, %v5333
  %v5522 = vpack.c.b16 %v5338, %v5334
  %v5523 = vpack.c.b16 %v5339, %v5335
  %v5524 = vpack.c.b16 %v5344, %v5340
  %v5525 = vpack.c.b16 %v5345, %v5341
  %v5526 = vpack.c.b16 %v5346, %v5342
  %v5527 = vpack.c.b16 %v5347, %v5343
  %v5528 = vpack.c.b16 %v5352, %v5348
  %v5529 = vpack.c.b16 %v5353, %v5349
  %v5530 = vpack.c.b16 %v5354, %v5350
  %v5531 = vpack.c.b16 %v5355, %v5351
  %v5532 = vpack.c.b16 %v5360, %v5356
  %v5533 = vpack.c.b16 %v5361, %v5357
  %v5534 = vpack.c.b16 %v5362, %v5358
  %v5535 = vpack.c.b16 %v5363, %v5359
  %v5536 = vpack.c.b16 %v5368, %v5364
  %v5537 = vpack.c.b16 %v5369, %v5365
  %v5538 = vpack.c.b16 %v5370, %v5366
  %v5539 = vpack.c.b16 %v5371, %v5367
  %v5540 = vpack.c.b16 %v5376, %v5372
  %v5541 = vpack.c.b16 %v5377, %v5373
  %v5542 = vpack.c.b16 %v5378, %v5374
  %v5543 = vpack.c.b16 %v5379, %v5375
  %v5544 = vpack.c.b16 %v5384, %v5380
  %v5545 = vpack.c.b16 %v5385, %v5381
  %v5546 = vpack.c.b16 %v5386, %v5382
  %v5547 = vpack.c.b16 %v5387, %v5383
  %v5548 = vpack.c.b16 %v5392, %v5388
  %v5549 = vpack.c.b16 %v5393, %v5389
  %v5550 = vpack.c.b16 %v5394, %v5390
  %v5551 = vpack.c.b16 %v5395, %v5391
  %v5552 = vpack.c.b16 %v5400, %v5396
  %v5553 = vpack.c.b16 %v5401, %v5397
  %v5554 = vpack.c.b16 %v5402, %v5398
  %v5555 = vpack.c.b16 %v5403, %v5399
  %v5556 = vpack.c.b16 %v5408, %v5404
  %v5557 = vpack.c.b16 %v5409, %v5405
  %v5558 = vpack.c.b16 %v5410, %v5406
  %v5559 = vpack.c.b16 %v5411, %v5407
  %v5560 = vpack.c.b16 %v5416, %v5412
  %v5561 = vpack.c.b16 %v5417, %v5413
  %v5562 = vpack.c.b16 %v5418, %v5414
  %v5563 = vpack.c.b16 %v5419, %v5415
  %v5564 = vpack.c.b16 %v5424, %v5420
  %v5565 = vpack.c.b16 %v5425, %v5421
  %v5566 = vpack.c.b16 %v5426, %v5422
  %v5567 = vpack.c.b16 %v5427, %v5423
  %v5568 = vpack.c.b16 %v5432, %v5428
  %v5569 = vpack.c.b16 %v5433, %v5429
  %v5570 = vpack.c.b16 %v5434, %v5430
  %v5571 = vpack.c.b16 %v5435, %v5431
  %v5572 = vpack.c.b16 %v5440, %v5436
  %v5573 = vpack.c.b16 %v5441, %v5437
  %v5574 = vpack.c.b16 %v5442, %v5438
  %v5575 = vpack.c.b16 %v5443, %v5439
  %v5576 = vpack.c.b16 %v5448, %v5444
  %v5577 = vpack.c.b16 %v5449, %v5445
  %v5578 = vpack.c.b16 %v5450, %v5446
  %v5579 = vpack.c.b16 %v5451, %v5447
  %5708 = vmatprep.subr.bf16.mxu0 %v5453
  %5709 = vmatpush1.bf16.msra.mxu0 %v5452
  %5710 = vmatprep.subr.bf16.mxu0 %v5457
  %5711 = vmatpush1.bf16.msra.mxu0 %v5456
  %5712 = vmatprep.subr.bf16.mxu0 %v5461
  %5713 = vmatpush1.bf16.msra.mxu0 %v5460
  %5714 = vmatprep.subr.bf16.mxu0 %v5465
  %5715 = vmatpush1.bf16.msra.mxu0 %v5464
  %5716 = vmatprep.subr.bf16.mxu0 %v5469
  %5717 = vmatpush1.bf16.msra.mxu0 %v5468
  %5718 = vmatprep.subr.bf16.mxu0 %v5473
  %5719 = vmatpush1.bf16.msra.mxu0 %v5472
  %5720 = vmatprep.subr.bf16.mxu0 %v5477
  %5721 = vmatpush1.bf16.msra.mxu0 %v5476
  %5722 = vmatprep.subr.bf16.mxu0 %v5481
  %5723 = vmatpush1.bf16.msra.mxu0 %v5480
  %5724 = vmatprep.subr.bf16.mxu0 %v5485
  %5725 = vmatpush1.bf16.msra.mxu0 %v5484
  %5726 = vmatprep.subr.bf16.mxu0 %v5489
  %5727 = vmatpush1.bf16.msra.mxu0 %v5488
  %5728 = vmatprep.subr.bf16.mxu0 %v5493
  %5729 = vmatpush1.bf16.msra.mxu0 %v5492
  %5730 = vmatprep.subr.bf16.mxu0 %v5497
  %5731 = vmatpush1.bf16.msra.mxu0 %v5496
  %5732 = vmatprep.subr.bf16.mxu0 %v5501
  %5733 = vmatpush1.bf16.msra.mxu0 %v5500
  %5734 = vmatprep.subr.bf16.mxu0 %v5505
  %5735 = vmatpush1.bf16.msra.mxu0 %v5504
  %5736 = vmatprep.subr.bf16.mxu0 %v5509
  %5737 = vmatpush1.bf16.msra.mxu0 %v5508
  %5738 = vmatprep.subr.bf16.mxu0 %v5513
  %5739 = vmatpush1.bf16.msra.mxu0 %v5512
  %5740 = vmatprep.mubr.bf16.mxu0 %v3019
  %5741 = vmatmul.mubr.bf16.gmra.mrb[0].mxu0 %v3018
  %v5742 = vpop.f32.mrb[0].mxu0
  %v5743 = vadd.f32 %v2142, %v5742
  %v5744 = vpop.f32.mrb[0].mxu0
  %v5745 = vadd.f32 %v2146, %v5744
  %v5746 = vpop.f32.mrb[0].mxu0
  %v5747 = vpop.f32.mrb[0].mxu0
  %5748 = vdwg.mxu0
  %5749 = vmatprep.subr.bf16.mxu0 %v5517
  %5750 = vmatpush1.bf16.msra.mxu0 %v5516
  %5751 = vmatprep.subr.bf16.mxu0 %v5521
  %5752 = vmatpush1.bf16.msra.mxu0 %v5520
  %5753 = vmatprep.subr.bf16.mxu0 %v5525
  %5754 = vmatpush1.bf16.msra.mxu0 %v5524
  %5755 = vmatprep.subr.bf16.mxu0 %v5529
  %5756 = vmatpush1.bf16.msra.mxu0 %v5528
  %5757 = vmatprep.subr.bf16.mxu0 %v5533
  %5758 = vmatpush1.bf16.msra.mxu0 %v5532
  %5759 = vmatprep.subr.bf16.mxu0 %v5537
  %5760 = vmatpush1.bf16.msra.mxu0 %v5536
  %5761 = vmatprep.subr.bf16.mxu0 %v5541
  %5762 = vmatpush1.bf16.msra.mxu0 %v5540
  %5763 = vmatprep.subr.bf16.mxu0 %v5545
  %5764 = vmatpush1.bf16.msra.mxu0 %v5544
  %5765 = vmatprep.subr.bf16.mxu0 %v5549
  %5766 = vmatpush1.bf16.msra.mxu0 %v5548
  %5767 = vmatprep.subr.bf16.mxu0 %v5553
  %5768 = vmatpush1.bf16.msra.mxu0 %v5552
  %5769 = vmatprep.subr.bf16.mxu0 %v5557
  %5770 = vmatpush1.bf16.msra.mxu0 %v5556
  %5771 = vmatprep.subr.bf16.mxu0 %v5561
  %5772 = vmatpush1.bf16.msra.mxu0 %v5560
  %5773 = vmatprep.subr.bf16.mxu0 %v5565
  %5774 = vmatpush1.bf16.msra.mxu0 %v5564
  %5775 = vmatprep.subr.bf16.mxu0 %v5569
  %5776 = vmatpush1.bf16.msra.mxu0 %v5568
  %5777 = vmatprep.subr.bf16.mxu0 %v5573
  %5778 = vmatpush1.bf16.msra.mxu0 %v5572
  %5779 = vmatprep.subr.bf16.mxu0 %v5577
  %5780 = vmatpush1.bf16.msra.mxu0 %v5576
  %5781 = vmatprep.mubr.bf16.mxu0 %v3021
  %5782 = vmatmul.mubr.bf16.gmra.mrb[0].mxu0 %v3020
  %v5783 = vpop.f32.mrb[0].mxu0
  %v5784 = vadd.f32 %v5743, %v5783
  %v5785 = vpop.f32.mrb[0].mxu0
  %v5786 = vadd.f32 %v5745, %v5785
  %v5787 = vpop.f32.mrb[0].mxu0
  %v5788 = vpop.f32.mrb[0].mxu0
  %5789 = vdwg.mxu0
  %5790 = vmatprep.subr.bf16.mxu0 %v5455
  %5791 = vmatpush1.bf16.msra.mxu0 %v5454
  %5792 = vmatprep.subr.bf16.mxu0 %v5459
  %5793 = vmatpush1.bf16.msra.mxu0 %v5458
  %5794 = vmatprep.subr.bf16.mxu0 %v5463
  %5795 = vmatpush1.bf16.msra.mxu0 %v5462
  %5796 = vmatprep.subr.bf16.mxu0 %v5467
  %5797 = vmatpush1.bf16.msra.mxu0 %v5466
  %5798 = vmatprep.subr.bf16.mxu0 %v5471
  %5799 = vmatpush1.bf16.msra.mxu0 %v5470
  %5800 = vmatprep.subr.bf16.mxu0 %v5475
  %5801 = vmatpush1.bf16.msra.mxu0 %v5474
  %5802 = vmatprep.subr.bf16.mxu0 %v5479
  %5803 = vmatpush1.bf16.msra.mxu0 %v5478
  %5804 = vmatprep.subr.bf16.mxu0 %v5483
  %5805 = vmatpush1.bf16.msra.mxu0 %v5482
  %5806 = vmatprep.subr.bf16.mxu0 %v5487
  %5807 = vmatpush1.bf16.msra.mxu0 %v5486
  %5808 = vmatprep.subr.bf16.mxu0 %v5491
  %5809 = vmatpush1.bf16.msra.mxu0 %v5490
  %5810 = vmatprep.subr.bf16.mxu0 %v5495
  %5811 = vmatpush1.bf16.msra.mxu0 %v5494
  %5812 = vmatprep.subr.bf16.mxu0 %v5499
  %5813 = vmatpush1.bf16.msra.mxu0 %v5498
  %5814 = vmatprep.subr.bf16.mxu0 %v5503
  %5815 = vmatpush1.bf16.msra.mxu0 %v5502
  %5816 = vmatprep.subr.bf16.mxu0 %v5507
  %5817 = vmatpush1.bf16.msra.mxu0 %v5506
  %5818 = vmatprep.subr.bf16.mxu0 %v5511
  %5819 = vmatpush1.bf16.msra.mxu0 %v5510
  %5820 = vmatprep.subr.bf16.mxu0 %v5515
  %5821 = vmatpush1.bf16.msra.mxu0 %v5514
  %5822 = vmatprep.mubr.bf16.mxu0 %v3019
  %5823 = vmatmul.mubr.bf16.gmra.mrb[0].mxu0 %v3018
  %v5824 = vpop.f32.mrb[0].mxu0
  %v5825 = vadd.f32 %v2150, %v5824
  %v5826 = vpop.f32.mrb[0].mxu0
  %v5827 = vadd.f32 %v2154, %v5826
  %v5828 = vpop.f32.mrb[0].mxu0
  %v5829 = vpop.f32.mrb[0].mxu0
  %5830 = vdwg.mxu0
  %5831 = vmatprep.subr.bf16.mxu0 %v5519
  %5832 = vmatpush1.bf16.msra.mxu0 %v5518
  %5833 = vmatprep.subr.bf16.mxu0 %v5523
  %5834 = vmatpush1.bf16.msra.mxu0 %v5522
  %5835 = vmatprep.subr.bf16.mxu0 %v5527
  %5836 = vmatpush1.bf16.msra.mxu0 %v5526
  %5837 = vmatprep.subr.bf16.mxu0 %v5531
  %5838 = vmatpush1.bf16.msra.mxu0 %v5530
  %5839 = vmatprep.subr.bf16.mxu0 %v5535
  %5840 = vmatpush1.bf16.msra.mxu0 %v5534
  %5841 = vmatprep.subr.bf16.mxu0 %v5539
  %5842 = vmatpush1.bf16.msra.mxu0 %v5538
  %5843 = vmatprep.subr.bf16.mxu0 %v5543
  %5844 = vmatpush1.bf16.msra.mxu0 %v5542
  %5845 = vmatprep.subr.bf16.mxu0 %v5547
  %5846 = vmatpush1.bf16.msra.mxu0 %v5546
  %5847 = vmatprep.subr.bf16.mxu0 %v5551
  %5848 = vmatpush1.bf16.msra.mxu0 %v5550
  %5849 = vmatprep.subr.bf16.mxu0 %v5555
  %5850 = vmatpush1.bf16.msra.mxu0 %v5554
  %5851 = vmatprep.subr.bf16.mxu0 %v5559
  %5852 = vmatpush1.bf16.msra.mxu0 %v5558
  %5853 = vmatprep.subr.bf16.mxu0 %v5563
  %5854 = vmatpush1.bf16.msra.mxu0 %v5562
  %5855 = vmatprep.subr.bf16.mxu0 %v5567
  %5856 = vmatpush1.bf16.msra.mxu0 %v5566
  %5857 = vmatprep.subr.bf16.mxu0 %v5571
  %5858 = vmatpush1.bf16.msra.mxu0 %v5570
  %5859 = vmatprep.subr.bf16.mxu0 %v5575
  %5860 = vmatpush1.bf16.msra.mxu0 %v5574
  %5861 = vmatprep.subr.bf16.mxu0 %v5579
  %5862 = vmatpush1.bf16.msra.mxu0 %v5578
  %5863 = vmatprep.mubr.bf16.mxu0 %v3021
  %5864 = vmatmul.mubr.bf16.gmra.mrb[0].mxu0 %v3020
  %v5865 = vpop.f32.mrb[0].mxu0
  %v5866 = vadd.f32 %v5825, %v5865
  %v5867 = vpop.f32.mrb[0].mxu0
  %v5868 = vadd.f32 %v5827, %v5867
  %v5869 = vpop.f32.mrb[0].mxu0
  %v5870 = vpop.f32.mrb[0].mxu0
  %5871 = vdwg.mxu0
  %v5876 = vcombine.low %v5784, %v5786
  %v5877 = vcombine.low %v5866, %v5868
  %v5879 = vunpack.c.l.s4 1983009808
  %v5880 = vunpack.c.0.s8 %v5879
  %v5881 = vlaneseq
  %v5882 = vshrl.u32 %v5881, 7
  %v5883 = vsub.s32 %v5880, %v5882
  %v5884 = vrot.slane %v5876, %v5883
  %v5886 = vunpack.c.l.s4 1983009808
  %v5887 = vunpack.c.0.s8 %v5886
  %v5888 = vlaneseq
  %v5889 = vshrl.u32 %v5888, 7
  %v5890 = vsub.s32 %v5887, %v5889
  %v5891 = vrot.slane %v5877, %v5890
  %v5892 = vcombine.low %v5884, %v5891
  %v5894 = vmul.f32 %v4912, %v5892
  %v5895 = vadd.f32 %v2995, %v5894
  %v5896 = vtanh.pop %v5895
  %v5897 = vsub.f32 1.0, %v4939
  %v5898 = vmul.f32 %v5897, %v5896
  %v5899 = vmul.f32 %v4939, %v2991
  %v5900 = vadd.f32 %v5898, %v5899
  %5901 = vst [vmem:[%s3 + $0x8] sm:$0xff] %v5900
  %v5902 = vld [vmem:[%s0 + $0x30] sm:$0xff]
  %v5903 = vld [vmem:[%s0 + $0x38] sm:$0xff]
  %v5904 = vld [vmem:[%s0 + $0x40] sm:$0xff]
  %v5906 = vcombine.high %v5900, %v5900
  %v5908 = vunpack.c.l.s4 1983009808
  %v5909 = vunpack.c.0.s8 %v5908
  %v5910 = vlaneseq
  %v5911 = vshrl.u32 %v5910, 7
  %v5912 = vsub.s32 %v5909, %v5911
  %v5913 = vrot.slane %v5900, %v5912
  %v5915 = vunpack.c.l.s4 1983009808
  %v5916 = vunpack.c.0.s8 %v5915
  %v5917 = vlaneseq
  %v5918 = vshrl.u32 %v5917, 7
  %v5919 = vsub.s32 %v5916, %v5918
  %v5920 = vrot.slane %v5906, %v5919
  %v5921 = vcombine.high %v5913, %v5913
  %v5922 = vcombine.high %v5920, %v5920
  %v5927 = vpack.c.bf16 %v5913, %v5913
  %v5928 = vpack.c.bf16 %v5921, %v5921
  %v5929 = vpack.c.bf16 %v5920, %v5920
  %v5930 = vpack.c.bf16 %v5922, %v5922
  %v5931 = vld [vmem:[%s1] sm:$0xff]
  %v5932 = vld [vmem:[%s1 + $0x8] sm:$0xff]
  %v5933 = vld [vmem:[%s1 + $0x10] sm:$0xff]
  %v5934 = vld [vmem:[%s1 + $0x18] sm:$0xff]
  %v5935 = vld [vmem:[%s1 + $0x30] sm:$0xff]
  %v5936 = vld [vmem:[%s1 + $0x38] sm:$0xff]
  %v5937 = vld [vmem:[%s1 + $0x40] sm:$0xff]
  %v5938 = vld [vmem:[%s1 + $0x48] sm:$0xff]
  %v5939 = vld [vmem:[%s1 + $0x60] sm:$0xff]
  %v5940 = vld [vmem:[%s1 + $0x68] sm:$0xff]
  %v5941 = vld [vmem:[%s1 + $0x70] sm:$0xff]
  %v5942 = vld [vmem:[%s1 + $0x78] sm:$0xff]
  %v5943 = vld [vmem:[%s1 + $0x90] sm:$0xff]
  %v5944 = vld [vmem:[%s1 + $0x98] sm:$0xff]
  %v5945 = vld [vmem:[%s1 + $0xa0] sm:$0xff]
  %v5946 = vld [vmem:[%s1 + $0xa8] sm:$0xff]
  %v5947 = vld [vmem:[%s1 + $0xc0] sm:$0xff]
  %v5948 = vld [vmem:[%s1 + $0xc8] sm:$0xff]
  %v5949 = vld [vmem:[%s1 + $0xd0] sm:$0xff]
  %v5950 = vld [vmem:[%s1 + $0xd8] sm:$0xff]
  %v5951 = vld [vmem:[%s1 + $0xf0] sm:$0xff]
  %v5952 = vld [vmem:[%s1 + $0xf8] sm:$0xff]
  %v5953 = vld [vmem:[%s1 + $0x100] sm:$0xff]
  %v5954 = vld [vmem:[%s1 + $0x108] sm:$0xff]
  %v5955 = vld [vmem:[%s1 + $0x120] sm:$0xff]
  %v5956 = vld [vmem:[%s1 + $0x128] sm:$0xff]
  %v5957 = vld [vmem:[%s1 + $0x130] sm:$0xff]
  %v5958 = vld [vmem:[%s1 + $0x138] sm:$0xff]
  %v5959 = vld [vmem:[%s1 + $0x150] sm:$0xff]
  %v5960 = vld [vmem:[%s1 + $0x158] sm:$0xff]
  %v5961 = vld [vmem:[%s1 + $0x160] sm:$0xff]
  %v5962 = vld [vmem:[%s1 + $0x168] sm:$0xff]
  %v5963 = vld [vmem:[%s1 + $0x180] sm:$0xff]
  %v5964 = vld [vmem:[%s1 + $0x188] sm:$0xff]
  %v5965 = vld [vmem:[%s1 + $0x190] sm:$0xff]
  %v5966 = vld [vmem:[%s1 + $0x198] sm:$0xff]
  %v5967 = vld [vmem:[%s1 + $0x1b0] sm:$0xff]
  %v5968 = vld [vmem:[%s1 + $0x1b8] sm:$0xff]
  %v5969 = vld [vmem:[%s1 + $0x1c0] sm:$0xff]
  %v5970 = vld [vmem:[%s1 + $0x1c8] sm:$0xff]
  %v5971 = vld [vmem:[%s1 + $0x1e0] sm:$0xff]
  %v5972 = vld [vmem:[%s1 + $0x1e8] sm:$0xff]
  %v5973 = vld [vmem:[%s1 + $0x1f0] sm:$0xff]
  %v5974 = vld [vmem:[%s1 + $0x1f8] sm:$0xff]
  %v5975 = vld [vmem:[%s1 + $0x210] sm:$0xff]
  %v5976 = vld [vmem:[%s1 + $0x218] sm:$0xff]
  %v5977 = vld [vmem:[%s1 + $0x220] sm:$0xff]
  %v5978 = vld [vmem:[%s1 + $0x228] sm:$0xff]
  %v5979 = vld [vmem:[%s1 + $0x240] sm:$0xff]
  %v5980 = vld [vmem:[%s1 + $0x248] sm:$0xff]
  %v5981 = vld [vmem:[%s1 + $0x250] sm:$0xff]
  %v5982 = vld [vmem:[%s1 + $0x258] sm:$0xff]
  %v5983 = vld [vmem:[%s1 + $0x270] sm:$0xff]
  %v5984 = vld [vmem:[%s1 + $0x278] sm:$0xff]
  %v5985 = vld [vmem:[%s1 + $0x280] sm:$0xff]
  %v5986 = vld [vmem:[%s1 + $0x288] sm:$0xff]
  %v5987 = vld [vmem:[%s1 + $0x2a0] sm:$0xff]
  %v5988 = vld [vmem:[%s1 + $0x2a8] sm:$0xff]
  %v5989 = vld [vmem:[%s1 + $0x2b0] sm:$0xff]
  %v5990 = vld [vmem:[%s1 + $0x2b8] sm:$0xff]
  %v5991 = vld [vmem:[%s1 + $0x2d0] sm:$0xff]
  %v5992 = vld [vmem:[%s1 + $0x2d8] sm:$0xff]
  %v5993 = vld [vmem:[%s1 + $0x2e0] sm:$0xff]
  %v5994 = vld [vmem:[%s1 + $0x2e8] sm:$0xff]
  %v5995 = vld [vmem:[%s1 + $0x300] sm:$0xff]
  %v5996 = vld [vmem:[%s1 + $0x308] sm:$0xff]
  %v5997 = vld [vmem:[%s1 + $0x310] sm:$0xff]
  %v5998 = vld [vmem:[%s1 + $0x318] sm:$0xff]
  %v5999 = vld [vmem:[%s1 + $0x330] sm:$0xff]
  %v6000 = vld [vmem:[%s1 + $0x338] sm:$0xff]
  %v6001 = vld [vmem:[%s1 + $0x340] sm:$0xff]
  %v6002 = vld [vmem:[%s1 + $0x348] sm:$0xff]
  %v6003 = vld [vmem:[%s1 + $0x360] sm:$0xff]
  %v6004 = vld [vmem:[%s1 + $0x368] sm:$0xff]
  %v6005 = vld [vmem:[%s1 + $0x370] sm:$0xff]
  %v6006 = vld [vmem:[%s1 + $0x378] sm:$0xff]
  %v6007 = vld [vmem:[%s1 + $0x390] sm:$0xff]
  %v6008 = vld [vmem:[%s1 + $0x398] sm:$0xff]
  %v6009 = vld [vmem:[%s1 + $0x3a0] sm:$0xff]
  %v6010 = vld [vmem:[%s1 + $0x3a8] sm:$0xff]
  %v6011 = vld [vmem:[%s1 + $0x3c0] sm:$0xff]
  %v6012 = vld [vmem:[%s1 + $0x3c8] sm:$0xff]
  %v6013 = vld [vmem:[%s1 + $0x3d0] sm:$0xff]
  %v6014 = vld [vmem:[%s1 + $0x3d8] sm:$0xff]
  %v6015 = vld [vmem:[%s1 + $0x3f0] sm:$0xff]
  %v6016 = vld [vmem:[%s1 + $0x3f8] sm:$0xff]
  %v6017 = vld [vmem:[%s1 + $0x400] sm:$0xff]
  %v6018 = vld [vmem:[%s1 + $0x408] sm:$0xff]
  %v6019 = vld [vmem:[%s1 + $0x420] sm:$0xff]
  %v6020 = vld [vmem:[%s1 + $0x428] sm:$0xff]
  %v6021 = vld [vmem:[%s1 + $0x430] sm:$0xff]
  %v6022 = vld [vmem:[%s1 + $0x438] sm:$0xff]
  %v6023 = vld [vmem:[%s1 + $0x450] sm:$0xff]
  %v6024 = vld [vmem:[%s1 + $0x458] sm:$0xff]
  %v6025 = vld [vmem:[%s1 + $0x460] sm:$0xff]
  %v6026 = vld [vmem:[%s1 + $0x468] sm:$0xff]
  %v6027 = vld [vmem:[%s1 + $0x480] sm:$0xff]
  %v6028 = vld [vmem:[%s1 + $0x488] sm:$0xff]
  %v6029 = vld [vmem:[%s1 + $0x490] sm:$0xff]
  %v6030 = vld [vmem:[%s1 + $0x498] sm:$0xff]
  %v6031 = vld [vmem:[%s1 + $0x4b0] sm:$0xff]
  %v6032 = vld [vmem:[%s1 + $0x4b8] sm:$0xff]
  %v6033 = vld [vmem:[%s1 + $0x4c0] sm:$0xff]
  %v6034 = vld [vmem:[%s1 + $0x4c8] sm:$0xff]
  %v6035 = vld [vmem:[%s1 + $0x4e0] sm:$0xff]
  %v6036 = vld [vmem:[%s1 + $0x4e8] sm:$0xff]
  %v6037 = vld [vmem:[%s1 + $0x4f0] sm:$0xff]
  %v6038 = vld [vmem:[%s1 + $0x4f8] sm:$0xff]
  %v6039 = vld [vmem:[%s1 + $0x510] sm:$0xff]
  %v6040 = vld [vmem:[%s1 + $0x518] sm:$0xff]
  %v6041 = vld [vmem:[%s1 + $0x520] sm:$0xff]
  %v6042 = vld [vmem:[%s1 + $0x528] sm:$0xff]
  %v6043 = vld [vmem:[%s1 + $0x540] sm:$0xff]
  %v6044 = vld [vmem:[%s1 + $0x548] sm:$0xff]
  %v6045 = vld [vmem:[%s1 + $0x550] sm:$0xff]
  %v6046 = vld [vmem:[%s1 + $0x558] sm:$0xff]
  %v6047 = vld [vmem:[%s1 + $0x570] sm:$0xff]
  %v6048 = vld [vmem:[%s1 + $0x578] sm:$0xff]
  %v6049 = vld [vmem:[%s1 + $0x580] sm:$0xff]
  %v6050 = vld [vmem:[%s1 + $0x588] sm:$0xff]
  %v6051 = vld [vmem:[%s1 + $0x5a0] sm:$0xff]
  %v6052 = vld [vmem:[%s1 + $0x5a8] sm:$0xff]
  %v6053 = vld [vmem:[%s1 + $0x5b0] sm:$0xff]
  %v6054 = vld [vmem:[%s1 + $0x5b8] sm:$0xff]
  %v6055 = vld [vmem:[%s1 + $0x5d0] sm:$0xff]
  %v6056 = vld [vmem:[%s1 + $0x5d8] sm:$0xff]
  %v6057 = vld [vmem:[%s1 + $0x5e0] sm:$0xff]
  %v6058 = vld [vmem:[%s1 + $0x5e8] sm:$0xff]
  %v6059 = vld [vmem:[%s1 + $0x600] sm:$0xff]
  %v6060 = vld [vmem:[%s1 + $0x608] sm:$0xff]
  %v6061 = vld [vmem:[%s1 + $0x610] sm:$0xff]
  %v6062 = vld [vmem:[%s1 + $0x618] sm:$0xff]
  %v6063 = vld [vmem:[%s1 + $0x630] sm:$0xff]
  %v6064 = vld [vmem:[%s1 + $0x638] sm:$0xff]
  %v6065 = vld [vmem:[%s1 + $0x640] sm:$0xff]
  %v6066 = vld [vmem:[%s1 + $0x648] sm:$0xff]
  %v6067 = vld [vmem:[%s1 + $0x660] sm:$0xff]
  %v6068 = vld [vmem:[%s1 + $0x668] sm:$0xff]
  %v6069 = vld [vmem:[%s1 + $0x670] sm:$0xff]
  %v6070 = vld [vmem:[%s1 + $0x678] sm:$0xff]
  %v6071 = vld [vmem:[%s1 + $0x690] sm:$0xff]
  %v6072 = vld [vmem:[%s1 + $0x698] sm:$0xff]
  %v6073 = vld [vmem:[%s1 + $0x6a0] sm:$0xff]
  %v6074 = vld [vmem:[%s1 + $0x6a8] sm:$0xff]
  %v6075 = vld [vmem:[%s1 + $0x6c0] sm:$0xff]
  %v6076 = vld [vmem:[%s1 + $0x6c8] sm:$0xff]
  %v6077 = vld [vmem:[%s1 + $0x6d0] sm:$0xff]
  %v6078 = vld [vmem:[%s1 + $0x6d8] sm:$0xff]
  %v6079 = vld [vmem:[%s1 + $0x6f0] sm:$0xff]
  %v6080 = vld [vmem:[%s1 + $0x6f8] sm:$0xff]
  %v6081 = vld [vmem:[%s1 + $0x700] sm:$0xff]
  %v6082 = vld [vmem:[%s1 + $0x708] sm:$0xff]
  %v6083 = vld [vmem:[%s1 + $0x720] sm:$0xff]
  %v6084 = vld [vmem:[%s1 + $0x728] sm:$0xff]
  %v6085 = vld [vmem:[%s1 + $0x730] sm:$0xff]
  %v6086 = vld [vmem:[%s1 + $0x738] sm:$0xff]
  %v6087 = vld [vmem:[%s1 + $0x750] sm:$0xff]
  %v6088 = vld [vmem:[%s1 + $0x758] sm:$0xff]
  %v6089 = vld [vmem:[%s1 + $0x760] sm:$0xff]
  %v6090 = vld [vmem:[%s1 + $0x768] sm:$0xff]
  %v6091 = vld [vmem:[%s1 + $0x780] sm:$0xff]
  %v6092 = vld [vmem:[%s1 + $0x788] sm:$0xff]
  %v6093 = vld [vmem:[%s1 + $0x790] sm:$0xff]
  %v6094 = vld [vmem:[%s1 + $0x798] sm:$0xff]
  %v6095 = vld [vmem:[%s1 + $0x7b0] sm:$0xff]
  %v6096 = vld [vmem:[%s1 + $0x7b8] sm:$0xff]
  %v6097 = vld [vmem:[%s1 + $0x7c0] sm:$0xff]
  %v6098 = vld [vmem:[%s1 + $0x7c8] sm:$0xff]
  %v6099 = vld [vmem:[%s1 + $0x7e0] sm:$0xff]
  %v6100 = vld [vmem:[%s1 + $0x7e8] sm:$0xff]
  %v6101 = vld [vmem:[%s1 + $0x7f0] sm:$0xff]
  %v6102 = vld [vmem:[%s1 + $0x7f8] sm:$0xff]
  %v6103 = vld [vmem:[%s1 + $0x810] sm:$0xff]
  %v6104 = vld [vmem:[%s1 + $0x818] sm:$0xff]
  %v6105 = vld [vmem:[%s1 + $0x820] sm:$0xff]
  %v6106 = vld [vmem:[%s1 + $0x828] sm:$0xff]
  %v6107 = vld [vmem:[%s1 + $0x840] sm:$0xff]
  %v6108 = vld [vmem:[%s1 + $0x848] sm:$0xff]
  %v6109 = vld [vmem:[%s1 + $0x850] sm:$0xff]
  %v6110 = vld [vmem:[%s1 + $0x858] sm:$0xff]
  %v6111 = vld [vmem:[%s1 + $0x870] sm:$0xff]
  %v6112 = vld [vmem:[%s1 + $0x878] sm:$0xff]
  %v6113 = vld [vmem:[%s1 + $0x880] sm:$0xff]
  %v6114 = vld [vmem:[%s1 + $0x888] sm:$0xff]
  %v6115 = vld [vmem:[%s1 + $0x8a0] sm:$0xff]
  %v6116 = vld [vmem:[%s1 + $0x8a8] sm:$0xff]
  %v6117 = vld [vmem:[%s1 + $0x8b0] sm:$0xff]
  %v6118 = vld [vmem:[%s1 + $0x8b8] sm:$0xff]
  %v6119 = vld [vmem:[%s1 + $0x8d0] sm:$0xff]
  %v6120 = vld [vmem:[%s1 + $0x8d8] sm:$0xff]
  %v6121 = vld [vmem:[%s1 + $0x8e0] sm:$0xff]
  %v6122 = vld [vmem:[%s1 + $0x8e8] sm:$0xff]
  %v6123 = vld [vmem:[%s1 + $0x900] sm:$0xff]
  %v6124 = vld [vmem:[%s1 + $0x908] sm:$0xff]
  %v6125 = vld [vmem:[%s1 + $0x910] sm:$0xff]
  %v6126 = vld [vmem:[%s1 + $0x918] sm:$0xff]
  %v6127 = vld [vmem:[%s1 + $0x930] sm:$0xff]
  %v6128 = vld [vmem:[%s1 + $0x938] sm:$0xff]
  %v6129 = vld [vmem:[%s1 + $0x940] sm:$0xff]
  %v6130 = vld [vmem:[%s1 + $0x948] sm:$0xff]
  %v6131 = vld [vmem:[%s1 + $0x960] sm:$0xff]
  %v6132 = vld [vmem:[%s1 + $0x968] sm:$0xff]
  %v6133 = vld [vmem:[%s1 + $0x970] sm:$0xff]
  %v6134 = vld [vmem:[%s1 + $0x978] sm:$0xff]
  %v6135 = vld [vmem:[%s1 + $0x990] sm:$0xff]
  %v6136 = vld [vmem:[%s1 + $0x998] sm:$0xff]
  %v6137 = vld [vmem:[%s1 + $0x9a0] sm:$0xff]
  %v6138 = vld [vmem:[%s1 + $0x9a8] sm:$0xff]
  %v6139 = vld [vmem:[%s1 + $0x9c0] sm:$0xff]
  %v6140 = vld [vmem:[%s1 + $0x9c8] sm:$0xff]
  %v6141 = vld [vmem:[%s1 + $0x9d0] sm:$0xff]
  %v6142 = vld [vmem:[%s1 + $0x9d8] sm:$0xff]
  %v6143 = vld [vmem:[%s1 + $0x9f0] sm:$0xff]
  %v6144 = vld [vmem:[%s1 + $0x9f8] sm:$0xff]
  %v6145 = vld [vmem:[%s1 + $0xa00] sm:$0xff]
  %v6146 = vld [vmem:[%s1 + $0xa08] sm:$0xff]
  %v6147 = vld [vmem:[%s1 + $0xa20] sm:$0xff]
  %v6148 = vld [vmem:[%s1 + $0xa28] sm:$0xff]
  %v6149 = vld [vmem:[%s1 + $0xa30] sm:$0xff]
  %v6150 = vld [vmem:[%s1 + $0xa38] sm:$0xff]
  %v6151 = vld [vmem:[%s1 + $0xa50] sm:$0xff]
  %v6152 = vld [vmem:[%s1 + $0xa58] sm:$0xff]
  %v6153 = vld [vmem:[%s1 + $0xa60] sm:$0xff]
  %v6154 = vld [vmem:[%s1 + $0xa68] sm:$0xff]
  %v6155 = vld [vmem:[%s1 + $0xa80] sm:$0xff]
  %v6156 = vld [vmem:[%s1 + $0xa88] sm:$0xff]
  %v6157 = vld [vmem:[%s1 + $0xa90] sm:$0xff]
  %v6158 = vld [vmem:[%s1 + $0xa98] sm:$0xff]
  %v6159 = vld [vmem:[%s1 + $0xab0] sm:$0xff]
  %v6160 = vld [vmem:[%s1 + $0xab8] sm:$0xff]
  %v6161 = vld [vmem:[%s1 + $0xac0] sm:$0xff]
  %v6162 = vld [vmem:[%s1 + $0xac8] sm:$0xff]
  %v6163 = vld [vmem:[%s1 + $0xae0] sm:$0xff]
  %v6164 = vld [vmem:[%s1 + $0xae8] sm:$0xff]
  %v6165 = vld [vmem:[%s1 + $0xaf0] sm:$0xff]
  %v6166 = vld [vmem:[%s1 + $0xaf8] sm:$0xff]
  %v6167 = vld [vmem:[%s1 + $0xb10] sm:$0xff]
  %v6168 = vld [vmem:[%s1 + $0xb18] sm:$0xff]
  %v6169 = vld [vmem:[%s1 + $0xb20] sm:$0xff]
  %v6170 = vld [vmem:[%s1 + $0xb28] sm:$0xff]
  %v6171 = vld [vmem:[%s1 + $0xb40] sm:$0xff]
  %v6172 = vld [vmem:[%s1 + $0xb48] sm:$0xff]
  %v6173 = vld [vmem:[%s1 + $0xb50] sm:$0xff]
  %v6174 = vld [vmem:[%s1 + $0xb58] sm:$0xff]
  %v6175 = vld [vmem:[%s1 + $0xb70] sm:$0xff]
  %v6176 = vld [vmem:[%s1 + $0xb78] sm:$0xff]
  %v6177 = vld [vmem:[%s1 + $0xb80] sm:$0xff]
  %v6178 = vld [vmem:[%s1 + $0xb88] sm:$0xff]
  %v6179 = vld [vmem:[%s1 + $0xba0] sm:$0xff]
  %v6180 = vld [vmem:[%s1 + $0xba8] sm:$0xff]
  %v6181 = vld [vmem:[%s1 + $0xbb0] sm:$0xff]
  %v6182 = vld [vmem:[%s1 + $0xbb8] sm:$0xff]
  %v6183 = vld [vmem:[%s1 + $0xbd0] sm:$0xff]
  %v6184 = vld [vmem:[%s1 + $0xbd8] sm:$0xff]
  %v6185 = vld [vmem:[%s1 + $0xbe0] sm:$0xff]
  %v6186 = vld [vmem:[%s1 + $0xbe8] sm:$0xff]
  %v6443 = vunpack.c.l.b16 %v5931
  %v6444 = vunpack.c.h.b16 %v5931
  %v6445 = vunpack.c.l.b16 %v5932
  %v6446 = vunpack.c.h.b16 %v5932
  %v6447 = vunpack.c.l.b16 %v5933
  %v6448 = vunpack.c.h.b16 %v5933
  %v6449 = vunpack.c.l.b16 %v5934
  %v6450 = vunpack.c.h.b16 %v5934
  %v6451 = vunpack.c.l.b16 %v5935
  %v6452 = vunpack.c.h.b16 %v5935
  %v6453 = vunpack.c.l.b16 %v5936
  %v6454 = vunpack.c.h.b16 %v5936
  %v6455 = vunpack.c.l.b16 %v5937
  %v6456 = vunpack.c.h.b16 %v5937
  %v6457 = vunpack.c.l.b16 %v5938
  %v6458 = vunpack.c.h.b16 %v5938
  %v6459 = vunpack.c.l.b16 %v5939
  %v6460 = vunpack.c.h.b16 %v5939
  %v6461 = vunpack.c.l.b16 %v5940
  %v6462 = vunpack.c.h.b16 %v5940
  %v6463 = vunpack.c.l.b16 %v5941
  %v6464 = vunpack.c.h.b16 %v5941
  %v6465 = vunpack.c.l.b16 %v5942
  %v6466 = vunpack.c.h.b16 %v5942
  %v6467 = vunpack.c.l.b16 %v5943
  %v6468 = vunpack.c.h.b16 %v5943
  %v6469 = vunpack.c.l.b16 %v5944
  %v6470 = vunpack.c.h.b16 %v5944
  %v6471 = vunpack.c.l.b16 %v5945
  %v6472 = vunpack.c.h.b16 %v5945
  %v6473 = vunpack.c.l.b16 %v5946
  %v6474 = vunpack.c.h.b16 %v5946
  %v6475 = vunpack.c.l.b16 %v5947
  %v6476 = vunpack.c.h.b16 %v5947
  %v6477 = vunpack.c.l.b16 %v5948
  %v6478 = vunpack.c.h.b16 %v5948
  %v6479 = vunpack.c.l.b16 %v5949
  %v6480 = vunpack.c.h.b16 %v5949
  %v6481 = vunpack.c.l.b16 %v5950
  %v6482 = vunpack.c.h.b16 %v5950
  %v6483 = vunpack.c.l.b16 %v5951
  %v6484 = vunpack.c.h.b16 %v5951
  %v6485 = vunpack.c.l.b16 %v5952
  %v6486 = vunpack.c.h.b16 %v5952
  %v6487 = vunpack.c.l.b16 %v5953
  %v6488 = vunpack.c.h.b16 %v5953
  %v6489 = vunpack.c.l.b16 %v5954
  %v6490 = vunpack.c.h.b16 %v5954
  %v6491 = vunpack.c.l.b16 %v5955
  %v6492 = vunpack.c.h.b16 %v5955
  %v6493 = vunpack.c.l.b16 %v5956
  %v6494 = vunpack.c.h.b16 %v5956
  %v6495 = vunpack.c.l.b16 %v5957
  %v6496 = vunpack.c.h.b16 %v5957
  %v6497 = vunpack.c.l.b16 %v5958
  %v6498 = vunpack.c.h.b16 %v5958
  %v6499 = vunpack.c.l.b16 %v5959
  %v6500 = vunpack.c.h.b16 %v5959
  %v6501 = vunpack.c.l.b16 %v5960
  %v6502 = vunpack.c.h.b16 %v5960
  %v6503 = vunpack.c.l.b16 %v5961
  %v6504 = vunpack.c.h.b16 %v5961
  %v6505 = vunpack.c.l.b16 %v5962
  %v6506 = vunpack.c.h.b16 %v5962
  %v6507 = vunpack.c.l.b16 %v5963
  %v6508 = vunpack.c.h.b16 %v5963
  %v6509 = vunpack.c.l.b16 %v5964
  %v6510 = vunpack.c.h.b16 %v5964
  %v6511 = vunpack.c.l.b16 %v5965
  %v6512 = vunpack.c.h.b16 %v5965
  %v6513 = vunpack.c.l.b16 %v5966
  %v6514 = vunpack.c.h.b16 %v5966
  %v6515 = vunpack.c.l.b16 %v5967
  %v6516 = vunpack.c.h.b16 %v5967
  %v6517 = vunpack.c.l.b16 %v5968
  %v6518 = vunpack.c.h.b16 %v5968
  %v6519 = vunpack.c.l.b16 %v5969
  %v6520 = vunpack.c.h.b16 %v5969
  %v6521 = vunpack.c.l.b16 %v5970
  %v6522 = vunpack.c.h.b16 %v5970
  %v6523 = vunpack.c.l.b16 %v5971
  %v6524 = vunpack.c.h.b16 %v5971
  %v6525 = vunpack.c.l.b16 %v5972
  %v6526 = vunpack.c.h.b16 %v5972
  %v6527 = vunpack.c.l.b16 %v5973
  %v6528 = vunpack.c.h.b16 %v5973
  %v6529 = vunpack.c.l.b16 %v5974
  %v6530 = vunpack.c.h.b16 %v5974
  %v6531 = vunpack.c.l.b16 %v5975
  %v6532 = vunpack.c.h.b16 %v5975
  %v6533 = vunpack.c.l.b16 %v5976
  %v6534 = vunpack.c.h.b16 %v5976
  %v6535 = vunpack.c.l.b16 %v5977
  %v6536 = vunpack.c.h.b16 %v5977
  %v6537 = vunpack.c.l.b16 %v5978
  %v6538 = vunpack.c.h.b16 %v5978
  %v6539 = vunpack.c.l.b16 %v5979
  %v6540 = vunpack.c.h.b16 %v5979
  %v6541 = vunpack.c.l.b16 %v5980
  %v6542 = vunpack.c.h.b16 %v5980
  %v6543 = vunpack.c.l.b16 %v5981
  %v6544 = vunpack.c.h.b16 %v5981
  %v6545 = vunpack.c.l.b16 %v5982
  %v6546 = vunpack.c.h.b16 %v5982
  %v6547 = vunpack.c.l.b16 %v5983
  %v6548 = vunpack.c.h.b16 %v5983
  %v6549 = vunpack.c.l.b16 %v5984
  %v6550 = vunpack.c.h.b16 %v5984
  %v6551 = vunpack.c.l.b16 %v5985
  %v6552 = vunpack.c.h.b16 %v5985
  %v6553 = vunpack.c.l.b16 %v5986
  %v6554 = vunpack.c.h.b16 %v5986
  %v6555 = vunpack.c.l.b16 %v5987
  %v6556 = vunpack.c.h.b16 %v5987
  %v6557 = vunpack.c.l.b16 %v5988
  %v6558 = vunpack.c.h.b16 %v5988
  %v6559 = vunpack.c.l.b16 %v5989
  %v6560 = vunpack.c.h.b16 %v5989
  %v6561 = vunpack.c.l.b16 %v5990
  %v6562 = vunpack.c.h.b16 %v5990
  %v6563 = vunpack.c.l.b16 %v5991
  %v6564 = vunpack.c.h.b16 %v5991
  %v6565 = vunpack.c.l.b16 %v5992
  %v6566 = vunpack.c.h.b16 %v5992
  %v6567 = vunpack.c.l.b16 %v5993
  %v6568 = vunpack.c.h.b16 %v5993
  %v6569 = vunpack.c.l.b16 %v5994
  %v6570 = vunpack.c.h.b16 %v5994
  %v6571 = vunpack.c.l.b16 %v5995
  %v6572 = vunpack.c.h.b16 %v5995
  %v6573 = vunpack.c.l.b16 %v5996
  %v6574 = vunpack.c.h.b16 %v5996
  %v6575 = vunpack.c.l.b16 %v5997
  %v6576 = vunpack.c.h.b16 %v5997
  %v6577 = vunpack.c.l.b16 %v5998
  %v6578 = vunpack.c.h.b16 %v5998
  %v6579 = vunpack.c.l.b16 %v5999
  %v6580 = vunpack.c.h.b16 %v5999
  %v6581 = vunpack.c.l.b16 %v6000
  %v6582 = vunpack.c.h.b16 %v6000
  %v6583 = vunpack.c.l.b16 %v6001
  %v6584 = vunpack.c.h.b16 %v6001
  %v6585 = vunpack.c.l.b16 %v6002
  %v6586 = vunpack.c.h.b16 %v6002
  %v6587 = vunpack.c.l.b16 %v6003
  %v6588 = vunpack.c.h.b16 %v6003
  %v6589 = vunpack.c.l.b16 %v6004
  %v6590 = vunpack.c.h.b16 %v6004
  %v6591 = vunpack.c.l.b16 %v6005
  %v6592 = vunpack.c.h.b16 %v6005
  %v6593 = vunpack.c.l.b16 %v6006
  %v6594 = vunpack.c.h.b16 %v6006
  %v6595 = vunpack.c.l.b16 %v6007
  %v6596 = vunpack.c.h.b16 %v6007
  %v6597 = vunpack.c.l.b16 %v6008
  %v6598 = vunpack.c.h.b16 %v6008
  %v6599 = vunpack.c.l.b16 %v6009
  %v6600 = vunpack.c.h.b16 %v6009
  %v6601 = vunpack.c.l.b16 %v6010
  %v6602 = vunpack.c.h.b16 %v6010
  %v6603 = vunpack.c.l.b16 %v6011
  %v6604 = vunpack.c.h.b16 %v6011
  %v6605 = vunpack.c.l.b16 %v6012
  %v6606 = vunpack.c.h.b16 %v6012
  %v6607 = vunpack.c.l.b16 %v6013
  %v6608 = vunpack.c.h.b16 %v6013
  %v6609 = vunpack.c.l.b16 %v6014
  %v6610 = vunpack.c.h.b16 %v6014
  %v6611 = vunpack.c.l.b16 %v6015
  %v6612 = vunpack.c.h.b16 %v6015
  %v6613 = vunpack.c.l.b16 %v6016
  %v6614 = vunpack.c.h.b16 %v6016
  %v6615 = vunpack.c.l.b16 %v6017
  %v6616 = vunpack.c.h.b16 %v6017
  %v6617 = vunpack.c.l.b16 %v6018
  %v6618 = vunpack.c.h.b16 %v6018
  %v6619 = vunpack.c.l.b16 %v6019
  %v6620 = vunpack.c.h.b16 %v6019
  %v6621 = vunpack.c.l.b16 %v6020
  %v6622 = vunpack.c.h.b16 %v6020
  %v6623 = vunpack.c.l.b16 %v6021
  %v6624 = vunpack.c.h.b16 %v6021
  %v6625 = vunpack.c.l.b16 %v6022
  %v6626 = vunpack.c.h.b16 %v6022
  %v6627 = vunpack.c.l.b16 %v6023
  %v6628 = vunpack.c.h.b16 %v6023
  %v6629 = vunpack.c.l.b16 %v6024
  %v6630 = vunpack.c.h.b16 %v6024
  %v6631 = vunpack.c.l.b16 %v6025
  %v6632 = vunpack.c.h.b16 %v6025
  %v6633 = vunpack.c.l.b16 %v6026
  %v6634 = vunpack.c.h.b16 %v6026
  %v6635 = vunpack.c.l.b16 %v6027
  %v6636 = vunpack.c.h.b16 %v6027
  %v6637 = vunpack.c.l.b16 %v6028
  %v6638 = vunpack.c.h.b16 %v6028
  %v6639 = vunpack.c.l.b16 %v6029
  %v6640 = vunpack.c.h.b16 %v6029
  %v6641 = vunpack.c.l.b16 %v6030
  %v6642 = vunpack.c.h.b16 %v6030
  %v6643 = vunpack.c.l.b16 %v6031
  %v6644 = vunpack.c.h.b16 %v6031
  %v6645 = vunpack.c.l.b16 %v6032
  %v6646 = vunpack.c.h.b16 %v6032
  %v6647 = vunpack.c.l.b16 %v6033
  %v6648 = vunpack.c.h.b16 %v6033
  %v6649 = vunpack.c.l.b16 %v6034
  %v6650 = vunpack.c.h.b16 %v6034
  %v6651 = vunpack.c.l.b16 %v6035
  %v6652 = vunpack.c.h.b16 %v6035
  %v6653 = vunpack.c.l.b16 %v6036
  %v6654 = vunpack.c.h.b16 %v6036
  %v6655 = vunpack.c.l.b16 %v6037
  %v6656 = vunpack.c.h.b16 %v6037
  %v6657 = vunpack.c.l.b16 %v6038
  %v6658 = vunpack.c.h.b16 %v6038
  %v6659 = vunpack.c.l.b16 %v6039
  %v6660 = vunpack.c.h.b16 %v6039
  %v6661 = vunpack.c.l.b16 %v6040
  %v6662 = vunpack.c.h.b16 %v6040
  %v6663 = vunpack.c.l.b16 %v6041
  %v6664 = vunpack.c.h.b16 %v6041
  %v6665 = vunpack.c.l.b16 %v6042
  %v6666 = vunpack.c.h.b16 %v6042
  %v6667 = vunpack.c.l.b16 %v6043
  %v6668 = vunpack.c.h.b16 %v6043
  %v6669 = vunpack.c.l.b16 %v6044
  %v6670 = vunpack.c.h.b16 %v6044
  %v6671 = vunpack.c.l.b16 %v6045
  %v6672 = vunpack.c.h.b16 %v6045
  %v6673 = vunpack.c.l.b16 %v6046
  %v6674 = vunpack.c.h.b16 %v6046
  %v6675 = vunpack.c.l.b16 %v6047
  %v6676 = vunpack.c.h.b16 %v6047
  %v6677 = vunpack.c.l.b16 %v6048
  %v6678 = vunpack.c.h.b16 %v6048
  %v6679 = vunpack.c.l.b16 %v6049
  %v6680 = vunpack.c.h.b16 %v6049
  %v6681 = vunpack.c.l.b16 %v6050
  %v6682 = vunpack.c.h.b16 %v6050
  %v6683 = vunpack.c.l.b16 %v6051
  %v6684 = vunpack.c.h.b16 %v6051
  %v6685 = vunpack.c.l.b16 %v6052
  %v6686 = vunpack.c.h.b16 %v6052
  %v6687 = vunpack.c.l.b16 %v6053
  %v6688 = vunpack.c.h.b16 %v6053
  %v6689 = vunpack.c.l.b16 %v6054
  %v6690 = vunpack.c.h.b16 %v6054
  %v6691 = vunpack.c.l.b16 %v6055
  %v6692 = vunpack.c.h.b16 %v6055
  %v6693 = vunpack.c.l.b16 %v6056
  %v6694 = vunpack.c.h.b16 %v6056
  %v6695 = vunpack.c.l.b16 %v6057
  %v6696 = vunpack.c.h.b16 %v6057
  %v6697 = vunpack.c.l.b16 %v6058
  %v6698 = vunpack.c.h.b16 %v6058
  %v6699 = vunpack.c.l.b16 %v6059
  %v6700 = vunpack.c.h.b16 %v6059
  %v6701 = vunpack.c.l.b16 %v6060
  %v6702 = vunpack.c.h.b16 %v6060
  %v6703 = vunpack.c.l.b16 %v6061
  %v6704 = vunpack.c.h.b16 %v6061
  %v6705 = vunpack.c.l.b16 %v6062
  %v6706 = vunpack.c.h.b16 %v6062
  %v6707 = vunpack.c.l.b16 %v6063
  %v6708 = vunpack.c.h.b16 %v6063
  %v6709 = vunpack.c.l.b16 %v6064
  %v6710 = vunpack.c.h.b16 %v6064
  %v6711 = vunpack.c.l.b16 %v6065
  %v6712 = vunpack.c.h.b16 %v6065
  %v6713 = vunpack.c.l.b16 %v6066
  %v6714 = vunpack.c.h.b16 %v6066
  %v6715 = vunpack.c.l.b16 %v6067
  %v6716 = vunpack.c.h.b16 %v6067
  %v6717 = vunpack.c.l.b16 %v6068
  %v6718 = vunpack.c.h.b16 %v6068
  %v6719 = vunpack.c.l.b16 %v6069
  %v6720 = vunpack.c.h.b16 %v6069
  %v6721 = vunpack.c.l.b16 %v6070
  %v6722 = vunpack.c.h.b16 %v6070
  %v6723 = vunpack.c.l.b16 %v6071
  %v6724 = vunpack.c.h.b16 %v6071
  %v6725 = vunpack.c.l.b16 %v6072
  %v6726 = vunpack.c.h.b16 %v6072
  %v6727 = vunpack.c.l.b16 %v6073
  %v6728 = vunpack.c.h.b16 %v6073
  %v6729 = vunpack.c.l.b16 %v6074
  %v6730 = vunpack.c.h.b16 %v6074
  %v6731 = vunpack.c.l.b16 %v6075
  %v6732 = vunpack.c.h.b16 %v6075
  %v6733 = vunpack.c.l.b16 %v6076
  %v6734 = vunpack.c.h.b16 %v6076
  %v6735 = vunpack.c.l.b16 %v6077
  %v6736 = vunpack.c.h.b16 %v6077
  %v6737 = vunpack.c.l.b16 %v6078
  %v6738 = vunpack.c.h.b16 %v6078
  %v6739 = vunpack.c.l.b16 %v6079
  %v6740 = vunpack.c.h.b16 %v6079
  %v6741 = vunpack.c.l.b16 %v6080
  %v6742 = vunpack.c.h.b16 %v6080
  %v6743 = vunpack.c.l.b16 %v6081
  %v6744 = vunpack.c.h.b16 %v6081
  %v6745 = vunpack.c.l.b16 %v6082
  %v6746 = vunpack.c.h.b16 %v6082
  %v6747 = vunpack.c.l.b16 %v6083
  %v6748 = vunpack.c.h.b16 %v6083
  %v6749 = vunpack.c.l.b16 %v6084
  %v6750 = vunpack.c.h.b16 %v6084
  %v6751 = vunpack.c.l.b16 %v6085
  %v6752 = vunpack.c.h.b16 %v6085
  %v6753 = vunpack.c.l.b16 %v6086
  %v6754 = vunpack.c.h.b16 %v6086
  %v6755 = vunpack.c.l.b16 %v6087
  %v6756 = vunpack.c.h.b16 %v6087
  %v6757 = vunpack.c.l.b16 %v6088
  %v6758 = vunpack.c.h.b16 %v6088
  %v6759 = vunpack.c.l.b16 %v6089
  %v6760 = vunpack.c.h.b16 %v6089
  %v6761 = vunpack.c.l.b16 %v6090
  %v6762 = vunpack.c.h.b16 %v6090
  %v6763 = vunpack.c.l.b16 %v6091
  %v6764 = vunpack.c.h.b16 %v6091
  %v6765 = vunpack.c.l.b16 %v6092
  %v6766 = vunpack.c.h.b16 %v6092
  %v6767 = vunpack.c.l.b16 %v6093
  %v6768 = vunpack.c.h.b16 %v6093
  %v6769 = vunpack.c.l.b16 %v6094
  %v6770 = vunpack.c.h.b16 %v6094
  %v6771 = vunpack.c.l.b16 %v6095
  %v6772 = vunpack.c.h.b16 %v6095
  %v6773 = vunpack.c.l.b16 %v6096
  %v6774 = vunpack.c.h.b16 %v6096
  %v6775 = vunpack.c.l.b16 %v6097
  %v6776 = vunpack.c.h.b16 %v6097
  %v6777 = vunpack.c.l.b16 %v6098
  %v6778 = vunpack.c.h.b16 %v6098
  %v6779 = vunpack.c.l.b16 %v6099
  %v6780 = vunpack.c.h.b16 %v6099
  %v6781 = vunpack.c.l.b16 %v6100
  %v6782 = vunpack.c.h.b16 %v6100
  %v6783 = vunpack.c.l.b16 %v6101
  %v6784 = vunpack.c.h.b16 %v6101
  %v6785 = vunpack.c.l.b16 %v6102
  %v6786 = vunpack.c.h.b16 %v6102
  %v6787 = vunpack.c.l.b16 %v6103
  %v6788 = vunpack.c.h.b16 %v6103
  %v6789 = vunpack.c.l.b16 %v6104
  %v6790 = vunpack.c.h.b16 %v6104
  %v6791 = vunpack.c.l.b16 %v6105
  %v6792 = vunpack.c.h.b16 %v6105
  %v6793 = vunpack.c.l.b16 %v6106
  %v6794 = vunpack.c.h.b16 %v6106
  %v6795 = vunpack.c.l.b16 %v6107
  %v6796 = vunpack.c.h.b16 %v6107
  %v6797 = vunpack.c.l.b16 %v6108
  %v6798 = vunpack.c.h.b16 %v6108
  %v6799 = vunpack.c.l.b16 %v6109
  %v6800 = vunpack.c.h.b16 %v6109
  %v6801 = vunpack.c.l.b16 %v6110
  %v6802 = vunpack.c.h.b16 %v6110
  %v6803 = vunpack.c.l.b16 %v6111
  %v6804 = vunpack.c.h.b16 %v6111
  %v6805 = vunpack.c.l.b16 %v6112
  %v6806 = vunpack.c.h.b16 %v6112
  %v6807 = vunpack.c.l.b16 %v6113
  %v6808 = vunpack.c.h.b16 %v6113
  %v6809 = vunpack.c.l.b16 %v6114
  %v6810 = vunpack.c.h.b16 %v6114
  %v6811 = vunpack.c.l.b16 %v6115
  %v6812 = vunpack.c.h.b16 %v6115
  %v6813 = vunpack.c.l.b16 %v6116
  %v6814 = vunpack.c.h.b16 %v6116
  %v6815 = vunpack.c.l.b16 %v6117
  %v6816 = vunpack.c.h.b16 %v6117
  %v6817 = vunpack.c.l.b16 %v6118
  %v6818 = vunpack.c.h.b16 %v6118
  %v6819 = vunpack.c.l.b16 %v6119
  %v6820 = vunpack.c.h.b16 %v6119
  %v6821 = vunpack.c.l.b16 %v6120
  %v6822 = vunpack.c.h.b16 %v6120
  %v6823 = vunpack.c.l.b16 %v6121
  %v6824 = vunpack.c.h.b16 %v6121
  %v6825 = vunpack.c.l.b16 %v6122
  %v6826 = vunpack.c.h.b16 %v6122
  %v6827 = vunpack.c.l.b16 %v6123
  %v6828 = vunpack.c.h.b16 %v6123
  %v6829 = vunpack.c.l.b16 %v6124
  %v6830 = vunpack.c.h.b16 %v6124
  %v6831 = vunpack.c.l.b16 %v6125
  %v6832 = vunpack.c.h.b16 %v6125
  %v6833 = vunpack.c.l.b16 %v6126
  %v6834 = vunpack.c.h.b16 %v6126
  %v6835 = vunpack.c.l.b16 %v6127
  %v6836 = vunpack.c.h.b16 %v6127
  %v6837 = vunpack.c.l.b16 %v6128
  %v6838 = vunpack.c.h.b16 %v6128
  %v6839 = vunpack.c.l.b16 %v6129
  %v6840 = vunpack.c.h.b16 %v6129
  %v6841 = vunpack.c.l.b16 %v6130
  %v6842 = vunpack.c.h.b16 %v6130
  %v6843 = vunpack.c.l.b16 %v6131
  %v6844 = vunpack.c.h.b16 %v6131
  %v6845 = vunpack.c.l.b16 %v6132
  %v6846 = vunpack.c.h.b16 %v6132
  %v6847 = vunpack.c.l.b16 %v6133
  %v6848 = vunpack.c.h.b16 %v6133
  %v6849 = vunpack.c.l.b16 %v6134
  %v6850 = vunpack.c.h.b16 %v6134
  %v6851 = vunpack.c.l.b16 %v6135
  %v6852 = vunpack.c.h.b16 %v6135
  %v6853 = vunpack.c.l.b16 %v6136
  %v6854 = vunpack.c.h.b16 %v6136
  %v6855 = vunpack.c.l.b16 %v6137
  %v6856 = vunpack.c.h.b16 %v6137
  %v6857 = vunpack.c.l.b16 %v6138
  %v6858 = vunpack.c.h.b16 %v6138
  %v6859 = vunpack.c.l.b16 %v6139
  %v6860 = vunpack.c.h.b16 %v6139
  %v6861 = vunpack.c.l.b16 %v6140
  %v6862 = vunpack.c.h.b16 %v6140
  %v6863 = vunpack.c.l.b16 %v6141
  %v6864 = vunpack.c.h.b16 %v6141
  %v6865 = vunpack.c.l.b16 %v6142
  %v6866 = vunpack.c.h.b16 %v6142
  %v6867 = vunpack.c.l.b16 %v6143
  %v6868 = vunpack.c.h.b16 %v6143
  %v6869 = vunpack.c.l.b16 %v6144
  %v6870 = vunpack.c.h.b16 %v6144
  %v6871 = vunpack.c.l.b16 %v6145
  %v6872 = vunpack.c.h.b16 %v6145
  %v6873 = vunpack.c.l.b16 %v6146
  %v6874 = vunpack.c.h.b16 %v6146
  %v6875 = vunpack.c.l.b16 %v6147
  %v6876 = vunpack.c.h.b16 %v6147
  %v6877 = vunpack.c.l.b16 %v6148
  %v6878 = vunpack.c.h.b16 %v6148
  %v6879 = vunpack.c.l.b16 %v6149
  %v6880 = vunpack.c.h.b16 %v6149
  %v6881 = vunpack.c.l.b16 %v6150
  %v6882 = vunpack.c.h.b16 %v6150
  %v6883 = vunpack.c.l.b16 %v6151
  %v6884 = vunpack.c.h.b16 %v6151
  %v6885 = vunpack.c.l.b16 %v6152
  %v6886 = vunpack.c.h.b16 %v6152
  %v6887 = vunpack.c.l.b16 %v6153
  %v6888 = vunpack.c.h.b16 %v6153
  %v6889 = vunpack.c.l.b16 %v6154
  %v6890 = vunpack.c.h.b16 %v6154
  %v6891 = vunpack.c.l.b16 %v6155
  %v6892 = vunpack.c.h.b16 %v6155
  %v6893 = vunpack.c.l.b16 %v6156
  %v6894 = vunpack.c.h.b16 %v6156
  %v6895 = vunpack.c.l.b16 %v6157
  %v6896 = vunpack.c.h.b16 %v6157
  %v6897 = vunpack.c.l.b16 %v6158
  %v6898 = vunpack.c.h.b16 %v6158
  %v6899 = vunpack.c.l.b16 %v6159
  %v6900 = vunpack.c.h.b16 %v6159
  %v6901 = vunpack.c.l.b16 %v6160
  %v6902 = vunpack.c.h.b16 %v6160
  %v6903 = vunpack.c.l.b16 %v6161
  %v6904 = vunpack.c.h.b16 %v6161
  %v6905 = vunpack.c.l.b16 %v6162
  %v6906 = vunpack.c.h.b16 %v6162
  %v6907 = vunpack.c.l.b16 %v6163
  %v6908 = vunpack.c.h.b16 %v6163
  %v6909 = vunpack.c.l.b16 %v6164
  %v6910 = vunpack.c.h.b16 %v6164
  %v6911 = vunpack.c.l.b16 %v6165
  %v6912 = vunpack.c.h.b16 %v6165
  %v6913 = vunpack.c.l.b16 %v6166
  %v6914 = vunpack.c.h.b16 %v6166
  %v6915 = vunpack.c.l.b16 %v6167
  %v6916 = vunpack.c.h.b16 %v6167
  %v6917 = vunpack.c.l.b16 %v6168
  %v6918 = vunpack.c.h.b16 %v6168
  %v6919 = vunpack.c.l.b16 %v6169
  %v6920 = vunpack.c.h.b16 %v6169
  %v6921 = vunpack.c.l.b16 %v6170
  %v6922 = vunpack.c.h.b16 %v6170
  %v6923 = vunpack.c.l.b16 %v6171
  %v6924 = vunpack.c.h.b16 %v6171
  %v6925 = vunpack.c.l.b16 %v6172
  %v6926 = vunpack.c.h.b16 %v6172
  %v6927 = vunpack.c.l.b16 %v6173
  %v6928 = vunpack.c.h.b16 %v6173
  %v6929 = vunpack.c.l.b16 %v6174
  %v6930 = vunpack.c.h.b16 %v6174
  %v6931 = vunpack.c.l.b16 %v6175
  %v6932 = vunpack.c.h.b16 %v6175
  %v6933 = vunpack.c.l.b16 %v6176
  %v6934 = vunpack.c.h.b16 %v6176
  %v6935 = vunpack.c.l.b16 %v6177
  %v6936 = vunpack.c.h.b16 %v6177
  %v6937 = vunpack.c.l.b16 %v6178
  %v6938 = vunpack.c.h.b16 %v6178
  %v6939 = vunpack.c.l.b16 %v6179
  %v6940 = vunpack.c.h.b16 %v6179
  %v6941 = vunpack.c.l.b16 %v6180
  %v6942 = vunpack.c.h.b16 %v6180
  %v6943 = vunpack.c.l.b16 %v6181
  %v6944 = vunpack.c.h.b16 %v6181
  %v6945 = vunpack.c.l.b16 %v6182
  %v6946 = vunpack.c.h.b16 %v6182
  %v6947 = vunpack.c.l.b16 %v6183
  %v6948 = vunpack.c.h.b16 %v6183
  %v6949 = vunpack.c.l.b16 %v6184
  %v6950 = vunpack.c.h.b16 %v6184
  %v6951 = vunpack.c.l.b16 %v6185
  %v6952 = vunpack.c.h.b16 %v6185
  %v6953 = vunpack.c.l.b16 %v6186
  %v6954 = vunpack.c.h.b16 %v6186
  %v6955 = vpack.c.b16 %v6451, %v6443
  %v6956 = vpack.c.b16 %v6452, %v6444
  %v6957 = vpack.c.b16 %v6453, %v6445
  %v6958 = vpack.c.b16 %v6454, %v6446
  %v6959 = vpack.c.b16 %v6455, %v6447
  %v6960 = vpack.c.b16 %v6456, %v6448
  %v6961 = vpack.c.b16 %v6457, %v6449
  %v6962 = vpack.c.b16 %v6458, %v6450
  %v6963 = vpack.c.b16 %v6467, %v6459
  %v6964 = vpack.c.b16 %v6468, %v6460
  %v6965 = vpack.c.b16 %v6469, %v6461
  %v6966 = vpack.c.b16 %v6470, %v6462
  %v6967 = vpack.c.b16 %v6471, %v6463
  %v6968 = vpack.c.b16 %v6472, %v6464
  %v6969 = vpack.c.b16 %v6473, %v6465
  %v6970 = vpack.c.b16 %v6474, %v6466
  %v6971 = vpack.c.b16 %v6483, %v6475
  %v6972 = vpack.c.b16 %v6484, %v6476
  %v6973 = vpack.c.b16 %v6485, %v6477
  %v6974 = vpack.c.b16 %v6486, %v6478
  %v6975 = vpack.c.b16 %v6487, %v6479
  %v6976 = vpack.c.b16 %v6488, %v6480
  %v6977 = vpack.c.b16 %v6489, %v6481
  %v6978 = vpack.c.b16 %v6490, %v6482
  %v6979 = vpack.c.b16 %v6499, %v6491
  %v6980 = vpack.c.b16 %v6500, %v6492
  %v6981 = vpack.c.b16 %v6501, %v6493
  %v6982 = vpack.c.b16 %v6502, %v6494
  %v6983 = vpack.c.b16 %v6503, %v6495
  %v6984 = vpack.c.b16 %v6504, %v6496
  %v6985 = vpack.c.b16 %v6505, %v6497
  %v6986 = vpack.c.b16 %v6506, %v6498
  %v6987 = vpack.c.b16 %v6515, %v6507
  %v6988 = vpack.c.b16 %v6516, %v6508
  %v6989 = vpack.c.b16 %v6517, %v6509
  %v6990 = vpack.c.b16 %v6518, %v6510
  %v6991 = vpack.c.b16 %v6519, %v6511
  %v6992 = vpack.c.b16 %v6520, %v6512
  %v6993 = vpack.c.b16 %v6521, %v6513
  %v6994 = vpack.c.b16 %v6522, %v6514
  %v6995 = vpack.c.b16 %v6531, %v6523
  %v6996 = vpack.c.b16 %v6532, %v6524
  %v6997 = vpack.c.b16 %v6533, %v6525
  %v6998 = vpack.c.b16 %v6534, %v6526
  %v6999 = vpack.c.b16 %v6535, %v6527
  %v7000 = vpack.c.b16 %v6536, %v6528
  %v7001 = vpack.c.b16 %v6537, %v6529
  %v7002 = vpack.c.b16 %v6538, %v6530
  %v7003 = vpack.c.b16 %v6547, %v6539
  %v7004 = vpack.c.b16 %v6548, %v6540
  %v7005 = vpack.c.b16 %v6549, %v6541
  %v7006 = vpack.c.b16 %v6550, %v6542
  %v7007 = vpack.c.b16 %v6551, %v6543
  %v7008 = vpack.c.b16 %v6552, %v6544
  %v7009 = vpack.c.b16 %v6553, %v6545
  %v7010 = vpack.c.b16 %v6554, %v6546
  %v7011 = vpack.c.b16 %v6563, %v6555
  %v7012 = vpack.c.b16 %v6564, %v6556
  %v7013 = vpack.c.b16 %v6565, %v6557
  %v7014 = vpack.c.b16 %v6566, %v6558
  %v7015 = vpack.c.b16 %v6567, %v6559
  %v7016 = vpack.c.b16 %v6568, %v6560
  %v7017 = vpack.c.b16 %v6569, %v6561
  %v7018 = vpack.c.b16 %v6570, %v6562
  %v7019 = vpack.c.b16 %v6579, %v6571
  %v7020 = vpack.c.b16 %v6580, %v6572
  %v7021 = vpack.c.b16 %v6581, %v6573
  %v7022 = vpack.c.b16 %v6582, %v6574
  %v7023 = vpack.c.b16 %v6583, %v6575
  %v7024 = vpack.c.b16 %v6584, %v6576
  %v7025 = vpack.c.b16 %v6585, %v6577
  %v7026 = vpack.c.b16 %v6586, %v6578
  %v7027 = vpack.c.b16 %v6595, %v6587
  %v7028 = vpack.c.b16 %v6596, %v6588
  %v7029 = vpack.c.b16 %v6597, %v6589
  %v7030 = vpack.c.b16 %v6598, %v6590
  %v7031 = vpack.c.b16 %v6599, %v6591
  %v7032 = vpack.c.b16 %v6600, %v6592
  %v7033 = vpack.c.b16 %v6601, %v6593
  %v7034 = vpack.c.b16 %v6602, %v6594
  %v7035 = vpack.c.b16 %v6611, %v6603
  %v7036 = vpack.c.b16 %v6612, %v6604
  %v7037 = vpack.c.b16 %v6613, %v6605
  %v7038 = vpack.c.b16 %v6614, %v6606
  %v7039 = vpack.c.b16 %v6615, %v6607
  %v7040 = vpack.c.b16 %v6616, %v6608
  %v7041 = vpack.c.b16 %v6617, %v6609
  %v7042 = vpack.c.b16 %v6618, %v6610
  %v7043 = vpack.c.b16 %v6627, %v6619
  %v7044 = vpack.c.b16 %v6628, %v6620
  %v7045 = vpack.c.b16 %v6629, %v6621
  %v7046 = vpack.c.b16 %v6630, %v6622
  %v7047 = vpack.c.b16 %v6631, %v6623
  %v7048 = vpack.c.b16 %v6632, %v6624
  %v7049 = vpack.c.b16 %v6633, %v6625
  %v7050 = vpack.c.b16 %v6634, %v6626
  %v7051 = vpack.c.b16 %v6643, %v6635
  %v7052 = vpack.c.b16 %v6644, %v6636
  %v7053 = vpack.c.b16 %v6645, %v6637
  %v7054 = vpack.c.b16 %v6646, %v6638
  %v7055 = vpack.c.b16 %v6647, %v6639
  %v7056 = vpack.c.b16 %v6648, %v6640
  %v7057 = vpack.c.b16 %v6649, %v6641
  %v7058 = vpack.c.b16 %v6650, %v6642
  %v7059 = vpack.c.b16 %v6659, %v6651
  %v7060 = vpack.c.b16 %v6660, %v6652
  %v7061 = vpack.c.b16 %v6661, %v6653
  %v7062 = vpack.c.b16 %v6662, %v6654
  %v7063 = vpack.c.b16 %v6663, %v6655
  %v7064 = vpack.c.b16 %v6664, %v6656
  %v7065 = vpack.c.b16 %v6665, %v6657
  %v7066 = vpack.c.b16 %v6666, %v6658
  %v7067 = vpack.c.b16 %v6675, %v6667
  %v7068 = vpack.c.b16 %v6676, %v6668
  %v7069 = vpack.c.b16 %v6677, %v6669
  %v7070 = vpack.c.b16 %v6678, %v6670
  %v7071 = vpack.c.b16 %v6679, %v6671
  %v7072 = vpack.c.b16 %v6680, %v6672
  %v7073 = vpack.c.b16 %v6681, %v6673
  %v7074 = vpack.c.b16 %v6682, %v6674
  %v7075 = vpack.c.b16 %v6691, %v6683
  %v7076 = vpack.c.b16 %v6692, %v6684
  %v7077 = vpack.c.b16 %v6693, %v6685
  %v7078 = vpack.c.b16 %v6694, %v6686
  %v7079 = vpack.c.b16 %v6695, %v6687
  %v7080 = vpack.c.b16 %v6696, %v6688
  %v7081 = vpack.c.b16 %v6697, %v6689
  %v7082 = vpack.c.b16 %v6698, %v6690
  %v7083 = vpack.c.b16 %v6707, %v6699
  %v7084 = vpack.c.b16 %v6708, %v6700
  %v7085 = vpack.c.b16 %v6709, %v6701
  %v7086 = vpack.c.b16 %v6710, %v6702
  %v7087 = vpack.c.b16 %v6711, %v6703
  %v7088 = vpack.c.b16 %v6712, %v6704
  %v7089 = vpack.c.b16 %v6713, %v6705
  %v7090 = vpack.c.b16 %v6714, %v6706
  %v7091 = vpack.c.b16 %v6723, %v6715
  %v7092 = vpack.c.b16 %v6724, %v6716
  %v7093 = vpack.c.b16 %v6725, %v6717
  %v7094 = vpack.c.b16 %v6726, %v6718
  %v7095 = vpack.c.b16 %v6727, %v6719
  %v7096 = vpack.c.b16 %v6728, %v6720
  %v7097 = vpack.c.b16 %v6729, %v6721
  %v7098 = vpack.c.b16 %v6730, %v6722
  %v7099 = vpack.c.b16 %v6739, %v6731
  %v7100 = vpack.c.b16 %v6740, %v6732
  %v7101 = vpack.c.b16 %v6741, %v6733
  %v7102 = vpack.c.b16 %v6742, %v6734
  %v7103 = vpack.c.b16 %v6743, %v6735
  %v7104 = vpack.c.b16 %v6744, %v6736
  %v7105 = vpack.c.b16 %v6745, %v6737
  %v7106 = vpack.c.b16 %v6746, %v6738
  %v7107 = vpack.c.b16 %v6755, %v6747
  %v7108 = vpack.c.b16 %v6756, %v6748
  %v7109 = vpack.c.b16 %v6757, %v6749
  %v7110 = vpack.c.b16 %v6758, %v6750
  %v7111 = vpack.c.b16 %v6759, %v6751
  %v7112 = vpack.c.b16 %v6760, %v6752
  %v7113 = vpack.c.b16 %v6761, %v6753
  %v7114 = vpack.c.b16 %v6762, %v6754
  %v7115 = vpack.c.b16 %v6771, %v6763
  %v7116 = vpack.c.b16 %v6772, %v6764
  %v7117 = vpack.c.b16 %v6773, %v6765
  %v7118 = vpack.c.b16 %v6774, %v6766
  %v7119 = vpack.c.b16 %v6775, %v6767
  %v7120 = vpack.c.b16 %v6776, %v6768
  %v7121 = vpack.c.b16 %v6777, %v6769
  %v7122 = vpack.c.b16 %v6778, %v6770
  %v7123 = vpack.c.b16 %v6787, %v6779
  %v7124 = vpack.c.b16 %v6788, %v6780
  %v7125 = vpack.c.b16 %v6789, %v6781
  %v7126 = vpack.c.b16 %v6790, %v6782
  %v7127 = vpack.c.b16 %v6791, %v6783
  %v7128 = vpack.c.b16 %v6792, %v6784
  %v7129 = vpack.c.b16 %v6793, %v6785
  %v7130 = vpack.c.b16 %v6794, %v6786
  %v7131 = vpack.c.b16 %v6803, %v6795
  %v7132 = vpack.c.b16 %v6804, %v6796
  %v7133 = vpack.c.b16 %v6805, %v6797
  %v7134 = vpack.c.b16 %v6806, %v6798
  %v7135 = vpack.c.b16 %v6807, %v6799
  %v7136 = vpack.c.b16 %v6808, %v6800
  %v7137 = vpack.c.b16 %v6809, %v6801
  %v7138 = vpack.c.b16 %v6810, %v6802
  %v7139 = vpack.c.b16 %v6819, %v6811
  %v7140 = vpack.c.b16 %v6820, %v6812
  %v7141 = vpack.c.b16 %v6821, %v6813
  %v7142 = vpack.c.b16 %v6822, %v6814
  %v7143 = vpack.c.b16 %v6823, %v6815
  %v7144 = vpack.c.b16 %v6824, %v6816
  %v7145 = vpack.c.b16 %v6825, %v6817
  %v7146 = vpack.c.b16 %v6826, %v6818
  %v7147 = vpack.c.b16 %v6835, %v6827
  %v7148 = vpack.c.b16 %v6836, %v6828
  %v7149 = vpack.c.b16 %v6837, %v6829
  %v7150 = vpack.c.b16 %v6838, %v6830
  %v7151 = vpack.c.b16 %v6839, %v6831
  %v7152 = vpack.c.b16 %v6840, %v6832
  %v7153 = vpack.c.b16 %v6841, %v6833
  %v7154 = vpack.c.b16 %v6842, %v6834
  %v7155 = vpack.c.b16 %v6851, %v6843
  %v7156 = vpack.c.b16 %v6852, %v6844
  %v7157 = vpack.c.b16 %v6853, %v6845
  %v7158 = vpack.c.b16 %v6854, %v6846
  %v7159 = vpack.c.b16 %v6855, %v6847
  %v7160 = vpack.c.b16 %v6856, %v6848
  %v7161 = vpack.c.b16 %v6857, %v6849
  %v7162 = vpack.c.b16 %v6858, %v6850
  %v7163 = vpack.c.b16 %v6867, %v6859
  %v7164 = vpack.c.b16 %v6868, %v6860
  %v7165 = vpack.c.b16 %v6869, %v6861
  %v7166 = vpack.c.b16 %v6870, %v6862
  %v7167 = vpack.c.b16 %v6871, %v6863
  %v7168 = vpack.c.b16 %v6872, %v6864
  %v7169 = vpack.c.b16 %v6873, %v6865
  %v7170 = vpack.c.b16 %v6874, %v6866
  %v7171 = vpack.c.b16 %v6883, %v6875
  %v7172 = vpack.c.b16 %v6884, %v6876
  %v7173 = vpack.c.b16 %v6885, %v6877
  %v7174 = vpack.c.b16 %v6886, %v6878
  %v7175 = vpack.c.b16 %v6887, %v6879
  %v7176 = vpack.c.b16 %v6888, %v6880
  %v7177 = vpack.c.b16 %v6889, %v6881
  %v7178 = vpack.c.b16 %v6890, %v6882
  %v7179 = vpack.c.b16 %v6899, %v6891
  %v7180 = vpack.c.b16 %v6900, %v6892
  %v7181 = vpack.c.b16 %v6901, %v6893
  %v7182 = vpack.c.b16 %v6902, %v6894
  %v7183 = vpack.c.b16 %v6903, %v6895
  %v7184 = vpack.c.b16 %v6904, %v6896
  %v7185 = vpack.c.b16 %v6905, %v6897
  %v7186 = vpack.c.b16 %v6906, %v6898
  %v7187 = vpack.c.b16 %v6915, %v6907
  %v7188 = vpack.c.b16 %v6916, %v6908
  %v7189 = vpack.c.b16 %v6917, %v6909
  %v7190 = vpack.c.b16 %v6918, %v6910
  %v7191 = vpack.c.b16 %v6919, %v6911
  %v7192 = vpack.c.b16 %v6920, %v6912
  %v7193 = vpack.c.b16 %v6921, %v6913
  %v7194 = vpack.c.b16 %v6922, %v6914
  %v7195 = vpack.c.b16 %v6931, %v6923
  %v7196 = vpack.c.b16 %v6932, %v6924
  %v7197 = vpack.c.b16 %v6933, %v6925
  %v7198 = vpack.c.b16 %v6934, %v6926
  %v7199 = vpack.c.b16 %v6935, %v6927
  %v7200 = vpack.c.b16 %v6936, %v6928
  %v7201 = vpack.c.b16 %v6937, %v6929
  %v7202 = vpack.c.b16 %v6938, %v6930
  %v7203 = vpack.c.b16 %v6947, %v6939
  %v7204 = vpack.c.b16 %v6948, %v6940
  %v7205 = vpack.c.b16 %v6949, %v6941
  %v7206 = vpack.c.b16 %v6950, %v6942
  %v7207 = vpack.c.b16 %v6951, %v6943
  %v7208 = vpack.c.b16 %v6952, %v6944
  %v7209 = vpack.c.b16 %v6953, %v6945
  %v7210 = vpack.c.b16 %v6954, %v6946
  %7467 = vmatprep.subr.bf16.mxu0 %v6956
  %7468 = vmatpush1.bf16.msra.mxu0 %v6955
  %7469 = vmatprep.subr.bf16.mxu0 %v6964
  %7470 = vmatpush1.bf16.msra.mxu0 %v6963
  %7471 = vmatprep.subr.bf16.mxu0 %v6972
  %7472 = vmatpush1.bf16.msra.mxu0 %v6971
  %7473 = vmatprep.subr.bf16.mxu0 %v6980
  %7474 = vmatpush1.bf16.msra.mxu0 %v6979
  %7475 = vmatprep.subr.bf16.mxu0 %v6988
  %7476 = vmatpush1.bf16.msra.mxu0 %v6987
  %7477 = vmatprep.subr.bf16.mxu0 %v6996
  %7478 = vmatpush1.bf16.msra.mxu0 %v6995
  %7479 = vmatprep.subr.bf16.mxu0 %v7004
  %7480 = vmatpush1.bf16.msra.mxu0 %v7003
  %7481 = vmatprep.subr.bf16.mxu0 %v7012
  %7482 = vmatpush1.bf16.msra.mxu0 %v7011
  %7483 = vmatprep.subr.bf16.mxu0 %v7020
  %7484 = vmatpush1.bf16.msra.mxu0 %v7019
  %7485 = vmatprep.subr.bf16.mxu0 %v7028
  %7486 = vmatpush1.bf16.msra.mxu0 %v7027
  %7487 = vmatprep.subr.bf16.mxu0 %v7036
  %7488 = vmatpush1.bf16.msra.mxu0 %v7035
  %7489 = vmatprep.subr.bf16.mxu0 %v7044
  %7490 = vmatpush1.bf16.msra.mxu0 %v7043
  %7491 = vmatprep.subr.bf16.mxu0 %v7052
  %7492 = vmatpush1.bf16.msra.mxu0 %v7051
  %7493 = vmatprep.subr.bf16.mxu0 %v7060
  %7494 = vmatpush1.bf16.msra.mxu0 %v7059
  %7495 = vmatprep.subr.bf16.mxu0 %v7068
  %7496 = vmatpush1.bf16.msra.mxu0 %v7067
  %7497 = vmatprep.subr.bf16.mxu0 %v7076
  %7498 = vmatpush1.bf16.msra.mxu0 %v7075
  %7499 = vmatprep.mubr.bf16.mxu0 %v5928
  %7500 = vmatmul.mubr.bf16.gmra.mrb[0].mxu0 %v5927
  %v7501 = vpop.f32.mrb[0].mxu0
  %v7502 = vadd.f32 %v311, %v7501
  %v7503 = vpop.f32.mrb[0].mxu0
  %v7504 = vadd.f32 %v315, %v7503
  %v7505 = vpop.f32.mrb[0].mxu0
  %v7506 = vpop.f32.mrb[0].mxu0
  %7507 = vdwg.mxu0
  %7508 = vmatprep.subr.bf16.mxu0 %v7084
  %7509 = vmatpush1.bf16.msra.mxu0 %v7083
  %7510 = vmatprep.subr.bf16.mxu0 %v7092
  %7511 = vmatpush1.bf16.msra.mxu0 %v7091
  %7512 = vmatprep.subr.bf16.mxu0 %v7100
  %7513 = vmatpush1.bf16.msra.mxu0 %v7099
  %7514 = vmatprep.subr.bf16.mxu0 %v7108
  %7515 = vmatpush1.bf16.msra.mxu0 %v7107
  %7516 = vmatprep.subr.bf16.mxu0 %v7116
  %7517 = vmatpush1.bf16.msra.mxu0 %v7115
  %7518 = vmatprep.subr.bf16.mxu0 %v7124
  %7519 = vmatpush1.bf16.msra.mxu0 %v7123
  %7520 = vmatprep.subr.bf16.mxu0 %v7132
  %7521 = vmatpush1.bf16.msra.mxu0 %v7131
  %7522 = vmatprep.subr.bf16.mxu0 %v7140
  %7523 = vmatpush1.bf16.msra.mxu0 %v7139
  %7524 = vmatprep.subr.bf16.mxu0 %v7148
  %7525 = vmatpush1.bf16.msra.mxu0 %v7147
  %7526 = vmatprep.subr.bf16.mxu0 %v7156
  %7527 = vmatpush1.bf16.msra.mxu0 %v7155
  %7528 = vmatprep.subr.bf16.mxu0 %v7164
  %7529 = vmatpush1.bf16.msra.mxu0 %v7163
  %7530 = vmatprep.subr.bf16.mxu0 %v7172
  %7531 = vmatpush1.bf16.msra.mxu0 %v7171
  %7532 = vmatprep.subr.bf16.mxu0 %v7180
  %7533 = vmatpush1.bf16.msra.mxu0 %v7179
  %7534 = vmatprep.subr.bf16.mxu0 %v7188
  %7535 = vmatpush1.bf16.msra.mxu0 %v7187
  %7536 = vmatprep.subr.bf16.mxu0 %v7196
  %7537 = vmatpush1.bf16.msra.mxu0 %v7195
  %7538 = vmatprep.subr.bf16.mxu0 %v7204
  %7539 = vmatpush1.bf16.msra.mxu0 %v7203
  %7540 = vmatprep.mubr.bf16.mxu0 %v5930
  %7541 = vmatmul.mubr.bf16.gmra.mrb[0].mxu0 %v5929
  %v7542 = vpop.f32.mrb[0].mxu0
  %v7543 = vadd.f32 %v7502, %v7542
  %v7544 = vpop.f32.mrb[0].mxu0
  %v7545 = vadd.f32 %v7504, %v7544
  %v7546 = vpop.f32.mrb[0].mxu0
  %v7547 = vpop.f32.mrb[0].mxu0
  %7548 = vdwg.mxu0
  %7549 = vmatprep.subr.bf16.mxu0 %v6958
  %7550 = vmatpush1.bf16.msra.mxu0 %v6957
  %7551 = vmatprep.subr.bf16.mxu0 %v6966
  %7552 = vmatpush1.bf16.msra.mxu0 %v6965
  %7553 = vmatprep.subr.bf16.mxu0 %v6974
  %7554 = vmatpush1.bf16.msra.mxu0 %v6973
  %7555 = vmatprep.subr.bf16.mxu0 %v6982
  %7556 = vmatpush1.bf16.msra.mxu0 %v6981
  %7557 = vmatprep.subr.bf16.mxu0 %v6990
  %7558 = vmatpush1.bf16.msra.mxu0 %v6989
  %7559 = vmatprep.subr.bf16.mxu0 %v6998
  %7560 = vmatpush1.bf16.msra.mxu0 %v6997
  %7561 = vmatprep.subr.bf16.mxu0 %v7006
  %7562 = vmatpush1.bf16.msra.mxu0 %v7005
  %7563 = vmatprep.subr.bf16.mxu0 %v7014
  %7564 = vmatpush1.bf16.msra.mxu0 %v7013
  %7565 = vmatprep.subr.bf16.mxu0 %v7022
  %7566 = vmatpush1.bf16.msra.mxu0 %v7021
  %7567 = vmatprep.subr.bf16.mxu0 %v7030
  %7568 = vmatpush1.bf16.msra.mxu0 %v7029
  %7569 = vmatprep.subr.bf16.mxu0 %v7038
  %7570 = vmatpush1.bf16.msra.mxu0 %v7037
  %7571 = vmatprep.subr.bf16.mxu0 %v7046
  %7572 = vmatpush1.bf16.msra.mxu0 %v7045
  %7573 = vmatprep.subr.bf16.mxu0 %v7054
  %7574 = vmatpush1.bf16.msra.mxu0 %v7053
  %7575 = vmatprep.subr.bf16.mxu0 %v7062
  %7576 = vmatpush1.bf16.msra.mxu0 %v7061
  %7577 = vmatprep.subr.bf16.mxu0 %v7070
  %7578 = vmatpush1.bf16.msra.mxu0 %v7069
  %7579 = vmatprep.subr.bf16.mxu0 %v7078
  %7580 = vmatpush1.bf16.msra.mxu0 %v7077
  %7581 = vmatprep.mubr.bf16.mxu0 %v5928
  %7582 = vmatmul.mubr.bf16.gmra.mrb[0].mxu0 %v5927
  %v7583 = vpop.f32.mrb[0].mxu0
  %v7584 = vadd.f32 %v319, %v7583
  %v7585 = vpop.f32.mrb[0].mxu0
  %v7586 = vadd.f32 %v323, %v7585
  %v7587 = vpop.f32.mrb[0].mxu0
  %v7588 = vpop.f32.mrb[0].mxu0
  %7589 = vdwg.mxu0
  %7590 = vmatprep.subr.bf16.mxu0 %v7086
  %7591 = vmatpush1.bf16.msra.mxu0 %v7085
  %7592 = vmatprep.subr.bf16.mxu0 %v7094
  %7593 = vmatpush1.bf16.msra.mxu0 %v7093
  %7594 = vmatprep.subr.bf16.mxu0 %v7102
  %7595 = vmatpush1.bf16.msra.mxu0 %v7101
  %7596 = vmatprep.subr.bf16.mxu0 %v7110
  %7597 = vmatpush1.bf16.msra.mxu0 %v7109
  %7598 = vmatprep.subr.bf16.mxu0 %v7118
  %7599 = vmatpush1.bf16.msra.mxu0 %v7117
  %7600 = vmatprep.subr.bf16.mxu0 %v7126
  %7601 = vmatpush1.bf16.msra.mxu0 %v7125
  %7602 = vmatprep.subr.bf16.mxu0 %v7134
  %7603 = vmatpush1.bf16.msra.mxu0 %v7133
  %7604 = vmatprep.subr.bf16.mxu0 %v7142
  %7605 = vmatpush1.bf16.msra.mxu0 %v7141
  %7606 = vmatprep.subr.bf16.mxu0 %v7150
  %7607 = vmatpush1.bf16.msra.mxu0 %v7149
  %7608 = vmatprep.subr.bf16.mxu0 %v7158
  %7609 = vmatpush1.bf16.msra.mxu0 %v7157
  %7610 = vmatprep.subr.bf16.mxu0 %v7166
  %7611 = vmatpush1.bf16.msra.mxu0 %v7165
  %7612 = vmatprep.subr.bf16.mxu0 %v7174
  %7613 = vmatpush1.bf16.msra.mxu0 %v7173
  %7614 = vmatprep.subr.bf16.mxu0 %v7182
  %7615 = vmatpush1.bf16.msra.mxu0 %v7181
  %7616 = vmatprep.subr.bf16.mxu0 %v7190
  %7617 = vmatpush1.bf16.msra.mxu0 %v7189
  %7618 = vmatprep.subr.bf16.mxu0 %v7198
  %7619 = vmatpush1.bf16.msra.mxu0 %v7197
  %7620 = vmatprep.subr.bf16.mxu0 %v7206
  %7621 = vmatpush1.bf16.msra.mxu0 %v7205
  %7622 = vmatprep.mubr.bf16.mxu0 %v5930
  %7623 = vmatmul.mubr.bf16.gmra.mrb[0].mxu0 %v5929
  %v7624 = vpop.f32.mrb[0].mxu0
  %v7625 = vadd.f32 %v7584, %v7624
  %v7626 = vpop.f32.mrb[0].mxu0
  %v7627 = vadd.f32 %v7586, %v7626
  %v7628 = vpop.f32.mrb[0].mxu0
  %v7629 = vpop.f32.mrb[0].mxu0
  %7630 = vdwg.mxu0
  %7631 = vmatprep.subr.bf16.mxu0 %v6960
  %7632 = vmatpush1.bf16.msra.mxu0 %v6959
  %7633 = vmatprep.subr.bf16.mxu0 %v6968
  %7634 = vmatpush1.bf16.msra.mxu0 %v6967
  %7635 = vmatprep.subr.bf16.mxu0 %v6976
  %7636 = vmatpush1.bf16.msra.mxu0 %v6975
  %7637 = vmatprep.subr.bf16.mxu0 %v6984
  %7638 = vmatpush1.bf16.msra.mxu0 %v6983
  %7639 = vmatprep.subr.bf16.mxu0 %v6992
  %7640 = vmatpush1.bf16.msra.mxu0 %v6991
  %7641 = vmatprep.subr.bf16.mxu0 %v7000
  %7642 = vmatpush1.bf16.msra.mxu0 %v6999
  %7643 = vmatprep.subr.bf16.mxu0 %v7008
  %7644 = vmatpush1.bf16.msra.mxu0 %v7007
  %7645 = vmatprep.subr.bf16.mxu0 %v7016
  %7646 = vmatpush1.bf16.msra.mxu0 %v7015
  %7647 = vmatprep.subr.bf16.mxu0 %v7024
  %7648 = vmatpush1.bf16.msra.mxu0 %v7023
  %7649 = vmatprep.subr.bf16.mxu0 %v7032
  %7650 = vmatpush1.bf16.msra.mxu0 %v7031
  %7651 = vmatprep.subr.bf16.mxu0 %v7040
  %7652 = vmatpush1.bf16.msra.mxu0 %v7039
  %7653 = vmatprep.subr.bf16.mxu0 %v7048
  %7654 = vmatpush1.bf16.msra.mxu0 %v7047
  %7655 = vmatprep.subr.bf16.mxu0 %v7056
  %7656 = vmatpush1.bf16.msra.mxu0 %v7055
  %7657 = vmatprep.subr.bf16.mxu0 %v7064
  %7658 = vmatpush1.bf16.msra.mxu0 %v7063
  %7659 = vmatprep.subr.bf16.mxu0 %v7072
  %7660 = vmatpush1.bf16.msra.mxu0 %v7071
  %7661 = vmatprep.subr.bf16.mxu0 %v7080
  %7662 = vmatpush1.bf16.msra.mxu0 %v7079
  %7663 = vmatprep.mubr.bf16.mxu0 %v5928
  %7664 = vmatmul.mubr.bf16.gmra.mrb[0].mxu0 %v5927
  %v7665 = vpop.f32.mrb[0].mxu0
  %v7666 = vadd.f32 %v327, %v7665
  %v7667 = vpop.f32.mrb[0].mxu0
  %v7668 = vadd.f32 %v331, %v7667
  %v7669 = vpop.f32.mrb[0].mxu0
  %v7670 = vpop.f32.mrb[0].mxu0
  %7671 = vdwg.mxu0
  %7672 = vmatprep.subr.bf16.mxu0 %v7088
  %7673 = vmatpush1.bf16.msra.mxu0 %v7087
  %7674 = vmatprep.subr.bf16.mxu0 %v7096
  %7675 = vmatpush1.bf16.msra.mxu0 %v7095
  %7676 = vmatprep.subr.bf16.mxu0 %v7104
  %7677 = vmatpush1.bf16.msra.mxu0 %v7103
  %7678 = vmatprep.subr.bf16.mxu0 %v7112
  %7679 = vmatpush1.bf16.msra.mxu0 %v7111
  %7680 = vmatprep.subr.bf16.mxu0 %v7120
  %7681 = vmatpush1.bf16.msra.mxu0 %v7119
  %7682 = vmatprep.subr.bf16.mxu0 %v7128
  %7683 = vmatpush1.bf16.msra.mxu0 %v7127
  %7684 = vmatprep.subr.bf16.mxu0 %v7136
  %7685 = vmatpush1.bf16.msra.mxu0 %v7135
  %7686 = vmatprep.subr.bf16.mxu0 %v7144
  %7687 = vmatpush1.bf16.msra.mxu0 %v7143
  %7688 = vmatprep.subr.bf16.mxu0 %v7152
  %7689 = vmatpush1.bf16.msra.mxu0 %v7151
  %7690 = vmatprep.subr.bf16.mxu0 %v7160
  %7691 = vmatpush1.bf16.msra.mxu0 %v7159
  %7692 = vmatprep.subr.bf16.mxu0 %v7168
  %7693 = vmatpush1.bf16.msra.mxu0 %v7167
  %7694 = vmatprep.subr.bf16.mxu0 %v7176
  %7695 = vmatpush1.bf16.msra.mxu0 %v7175
  %7696 = vmatprep.subr.bf16.mxu0 %v7184
  %7697 = vmatpush1.bf16.msra.mxu0 %v7183
  %7698 = vmatprep.subr.bf16.mxu0 %v7192
  %7699 = vmatpush1.bf16.msra.mxu0 %v7191
  %7700 = vmatprep.subr.bf16.mxu0 %v7200
  %7701 = vmatpush1.bf16.msra.mxu0 %v7199
  %7702 = vmatprep.subr.bf16.mxu0 %v7208
  %7703 = vmatpush1.bf16.msra.mxu0 %v7207
  %7704 = vmatprep.mubr.bf16.mxu0 %v5930
  %7705 = vmatmul.mubr.bf16.gmra.mrb[0].mxu0 %v5929
  %v7706 = vpop.f32.mrb[0].mxu0
  %v7707 = vadd.f32 %v7666, %v7706
  %v7708 = vpop.f32.mrb[0].mxu0
  %v7709 = vadd.f32 %v7668, %v7708
  %v7710 = vpop.f32.mrb[0].mxu0
  %v7711 = vpop.f32.mrb[0].mxu0
  %7712 = vdwg.mxu0
  %7713 = vmatprep.subr.bf16.mxu0 %v6962
  %7714 = vmatpush1.bf16.msra.mxu0 %v6961
  %7715 = vmatprep.subr.bf16.mxu0 %v6970
  %7716 = vmatpush1.bf16.msra.mxu0 %v6969
  %7717 = vmatprep.subr.bf16.mxu0 %v6978
  %7718 = vmatpush1.bf16.msra.mxu0 %v6977
  %7719 = vmatprep.subr.bf16.mxu0 %v6986
  %7720 = vmatpush1.bf16.msra.mxu0 %v6985
  %7721 = vmatprep.subr.bf16.mxu0 %v6994
  %7722 = vmatpush1.bf16.msra.mxu0 %v6993
  %7723 = vmatprep.subr.bf16.mxu0 %v7002
  %7724 = vmatpush1.bf16.msra.mxu0 %v7001
  %7725 = vmatprep.subr.bf16.mxu0 %v7010
  %7726 = vmatpush1.bf16.msra.mxu0 %v7009
  %7727 = vmatprep.subr.bf16.mxu0 %v7018
  %7728 = vmatpush1.bf16.msra.mxu0 %v7017
  %7729 = vmatprep.subr.bf16.mxu0 %v7026
  %7730 = vmatpush1.bf16.msra.mxu0 %v7025
  %7731 = vmatprep.subr.bf16.mxu0 %v7034
  %7732 = vmatpush1.bf16.msra.mxu0 %v7033
  %7733 = vmatprep.subr.bf16.mxu0 %v7042
  %7734 = vmatpush1.bf16.msra.mxu0 %v7041
  %7735 = vmatprep.subr.bf16.mxu0 %v7050
  %7736 = vmatpush1.bf16.msra.mxu0 %v7049
  %7737 = vmatprep.subr.bf16.mxu0 %v7058
  %7738 = vmatpush1.bf16.msra.mxu0 %v7057
  %7739 = vmatprep.subr.bf16.mxu0 %v7066
  %7740 = vmatpush1.bf16.msra.mxu0 %v7065
  %7741 = vmatprep.subr.bf16.mxu0 %v7074
  %7742 = vmatpush1.bf16.msra.mxu0 %v7073
  %7743 = vmatprep.subr.bf16.mxu0 %v7082
  %7744 = vmatpush1.bf16.msra.mxu0 %v7081
  %7745 = vmatprep.mubr.bf16.mxu0 %v5928
  %7746 = vmatmul.mubr.bf16.gmra.mrb[0].mxu0 %v5927
  %v7747 = vpop.f32.mrb[0].mxu0
  %v7748 = vadd.f32 %v335, %v7747
  %v7749 = vpop.f32.mrb[0].mxu0
  %v7750 = vadd.f32 %v339, %v7749
  %v7751 = vpop.f32.mrb[0].mxu0
  %v7752 = vpop.f32.mrb[0].mxu0
  %7753 = vdwg.mxu0
  %7754 = vmatprep.subr.bf16.mxu0 %v7090
  %7755 = vmatpush1.bf16.msra.mxu0 %v7089
  %7756 = vmatprep.subr.bf16.mxu0 %v7098
  %7757 = vmatpush1.bf16.msra.mxu0 %v7097
  %7758 = vmatprep.subr.bf16.mxu0 %v7106
  %7759 = vmatpush1.bf16.msra.mxu0 %v7105
  %7760 = vmatprep.subr.bf16.mxu0 %v7114
  %7761 = vmatpush1.bf16.msra.mxu0 %v7113
  %7762 = vmatprep.subr.bf16.mxu0 %v7122
  %7763 = vmatpush1.bf16.msra.mxu0 %v7121
  %7764 = vmatprep.subr.bf16.mxu0 %v7130
  %7765 = vmatpush1.bf16.msra.mxu0 %v7129
  %7766 = vmatprep.subr.bf16.mxu0 %v7138
  %7767 = vmatpush1.bf16.msra.mxu0 %v7137
  %7768 = vmatprep.subr.bf16.mxu0 %v7146
  %7769 = vmatpush1.bf16.msra.mxu0 %v7145
  %7770 = vmatprep.subr.bf16.mxu0 %v7154
  %7771 = vmatpush1.bf16.msra.mxu0 %v7153
  %7772 = vmatprep.subr.bf16.mxu0 %v7162
  %7773 = vmatpush1.bf16.msra.mxu0 %v7161
  %7774 = vmatprep.subr.bf16.mxu0 %v7170
  %7775 = vmatpush1.bf16.msra.mxu0 %v7169
  %7776 = vmatprep.subr.bf16.mxu0 %v7178
  %7777 = vmatpush1.bf16.msra.mxu0 %v7177
  %7778 = vmatprep.subr.bf16.mxu0 %v7186
  %7779 = vmatpush1.bf16.msra.mxu0 %v7185
  %7780 = vmatprep.subr.bf16.mxu0 %v7194
  %7781 = vmatpush1.bf16.msra.mxu0 %v7193
  %7782 = vmatprep.subr.bf16.mxu0 %v7202
  %7783 = vmatpush1.bf16.msra.mxu0 %v7201
  %7784 = vmatprep.subr.bf16.mxu0 %v7210
  %7785 = vmatpush1.bf16.msra.mxu0 %v7209
  %7786 = vmatprep.mubr.bf16.mxu0 %v5930
  %7787 = vmatmul.mubr.bf16.gmra.mrb[0].mxu0 %v5929
  %v7788 = vpop.f32.mrb[0].mxu0
  %v7789 = vadd.f32 %v7748, %v7788
  %v7790 = vpop.f32.mrb[0].mxu0
  %v7791 = vadd.f32 %v7750, %v7790
  %v7792 = vpop.f32.mrb[0].mxu0
  %v7793 = vpop.f32.mrb[0].mxu0
  %7794 = vdwg.mxu0
  %v7799 = vcombine.low %v7543, %v7545
  %v7800 = vcombine.low %v7625, %v7627
  %v7802 = vunpack.c.l.s4 1983009808
  %v7803 = vunpack.c.0.s8 %v7802
  %v7804 = vlaneseq
  %v7805 = vshrl.u32 %v7804, 7
  %v7806 = vsub.s32 %v7803, %v7805
  %v7807 = vrot.slane %v7799, %v7806
  %v7809 = vunpack.c.l.s4 1983009808
  %v7810 = vunpack.c.0.s8 %v7809
  %v7811 = vlaneseq
  %v7812 = vshrl.u32 %v7811, 7
  %v7813 = vsub.s32 %v7810, %v7812
  %v7814 = vrot.slane %v7800, %v7813
  %v7815 = vcombine.low %v7807, %v7814
  %v7817 = vadd.f32 %v5902, %v7815
  %v7818 = vmul.f32 %v7817, 0.5
  %v7819 = vtanh.pop %v7818
  %v7820 = vadd.f32 %v7819, 1.0
  %v7821 = vmul.f32 %v7820, 0.5
  %v7826 = vcombine.low %v7707, %v7709
  %v7827 = vcombine.low %v7789, %v7791
  %v7829 = vunpack.c.l.s4 1983009808
  %v7830 = vunpack.c.0.s8 %v7829
  %v7831 = vlaneseq
  %v7832 = vshrl.u32 %v7831, 7
  %v7833 = vsub.s32 %v7830, %v7832
  %v7834 = vrot.slane %v7826, %v7833
  %v7836 = vunpack.c.l.s4 1983009808
  %v7837 = vunpack.c.0.s8 %v7836
  %v7838 = vlaneseq
  %v7839 = vshrl.u32 %v7838, 7
  %v7840 = vsub.s32 %v7837, %v7839
  %v7841 = vrot.slane %v7827, %v7840
  %v7842 = vcombine.low %v7834, %v7841
  %v7844 = vadd.f32 %v5903, %v7842
  %v7845 = vmul.f32 %v7844, 0.5
  %v7846 = vtanh.pop %v7845
  %v7847 = vadd.f32 %v7846, 1.0
  %v7848 = vmul.f32 %v7847, 0.5
  %v7849 = vld [vmem:[%s1 + $0x20] sm:$0xff]
  %v7850 = vld [vmem:[%s1 + $0x28] sm:$0xff]
  %v7851 = vld [vmem:[%s1 + $0x50] sm:$0xff]
  %v7852 = vld [vmem:[%s1 + $0x58] sm:$0xff]
  %v7853 = vld [vmem:[%s1 + $0x80] sm:$0xff]
  %v7854 = vld [vmem:[%s1 + $0x88] sm:$0xff]
  %v7855 = vld [vmem:[%s1 + $0xb0] sm:$0xff]
  %v7856 = vld [vmem:[%s1 + $0xb8] sm:$0xff]
  %v7857 = vld [vmem:[%s1 + $0xe0] sm:$0xff]
  %v7858 = vld [vmem:[%s1 + $0xe8] sm:$0xff]
  %v7859 = vld [vmem:[%s1 + $0x110] sm:$0xff]
  %v7860 = vld [vmem:[%s1 + $0x118] sm:$0xff]
  %v7861 = vld [vmem:[%s1 + $0x140] sm:$0xff]
  %v7862 = vld [vmem:[%s1 + $0x148] sm:$0xff]
  %v7863 = vld [vmem:[%s1 + $0x170] sm:$0xff]
  %v7864 = vld [vmem:[%s1 + $0x178] sm:$0xff]
  %v7865 = vld [vmem:[%s1 + $0x1a0] sm:$0xff]
  %v7866 = vld [vmem:[%s1 + $0x1a8] sm:$0xff]
  %v7867 = vld [vmem:[%s1 + $0x1d0] sm:$0xff]
  %v7868 = vld [vmem:[%s1 + $0x1d8] sm:$0xff]
  %v7869 = vld [vmem:[%s1 + $0x200] sm:$0xff]
  %v7870 = vld [vmem:[%s1 + $0x208] sm:$0xff]
  %v7871 = vld [vmem:[%s1 + $0x230] sm:$0xff]
  %v7872 = vld [vmem:[%s1 + $0x238] sm:$0xff]
  %v7873 = vld [vmem:[%s1 + $0x260] sm:$0xff]
  %v7874 = vld [vmem:[%s1 + $0x268] sm:$0xff]
  %v7875 = vld [vmem:[%s1 + $0x290] sm:$0xff]
  %v7876 = vld [vmem:[%s1 + $0x298] sm:$0xff]
  %v7877 = vld [vmem:[%s1 + $0x2c0] sm:$0xff]
  %v7878 = vld [vmem:[%s1 + $0x2c8] sm:$0xff]
  %v7879 = vld [vmem:[%s1 + $0x2f0] sm:$0xff]
  %v7880 = vld [vmem:[%s1 + $0x2f8] sm:$0xff]
  %v7881 = vld [vmem:[%s1 + $0x320] sm:$0xff]
  %v7882 = vld [vmem:[%s1 + $0x328] sm:$0xff]
  %v7883 = vld [vmem:[%s1 + $0x350] sm:$0xff]
  %v7884 = vld [vmem:[%s1 + $0x358] sm:$0xff]
  %v7885 = vld [vmem:[%s1 + $0x380] sm:$0xff]
  %v7886 = vld [vmem:[%s1 + $0x388] sm:$0xff]
  %v7887 = vld [vmem:[%s1 + $0x3b0] sm:$0xff]
  %v7888 = vld [vmem:[%s1 + $0x3b8] sm:$0xff]
  %v7889 = vld [vmem:[%s1 + $0x3e0] sm:$0xff]
  %v7890 = vld [vmem:[%s1 + $0x3e8] sm:$0xff]
  %v7891 = vld [vmem:[%s1 + $0x410] sm:$0xff]
  %v7892 = vld [vmem:[%s1 + $0x418] sm:$0xff]
  %v7893 = vld [vmem:[%s1 + $0x440] sm:$0xff]
  %v7894 = vld [vmem:[%s1 + $0x448] sm:$0xff]
  %v7895 = vld [vmem:[%s1 + $0x470] sm:$0xff]
  %v7896 = vld [vmem:[%s1 + $0x478] sm:$0xff]
  %v7897 = vld [vmem:[%s1 + $0x4a0] sm:$0xff]
  %v7898 = vld [vmem:[%s1 + $0x4a8] sm:$0xff]
  %v7899 = vld [vmem:[%s1 + $0x4d0] sm:$0xff]
  %v7900 = vld [vmem:[%s1 + $0x4d8] sm:$0xff]
  %v7901 = vld [vmem:[%s1 + $0x500] sm:$0xff]
  %v7902 = vld [vmem:[%s1 + $0x508] sm:$0xff]
  %v7903 = vld [vmem:[%s1 + $0x530] sm:$0xff]
  %v7904 = vld [vmem:[%s1 + $0x538] sm:$0xff]
  %v7905 = vld [vmem:[%s1 + $0x560] sm:$0xff]
  %v7906 = vld [vmem:[%s1 + $0x568] sm:$0xff]
  %v7907 = vld [vmem:[%s1 + $0x590] sm:$0xff]
  %v7908 = vld [vmem:[%s1 + $0x598] sm:$0xff]
  %v7909 = vld [vmem:[%s1 + $0x5c0] sm:$0xff]
  %v7910 = vld [vmem:[%s1 + $0x5c8] sm:$0xff]
  %v7911 = vld [vmem:[%s1 + $0x5f0] sm:$0xff]
  %v7912 = vld [vmem:[%s1 + $0x5f8] sm:$0xff]
  %v7913 = vld [vmem:[%s1 + $0x620] sm:$0xff]
  %v7914 = vld [vmem:[%s1 + $0x628] sm:$0xff]
  %v7915 = vld [vmem:[%s1 + $0x650] sm:$0xff]
  %v7916 = vld [vmem:[%s1 + $0x658] sm:$0xff]
  %v7917 = vld [vmem:[%s1 + $0x680] sm:$0xff]
  %v7918 = vld [vmem:[%s1 + $0x688] sm:$0xff]
  %v7919 = vld [vmem:[%s1 + $0x6b0] sm:$0xff]
  %v7920 = vld [vmem:[%s1 + $0x6b8] sm:$0xff]
  %v7921 = vld [vmem:[%s1 + $0x6e0] sm:$0xff]
  %v7922 = vld [vmem:[%s1 + $0x6e8] sm:$0xff]
  %v7923 = vld [vmem:[%s1 + $0x710] sm:$0xff]
  %v7924 = vld [vmem:[%s1 + $0x718] sm:$0xff]
  %v7925 = vld [vmem:[%s1 + $0x740] sm:$0xff]
  %v7926 = vld [vmem:[%s1 + $0x748] sm:$0xff]
  %v7927 = vld [vmem:[%s1 + $0x770] sm:$0xff]
  %v7928 = vld [vmem:[%s1 + $0x778] sm:$0xff]
  %v7929 = vld [vmem:[%s1 + $0x7a0] sm:$0xff]
  %v7930 = vld [vmem:[%s1 + $0x7a8] sm:$0xff]
  %v7931 = vld [vmem:[%s1 + $0x7d0] sm:$0xff]
  %v7932 = vld [vmem:[%s1 + $0x7d8] sm:$0xff]
  %v7933 = vld [vmem:[%s1 + $0x800] sm:$0xff]
  %v7934 = vld [vmem:[%s1 + $0x808] sm:$0xff]
  %v7935 = vld [vmem:[%s1 + $0x830] sm:$0xff]
  %v7936 = vld [vmem:[%s1 + $0x838] sm:$0xff]
  %v7937 = vld [vmem:[%s1 + $0x860] sm:$0xff]
  %v7938 = vld [vmem:[%s1 + $0x868] sm:$0xff]
  %v7939 = vld [vmem:[%s1 + $0x890] sm:$0xff]
  %v7940 = vld [vmem:[%s1 + $0x898] sm:$0xff]
  %v7941 = vld [vmem:[%s1 + $0x8c0] sm:$0xff]
  %v7942 = vld [vmem:[%s1 + $0x8c8] sm:$0xff]
  %v7943 = vld [vmem:[%s1 + $0x8f0] sm:$0xff]
  %v7944 = vld [vmem:[%s1 + $0x8f8] sm:$0xff]
  %v7945 = vld [vmem:[%s1 + $0x920] sm:$0xff]
  %v7946 = vld [vmem:[%s1 + $0x928] sm:$0xff]
  %v7947 = vld [vmem:[%s1 + $0x950] sm:$0xff]
  %v7948 = vld [vmem:[%s1 + $0x958] sm:$0xff]
  %v7949 = vld [vmem:[%s1 + $0x980] sm:$0xff]
  %v7950 = vld [vmem:[%s1 + $0x988] sm:$0xff]
  %v7951 = vld [vmem:[%s1 + $0x9b0] sm:$0xff]
  %v7952 = vld [vmem:[%s1 + $0x9b8] sm:$0xff]
  %v7953 = vld [vmem:[%s1 + $0x9e0] sm:$0xff]
  %v7954 = vld [vmem:[%s1 + $0x9e8] sm:$0xff]
  %v7955 = vld [vmem:[%s1 + $0xa10] sm:$0xff]
  %v7956 = vld [vmem:[%s1 + $0xa18] sm:$0xff]
  %v7957 = vld [vmem:[%s1 + $0xa40] sm:$0xff]
  %v7958 = vld [vmem:[%s1 + $0xa48] sm:$0xff]
  %v7959 = vld [vmem:[%s1 + $0xa70] sm:$0xff]
  %v7960 = vld [vmem:[%s1 + $0xa78] sm:$0xff]
  %v7961 = vld [vmem:[%s1 + $0xaa0] sm:$0xff]
  %v7962 = vld [vmem:[%s1 + $0xaa8] sm:$0xff]
  %v7963 = vld [vmem:[%s1 + $0xad0] sm:$0xff]
  %v7964 = vld [vmem:[%s1 + $0xad8] sm:$0xff]
  %v7965 = vld [vmem:[%s1 + $0xb00] sm:$0xff]
  %v7966 = vld [vmem:[%s1 + $0xb08] sm:$0xff]
  %v7967 = vld [vmem:[%s1 + $0xb30] sm:$0xff]
  %v7968 = vld [vmem:[%s1 + $0xb38] sm:$0xff]
  %v7969 = vld [vmem:[%s1 + $0xb60] sm:$0xff]
  %v7970 = vld [vmem:[%s1 + $0xb68] sm:$0xff]
  %v7971 = vld [vmem:[%s1 + $0xb90] sm:$0xff]
  %v7972 = vld [vmem:[%s1 + $0xb98] sm:$0xff]
  %v7973 = vld [vmem:[%s1 + $0xbc0] sm:$0xff]
  %v7974 = vld [vmem:[%s1 + $0xbc8] sm:$0xff]
  %v7975 = vld [vmem:[%s1 + $0xbf0] sm:$0xff]
  %v7976 = vld [vmem:[%s1 + $0xbf8] sm:$0xff]
  %v8105 = vunpack.c.l.b16 %v7849
  %v8106 = vunpack.c.h.b16 %v7849
  %v8107 = vunpack.c.l.b16 %v7850
  %v8108 = vunpack.c.h.b16 %v7850
  %v8109 = vunpack.c.l.b16 %v7851
  %v8110 = vunpack.c.h.b16 %v7851
  %v8111 = vunpack.c.l.b16 %v7852
  %v8112 = vunpack.c.h.b16 %v7852
  %v8113 = vunpack.c.l.b16 %v7853
  %v8114 = vunpack.c.h.b16 %v7853
  %v8115 = vunpack.c.l.b16 %v7854
  %v8116 = vunpack.c.h.b16 %v7854
  %v8117 = vunpack.c.l.b16 %v7855
  %v8118 = vunpack.c.h.b16 %v7855
  %v8119 = vunpack.c.l.b16 %v7856
  %v8120 = vunpack.c.h.b16 %v7856
  %v8121 = vunpack.c.l.b16 %v7857
  %v8122 = vunpack.c.h.b16 %v7857
  %v8123 = vunpack.c.l.b16 %v7858
  %v8124 = vunpack.c.h.b16 %v7858
  %v8125 = vunpack.c.l.b16 %v7859
  %v8126 = vunpack.c.h.b16 %v7859
  %v8127 = vunpack.c.l.b16 %v7860
  %v8128 = vunpack.c.h.b16 %v7860
  %v8129 = vunpack.c.l.b16 %v7861
  %v8130 = vunpack.c.h.b16 %v7861
  %v8131 = vunpack.c.l.b16 %v7862
  %v8132 = vunpack.c.h.b16 %v7862
  %v8133 = vunpack.c.l.b16 %v7863
  %v8134 = vunpack.c.h.b16 %v7863
  %v8135 = vunpack.c.l.b16 %v7864
  %v8136 = vunpack.c.h.b16 %v7864
  %v8137 = vunpack.c.l.b16 %v7865
  %v8138 = vunpack.c.h.b16 %v7865
  %v8139 = vunpack.c.l.b16 %v7866
  %v8140 = vunpack.c.h.b16 %v7866
  %v8141 = vunpack.c.l.b16 %v7867
  %v8142 = vunpack.c.h.b16 %v7867
  %v8143 = vunpack.c.l.b16 %v7868
  %v8144 = vunpack.c.h.b16 %v7868
  %v8145 = vunpack.c.l.b16 %v7869
  %v8146 = vunpack.c.h.b16 %v7869
  %v8147 = vunpack.c.l.b16 %v7870
  %v8148 = vunpack.c.h.b16 %v7870
  %v8149 = vunpack.c.l.b16 %v7871
  %v8150 = vunpack.c.h.b16 %v7871
  %v8151 = vunpack.c.l.b16 %v7872
  %v8152 = vunpack.c.h.b16 %v7872
  %v8153 = vunpack.c.l.b16 %v7873
  %v8154 = vunpack.c.h.b16 %v7873
  %v8155 = vunpack.c.l.b16 %v7874
  %v8156 = vunpack.c.h.b16 %v7874
  %v8157 = vunpack.c.l.b16 %v7875
  %v8158 = vunpack.c.h.b16 %v7875
  %v8159 = vunpack.c.l.b16 %v7876
  %v8160 = vunpack.c.h.b16 %v7876
  %v8161 = vunpack.c.l.b16 %v7877
  %v8162 = vunpack.c.h.b16 %v7877
  %v8163 = vunpack.c.l.b16 %v7878
  %v8164 = vunpack.c.h.b16 %v7878
  %v8165 = vunpack.c.l.b16 %v7879
  %v8166 = vunpack.c.h.b16 %v7879
  %v8167 = vunpack.c.l.b16 %v7880
  %v8168 = vunpack.c.h.b16 %v7880
  %v8169 = vunpack.c.l.b16 %v7881
  %v8170 = vunpack.c.h.b16 %v7881
  %v8171 = vunpack.c.l.b16 %v7882
  %v8172 = vunpack.c.h.b16 %v7882
  %v8173 = vunpack.c.l.b16 %v7883
  %v8174 = vunpack.c.h.b16 %v7883
  %v8175 = vunpack.c.l.b16 %v7884
  %v8176 = vunpack.c.h.b16 %v7884
  %v8177 = vunpack.c.l.b16 %v7885
  %v8178 = vunpack.c.h.b16 %v7885
  %v8179 = vunpack.c.l.b16 %v7886
  %v8180 = vunpack.c.h.b16 %v7886
  %v8181 = vunpack.c.l.b16 %v7887
  %v8182 = vunpack.c.h.b16 %v7887
  %v8183 = vunpack.c.l.b16 %v7888
  %v8184 = vunpack.c.h.b16 %v7888
  %v8185 = vunpack.c.l.b16 %v7889
  %v8186 = vunpack.c.h.b16 %v7889
  %v8187 = vunpack.c.l.b16 %v7890
  %v8188 = vunpack.c.h.b16 %v7890
  %v8189 = vunpack.c.l.b16 %v7891
  %v8190 = vunpack.c.h.b16 %v7891
  %v8191 = vunpack.c.l.b16 %v7892
  %v8192 = vunpack.c.h.b16 %v7892
  %v8193 = vunpack.c.l.b16 %v7893
  %v8194 = vunpack.c.h.b16 %v7893
  %v8195 = vunpack.c.l.b16 %v7894
  %v8196 = vunpack.c.h.b16 %v7894
  %v8197 = vunpack.c.l.b16 %v7895
  %v8198 = vunpack.c.h.b16 %v7895
  %v8199 = vunpack.c.l.b16 %v7896
  %v8200 = vunpack.c.h.b16 %v7896
  %v8201 = vunpack.c.l.b16 %v7897
  %v8202 = vunpack.c.h.b16 %v7897
  %v8203 = vunpack.c.l.b16 %v7898
  %v8204 = vunpack.c.h.b16 %v7898
  %v8205 = vunpack.c.l.b16 %v7899
  %v8206 = vunpack.c.h.b16 %v7899
  %v8207 = vunpack.c.l.b16 %v7900
  %v8208 = vunpack.c.h.b16 %v7900
  %v8209 = vunpack.c.l.b16 %v7901
  %v8210 = vunpack.c.h.b16 %v7901
  %v8211 = vunpack.c.l.b16 %v7902
  %v8212 = vunpack.c.h.b16 %v7902
  %v8213 = vunpack.c.l.b16 %v7903
  %v8214 = vunpack.c.h.b16 %v7903
  %v8215 = vunpack.c.l.b16 %v7904
  %v8216 = vunpack.c.h.b16 %v7904
  %v8217 = vunpack.c.l.b16 %v7905
  %v8218 = vunpack.c.h.b16 %v7905
  %v8219 = vunpack.c.l.b16 %v7906
  %v8220 = vunpack.c.h.b16 %v7906
  %v8221 = vunpack.c.l.b16 %v7907
  %v8222 = vunpack.c.h.b16 %v7907
  %v8223 = vunpack.c.l.b16 %v7908
  %v8224 = vunpack.c.h.b16 %v7908
  %v8225 = vunpack.c.l.b16 %v7909
  %v8226 = vunpack.c.h.b16 %v7909
  %v8227 = vunpack.c.l.b16 %v7910
  %v8228 = vunpack.c.h.b16 %v7910
  %v8229 = vunpack.c.l.b16 %v7911
  %v8230 = vunpack.c.h.b16 %v7911
  %v8231 = vunpack.c.l.b16 %v7912
  %v8232 = vunpack.c.h.b16 %v7912
  %v8233 = vunpack.c.l.b16 %v7913
  %v8234 = vunpack.c.h.b16 %v7913
  %v8235 = vunpack.c.l.b16 %v7914
  %v8236 = vunpack.c.h.b16 %v7914
  %v8237 = vunpack.c.l.b16 %v7915
  %v8238 = vunpack.c.h.b16 %v7915
  %v8239 = vunpack.c.l.b16 %v7916
  %v8240 = vunpack.c.h.b16 %v7916
  %v8241 = vunpack.c.l.b16 %v7917
  %v8242 = vunpack.c.h.b16 %v7917
  %v8243 = vunpack.c.l.b16 %v7918
  %v8244 = vunpack.c.h.b16 %v7918
  %v8245 = vunpack.c.l.b16 %v7919
  %v8246 = vunpack.c.h.b16 %v7919
  %v8247 = vunpack.c.l.b16 %v7920
  %v8248 = vunpack.c.h.b16 %v7920
  %v8249 = vunpack.c.l.b16 %v7921
  %v8250 = vunpack.c.h.b16 %v7921
  %v8251 = vunpack.c.l.b16 %v7922
  %v8252 = vunpack.c.h.b16 %v7922
  %v8253 = vunpack.c.l.b16 %v7923
  %v8254 = vunpack.c.h.b16 %v7923
  %v8255 = vunpack.c.l.b16 %v7924
  %v8256 = vunpack.c.h.b16 %v7924
  %v8257 = vunpack.c.l.b16 %v7925
  %v8258 = vunpack.c.h.b16 %v7925
  %v8259 = vunpack.c.l.b16 %v7926
  %v8260 = vunpack.c.h.b16 %v7926
  %v8261 = vunpack.c.l.b16 %v7927
  %v8262 = vunpack.c.h.b16 %v7927
  %v8263 = vunpack.c.l.b16 %v7928
  %v8264 = vunpack.c.h.b16 %v7928
  %v8265 = vunpack.c.l.b16 %v7929
  %v8266 = vunpack.c.h.b16 %v7929
  %v8267 = vunpack.c.l.b16 %v7930
  %v8268 = vunpack.c.h.b16 %v7930
  %v8269 = vunpack.c.l.b16 %v7931
  %v8270 = vunpack.c.h.b16 %v7931
  %v8271 = vunpack.c.l.b16 %v7932
  %v8272 = vunpack.c.h.b16 %v7932
  %v8273 = vunpack.c.l.b16 %v7933
  %v8274 = vunpack.c.h.b16 %v7933
  %v8275 = vunpack.c.l.b16 %v7934
  %v8276 = vunpack.c.h.b16 %v7934
  %v8277 = vunpack.c.l.b16 %v7935
  %v8278 = vunpack.c.h.b16 %v7935
  %v8279 = vunpack.c.l.b16 %v7936
  %v8280 = vunpack.c.h.b16 %v7936
  %v8281 = vunpack.c.l.b16 %v7937
  %v8282 = vunpack.c.h.b16 %v7937
  %v8283 = vunpack.c.l.b16 %v7938
  %v8284 = vunpack.c.h.b16 %v7938
  %v8285 = vunpack.c.l.b16 %v7939
  %v8286 = vunpack.c.h.b16 %v7939
  %v8287 = vunpack.c.l.b16 %v7940
  %v8288 = vunpack.c.h.b16 %v7940
  %v8289 = vunpack.c.l.b16 %v7941
  %v8290 = vunpack.c.h.b16 %v7941
  %v8291 = vunpack.c.l.b16 %v7942
  %v8292 = vunpack.c.h.b16 %v7942
  %v8293 = vunpack.c.l.b16 %v7943
  %v8294 = vunpack.c.h.b16 %v7943
  %v8295 = vunpack.c.l.b16 %v7944
  %v8296 = vunpack.c.h.b16 %v7944
  %v8297 = vunpack.c.l.b16 %v7945
  %v8298 = vunpack.c.h.b16 %v7945
  %v8299 = vunpack.c.l.b16 %v7946
  %v8300 = vunpack.c.h.b16 %v7946
  %v8301 = vunpack.c.l.b16 %v7947
  %v8302 = vunpack.c.h.b16 %v7947
  %v8303 = vunpack.c.l.b16 %v7948
  %v8304 = vunpack.c.h.b16 %v7948
  %v8305 = vunpack.c.l.b16 %v7949
  %v8306 = vunpack.c.h.b16 %v7949
  %v8307 = vunpack.c.l.b16 %v7950
  %v8308 = vunpack.c.h.b16 %v7950
  %v8309 = vunpack.c.l.b16 %v7951
  %v8310 = vunpack.c.h.b16 %v7951
  %v8311 = vunpack.c.l.b16 %v7952
  %v8312 = vunpack.c.h.b16 %v7952
  %v8313 = vunpack.c.l.b16 %v7953
  %v8314 = vunpack.c.h.b16 %v7953
  %v8315 = vunpack.c.l.b16 %v7954
  %v8316 = vunpack.c.h.b16 %v7954
  %v8317 = vunpack.c.l.b16 %v7955
  %v8318 = vunpack.c.h.b16 %v7955
  %v8319 = vunpack.c.l.b16 %v7956
  %v8320 = vunpack.c.h.b16 %v7956
  %v8321 = vunpack.c.l.b16 %v7957
  %v8322 = vunpack.c.h.b16 %v7957
  %v8323 = vunpack.c.l.b16 %v7958
  %v8324 = vunpack.c.h.b16 %v7958
  %v8325 = vunpack.c.l.b16 %v7959
  %v8326 = vunpack.c.h.b16 %v7959
  %v8327 = vunpack.c.l.b16 %v7960
  %v8328 = vunpack.c.h.b16 %v7960
  %v8329 = vunpack.c.l.b16 %v7961
  %v8330 = vunpack.c.h.b16 %v7961
  %v8331 = vunpack.c.l.b16 %v7962
  %v8332 = vunpack.c.h.b16 %v7962
  %v8333 = vunpack.c.l.b16 %v7963
  %v8334 = vunpack.c.h.b16 %v7963
  %v8335 = vunpack.c.l.b16 %v7964
  %v8336 = vunpack.c.h.b16 %v7964
  %v8337 = vunpack.c.l.b16 %v7965
  %v8338 = vunpack.c.h.b16 %v7965
  %v8339 = vunpack.c.l.b16 %v7966
  %v8340 = vunpack.c.h.b16 %v7966
  %v8341 = vunpack.c.l.b16 %v7967
  %v8342 = vunpack.c.h.b16 %v7967
  %v8343 = vunpack.c.l.b16 %v7968
  %v8344 = vunpack.c.h.b16 %v7968
  %v8345 = vunpack.c.l.b16 %v7969
  %v8346 = vunpack.c.h.b16 %v7969
  %v8347 = vunpack.c.l.b16 %v7970
  %v8348 = vunpack.c.h.b16 %v7970
  %v8349 = vunpack.c.l.b16 %v7971
  %v8350 = vunpack.c.h.b16 %v7971
  %v8351 = vunpack.c.l.b16 %v7972
  %v8352 = vunpack.c.h.b16 %v7972
  %v8353 = vunpack.c.l.b16 %v7973
  %v8354 = vunpack.c.h.b16 %v7973
  %v8355 = vunpack.c.l.b16 %v7974
  %v8356 = vunpack.c.h.b16 %v7974
  %v8357 = vunpack.c.l.b16 %v7975
  %v8358 = vunpack.c.h.b16 %v7975
  %v8359 = vunpack.c.l.b16 %v7976
  %v8360 = vunpack.c.h.b16 %v7976
  %v8361 = vpack.c.b16 %v8109, %v8105
  %v8362 = vpack.c.b16 %v8110, %v8106
  %v8363 = vpack.c.b16 %v8111, %v8107
  %v8364 = vpack.c.b16 %v8112, %v8108
  %v8365 = vpack.c.b16 %v8117, %v8113
  %v8366 = vpack.c.b16 %v8118, %v8114
  %v8367 = vpack.c.b16 %v8119, %v8115
  %v8368 = vpack.c.b16 %v8120, %v8116
  %v8369 = vpack.c.b16 %v8125, %v8121
  %v8370 = vpack.c.b16 %v8126, %v8122
  %v8371 = vpack.c.b16 %v8127, %v8123
  %v8372 = vpack.c.b16 %v8128, %v8124
  %v8373 = vpack.c.b16 %v8133, %v8129
  %v8374 = vpack.c.b16 %v8134, %v8130
  %v8375 = vpack.c.b16 %v8135, %v8131
  %v8376 = vpack.c.b16 %v8136, %v8132
  %v8377 = vpack.c.b16 %v8141, %v8137
  %v8378 = vpack.c.b16 %v8142, %v8138
  %v8379 = vpack.c.b16 %v8143, %v8139
  %v8380 = vpack.c.b16 %v8144, %v8140
  %v8381 = vpack.c.b16 %v8149, %v8145
  %v8382 = vpack.c.b16 %v8150, %v8146
  %v8383 = vpack.c.b16 %v8151, %v8147
  %v8384 = vpack.c.b16 %v8152, %v8148
  %v8385 = vpack.c.b16 %v8157, %v8153
  %v8386 = vpack.c.b16 %v8158, %v8154
  %v8387 = vpack.c.b16 %v8159, %v8155
  %v8388 = vpack.c.b16 %v8160, %v8156
  %v8389 = vpack.c.b16 %v8165, %v8161
  %v8390 = vpack.c.b16 %v8166, %v8162
  %v8391 = vpack.c.b16 %v8167, %v8163
  %v8392 = vpack.c.b16 %v8168, %v8164
  %v8393 = vpack.c.b16 %v8173, %v8169
  %v8394 = vpack.c.b16 %v8174, %v8170
  %v8395 = vpack.c.b16 %v8175, %v8171
  %v8396 = vpack.c.b16 %v8176, %v8172
  %v8397 = vpack.c.b16 %v8181, %v8177
  %v8398 = vpack.c.b16 %v8182, %v8178
  %v8399 = vpack.c.b16 %v8183, %v8179
  %v8400 = vpack.c.b16 %v8184, %v8180
  %v8401 = vpack.c.b16 %v8189, %v8185
  %v8402 = vpack.c.b16 %v8190, %v8186
  %v8403 = vpack.c.b16 %v8191, %v8187
  %v8404 = vpack.c.b16 %v8192, %v8188
  %v8405 = vpack.c.b16 %v8197, %v8193
  %v8406 = vpack.c.b16 %v8198, %v8194
  %v8407 = vpack.c.b16 %v8199, %v8195
  %v8408 = vpack.c.b16 %v8200, %v8196
  %v8409 = vpack.c.b16 %v8205, %v8201
  %v8410 = vpack.c.b16 %v8206, %v8202
  %v8411 = vpack.c.b16 %v8207, %v8203
  %v8412 = vpack.c.b16 %v8208, %v8204
  %v8413 = vpack.c.b16 %v8213, %v8209
  %v8414 = vpack.c.b16 %v8214, %v8210
  %v8415 = vpack.c.b16 %v8215, %v8211
  %v8416 = vpack.c.b16 %v8216, %v8212
  %v8417 = vpack.c.b16 %v8221, %v8217
  %v8418 = vpack.c.b16 %v8222, %v8218
  %v8419 = vpack.c.b16 %v8223, %v8219
  %v8420 = vpack.c.b16 %v8224, %v8220
  %v8421 = vpack.c.b16 %v8229, %v8225
  %v8422 = vpack.c.b16 %v8230, %v8226
  %v8423 = vpack.c.b16 %v8231, %v8227
  %v8424 = vpack.c.b16 %v8232, %v8228
  %v8425 = vpack.c.b16 %v8237, %v8233
  %v8426 = vpack.c.b16 %v8238, %v8234
  %v8427 = vpack.c.b16 %v8239, %v8235
  %v8428 = vpack.c.b16 %v8240, %v8236
  %v8429 = vpack.c.b16 %v8245, %v8241
  %v8430 = vpack.c.b16 %v8246, %v8242
  %v8431 = vpack.c.b16 %v8247, %v8243
  %v8432 = vpack.c.b16 %v8248, %v8244
  %v8433 = vpack.c.b16 %v8253, %v8249
  %v8434 = vpack.c.b16 %v8254, %v8250
  %v8435 = vpack.c.b16 %v8255, %v8251
  %v8436 = vpack.c.b16 %v8256, %v8252
  %v8437 = vpack.c.b16 %v8261, %v8257
  %v8438 = vpack.c.b16 %v8262, %v8258
  %v8439 = vpack.c.b16 %v8263, %v8259
  %v8440 = vpack.c.b16 %v8264, %v8260
  %v8441 = vpack.c.b16 %v8269, %v8265
  %v8442 = vpack.c.b16 %v8270, %v8266
  %v8443 = vpack.c.b16 %v8271, %v8267
  %v8444 = vpack.c.b16 %v8272, %v8268
  %v8445 = vpack.c.b16 %v8277, %v8273
  %v8446 = vpack.c.b16 %v8278, %v8274
  %v8447 = vpack.c.b16 %v8279, %v8275
  %v8448 = vpack.c.b16 %v8280, %v8276
  %v8449 = vpack.c.b16 %v8285, %v8281
  %v8450 = vpack.c.b16 %v8286, %v8282
  %v8451 = vpack.c.b16 %v8287, %v8283
  %v8452 = vpack.c.b16 %v8288, %v8284
  %v8453 = vpack.c.b16 %v8293, %v8289
  %v8454 = vpack.c.b16 %v8294, %v8290
  %v8455 = vpack.c.b16 %v8295, %v8291
  %v8456 = vpack.c.b16 %v8296, %v8292
  %v8457 = vpack.c.b16 %v8301, %v8297
  %v8458 = vpack.c.b16 %v8302, %v8298
  %v8459 = vpack.c.b16 %v8303, %v8299
  %v8460 = vpack.c.b16 %v8304, %v8300
  %v8461 = vpack.c.b16 %v8309, %v8305
  %v8462 = vpack.c.b16 %v8310, %v8306
  %v8463 = vpack.c.b16 %v8311, %v8307
  %v8464 = vpack.c.b16 %v8312, %v8308
  %v8465 = vpack.c.b16 %v8317, %v8313
  %v8466 = vpack.c.b16 %v8318, %v8314
  %v8467 = vpack.c.b16 %v8319, %v8315
  %v8468 = vpack.c.b16 %v8320, %v8316
  %v8469 = vpack.c.b16 %v8325, %v8321
  %v8470 = vpack.c.b16 %v8326, %v8322
  %v8471 = vpack.c.b16 %v8327, %v8323
  %v8472 = vpack.c.b16 %v8328, %v8324
  %v8473 = vpack.c.b16 %v8333, %v8329
  %v8474 = vpack.c.b16 %v8334, %v8330
  %v8475 = vpack.c.b16 %v8335, %v8331
  %v8476 = vpack.c.b16 %v8336, %v8332
  %v8477 = vpack.c.b16 %v8341, %v8337
  %v8478 = vpack.c.b16 %v8342, %v8338
  %v8479 = vpack.c.b16 %v8343, %v8339
  %v8480 = vpack.c.b16 %v8344, %v8340
  %v8481 = vpack.c.b16 %v8349, %v8345
  %v8482 = vpack.c.b16 %v8350, %v8346
  %v8483 = vpack.c.b16 %v8351, %v8347
  %v8484 = vpack.c.b16 %v8352, %v8348
  %v8485 = vpack.c.b16 %v8357, %v8353
  %v8486 = vpack.c.b16 %v8358, %v8354
  %v8487 = vpack.c.b16 %v8359, %v8355
  %v8488 = vpack.c.b16 %v8360, %v8356
  %8617 = vmatprep.subr.bf16.mxu0 %v8362
  %8618 = vmatpush1.bf16.msra.mxu0 %v8361
  %8619 = vmatprep.subr.bf16.mxu0 %v8366
  %8620 = vmatpush1.bf16.msra.mxu0 %v8365
  %8621 = vmatprep.subr.bf16.mxu0 %v8370
  %8622 = vmatpush1.bf16.msra.mxu0 %v8369
  %8623 = vmatprep.subr.bf16.mxu0 %v8374
  %8624 = vmatpush1.bf16.msra.mxu0 %v8373
  %8625 = vmatprep.subr.bf16.mxu0 %v8378
  %8626 = vmatpush1.bf16.msra.mxu0 %v8377
  %8627 = vmatprep.subr.bf16.mxu0 %v8382
  %8628 = vmatpush1.bf16.msra.mxu0 %v8381
  %8629 = vmatprep.subr.bf16.mxu0 %v8386
  %8630 = vmatpush1.bf16.msra.mxu0 %v8385
  %8631 = vmatprep.subr.bf16.mxu0 %v8390
  %8632 = vmatpush1.bf16.msra.mxu0 %v8389
  %8633 = vmatprep.subr.bf16.mxu0 %v8394
  %8634 = vmatpush1.bf16.msra.mxu0 %v8393
  %8635 = vmatprep.subr.bf16.mxu0 %v8398
  %8636 = vmatpush1.bf16.msra.mxu0 %v8397
  %8637 = vmatprep.subr.bf16.mxu0 %v8402
  %8638 = vmatpush1.bf16.msra.mxu0 %v8401
  %8639 = vmatprep.subr.bf16.mxu0 %v8406
  %8640 = vmatpush1.bf16.msra.mxu0 %v8405
  %8641 = vmatprep.subr.bf16.mxu0 %v8410
  %8642 = vmatpush1.bf16.msra.mxu0 %v8409
  %8643 = vmatprep.subr.bf16.mxu0 %v8414
  %8644 = vmatpush1.bf16.msra.mxu0 %v8413
  %8645 = vmatprep.subr.bf16.mxu0 %v8418
  %8646 = vmatpush1.bf16.msra.mxu0 %v8417
  %8647 = vmatprep.subr.bf16.mxu0 %v8422
  %8648 = vmatpush1.bf16.msra.mxu0 %v8421
  %8649 = vmatprep.mubr.bf16.mxu0 %v5928
  %8650 = vmatmul.mubr.bf16.gmra.mrb[0].mxu0 %v5927
  %v8651 = vpop.f32.mrb[0].mxu0
  %v8652 = vadd.f32 %v2142, %v8651
  %v8653 = vpop.f32.mrb[0].mxu0
  %v8654 = vadd.f32 %v2146, %v8653
  %v8655 = vpop.f32.mrb[0].mxu0
  %v8656 = vpop.f32.mrb[0].mxu0
  %8657 = vdwg.mxu0
  %8658 = vmatprep.subr.bf16.mxu0 %v8426
  %8659 = vmatpush1.bf16.msra.mxu0 %v8425
  %8660 = vmatprep.subr.bf16.mxu0 %v8430
  %8661 = vmatpush1.bf16.msra.mxu0 %v8429
  %8662 = vmatprep.subr.bf16.mxu0 %v8434
  %8663 = vmatpush1.bf16.msra.mxu0 %v8433
  %8664 = vmatprep.subr.bf16.mxu0 %v8438
  %8665 = vmatpush1.bf16.msra.mxu0 %v8437
  %8666 = vmatprep.subr.bf16.mxu0 %v8442
  %8667 = vmatpush1.bf16.msra.mxu0 %v8441
  %8668 = vmatprep.subr.bf16.mxu0 %v8446
  %8669 = vmatpush1.bf16.msra.mxu0 %v8445
  %8670 = vmatprep.subr.bf16.mxu0 %v8450
  %8671 = vmatpush1.bf16.msra.mxu0 %v8449
  %8672 = vmatprep.subr.bf16.mxu0 %v8454
  %8673 = vmatpush1.bf16.msra.mxu0 %v8453
  %8674 = vmatprep.subr.bf16.mxu0 %v8458
  %8675 = vmatpush1.bf16.msra.mxu0 %v8457
  %8676 = vmatprep.subr.bf16.mxu0 %v8462
  %8677 = vmatpush1.bf16.msra.mxu0 %v8461
  %8678 = vmatprep.subr.bf16.mxu0 %v8466
  %8679 = vmatpush1.bf16.msra.mxu0 %v8465
  %8680 = vmatprep.subr.bf16.mxu0 %v8470
  %8681 = vmatpush1.bf16.msra.mxu0 %v8469
  %8682 = vmatprep.subr.bf16.mxu0 %v8474
  %8683 = vmatpush1.bf16.msra.mxu0 %v8473
  %8684 = vmatprep.subr.bf16.mxu0 %v8478
  %8685 = vmatpush1.bf16.msra.mxu0 %v8477
  %8686 = vmatprep.subr.bf16.mxu0 %v8482
  %8687 = vmatpush1.bf16.msra.mxu0 %v8481
  %8688 = vmatprep.subr.bf16.mxu0 %v8486
  %8689 = vmatpush1.bf16.msra.mxu0 %v8485
  %8690 = vmatprep.mubr.bf16.mxu0 %v5930
  %8691 = vmatmul.mubr.bf16.gmra.mrb[0].mxu0 %v5929
  %v8692 = vpop.f32.mrb[0].mxu0
  %v8693 = vadd.f32 %v8652, %v8692
  %v8694 = vpop.f32.mrb[0].mxu0
  %v8695 = vadd.f32 %v8654, %v8694
  %v8696 = vpop.f32.mrb[0].mxu0
  %v8697 = vpop.f32.mrb[0].mxu0
  %8698 = vdwg.mxu0
  %8699 = vmatprep.subr.bf16.mxu0 %v8364
  %8700 = vmatpush1.bf16.msra.mxu0 %v8363
  %8701 = vmatprep.subr.bf16.mxu0 %v8368
  %8702 = vmatpush1.bf16.msra.mxu0 %v8367
  %8703 = vmatprep.subr.bf16.mxu0 %v8372
  %8704 = vmatpush1.bf16.msra.mxu0 %v8371
  %8705 = vmatprep.subr.bf16.mxu0 %v8376
  %8706 = vmatpush1.bf16.msra.mxu0 %v8375
  %8707 = vmatprep.subr.bf16.mxu0 %v8380
  %8708 = vmatpush1.bf16.msra.mxu0 %v8379
  %8709 = vmatprep.subr.bf16.mxu0 %v8384
  %8710 = vmatpush1.bf16.msra.mxu0 %v8383
  %8711 = vmatprep.subr.bf16.mxu0 %v8388
  %8712 = vmatpush1.bf16.msra.mxu0 %v8387
  %8713 = vmatprep.subr.bf16.mxu0 %v8392
  %8714 = vmatpush1.bf16.msra.mxu0 %v8391
  %8715 = vmatprep.subr.bf16.mxu0 %v8396
  %8716 = vmatpush1.bf16.msra.mxu0 %v8395
  %8717 = vmatprep.subr.bf16.mxu0 %v8400
  %8718 = vmatpush1.bf16.msra.mxu0 %v8399
  %8719 = vmatprep.subr.bf16.mxu0 %v8404
  %8720 = vmatpush1.bf16.msra.mxu0 %v8403
  %8721 = vmatprep.subr.bf16.mxu0 %v8408
  %8722 = vmatpush1.bf16.msra.mxu0 %v8407
  %8723 = vmatprep.subr.bf16.mxu0 %v8412
  %8724 = vmatpush1.bf16.msra.mxu0 %v8411
  %8725 = vmatprep.subr.bf16.mxu0 %v8416
  %8726 = vmatpush1.bf16.msra.mxu0 %v8415
  %8727 = vmatprep.subr.bf16.mxu0 %v8420
  %8728 = vmatpush1.bf16.msra.mxu0 %v8419
  %8729 = vmatprep.subr.bf16.mxu0 %v8424
  %8730 = vmatpush1.bf16.msra.mxu0 %v8423
  %8731 = vmatprep.mubr.bf16.mxu0 %v5928
  %8732 = vmatmul.mubr.bf16.gmra.mrb[0].mxu0 %v5927
  %v8733 = vpop.f32.mrb[0].mxu0
  %v8734 = vadd.f32 %v2150, %v8733
  %v8735 = vpop.f32.mrb[0].mxu0
  %v8736 = vadd.f32 %v2154, %v8735
  %v8737 = vpop.f32.mrb[0].mxu0
  %v8738 = vpop.f32.mrb[0].mxu0
  %8739 = vdwg.mxu0
  %8740 = vmatprep.subr.bf16.mxu0 %v8428
  %8741 = vmatpush1.bf16.msra.mxu0 %v8427
  %8742 = vmatprep.subr.bf16.mxu0 %v8432
  %8743 = vmatpush1.bf16.msra.mxu0 %v8431
  %8744 = vmatprep.subr.bf16.mxu0 %v8436
  %8745 = vmatpush1.bf16.msra.mxu0 %v8435
  %8746 = vmatprep.subr.bf16.mxu0 %v8440
  %8747 = vmatpush1.bf16.msra.mxu0 %v8439
  %8748 = vmatprep.subr.bf16.mxu0 %v8444
  %8749 = vmatpush1.bf16.msra.mxu0 %v8443
  %8750 = vmatprep.subr.bf16.mxu0 %v8448
  %8751 = vmatpush1.bf16.msra.mxu0 %v8447
  %8752 = vmatprep.subr.bf16.mxu0 %v8452
  %8753 = vmatpush1.bf16.msra.mxu0 %v8451
  %8754 = vmatprep.subr.bf16.mxu0 %v8456
  %8755 = vmatpush1.bf16.msra.mxu0 %v8455
  %8756 = vmatprep.subr.bf16.mxu0 %v8460
  %8757 = vmatpush1.bf16.msra.mxu0 %v8459
  %8758 = vmatprep.subr.bf16.mxu0 %v8464
  %8759 = vmatpush1.bf16.msra.mxu0 %v8463
  %8760 = vmatprep.subr.bf16.mxu0 %v8468
  %8761 = vmatpush1.bf16.msra.mxu0 %v8467
  %8762 = vmatprep.subr.bf16.mxu0 %v8472
  %8763 = vmatpush1.bf16.msra.mxu0 %v8471
  %8764 = vmatprep.subr.bf16.mxu0 %v8476
  %8765 = vmatpush1.bf16.msra.mxu0 %v8475
  %8766 = vmatprep.subr.bf16.mxu0 %v8480
  %8767 = vmatpush1.bf16.msra.mxu0 %v8479
  %8768 = vmatprep.subr.bf16.mxu0 %v8484
  %8769 = vmatpush1.bf16.msra.mxu0 %v8483
  %8770 = vmatprep.subr.bf16.mxu0 %v8488
  %8771 = vmatpush1.bf16.msra.mxu0 %v8487
  %8772 = vmatprep.mubr.bf16.mxu0 %v5930
  %8773 = vmatmul.mubr.bf16.gmra.mrb[0].mxu0 %v5929
  %v8774 = vpop.f32.mrb[0].mxu0
  %v8775 = vadd.f32 %v8734, %v8774
  %v8776 = vpop.f32.mrb[0].mxu0
  %v8777 = vadd.f32 %v8736, %v8776
  %v8778 = vpop.f32.mrb[0].mxu0
  %v8779 = vpop.f32.mrb[0].mxu0
  %8780 = vdwg.mxu0
  %v8785 = vcombine.low %v8693, %v8695
  %v8786 = vcombine.low %v8775, %v8777
  %v8788 = vunpack.c.l.s4 1983009808
  %v8789 = vunpack.c.0.s8 %v8788
  %v8790 = vlaneseq
  %v8791 = vshrl.u32 %v8790, 7
  %v8792 = vsub.s32 %v8789, %v8791
  %v8793 = vrot.slane %v8785, %v8792
  %v8795 = vunpack.c.l.s4 1983009808
  %v8796 = vunpack.c.0.s8 %v8795
  %v8797 = vlaneseq
  %v8798 = vshrl.u32 %v8797, 7
  %v8799 = vsub.s32 %v8796, %v8798
  %v8800 = vrot.slane %v8786, %v8799
  %v8801 = vcombine.low %v8793, %v8800
  %v8803 = vmul.f32 %v7821, %v8801
  %v8804 = vadd.f32 %v5904, %v8803
  %v8805 = vtanh.pop %v8804
  %v8806 = vsub.f32 1.0, %v7848
  %v8807 = vmul.f32 %v8806, %v8805
  %v8808 = vmul.f32 %v7848, %v5900
  %v8809 = vadd.f32 %v8807, %v8808
  %8810 = vst [vmem:[%s3 + $0x10] sm:$0xff] %v8809
  %v8811 = vld [vmem:[%s0 + $0x48] sm:$0xff]
  %v8812 = vld [vmem:[%s0 + $0x50] sm:$0xff]
  %v8813 = vld [vmem:[%s0 + $0x58] sm:$0xff]
  %v8815 = vcombine.high %v8809, %v8809
  %v8817 = vunpack.c.l.s4 1983009808
  %v8818 = vunpack.c.0.s8 %v8817
  %v8819 = vlaneseq
  %v8820 = vshrl.u32 %v8819, 7
  %v8821 = vsub.s32 %v8818, %v8820
  %v8822 = vrot.slane %v8809, %v8821
  %v8824 = vunpack.c.l.s4 1983009808
  %v8825 = vunpack.c.0.s8 %v8824
  %v8826 = vlaneseq
  %v8827 = vshrl.u32 %v8826, 7
  %v8828 = vsub.s32 %v8825, %v8827
  %v8829 = vrot.slane %v8815, %v8828
  %v8830 = vcombine.high %v8822, %v8822
  %v8831 = vcombine.high %v8829, %v8829
  %v8836 = vpack.c.bf16 %v8822, %v8822
  %v8837 = vpack.c.bf16 %v8830, %v8830
  %v8838 = vpack.c.bf16 %v8829, %v8829
  %v8839 = vpack.c.bf16 %v8831, %v8831
  %v8840 = vld [vmem:[%s1] sm:$0xff]
  %v8841 = vld [vmem:[%s1 + $0x8] sm:$0xff]
  %v8842 = vld [vmem:[%s1 + $0x10] sm:$0xff]
  %v8843 = vld [vmem:[%s1 + $0x18] sm:$0xff]
  %v8844 = vld [vmem:[%s1 + $0x30] sm:$0xff]
  %v8845 = vld [vmem:[%s1 + $0x38] sm:$0xff]
  %v8846 = vld [vmem:[%s1 + $0x40] sm:$0xff]
  %v8847 = vld [vmem:[%s1 + $0x48] sm:$0xff]
  %v8848 = vld [vmem:[%s1 + $0x60] sm:$0xff]
  %v8849 = vld [vmem:[%s1 + $0x68] sm:$0xff]
  %v8850 = vld [vmem:[%s1 + $0x70] sm:$0xff]
  %v8851 = vld [vmem:[%s1 + $0x78] sm:$0xff]
  %v8852 = vld [vmem:[%s1 + $0x90] sm:$0xff]
  %v8853 = vld [vmem:[%s1 + $0x98] sm:$0xff]
  %v8854 = vld [vmem:[%s1 + $0xa0] sm:$0xff]
  %v8855 = vld [vmem:[%s1 + $0xa8] sm:$0xff]
  %v8856 = vld [vmem:[%s1 + $0xc0] sm:$0xff]
  %v8857 = vld [vmem:[%s1 + $0xc8] sm:$0xff]
  %v8858 = vld [vmem:[%s1 + $0xd0] sm:$0xff]
  %v8859 = vld [vmem:[%s1 + $0xd8] sm:$0xff]
  %v8860 = vld [vmem:[%s1 + $0xf0] sm:$0xff]
  %v8861 = vld [vmem:[%s1 + $0xf8] sm:$0xff]
  %v8862 = vld [vmem:[%s1 + $0x100] sm:$0xff]
  %v8863 = vld [vmem:[%s1 + $0x108] sm:$0xff]
  %v8864 = vld [vmem:[%s1 + $0x120] sm:$0xff]
  %v8865 = vld [vmem:[%s1 + $0x128] sm:$0xff]
  %v8866 = vld [vmem:[%s1 + $0x130] sm:$0xff]
  %v8867 = vld [vmem:[%s1 + $0x138] sm:$0xff]
  %v8868 = vld [vmem:[%s1 + $0x150] sm:$0xff]
  %v8869 = vld [vmem:[%s1 + $0x158] sm:$0xff]
  %v8870 = vld [vmem:[%s1 + $0x160] sm:$0xff]
  %v8871 = vld [vmem:[%s1 + $0x168] sm:$0xff]
  %v8872 = vld [vmem:[%s1 + $0x180] sm:$0xff]
  %v8873 = vld [vmem:[%s1 + $0x188] sm:$0xff]
  %v8874 = vld [vmem:[%s1 + $0x190] sm:$0xff]
  %v8875 = vld [vmem:[%s1 + $0x198] sm:$0xff]
  %v8876 = vld [vmem:[%s1 + $0x1b0] sm:$0xff]
  %v8877 = vld [vmem:[%s1 + $0x1b8] sm:$0xff]
  %v8878 = vld [vmem:[%s1 + $0x1c0] sm:$0xff]
  %v8879 = vld [vmem:[%s1 + $0x1c8] sm:$0xff]
  %v8880 = vld [vmem:[%s1 + $0x1e0] sm:$0xff]
  %v8881 = vld [vmem:[%s1 + $0x1e8] sm:$0xff]
  %v8882 = vld [vmem:[%s1 + $0x1f0] sm:$0xff]
  %v8883 = vld [vmem:[%s1 + $0x1f8] sm:$0xff]
  %v8884 = vld [vmem:[%s1 + $0x210] sm:$0xff]
  %v8885 = vld [vmem:[%s1 + $0x218] sm:$0xff]
  %v8886 = vld [vmem:[%s1 + $0x220] sm:$0xff]
  %v8887 = vld [vmem:[%s1 + $0x228] sm:$0xff]
  %v8888 = vld [vmem:[%s1 + $0x240] sm:$0xff]
  %v8889 = vld [vmem:[%s1 + $0x248] sm:$0xff]
  %v8890 = vld [vmem:[%s1 + $0x250] sm:$0xff]
  %v8891 = vld [vmem:[%s1 + $0x258] sm:$0xff]
  %v8892 = vld [vmem:[%s1 + $0x270] sm:$0xff]
  %v8893 = vld [vmem:[%s1 + $0x278] sm:$0xff]
  %v8894 = vld [vmem:[%s1 + $0x280] sm:$0xff]
  %v8895 = vld [vmem:[%s1 + $0x288] sm:$0xff]
  %v8896 = vld [vmem:[%s1 + $0x2a0] sm:$0xff]
  %v8897 = vld [vmem:[%s1 + $0x2a8] sm:$0xff]
  %v8898 = vld [vmem:[%s1 + $0x2b0] sm:$0xff]
  %v8899 = vld [vmem:[%s1 + $0x2b8] sm:$0xff]
  %v8900 = vld [vmem:[%s1 + $0x2d0] sm:$0xff]
  %v8901 = vld [vmem:[%s1 + $0x2d8] sm:$0xff]
  %v8902 = vld [vmem:[%s1 + $0x2e0] sm:$0xff]
  %v8903 = vld [vmem:[%s1 + $0x2e8] sm:$0xff]
  %v8904 = vld [vmem:[%s1 + $0x300] sm:$0xff]
  %v8905 = vld [vmem:[%s1 + $0x308] sm:$0xff]
  %v8906 = vld [vmem:[%s1 + $0x310] sm:$0xff]
  %v8907 = vld [vmem:[%s1 + $0x318] sm:$0xff]
  %v8908 = vld [vmem:[%s1 + $0x330] sm:$0xff]
  %v8909 = vld [vmem:[%s1 + $0x338] sm:$0xff]
  %v8910 = vld [vmem:[%s1 + $0x340] sm:$0xff]
  %v8911 = vld [vmem:[%s1 + $0x348] sm:$0xff]
  %v8912 = vld [vmem:[%s1 + $0x360] sm:$0xff]
  %v8913 = vld [vmem:[%s1 + $0x368] sm:$0xff]
  %v8914 = vld [vmem:[%s1 + $0x370] sm:$0xff]
  %v8915 = vld [vmem:[%s1 + $0x378] sm:$0xff]
  %v8916 = vld [vmem:[%s1 + $0x390] sm:$0xff]
  %v8917 = vld [vmem:[%s1 + $0x398] sm:$0xff]
  %v8918 = vld [vmem:[%s1 + $0x3a0] sm:$0xff]
  %v8919 = vld [vmem:[%s1 + $0x3a8] sm:$0xff]
  %v8920 = vld [vmem:[%s1 + $0x3c0] sm:$0xff]
  %v8921 = vld [vmem:[%s1 + $0x3c8] sm:$0xff]
  %v8922 = vld [vmem:[%s1 + $0x3d0] sm:$0xff]
  %v8923 = vld [vmem:[%s1 + $0x3d8] sm:$0xff]
  %v8924 = vld [vmem:[%s1 + $0x3f0] sm:$0xff]
  %v8925 = vld [vmem:[%s1 + $0x3f8] sm:$0xff]
  %v8926 = vld [vmem:[%s1 + $0x400] sm:$0xff]
  %v8927 = vld [vmem:[%s1 + $0x408] sm:$0xff]
  %v8928 = vld [vmem:[%s1 + $0x420] sm:$0xff]
  %v8929 = vld [vmem:[%s1 + $0x428] sm:$0xff]
  %v8930 = vld [vmem:[%s1 + $0x430] sm:$0xff]
  %v8931 = vld [vmem:[%s1 + $0x438] sm:$0xff]
  %v8932 = vld [vmem:[%s1 + $0x450] sm:$0xff]
  %v8933 = vld [vmem:[%s1 + $0x458] sm:$0xff]
  %v8934 = vld [vmem:[%s1 + $0x460] sm:$0xff]
  %v8935 = vld [vmem:[%s1 + $0x468] sm:$0xff]
  %v8936 = vld [vmem:[%s1 + $0x480] sm:$0xff]
  %v8937 = vld [vmem:[%s1 + $0x488] sm:$0xff]
  %v8938 = vld [vmem:[%s1 + $0x490] sm:$0xff]
  %v8939 = vld [vmem:[%s1 + $0x498] sm:$0xff]
  %v8940 = vld [vmem:[%s1 + $0x4b0] sm:$0xff]
  %v8941 = vld [vmem:[%s1 + $0x4b8] sm:$0xff]
  %v8942 = vld [vmem:[%s1 + $0x4c0] sm:$0xff]
  %v8943 = vld [vmem:[%s1 + $0x4c8] sm:$0xff]
  %v8944 = vld [vmem:[%s1 + $0x4e0] sm:$0xff]
  %v8945 = vld [vmem:[%s1 + $0x4e8] sm:$0xff]
  %v8946 = vld [vmem:[%s1 + $0x4f0] sm:$0xff]
  %v8947 = vld [vmem:[%s1 + $0x4f8] sm:$0xff]
  %v8948 = vld [vmem:[%s1 + $0x510] sm:$0xff]
  %v8949 = vld [vmem:[%s1 + $0x518] sm:$0xff]
  %v8950 = vld [vmem:[%s1 + $0x520] sm:$0xff]
  %v8951 = vld [vmem:[%s1 + $0x528] sm:$0xff]
  %v8952 = vld [vmem:[%s1 + $0x540] sm:$0xff]
  %v8953 = vld [vmem:[%s1 + $0x548] sm:$0xff]
  %v8954 = vld [vmem:[%s1 + $0x550] sm:$0xff]
  %v8955 = vld [vmem:[%s1 + $0x558] sm:$0xff]
  %v8956 = vld [vmem:[%s1 + $0x570] sm:$0xff]
  %v8957 = vld [vmem:[%s1 + $0x578] sm:$0xff]
  %v8958 = vld [vmem:[%s1 + $0x580] sm:$0xff]
  %v8959 = vld [vmem:[%s1 + $0x588] sm:$0xff]
  %v8960 = vld [vmem:[%s1 + $0x5a0] sm:$0xff]
  %v8961 = vld [vmem:[%s1 + $0x5a8] sm:$0xff]
  %v8962 = vld [vmem:[%s1 + $0x5b0] sm:$0xff]
  %v8963 = vld [vmem:[%s1 + $0x5b8] sm:$0xff]
  %v8964 = vld [vmem:[%s1 + $0x5d0] sm:$0xff]
  %v8965 = vld [vmem:[%s1 + $0x5d8] sm:$0xff]
  %v8966 = vld [vmem:[%s1 + $0x5e0] sm:$0xff]
  %v8967 = vld [vmem:[%s1 + $0x5e8] sm:$0xff]
  %v8968 = vld [vmem:[%s1 + $0x600] sm:$0xff]
  %v8969 = vld [vmem:[%s1 + $0x608] sm:$0xff]
  %v8970 = vld [vmem:[%s1 + $0x610] sm:$0xff]
  %v8971 = vld [vmem:[%s1 + $0x618] sm:$0xff]
  %v8972 = vld [vmem:[%s1 + $0x630] sm:$0xff]
  %v8973 = vld [vmem:[%s1 + $0x638] sm:$0xff]
  %v8974 = vld [vmem:[%s1 + $0x640] sm:$0xff]
  %v8975 = vld [vmem:[%s1 + $0x648] sm:$0xff]
  %v8976 = vld [vmem:[%s1 + $0x660] sm:$0xff]
  %v8977 = vld [vmem:[%s1 + $0x668] sm:$0xff]
  %v8978 = vld [vmem:[%s1 + $0x670] sm:$0xff]
  %v8979 = vld [vmem:[%s1 + $0x678] sm:$0xff]
  %v8980 = vld [vmem:[%s1 + $0x690] sm:$0xff]
  %v8981 = vld [vmem:[%s1 + $0x698] sm:$0xff]
  %v8982 = vld [vmem:[%s1 + $0x6a0] sm:$0xff]
  %v8983 = vld [vmem:[%s1 + $0x6a8] sm:$0xff]
  %v8984 = vld [vmem:[%s1 + $0x6c0] sm:$0xff]
  %v8985 = vld [vmem:[%s1 + $0x6c8] sm:$0xff]
  %v8986 = vld [vmem:[%s1 + $0x6d0] sm:$0xff]
  %v8987 = vld [vmem:[%s1 + $0x6d8] sm:$0xff]
  %v8988 = vld [vmem:[%s1 + $0x6f0] sm:$0xff]
  %v8989 = vld [vmem:[%s1 + $0x6f8] sm:$0xff]
  %v8990 = vld [vmem:[%s1 + $0x700] sm:$0xff]
  %v8991 = vld [vmem:[%s1 + $0x708] sm:$0xff]
  %v8992 = vld [vmem:[%s1 + $0x720] sm:$0xff]
  %v8993 = vld [vmem:[%s1 + $0x728] sm:$0xff]
  %v8994 = vld [vmem:[%s1 + $0x730] sm:$0xff]
  %v8995 = vld [vmem:[%s1 + $0x738] sm:$0xff]
  %v8996 = vld [vmem:[%s1 + $0x750] sm:$0xff]
  %v8997 = vld [vmem:[%s1 + $0x758] sm:$0xff]
  %v8998 = vld [vmem:[%s1 + $0x760] sm:$0xff]
  %v8999 = vld [vmem:[%s1 + $0x768] sm:$0xff]
  %v9000 = vld [vmem:[%s1 + $0x780] sm:$0xff]
  %v9001 = vld [vmem:[%s1 + $0x788] sm:$0xff]
  %v9002 = vld [vmem:[%s1 + $0x790] sm:$0xff]
  %v9003 = vld [vmem:[%s1 + $0x798] sm:$0xff]
  %v9004 = vld [vmem:[%s1 + $0x7b0] sm:$0xff]
  %v9005 = vld [vmem:[%s1 + $0x7b8] sm:$0xff]
  %v9006 = vld [vmem:[%s1 + $0x7c0] sm:$0xff]
  %v9007 = vld [vmem:[%s1 + $0x7c8] sm:$0xff]
  %v9008 = vld [vmem:[%s1 + $0x7e0] sm:$0xff]
  %v9009 = vld [vmem:[%s1 + $0x7e8] sm:$0xff]
  %v9010 = vld [vmem:[%s1 + $0x7f0] sm:$0xff]
  %v9011 = vld [vmem:[%s1 + $0x7f8] sm:$0xff]
  %v9012 = vld [vmem:[%s1 + $0x810] sm:$0xff]
  %v9013 = vld [vmem:[%s1 + $0x818] sm:$0xff]
  %v9014 = vld [vmem:[%s1 + $0x820] sm:$0xff]
  %v9015 = vld [vmem:[%s1 + $0x828] sm:$0xff]
  %v9016 = vld [vmem:[%s1 + $0x840] sm:$0xff]
  %v9017 = vld [vmem:[%s1 + $0x848] sm:$0xff]
  %v9018 = vld [vmem:[%s1 + $0x850] sm:$0xff]
  %v9019 = vld [vmem:[%s1 + $0x858] sm:$0xff]
  %v9020 = vld [vmem:[%s1 + $0x870] sm:$0xff]
  %v9021 = vld [vmem:[%s1 + $0x878] sm:$0xff]
  %v9022 = vld [vmem:[%s1 + $0x880] sm:$0xff]
  %v9023 = vld [vmem:[%s1 + $0x888] sm:$0xff]
  %v9024 = vld [vmem:[%s1 + $0x8a0] sm:$0xff]
  %v9025 = vld [vmem:[%s1 + $0x8a8] sm:$0xff]
  %v9026 = vld [vmem:[%s1 + $0x8b0] sm:$0xff]
  %v9027 = vld [vmem:[%s1 + $0x8b8] sm:$0xff]
  %v9028 = vld [vmem:[%s1 + $0x8d0] sm:$0xff]
  %v9029 = vld [vmem:[%s1 + $0x8d8] sm:$0xff]
  %v9030 = vld [vmem:[%s1 + $0x8e0] sm:$0xff]
  %v9031 = vld [vmem:[%s1 + $0x8e8] sm:$0xff]
  %v9032 = vld [vmem:[%s1 + $0x900] sm:$0xff]
  %v9033 = vld [vmem:[%s1 + $0x908] sm:$0xff]
  %v9034 = vld [vmem:[%s1 + $0x910] sm:$0xff]
  %v9035 = vld [vmem:[%s1 + $0x918] sm:$0xff]
  %v9036 = vld [vmem:[%s1 + $0x930] sm:$0xff]
  %v9037 = vld [vmem:[%s1 + $0x938] sm:$0xff]
  %v9038 = vld [vmem:[%s1 + $0x940] sm:$0xff]
  %v9039 = vld [vmem:[%s1 + $0x948] sm:$0xff]
  %v9040 = vld [vmem:[%s1 + $0x960] sm:$0xff]
  %v9041 = vld [vmem:[%s1 + $0x968] sm:$0xff]
  %v9042 = vld [vmem:[%s1 + $0x970] sm:$0xff]
  %v9043 = vld [vmem:[%s1 + $0x978] sm:$0xff]
  %v9044 = vld [vmem:[%s1 + $0x990] sm:$0xff]
  %v9045 = vld [vmem:[%s1 + $0x998] sm:$0xff]
  %v9046 = vld [vmem:[%s1 + $0x9a0] sm:$0xff]
  %v9047 = vld [vmem:[%s1 + $0x9a8] sm:$0xff]
  %v9048 = vld [vmem:[%s1 + $0x9c0] sm:$0xff]
  %v9049 = vld [vmem:[%s1 + $0x9c8] sm:$0xff]
  %v9050 = vld [vmem:[%s1 + $0x9d0] sm:$0xff]
  %v9051 = vld [vmem:[%s1 + $0x9d8] sm:$0xff]
  %v9052 = vld [vmem:[%s1 + $0x9f0] sm:$0xff]
  %v9053 = vld [vmem:[%s1 + $0x9f8] sm:$0xff]
  %v9054 = vld [vmem:[%s1 + $0xa00] sm:$0xff]
  %v9055 = vld [vmem:[%s1 + $0xa08] sm:$0xff]
  %v9056 = vld [vmem:[%s1 + $0xa20] sm:$0xff]
  %v9057 = vld [vmem:[%s1 + $0xa28] sm:$0xff]
  %v9058 = vld [vmem:[%s1 + $0xa30] sm:$0xff]
  %v9059 = vld [vmem:[%s1 + $0xa38] sm:$0xff]
  %v9060 = vld [vmem:[%s1 + $0xa50] sm:$0xff]
  %v9061 = vld [vmem:[%s1 + $0xa58] sm:$0xff]
  %v9062 = vld [vmem:[%s1 + $0xa60] sm:$0xff]
  %v9063 = vld [vmem:[%s1 + $0xa68] sm:$0xff]
  %v9064 = vld [vmem:[%s1 + $0xa80] sm:$0xff]
  %v9065 = vld [vmem:[%s1 + $0xa88] sm:$0xff]
  %v9066 = vld [vmem:[%s1 + $0xa90] sm:$0xff]
  %v9067 = vld [vmem:[%s1 + $0xa98] sm:$0xff]
  %v9068 = vld [vmem:[%s1 + $0xab0] sm:$0xff]
  %v9069 = vld [vmem:[%s1 + $0xab8] sm:$0xff]
  %v9070 = vld [vmem:[%s1 + $0xac0] sm:$0xff]
  %v9071 = vld [vmem:[%s1 + $0xac8] sm:$0xff]
  %v9072 = vld [vmem:[%s1 + $0xae0] sm:$0xff]
  %v9073 = vld [vmem:[%s1 + $0xae8] sm:$0xff]
  %v9074 = vld [vmem:[%s1 + $0xaf0] sm:$0xff]
  %v9075 = vld [vmem:[%s1 + $0xaf8] sm:$0xff]
  %v9076 = vld [vmem:[%s1 + $0xb10] sm:$0xff]
  %v9077 = vld [vmem:[%s1 + $0xb18] sm:$0xff]
  %v9078 = vld [vmem:[%s1 + $0xb20] sm:$0xff]
  %v9079 = vld [vmem:[%s1 + $0xb28] sm:$0xff]
  %v9080 = vld [vmem:[%s1 + $0xb40] sm:$0xff]
  %v9081 = vld [vmem:[%s1 + $0xb48] sm:$0xff]
  %v9082 = vld [vmem:[%s1 + $0xb50] sm:$0xff]
  %v9083 = vld [vmem:[%s1 + $0xb58] sm:$0xff]
  %v9084 = vld [vmem:[%s1 + $0xb70] sm:$0xff]
  %v9085 = vld [vmem:[%s1 + $0xb78] sm:$0xff]
  %v9086 = vld [vmem:[%s1 + $0xb80] sm:$0xff]
  %v9087 = vld [vmem:[%s1 + $0xb88] sm:$0xff]
  %v9088 = vld [vmem:[%s1 + $0xba0] sm:$0xff]
  %v9089 = vld [vmem:[%s1 + $0xba8] sm:$0xff]
  %v9090 = vld [vmem:[%s1 + $0xbb0] sm:$0xff]
  %v9091 = vld [vmem:[%s1 + $0xbb8] sm:$0xff]
  %v9092 = vld [vmem:[%s1 + $0xbd0] sm:$0xff]
  %v9093 = vld [vmem:[%s1 + $0xbd8] sm:$0xff]
  %v9094 = vld [vmem:[%s1 + $0xbe0] sm:$0xff]
  %v9095 = vld [vmem:[%s1 + $0xbe8] sm:$0xff]
  %v9352 = vunpack.c.l.b16 %v8840
  %v9353 = vunpack.c.h.b16 %v8840
  %v9354 = vunpack.c.l.b16 %v8841
  %v9355 = vunpack.c.h.b16 %v8841
  %v9356 = vunpack.c.l.b16 %v8842
  %v9357 = vunpack.c.h.b16 %v8842
  %v9358 = vunpack.c.l.b16 %v8843
  %v9359 = vunpack.c.h.b16 %v8843
  %v9360 = vunpack.c.l.b16 %v8844
  %v9361 = vunpack.c.h.b16 %v8844
  %v9362 = vunpack.c.l.b16 %v8845
  %v9363 = vunpack.c.h.b16 %v8845
  %v9364 = vunpack.c.l.b16 %v8846
  %v9365 = vunpack.c.h.b16 %v8846
  %v9366 = vunpack.c.l.b16 %v8847
  %v9367 = vunpack.c.h.b16 %v8847
  %v9368 = vunpack.c.l.b16 %v8848
  %v9369 = vunpack.c.h.b16 %v8848
  %v9370 = vunpack.c.l.b16 %v8849
  %v9371 = vunpack.c.h.b16 %v8849
  %v9372 = vunpack.c.l.b16 %v8850
  %v9373 = vunpack.c.h.b16 %v8850
  %v9374 = vunpack.c.l.b16 %v8851
  %v9375 = vunpack.c.h.b16 %v8851
  %v9376 = vunpack.c.l.b16 %v8852
  %v9377 = vunpack.c.h.b16 %v8852
  %v9378 = vunpack.c.l.b16 %v8853
  %v9379 = vunpack.c.h.b16 %v8853
  %v9380 = vunpack.c.l.b16 %v8854
  %v9381 = vunpack.c.h.b16 %v8854
  %v9382 = vunpack.c.l.b16 %v8855
  %v9383 = vunpack.c.h.b16 %v8855
  %v9384 = vunpack.c.l.b16 %v8856
  %v9385 = vunpack.c.h.b16 %v8856
  %v9386 = vunpack.c.l.b16 %v8857
  %v9387 = vunpack.c.h.b16 %v8857
  %v9388 = vunpack.c.l.b16 %v8858
  %v9389 = vunpack.c.h.b16 %v8858
  %v9390 = vunpack.c.l.b16 %v8859
  %v9391 = vunpack.c.h.b16 %v8859
  %v9392 = vunpack.c.l.b16 %v8860
  %v9393 = vunpack.c.h.b16 %v8860
  %v9394 = vunpack.c.l.b16 %v8861
  %v9395 = vunpack.c.h.b16 %v8861
  %v9396 = vunpack.c.l.b16 %v8862
  %v9397 = vunpack.c.h.b16 %v8862
  %v9398 = vunpack.c.l.b16 %v8863
  %v9399 = vunpack.c.h.b16 %v8863
  %v9400 = vunpack.c.l.b16 %v8864
  %v9401 = vunpack.c.h.b16 %v8864
  %v9402 = vunpack.c.l.b16 %v8865
  %v9403 = vunpack.c.h.b16 %v8865
  %v9404 = vunpack.c.l.b16 %v8866
  %v9405 = vunpack.c.h.b16 %v8866
  %v9406 = vunpack.c.l.b16 %v8867
  %v9407 = vunpack.c.h.b16 %v8867
  %v9408 = vunpack.c.l.b16 %v8868
  %v9409 = vunpack.c.h.b16 %v8868
  %v9410 = vunpack.c.l.b16 %v8869
  %v9411 = vunpack.c.h.b16 %v8869
  %v9412 = vunpack.c.l.b16 %v8870
  %v9413 = vunpack.c.h.b16 %v8870
  %v9414 = vunpack.c.l.b16 %v8871
  %v9415 = vunpack.c.h.b16 %v8871
  %v9416 = vunpack.c.l.b16 %v8872
  %v9417 = vunpack.c.h.b16 %v8872
  %v9418 = vunpack.c.l.b16 %v8873
  %v9419 = vunpack.c.h.b16 %v8873
  %v9420 = vunpack.c.l.b16 %v8874
  %v9421 = vunpack.c.h.b16 %v8874
  %v9422 = vunpack.c.l.b16 %v8875
  %v9423 = vunpack.c.h.b16 %v8875
  %v9424 = vunpack.c.l.b16 %v8876
  %v9425 = vunpack.c.h.b16 %v8876
  %v9426 = vunpack.c.l.b16 %v8877
  %v9427 = vunpack.c.h.b16 %v8877
  %v9428 = vunpack.c.l.b16 %v8878
  %v9429 = vunpack.c.h.b16 %v8878
  %v9430 = vunpack.c.l.b16 %v8879
  %v9431 = vunpack.c.h.b16 %v8879
  %v9432 = vunpack.c.l.b16 %v8880
  %v9433 = vunpack.c.h.b16 %v8880
  %v9434 = vunpack.c.l.b16 %v8881
  %v9435 = vunpack.c.h.b16 %v8881
  %v9436 = vunpack.c.l.b16 %v8882
  %v9437 = vunpack.c.h.b16 %v8882
  %v9438 = vunpack.c.l.b16 %v8883
  %v9439 = vunpack.c.h.b16 %v8883
  %v9440 = vunpack.c.l.b16 %v8884
  %v9441 = vunpack.c.h.b16 %v8884
  %v9442 = vunpack.c.l.b16 %v8885
  %v9443 = vunpack.c.h.b16 %v8885
  %v9444 = vunpack.c.l.b16 %v8886
  %v9445 = vunpack.c.h.b16 %v8886
  %v9446 = vunpack.c.l.b16 %v8887
  %v9447 = vunpack.c.h.b16 %v8887
  %v9448 = vunpack.c.l.b16 %v8888
  %v9449 = vunpack.c.h.b16 %v8888
  %v9450 = vunpack.c.l.b16 %v8889
  %v9451 = vunpack.c.h.b16 %v8889
  %v9452 = vunpack.c.l.b16 %v8890
  %v9453 = vunpack.c.h.b16 %v8890
  %v9454 = vunpack.c.l.b16 %v8891
  %v9455 = vunpack.c.h.b16 %v8891
  %v9456 = vunpack.c.l.b16 %v8892
  %v9457 = vunpack.c.h.b16 %v8892
  %v9458 = vunpack.c.l.b16 %v8893
  %v9459 = vunpack.c.h.b16 %v8893
  %v9460 = vunpack.c.l.b16 %v8894
  %v9461 = vunpack.c.h.b16 %v8894
  %v9462 = vunpack.c.l.b16 %v8895
  %v9463 = vunpack.c.h.b16 %v8895
  %v9464 = vunpack.c.l.b16 %v8896
  %v9465 = vunpack.c.h.b16 %v8896
  %v9466 = vunpack.c.l.b16 %v8897
  %v9467 = vunpack.c.h.b16 %v8897
  %v9468 = vunpack.c.l.b16 %v8898
  %v9469 = vunpack.c.h.b16 %v8898
  %v9470 = vunpack.c.l.b16 %v8899
  %v9471 = vunpack.c.h.b16 %v8899
  %v9472 = vunpack.c.l.b16 %v8900
  %v9473 = vunpack.c.h.b16 %v8900
  %v9474 = vunpack.c.l.b16 %v8901
  %v9475 = vunpack.c.h.b16 %v8901
  %v9476 = vunpack.c.l.b16 %v8902
  %v9477 = vunpack.c.h.b16 %v8902
  %v9478 = vunpack.c.l.b16 %v8903
  %v9479 = vunpack.c.h.b16 %v8903
  %v9480 = vunpack.c.l.b16 %v8904
  %v9481 = vunpack.c.h.b16 %v8904
  %v9482 = vunpack.c.l.b16 %v8905
  %v9483 = vunpack.c.h.b16 %v8905
  %v9484 = vunpack.c.l.b16 %v8906
  %v9485 = vunpack.c.h.b16 %v8906
  %v9486 = vunpack.c.l.b16 %v8907
  %v9487 = vunpack.c.h.b16 %v8907
  %v9488 = vunpack.c.l.b16 %v8908
  %v9489 = vunpack.c.h.b16 %v8908
  %v9490 = vunpack.c.l.b16 %v8909
  %v9491 = vunpack.c.h.b16 %v8909
  %v9492 = vunpack.c.l.b16 %v8910
  %v9493 = vunpack.c.h.b16 %v8910
  %v9494 = vunpack.c.l.b16 %v8911
  %v9495 = vunpack.c.h.b16 %v8911
  %v9496 = vunpack.c.l.b16 %v8912
  %v9497 = vunpack.c.h.b16 %v8912
  %v9498 = vunpack.c.l.b16 %v8913
  %v9499 = vunpack.c.h.b16 %v8913
  %v9500 = vunpack.c.l.b16 %v8914
  %v9501 = vunpack.c.h.b16 %v8914
  %v9502 = vunpack.c.l.b16 %v8915
  %v9503 = vunpack.c.h.b16 %v8915
  %v9504 = vunpack.c.l.b16 %v8916
  %v9505 = vunpack.c.h.b16 %v8916
  %v9506 = vunpack.c.l.b16 %v8917
  %v9507 = vunpack.c.h.b16 %v8917
  %v9508 = vunpack.c.l.b16 %v8918
  %v9509 = vunpack.c.h.b16 %v8918
  %v9510 = vunpack.c.l.b16 %v8919
  %v9511 = vunpack.c.h.b16 %v8919
  %v9512 = vunpack.c.l.b16 %v8920
  %v9513 = vunpack.c.h.b16 %v8920
  %v9514 = vunpack.c.l.b16 %v8921
  %v9515 = vunpack.c.h.b16 %v8921
  %v9516 = vunpack.c.l.b16 %v8922
  %v9517 = vunpack.c.h.b16 %v8922
  %v9518 = vunpack.c.l.b16 %v8923
  %v9519 = vunpack.c.h.b16 %v8923
  %v9520 = vunpack.c.l.b16 %v8924
  %v9521 = vunpack.c.h.b16 %v8924
  %v9522 = vunpack.c.l.b16 %v8925
  %v9523 = vunpack.c.h.b16 %v8925
  %v9524 = vunpack.c.l.b16 %v8926
  %v9525 = vunpack.c.h.b16 %v8926
  %v9526 = vunpack.c.l.b16 %v8927
  %v9527 = vunpack.c.h.b16 %v8927
  %v9528 = vunpack.c.l.b16 %v8928
  %v9529 = vunpack.c.h.b16 %v8928
  %v9530 = vunpack.c.l.b16 %v8929
  %v9531 = vunpack.c.h.b16 %v8929
  %v9532 = vunpack.c.l.b16 %v8930
  %v9533 = vunpack.c.h.b16 %v8930
  %v9534 = vunpack.c.l.b16 %v8931
  %v9535 = vunpack.c.h.b16 %v8931
  %v9536 = vunpack.c.l.b16 %v8932
  %v9537 = vunpack.c.h.b16 %v8932
  %v9538 = vunpack.c.l.b16 %v8933
  %v9539 = vunpack.c.h.b16 %v8933
  %v9540 = vunpack.c.l.b16 %v8934
  %v9541 = vunpack.c.h.b16 %v8934
  %v9542 = vunpack.c.l.b16 %v8935
  %v9543 = vunpack.c.h.b16 %v8935
  %v9544 = vunpack.c.l.b16 %v8936
  %v9545 = vunpack.c.h.b16 %v8936
  %v9546 = vunpack.c.l.b16 %v8937
  %v9547 = vunpack.c.h.b16 %v8937
  %v9548 = vunpack.c.l.b16 %v8938
  %v9549 = vunpack.c.h.b16 %v8938
  %v9550 = vunpack.c.l.b16 %v8939
  %v9551 = vunpack.c.h.b16 %v8939
  %v9552 = vunpack.c.l.b16 %v8940
  %v9553 = vunpack.c.h.b16 %v8940
  %v9554 = vunpack.c.l.b16 %v8941
  %v9555 = vunpack.c.h.b16 %v8941
  %v9556 = vunpack.c.l.b16 %v8942
  %v9557 = vunpack.c.h.b16 %v8942
  %v9558 = vunpack.c.l.b16 %v8943
  %v9559 = vunpack.c.h.b16 %v8943
  %v9560 = vunpack.c.l.b16 %v8944
  %v9561 = vunpack.c.h.b16 %v8944
  %v9562 = vunpack.c.l.b16 %v8945
  %v9563 = vunpack.c.h.b16 %v8945
  %v9564 = vunpack.c.l.b16 %v8946
  %v9565 = vunpack.c.h.b16 %v8946
  %v9566 = vunpack.c.l.b16 %v8947
  %v9567 = vunpack.c.h.b16 %v8947
  %v9568 = vunpack.c.l.b16 %v8948
  %v9569 = vunpack.c.h.b16 %v8948
  %v9570 = vunpack.c.l.b16 %v8949
  %v9571 = vunpack.c.h.b16 %v8949
  %v9572 = vunpack.c.l.b16 %v8950
  %v9573 = vunpack.c.h.b16 %v8950
  %v9574 = vunpack.c.l.b16 %v8951
  %v9575 = vunpack.c.h.b16 %v8951
  %v9576 = vunpack.c.l.b16 %v8952
  %v9577 = vunpack.c.h.b16 %v8952
  %v9578 = vunpack.c.l.b16 %v8953
  %v9579 = vunpack.c.h.b16 %v8953
  %v9580 = vunpack.c.l.b16 %v8954
  %v9581 = vunpack.c.h.b16 %v8954
  %v9582 = vunpack.c.l.b16 %v8955
  %v9583 = vunpack.c.h.b16 %v8955
  %v9584 = vunpack.c.l.b16 %v8956
  %v9585 = vunpack.c.h.b16 %v8956
  %v9586 = vunpack.c.l.b16 %v8957
  %v9587 = vunpack.c.h.b16 %v8957
  %v9588 = vunpack.c.l.b16 %v8958
  %v9589 = vunpack.c.h.b16 %v8958
  %v9590 = vunpack.c.l.b16 %v8959
  %v9591 = vunpack.c.h.b16 %v8959
  %v9592 = vunpack.c.l.b16 %v8960
  %v9593 = vunpack.c.h.b16 %v8960
  %v9594 = vunpack.c.l.b16 %v8961
  %v9595 = vunpack.c.h.b16 %v8961
  %v9596 = vunpack.c.l.b16 %v8962
  %v9597 = vunpack.c.h.b16 %v8962
  %v9598 = vunpack.c.l.b16 %v8963
  %v9599 = vunpack.c.h.b16 %v8963
  %v9600 = vunpack.c.l.b16 %v8964
  %v9601 = vunpack.c.h.b16 %v8964
  %v9602 = vunpack.c.l.b16 %v8965
  %v9603 = vunpack.c.h.b16 %v8965
  %v9604 = vunpack.c.l.b16 %v8966
  %v9605 = vunpack.c.h.b16 %v8966
  %v9606 = vunpack.c.l.b16 %v8967
  %v9607 = vunpack.c.h.b16 %v8967
  %v9608 = vunpack.c.l.b16 %v8968
  %v9609 = vunpack.c.h.b16 %v8968
  %v9610 = vunpack.c.l.b16 %v8969
  %v9611 = vunpack.c.h.b16 %v8969
  %v9612 = vunpack.c.l.b16 %v8970
  %v9613 = vunpack.c.h.b16 %v8970
  %v9614 = vunpack.c.l.b16 %v8971
  %v9615 = vunpack.c.h.b16 %v8971
  %v9616 = vunpack.c.l.b16 %v8972
  %v9617 = vunpack.c.h.b16 %v8972
  %v9618 = vunpack.c.l.b16 %v8973
  %v9619 = vunpack.c.h.b16 %v8973
  %v9620 = vunpack.c.l.b16 %v8974
  %v9621 = vunpack.c.h.b16 %v8974
  %v9622 = vunpack.c.l.b16 %v8975
  %v9623 = vunpack.c.h.b16 %v8975
  %v9624 = vunpack.c.l.b16 %v8976
  %v9625 = vunpack.c.h.b16 %v8976
  %v9626 = vunpack.c.l.b16 %v8977
  %v9627 = vunpack.c.h.b16 %v8977
  %v9628 = vunpack.c.l.b16 %v8978
  %v9629 = vunpack.c.h.b16 %v8978
  %v9630 = vunpack.c.l.b16 %v8979
  %v9631 = vunpack.c.h.b16 %v8979
  %v9632 = vunpack.c.l.b16 %v8980
  %v9633 = vunpack.c.h.b16 %v8980
  %v9634 = vunpack.c.l.b16 %v8981
  %v9635 = vunpack.c.h.b16 %v8981
  %v9636 = vunpack.c.l.b16 %v8982
  %v9637 = vunpack.c.h.b16 %v8982
  %v9638 = vunpack.c.l.b16 %v8983
  %v9639 = vunpack.c.h.b16 %v8983
  %v9640 = vunpack.c.l.b16 %v8984
  %v9641 = vunpack.c.h.b16 %v8984
  %v9642 = vunpack.c.l.b16 %v8985
  %v9643 = vunpack.c.h.b16 %v8985
  %v9644 = vunpack.c.l.b16 %v8986
  %v9645 = vunpack.c.h.b16 %v8986
  %v9646 = vunpack.c.l.b16 %v8987
  %v9647 = vunpack.c.h.b16 %v8987
  %v9648 = vunpack.c.l.b16 %v8988
  %v9649 = vunpack.c.h.b16 %v8988
  %v9650 = vunpack.c.l.b16 %v8989
  %v9651 = vunpack.c.h.b16 %v8989
  %v9652 = vunpack.c.l.b16 %v8990
  %v9653 = vunpack.c.h.b16 %v8990
  %v9654 = vunpack.c.l.b16 %v8991
  %v9655 = vunpack.c.h.b16 %v8991
  %v9656 = vunpack.c.l.b16 %v8992
  %v9657 = vunpack.c.h.b16 %v8992
  %v9658 = vunpack.c.l.b16 %v8993
  %v9659 = vunpack.c.h.b16 %v8993
  %v9660 = vunpack.c.l.b16 %v8994
  %v9661 = vunpack.c.h.b16 %v8994
  %v9662 = vunpack.c.l.b16 %v8995
  %v9663 = vunpack.c.h.b16 %v8995
  %v9664 = vunpack.c.l.b16 %v8996
  %v9665 = vunpack.c.h.b16 %v8996
  %v9666 = vunpack.c.l.b16 %v8997
  %v9667 = vunpack.c.h.b16 %v8997
  %v9668 = vunpack.c.l.b16 %v8998
  %v9669 = vunpack.c.h.b16 %v8998
  %v9670 = vunpack.c.l.b16 %v8999
  %v9671 = vunpack.c.h.b16 %v8999
  %v9672 = vunpack.c.l.b16 %v9000
  %v9673 = vunpack.c.h.b16 %v9000
  %v9674 = vunpack.c.l.b16 %v9001
  %v9675 = vunpack.c.h.b16 %v9001
  %v9676 = vunpack.c.l.b16 %v9002
  %v9677 = vunpack.c.h.b16 %v9002
  %v9678 = vunpack.c.l.b16 %v9003
  %v9679 = vunpack.c.h.b16 %v9003
  %v9680 = vunpack.c.l.b16 %v9004
  %v9681 = vunpack.c.h.b16 %v9004
  %v9682 = vunpack.c.l.b16 %v9005
  %v9683 = vunpack.c.h.b16 %v9005
  %v9684 = vunpack.c.l.b16 %v9006
  %v9685 = vunpack.c.h.b16 %v9006
  %v9686 = vunpack.c.l.b16 %v9007
  %v9687 = vunpack.c.h.b16 %v9007
  %v9688 = vunpack.c.l.b16 %v9008
  %v9689 = vunpack.c.h.b16 %v9008
  %v9690 = vunpack.c.l.b16 %v9009
  %v9691 = vunpack.c.h.b16 %v9009
  %v9692 = vunpack.c.l.b16 %v9010
  %v9693 = vunpack.c.h.b16 %v9010
  %v9694 = vunpack.c.l.b16 %v9011
  %v9695 = vunpack.c.h.b16 %v9011
  %v9696 = vunpack.c.l.b16 %v9012
  %v9697 = vunpack.c.h.b16 %v9012
  %v9698 = vunpack.c.l.b16 %v9013
  %v9699 = vunpack.c.h.b16 %v9013
  %v9700 = vunpack.c.l.b16 %v9014
  %v9701 = vunpack.c.h.b16 %v9014
  %v9702 = vunpack.c.l.b16 %v9015
  %v9703 = vunpack.c.h.b16 %v9015
  %v9704 = vunpack.c.l.b16 %v9016
  %v9705 = vunpack.c.h.b16 %v9016
  %v9706 = vunpack.c.l.b16 %v9017
  %v9707 = vunpack.c.h.b16 %v9017
  %v9708 = vunpack.c.l.b16 %v9018
  %v9709 = vunpack.c.h.b16 %v9018
  %v9710 = vunpack.c.l.b16 %v9019
  %v9711 = vunpack.c.h.b16 %v9019
  %v9712 = vunpack.c.l.b16 %v9020
  %v9713 = vunpack.c.h.b16 %v9020
  %v9714 = vunpack.c.l.b16 %v9021
  %v9715 = vunpack.c.h.b16 %v9021
  %v9716 = vunpack.c.l.b16 %v9022
  %v9717 = vunpack.c.h.b16 %v9022
  %v9718 = vunpack.c.l.b16 %v9023
  %v9719 = vunpack.c.h.b16 %v9023
  %v9720 = vunpack.c.l.b16 %v9024
  %v9721 = vunpack.c.h.b16 %v9024
  %v9722 = vunpack.c.l.b16 %v9025
  %v9723 = vunpack.c.h.b16 %v9025
  %v9724 = vunpack.c.l.b16 %v9026
  %v9725 = vunpack.c.h.b16 %v9026
  %v9726 = vunpack.c.l.b16 %v9027
  %v9727 = vunpack.c.h.b16 %v9027
  %v9728 = vunpack.c.l.b16 %v9028
  %v9729 = vunpack.c.h.b16 %v9028
  %v9730 = vunpack.c.l.b16 %v9029
  %v9731 = vunpack.c.h.b16 %v9029
  %v9732 = vunpack.c.l.b16 %v9030
  %v9733 = vunpack.c.h.b16 %v9030
  %v9734 = vunpack.c.l.b16 %v9031
  %v9735 = vunpack.c.h.b16 %v9031
  %v9736 = vunpack.c.l.b16 %v9032
  %v9737 = vunpack.c.h.b16 %v9032
  %v9738 = vunpack.c.l.b16 %v9033
  %v9739 = vunpack.c.h.b16 %v9033
  %v9740 = vunpack.c.l.b16 %v9034
  %v9741 = vunpack.c.h.b16 %v9034
  %v9742 = vunpack.c.l.b16 %v9035
  %v9743 = vunpack.c.h.b16 %v9035
  %v9744 = vunpack.c.l.b16 %v9036
  %v9745 = vunpack.c.h.b16 %v9036
  %v9746 = vunpack.c.l.b16 %v9037
  %v9747 = vunpack.c.h.b16 %v9037
  %v9748 = vunpack.c.l.b16 %v9038
  %v9749 = vunpack.c.h.b16 %v9038
  %v9750 = vunpack.c.l.b16 %v9039
  %v9751 = vunpack.c.h.b16 %v9039
  %v9752 = vunpack.c.l.b16 %v9040
  %v9753 = vunpack.c.h.b16 %v9040
  %v9754 = vunpack.c.l.b16 %v9041
  %v9755 = vunpack.c.h.b16 %v9041
  %v9756 = vunpack.c.l.b16 %v9042
  %v9757 = vunpack.c.h.b16 %v9042
  %v9758 = vunpack.c.l.b16 %v9043
  %v9759 = vunpack.c.h.b16 %v9043
  %v9760 = vunpack.c.l.b16 %v9044
  %v9761 = vunpack.c.h.b16 %v9044
  %v9762 = vunpack.c.l.b16 %v9045
  %v9763 = vunpack.c.h.b16 %v9045
  %v9764 = vunpack.c.l.b16 %v9046
  %v9765 = vunpack.c.h.b16 %v9046
  %v9766 = vunpack.c.l.b16 %v9047
  %v9767 = vunpack.c.h.b16 %v9047
  %v9768 = vunpack.c.l.b16 %v9048
  %v9769 = vunpack.c.h.b16 %v9048
  %v9770 = vunpack.c.l.b16 %v9049
  %v9771 = vunpack.c.h.b16 %v9049
  %v9772 = vunpack.c.l.b16 %v9050
  %v9773 = vunpack.c.h.b16 %v9050
  %v9774 = vunpack.c.l.b16 %v9051
  %v9775 = vunpack.c.h.b16 %v9051
  %v9776 = vunpack.c.l.b16 %v9052
  %v9777 = vunpack.c.h.b16 %v9052
  %v9778 = vunpack.c.l.b16 %v9053
  %v9779 = vunpack.c.h.b16 %v9053
  %v9780 = vunpack.c.l.b16 %v9054
  %v9781 = vunpack.c.h.b16 %v9054
  %v9782 = vunpack.c.l.b16 %v9055
  %v9783 = vunpack.c.h.b16 %v9055
  %v9784 = vunpack.c.l.b16 %v9056
  %v9785 = vunpack.c.h.b16 %v9056
  %v9786 = vunpack.c.l.b16 %v9057
  %v9787 = vunpack.c.h.b16 %v9057
  %v9788 = vunpack.c.l.b16 %v9058
  %v9789 = vunpack.c.h.b16 %v9058
  %v9790 = vunpack.c.l.b16 %v9059
  %v9791 = vunpack.c.h.b16 %v9059
  %v9792 = vunpack.c.l.b16 %v9060
  %v9793 = vunpack.c.h.b16 %v9060
  %v9794 = vunpack.c.l.b16 %v9061
  %v9795 = vunpack.c.h.b16 %v9061
  %v9796 = vunpack.c.l.b16 %v9062
  %v9797 = vunpack.c.h.b16 %v9062
  %v9798 = vunpack.c.l.b16 %v9063
  %v9799 = vunpack.c.h.b16 %v9063
  %v9800 = vunpack.c.l.b16 %v9064
  %v9801 = vunpack.c.h.b16 %v9064
  %v9802 = vunpack.c.l.b16 %v9065
  %v9803 = vunpack.c.h.b16 %v9065
  %v9804 = vunpack.c.l.b16 %v9066
  %v9805 = vunpack.c.h.b16 %v9066
  %v9806 = vunpack.c.l.b16 %v9067
  %v9807 = vunpack.c.h.b16 %v9067
  %v9808 = vunpack.c.l.b16 %v9068
  %v9809 = vunpack.c.h.b16 %v9068
  %v9810 = vunpack.c.l.b16 %v9069
  %v9811 = vunpack.c.h.b16 %v9069
  %v9812 = vunpack.c.l.b16 %v9070
  %v9813 = vunpack.c.h.b16 %v9070
  %v9814 = vunpack.c.l.b16 %v9071
  %v9815 = vunpack.c.h.b16 %v9071
  %v9816 = vunpack.c.l.b16 %v9072
  %v9817 = vunpack.c.h.b16 %v9072
  %v9818 = vunpack.c.l.b16 %v9073
  %v9819 = vunpack.c.h.b16 %v9073
  %v9820 = vunpack.c.l.b16 %v9074
  %v9821 = vunpack.c.h.b16 %v9074
  %v9822 = vunpack.c.l.b16 %v9075
  %v9823 = vunpack.c.h.b16 %v9075
  %v9824 = vunpack.c.l.b16 %v9076
  %v9825 = vunpack.c.h.b16 %v9076
  %v9826 = vunpack.c.l.b16 %v9077
  %v9827 = vunpack.c.h.b16 %v9077
  %v9828 = vunpack.c.l.b16 %v9078
  %v9829 = vunpack.c.h.b16 %v9078
  %v9830 = vunpack.c.l.b16 %v9079
  %v9831 = vunpack.c.h.b16 %v9079
  %v9832 = vunpack.c.l.b16 %v9080
  %v9833 = vunpack.c.h.b16 %v9080
  %v9834 = vunpack.c.l.b16 %v9081
  %v9835 = vunpack.c.h.b16 %v9081
  %v9836 = vunpack.c.l.b16 %v9082
  %v9837 = vunpack.c.h.b16 %v9082
  %v9838 = vunpack.c.l.b16 %v9083
  %v9839 = vunpack.c.h.b16 %v9083
  %v9840 = vunpack.c.l.b16 %v9084
  %v9841 = vunpack.c.h.b16 %v9084
  %v9842 = vunpack.c.l.b16 %v9085
  %v9843 = vunpack.c.h.b16 %v9085
  %v9844 = vunpack.c.l.b16 %v9086
  %v9845 = vunpack.c.h.b16 %v9086
  %v9846 = vunpack.c.l.b16 %v9087
  %v9847 = vunpack.c.h.b16 %v9087
  %v9848 = vunpack.c.l.b16 %v9088
  %v9849 = vunpack.c.h.b16 %v9088
  %v9850 = vunpack.c.l.b16 %v9089
  %v9851 = vunpack.c.h.b16 %v9089
  %v9852 = vunpack.c.l.b16 %v9090
  %v9853 = vunpack.c.h.b16 %v9090
  %v9854 = vunpack.c.l.b16 %v9091
  %v9855 = vunpack.c.h.b16 %v9091
  %v9856 = vunpack.c.l.b16 %v9092
  %v9857 = vunpack.c.h.b16 %v9092
  %v9858 = vunpack.c.l.b16 %v9093
  %v9859 = vunpack.c.h.b16 %v9093
  %v9860 = vunpack.c.l.b16 %v9094
  %v9861 = vunpack.c.h.b16 %v9094
  %v9862 = vunpack.c.l.b16 %v9095
  %v9863 = vunpack.c.h.b16 %v9095
  %v9864 = vpack.c.b16 %v9360, %v9352
  %v9865 = vpack.c.b16 %v9361, %v9353
  %v9866 = vpack.c.b16 %v9362, %v9354
  %v9867 = vpack.c.b16 %v9363, %v9355
  %v9868 = vpack.c.b16 %v9364, %v9356
  %v9869 = vpack.c.b16 %v9365, %v9357
  %v9870 = vpack.c.b16 %v9366, %v9358
  %v9871 = vpack.c.b16 %v9367, %v9359
  %v9872 = vpack.c.b16 %v9376, %v9368
  %v9873 = vpack.c.b16 %v9377, %v9369
  %v9874 = vpack.c.b16 %v9378, %v9370
  %v9875 = vpack.c.b16 %v9379, %v9371
  %v9876 = vpack.c.b16 %v9380, %v9372
  %v9877 = vpack.c.b16 %v9381, %v9373
  %v9878 = vpack.c.b16 %v9382, %v9374
  %v9879 = vpack.c.b16 %v9383, %v9375
  %v9880 = vpack.c.b16 %v9392, %v9384
  %v9881 = vpack.c.b16 %v9393, %v9385
  %v9882 = vpack.c.b16 %v9394, %v9386
  %v9883 = vpack.c.b16 %v9395, %v9387
  %v9884 = vpack.c.b16 %v9396, %v9388
  %v9885 = vpack.c.b16 %v9397, %v9389
  %v9886 = vpack.c.b16 %v9398, %v9390
  %v9887 = vpack.c.b16 %v9399, %v9391
  %v9888 = vpack.c.b16 %v9408, %v9400
  %v9889 = vpack.c.b16 %v9409, %v9401
  %v9890 = vpack.c.b16 %v9410, %v9402
  %v9891 = vpack.c.b16 %v9411, %v9403
  %v9892 = vpack.c.b16 %v9412, %v9404
  %v9893 = vpack.c.b16 %v9413, %v9405
  %v9894 = vpack.c.b16 %v9414, %v9406
  %v9895 = vpack.c.b16 %v9415, %v9407
  %v9896 = vpack.c.b16 %v9424, %v9416
  %v9897 = vpack.c.b16 %v9425, %v9417
  %v9898 = vpack.c.b16 %v9426, %v9418
  %v9899 = vpack.c.b16 %v9427, %v9419
  %v9900 = vpack.c.b16 %v9428, %v9420
  %v9901 = vpack.c.b16 %v9429, %v9421
  %v9902 = vpack.c.b16 %v9430, %v9422
  %v9903 = vpack.c.b16 %v9431, %v9423
  %v9904 = vpack.c.b16 %v9440, %v9432
  %v9905 = vpack.c.b16 %v9441, %v9433
  %v9906 = vpack.c.b16 %v9442, %v9434
  %v9907 = vpack.c.b16 %v9443, %v9435
  %v9908 = vpack.c.b16 %v9444, %v9436
  %v9909 = vpack.c.b16 %v9445, %v9437
  %v9910 = vpack.c.b16 %v9446, %v9438
  %v9911 = vpack.c.b16 %v9447, %v9439
  %v9912 = vpack.c.b16 %v9456, %v9448
  %v9913 = vpack.c.b16 %v9457, %v9449
  %v9914 = vpack.c.b16 %v9458, %v9450
  %v9915 = vpack.c.b16 %v9459, %v9451
  %v9916 = vpack.c.b16 %v9460, %v9452
  %v9917 = vpack.c.b16 %v9461, %v9453
  %v9918 = vpack.c.b16 %v9462, %v9454
  %v9919 = vpack.c.b16 %v9463, %v9455
  %v9920 = vpack.c.b16 %v9472, %v9464
  %v9921 = vpack.c.b16 %v9473, %v9465
  %v9922 = vpack.c.b16 %v9474, %v9466
  %v9923 = vpack.c.b16 %v9475, %v9467
  %v9924 = vpack.c.b16 %v9476, %v9468
  %v9925 = vpack.c.b16 %v9477, %v9469
  %v9926 = vpack.c.b16 %v9478, %v9470
  %v9927 = vpack.c.b16 %v9479, %v9471
  %v9928 = vpack.c.b16 %v9488, %v9480
  %v9929 = vpack.c.b16 %v9489, %v9481
  %v9930 = vpack.c.b16 %v9490, %v9482
  %v9931 = vpack.c.b16 %v9491, %v9483
  %v9932 = vpack.c.b16 %v9492, %v9484
  %v9933 = vpack.c.b16 %v9493, %v9485
  %v9934 = vpack.c.b16 %v9494, %v9486
  %v9935 = vpack.c.b16 %v9495, %v9487
  %v9936 = vpack.c.b16 %v9504, %v9496
  %v9937 = vpack.c.b16 %v9505, %v9497
  %v9938 = vpack.c.b16 %v9506, %v9498
  %v9939 = vpack.c.b16 %v9507, %v9499
  %v9940 = vpack.c.b16 %v9508, %v9500
  %v9941 = vpack.c.b16 %v9509, %v9501
  %v9942 = vpack.c.b16 %v9510, %v9502
  %v9943 = vpack.c.b16 %v9511, %v9503
  %v9944 = vpack.c.b16 %v9520, %v9512
  %v9945 = vpack.c.b16 %v9521, %v9513
  %v9946 = vpack.c.b16 %v9522, %v9514
  %v9947 = vpack.c.b16 %v9523, %v9515
  %v9948 = vpack.c.b16 %v9524, %v9516
  %v9949 = vpack.c.b16 %v9525, %v9517
  %v9950 = vpack.c.b16 %v9526, %v9518
  %v9951 = vpack.c.b16 %v9527, %v9519
  %v9952 = vpack.c.b16 %v9536, %v9528
  %v9953 = vpack.c.b16 %v9537, %v9529
  %v9954 = vpack.c.b16 %v9538, %v9530
  %v9955 = vpack.c.b16 %v9539, %v9531
  %v9956 = vpack.c.b16 %v9540, %v9532
  %v9957 = vpack.c.b16 %v9541, %v9533
  %v9958 = vpack.c.b16 %v9542, %v9534
  %v9959 = vpack.c.b16 %v9543, %v9535
  %v9960 = vpack.c.b16 %v9552, %v9544
  %v9961 = vpack.c.b16 %v9553, %v9545
  %v9962 = vpack.c.b16 %v9554, %v9546
  %v9963 = vpack.c.b16 %v9555, %v9547
  %v9964 = vpack.c.b16 %v9556, %v9548
  %v9965 = vpack.c.b16 %v9557, %v9549
  %v9966 = vpack.c.b16 %v9558, %v9550
  %v9967 = vpack.c.b16 %v9559, %v9551
  %v9968 = vpack.c.b16 %v9568, %v9560
  %v9969 = vpack.c.b16 %v9569, %v9561
  %v9970 = vpack.c.b16 %v9570, %v9562
  %v9971 = vpack.c.b16 %v9571, %v9563
  %v9972 = vpack.c.b16 %v9572, %v9564
  %v9973 = vpack.c.b16 %v9573, %v9565
  %v9974 = vpack.c.b16 %v9574, %v9566
  %v9975 = vpack.c.b16 %v9575, %v9567
  %v9976 = vpack.c.b16 %v9584, %v9576
  %v9977 = vpack.c.b16 %v9585, %v9577
  %v9978 = vpack.c.b16 %v9586, %v9578
  %v9979 = vpack.c.b16 %v9587, %v9579
  %v9980 = vpack.c.b16 %v9588, %v9580
  %v9981 = vpack.c.b16 %v9589, %v9581
  %v9982 = vpack.c.b16 %v9590, %v9582
  %v9983 = vpack.c.b16 %v9591, %v9583
  %v9984 = vpack.c.b16 %v9600, %v9592
  %v9985 = vpack.c.b16 %v9601, %v9593
  %v9986 = vpack.c.b16 %v9602, %v9594
  %v9987 = vpack.c.b16 %v9603, %v9595
  %v9988 = vpack.c.b16 %v9604, %v9596
  %v9989 = vpack.c.b16 %v9605, %v9597
  %v9990 = vpack.c.b16 %v9606, %v9598
  %v9991 = vpack.c.b16 %v9607, %v9599
  %v9992 = vpack.c.b16 %v9616, %v9608
  %v9993 = vpack.c.b16 %v9617, %v9609
  %v9994 = vpack.c.b16 %v9618, %v9610
  %v9995 = vpack.c.b16 %v9619, %v9611
  %v9996 = vpack.c.b16 %v9620, %v9612
  %v9997 = vpack.c.b16 %v9621, %v9613
  %v9998 = vpack.c.b16 %v9622, %v9614
  %v9999 = vpack.c.b16 %v9623, %v9615
  %v10000 = vpack.c.b16 %v9632, %v9624
  %v10001 = vpack.c.b16 %v9633, %v9625
  %v10002 = vpack.c.b16 %v9634, %v9626
  %v10003 = vpack.c.b16 %v9635, %v9627
  %v10004 = vpack.c.b16 %v9636, %v9628
  %v10005 = vpack.c.b16 %v9637, %v9629
  %v10006 = vpack.c.b16 %v9638, %v9630
  %v10007 = vpack.c.b16 %v9639, %v9631
  %v10008 = vpack.c.b16 %v9648, %v9640
  %v10009 = vpack.c.b16 %v9649, %v9641
  %v10010 = vpack.c.b16 %v9650, %v9642
  %v10011 = vpack.c.b16 %v9651, %v9643
  %v10012 = vpack.c.b16 %v9652, %v9644
  %v10013 = vpack.c.b16 %v9653, %v9645
  %v10014 = vpack.c.b16 %v9654, %v9646
  %v10015 = vpack.c.b16 %v9655, %v9647
  %v10016 = vpack.c.b16 %v9664, %v9656
  %v10017 = vpack.c.b16 %v9665, %v9657
  %v10018 = vpack.c.b16 %v9666, %v9658
  %v10019 = vpack.c.b16 %v9667, %v9659
  %v10020 = vpack.c.b16 %v9668, %v9660
  %v10021 = vpack.c.b16 %v9669, %v9661
  %v10022 = vpack.c.b16 %v9670, %v9662
  %v10023 = vpack.c.b16 %v9671, %v9663
  %v10024 = vpack.c.b16 %v9680, %v9672
  %v10025 = vpack.c.b16 %v9681, %v9673
  %v10026 = vpack.c.b16 %v9682, %v9674
  %v10027 = vpack.c.b16 %v9683, %v9675
  %v10028 = vpack.c.b16 %v9684, %v9676
  %v10029 = vpack.c.b16 %v9685, %v9677
  %v10030 = vpack.c.b16 %v9686, %v9678
  %v10031 = vpack.c.b16 %v9687, %v9679
  %v10032 = vpack.c.b16 %v9696, %v9688
  %v10033 = vpack.c.b16 %v9697, %v9689
  %v10034 = vpack.c.b16 %v9698, %v9690
  %v10035 = vpack.c.b16 %v9699, %v9691
  %v10036 = vpack.c.b16 %v9700, %v9692
  %v10037 = vpack.c.b16 %v9701, %v9693
  %v10038 = vpack.c.b16 %v9702, %v9694
  %v10039 = vpack.c.b16 %v9703, %v9695
  %v10040 = vpack.c.b16 %v9712, %v9704
  %v10041 = vpack.c.b16 %v9713, %v9705
  %v10042 = vpack.c.b16 %v9714, %v9706
  %v10043 = vpack.c.b16 %v9715, %v9707
  %v10044 = vpack.c.b16 %v9716, %v9708
  %v10045 = vpack.c.b16 %v9717, %v9709
  %v10046 = vpack.c.b16 %v9718, %v9710
  %v10047 = vpack.c.b16 %v9719, %v9711
  %v10048 = vpack.c.b16 %v9728, %v9720
  %v10049 = vpack.c.b16 %v9729, %v9721
  %v10050 = vpack.c.b16 %v9730, %v9722
  %v10051 = vpack.c.b16 %v9731, %v9723
  %v10052 = vpack.c.b16 %v9732, %v9724
  %v10053 = vpack.c.b16 %v9733, %v9725
  %v10054 = vpack.c.b16 %v9734, %v9726
  %v10055 = vpack.c.b16 %v9735, %v9727
  %v10056 = vpack.c.b16 %v9744, %v9736
  %v10057 = vpack.c.b16 %v9745, %v9737
  %v10058 = vpack.c.b16 %v9746, %v9738
  %v10059 = vpack.c.b16 %v9747, %v9739
  %v10060 = vpack.c.b16 %v9748, %v9740
  %v10061 = vpack.c.b16 %v9749, %v9741
  %v10062 = vpack.c.b16 %v9750, %v9742
  %v10063 = vpack.c.b16 %v9751, %v9743
  %v10064 = vpack.c.b16 %v9760, %v9752
  %v10065 = vpack.c.b16 %v9761, %v9753
  %v10066 = vpack.c.b16 %v9762, %v9754
  %v10067 = vpack.c.b16 %v9763, %v9755
  %v10068 = vpack.c.b16 %v9764, %v9756
  %v10069 = vpack.c.b16 %v9765, %v9757
  %v10070 = vpack.c.b16 %v9766, %v9758
  %v10071 = vpack.c.b16 %v9767, %v9759
  %v10072 = vpack.c.b16 %v9776, %v9768
  %v10073 = vpack.c.b16 %v9777, %v9769
  %v10074 = vpack.c.b16 %v9778, %v9770
  %v10075 = vpack.c.b16 %v9779, %v9771
  %v10076 = vpack.c.b16 %v9780, %v9772
  %v10077 = vpack.c.b16 %v9781, %v9773
  %v10078 = vpack.c.b16 %v9782, %v9774
  %v10079 = vpack.c.b16 %v9783, %v9775
  %v10080 = vpack.c.b16 %v9792, %v9784
  %v10081 = vpack.c.b16 %v9793, %v9785
  %v10082 = vpack.c.b16 %v9794, %v9786
  %v10083 = vpack.c.b16 %v9795, %v9787
  %v10084 = vpack.c.b16 %v9796, %v9788
  %v10085 = vpack.c.b16 %v9797, %v9789
  %v10086 = vpack.c.b16 %v9798, %v9790
  %v10087 = vpack.c.b16 %v9799, %v9791
  %v10088 = vpack.c.b16 %v9808, %v9800
  %v10089 = vpack.c.b16 %v9809, %v9801
  %v10090 = vpack.c.b16 %v9810, %v9802
  %v10091 = vpack.c.b16 %v9811, %v9803
  %v10092 = vpack.c.b16 %v9812, %v9804
  %v10093 = vpack.c.b16 %v9813, %v9805
  %v10094 = vpack.c.b16 %v9814, %v9806
  %v10095 = vpack.c.b16 %v9815, %v9807
  %v10096 = vpack.c.b16 %v9824, %v9816
  %v10097 = vpack.c.b16 %v9825, %v9817
  %v10098 = vpack.c.b16 %v9826, %v9818
  %v10099 = vpack.c.b16 %v9827, %v9819
  %v10100 = vpack.c.b16 %v9828, %v9820
  %v10101 = vpack.c.b16 %v9829, %v9821
  %v10102 = vpack.c.b16 %v9830, %v9822
  %v10103 = vpack.c.b16 %v9831, %v9823
  %v10104 = vpack.c.b16 %v9840, %v9832
  %v10105 = vpack.c.b16 %v9841, %v9833
  %v10106 = vpack.c.b16 %v9842, %v9834
  %v10107 = vpack.c.b16 %v9843, %v9835
  %v10108 = vpack.c.b16 %v9844, %v9836
  %v10109 = vpack.c.b16 %v9845, %v9837
  %v10110 = vpack.c.b16 %v9846, %v9838
  %v10111 = vpack.c.b16 %v9847, %v9839
  %v10112 = vpack.c.b16 %v9856, %v9848
  %v10113 = vpack.c.b16 %v9857, %v9849
  %v10114 = vpack.c.b16 %v9858, %v9850
  %v10115 = vpack.c.b16 %v9859, %v9851
  %v10116 = vpack.c.b16 %v9860, %v9852
  %v10117 = vpack.c.b16 %v9861, %v9853
  %v10118 = vpack.c.b16 %v9862, %v9854
  %v10119 = vpack.c.b16 %v9863, %v9855
  %10376 = vmatprep.subr.bf16.mxu0 %v9865
  %10377 = vmatpush1.bf16.msra.mxu0 %v9864
  %10378 = vmatprep.subr.bf16.mxu0 %v9873
  %10379 = vmatpush1.bf16.msra.mxu0 %v9872
  %10380 = vmatprep.subr.bf16.mxu0 %v9881
  %10381 = vmatpush1.bf16.msra.mxu0 %v9880
  %10382 = vmatprep.subr.bf16.mxu0 %v9889
  %10383 = vmatpush1.bf16.msra.mxu0 %v9888
  %10384 = vmatprep.subr.bf16.mxu0 %v9897
  %10385 = vmatpush1.bf16.msra.mxu0 %v9896
  %10386 = vmatprep.subr.bf16.mxu0 %v9905
  %10387 = vmatpush1.bf16.msra.mxu0 %v9904
  %10388 = vmatprep.subr.bf16.mxu0 %v9913
  %10389 = vmatpush1.bf16.msra.mxu0 %v9912
  %10390 = vmatprep.subr.bf16.mxu0 %v9921
  %10391 = vmatpush1.bf16.msra.mxu0 %v9920
  %10392 = vmatprep.subr.bf16.mxu0 %v9929
  %10393 = vmatpush1.bf16.msra.mxu0 %v9928
  %10394 = vmatprep.subr.bf16.mxu0 %v9937
  %10395 = vmatpush1.bf16.msra.mxu0 %v9936
  %10396 = vmatprep.subr.bf16.mxu0 %v9945
  %10397 = vmatpush1.bf16.msra.mxu0 %v9944
  %10398 = vmatprep.subr.bf16.mxu0 %v9953
  %10399 = vmatpush1.bf16.msra.mxu0 %v9952
  %10400 = vmatprep.subr.bf16.mxu0 %v9961
  %10401 = vmatpush1.bf16.msra.mxu0 %v9960
  %10402 = vmatprep.subr.bf16.mxu0 %v9969
  %10403 = vmatpush1.bf16.msra.mxu0 %v9968
  %10404 = vmatprep.subr.bf16.mxu0 %v9977
  %10405 = vmatpush1.bf16.msra.mxu0 %v9976
  %10406 = vmatprep.subr.bf16.mxu0 %v9985
  %10407 = vmatpush1.bf16.msra.mxu0 %v9984
  %10408 = vmatprep.mubr.bf16.mxu0 %v8837
  %10409 = vmatmul.mubr.bf16.gmra.mrb[0].mxu0 %v8836
  %v10410 = vpop.f32.mrb[0].mxu0
  %v10411 = vadd.f32 %v311, %v10410
  %v10412 = vpop.f32.mrb[0].mxu0
  %v10413 = vadd.f32 %v315, %v10412
  %v10414 = vpop.f32.mrb[0].mxu0
  %v10415 = vpop.f32.mrb[0].mxu0
  %10416 = vdwg.mxu0
  %10417 = vmatprep.subr.bf16.mxu0 %v9993
  %10418 = vmatpush1.bf16.msra.mxu0 %v9992
  %10419 = vmatprep.subr.bf16.mxu0 %v10001
  %10420 = vmatpush1.bf16.msra.mxu0 %v10000
  %10421 = vmatprep.subr.bf16.mxu0 %v10009
  %10422 = vmatpush1.bf16.msra.mxu0 %v10008
  %10423 = vmatprep.subr.bf16.mxu0 %v10017
  %10424 = vmatpush1.bf16.msra.mxu0 %v10016
  %10425 = vmatprep.subr.bf16.mxu0 %v10025
  %10426 = vmatpush1.bf16.msra.mxu0 %v10024
  %10427 = vmatprep.subr.bf16.mxu0 %v10033
  %10428 = vmatpush1.bf16.msra.mxu0 %v10032
  %10429 = vmatprep.subr.bf16.mxu0 %v10041
  %10430 = vmatpush1.bf16.msra.mxu0 %v10040
  %10431 = vmatprep.subr.bf16.mxu0 %v10049
  %10432 = vmatpush1.bf16.msra.mxu0 %v10048
  %10433 = vmatprep.subr.bf16.mxu0 %v10057
  %10434 = vmatpush1.bf16.msra.mxu0 %v10056
  %10435 = vmatprep.subr.bf16.mxu0 %v10065
  %10436 = vmatpush1.bf16.msra.mxu0 %v10064
  %10437 = vmatprep.subr.bf16.mxu0 %v10073
  %10438 = vmatpush1.bf16.msra.mxu0 %v10072
  %10439 = vmatprep.subr.bf16.mxu0 %v10081
  %10440 = vmatpush1.bf16.msra.mxu0 %v10080
  %10441 = vmatprep.subr.bf16.mxu0 %v10089
  %10442 = vmatpush1.bf16.msra.mxu0 %v10088
  %10443 = vmatprep.subr.bf16.mxu0 %v10097
  %10444 = vmatpush1.bf16.msra.mxu0 %v10096
  %10445 = vmatprep.subr.bf16.mxu0 %v10105
  %10446 = vmatpush1.bf16.msra.mxu0 %v10104
  %10447 = vmatprep.subr.bf16.mxu0 %v10113
  %10448 = vmatpush1.bf16.msra.mxu0 %v10112
  %10449 = vmatprep.mubr.bf16.mxu0 %v8839
  %10450 = vmatmul.mubr.bf16.gmra.mrb[0].mxu0 %v8838
  %v10451 = vpop.f32.mrb[0].mxu0
  %v10452 = vadd.f32 %v10411, %v10451
  %v10453 = vpop.f32.mrb[0].mxu0
  %v10454 = vadd.f32 %v10413, %v10453
  %v10455 = vpop.f32.mrb[0].mxu0
  %v10456 = vpop.f32.mrb[0].mxu0
  %10457 = vdwg.mxu0
  %10458 = vmatprep.subr.bf16.mxu0 %v9867
  %10459 = vmatpush1.bf16.msra.mxu0 %v9866
  %10460 = vmatprep.subr.bf16.mxu0 %v9875
  %10461 = vmatpush1.bf16.msra.mxu0 %v9874
  %10462 = vmatprep.subr.bf16.mxu0 %v9883
  %10463 = vmatpush1.bf16.msra.mxu0 %v9882
  %10464 = vmatprep.subr.bf16.mxu0 %v9891
  %10465 = vmatpush1.bf16.msra.mxu0 %v9890
  %10466 = vmatprep.subr.bf16.mxu0 %v9899
  %10467 = vmatpush1.bf16.msra.mxu0 %v9898
  %10468 = vmatprep.subr.bf16.mxu0 %v9907
  %10469 = vmatpush1.bf16.msra.mxu0 %v9906
  %10470 = vmatprep.subr.bf16.mxu0 %v9915
  %10471 = vmatpush1.bf16.msra.mxu0 %v9914
  %10472 = vmatprep.subr.bf16.mxu0 %v9923
  %10473 = vmatpush1.bf16.msra.mxu0 %v9922
  %10474 = vmatprep.subr.bf16.mxu0 %v9931
  %10475 = vmatpush1.bf16.msra.mxu0 %v9930
  %10476 = vmatprep.subr.bf16.mxu0 %v9939
  %10477 = vmatpush1.bf16.msra.mxu0 %v9938
  %10478 = vmatprep.subr.bf16.mxu0 %v9947
  %10479 = vmatpush1.bf16.msra.mxu0 %v9946
  %10480 = vmatprep.subr.bf16.mxu0 %v9955
  %10481 = vmatpush1.bf16.msra.mxu0 %v9954
  %10482 = vmatprep.subr.bf16.mxu0 %v9963
  %10483 = vmatpush1.bf16.msra.mxu0 %v9962
  %10484 = vmatprep.subr.bf16.mxu0 %v9971
  %10485 = vmatpush1.bf16.msra.mxu0 %v9970
  %10486 = vmatprep.subr.bf16.mxu0 %v9979
  %10487 = vmatpush1.bf16.msra.mxu0 %v9978
  %10488 = vmatprep.subr.bf16.mxu0 %v9987
  %10489 = vmatpush1.bf16.msra.mxu0 %v9986
  %10490 = vmatprep.mubr.bf16.mxu0 %v8837
  %10491 = vmatmul.mubr.bf16.gmra.mrb[0].mxu0 %v8836
  %v10492 = vpop.f32.mrb[0].mxu0
  %v10493 = vadd.f32 %v319, %v10492
  %v10494 = vpop.f32.mrb[0].mxu0
  %v10495 = vadd.f32 %v323, %v10494
  %v10496 = vpop.f32.mrb[0].mxu0
  %v10497 = vpop.f32.mrb[0].mxu0
  %10498 = vdwg.mxu0
  %10499 = vmatprep.subr.bf16.mxu0 %v9995
  %10500 = vmatpush1.bf16.msra.mxu0 %v9994
  %10501 = vmatprep.subr.bf16.mxu0 %v10003
  %10502 = vmatpush1.bf16.msra.mxu0 %v10002
  %10503 = vmatprep.subr.bf16.mxu0 %v10011
  %10504 = vmatpush1.bf16.msra.mxu0 %v10010
  %10505 = vmatprep.subr.bf16.mxu0 %v10019
  %10506 = vmatpush1.bf16.msra.mxu0 %v10018
  %10507 = vmatprep.subr.bf16.mxu0 %v10027
  %10508 = vmatpush1.bf16.msra.mxu0 %v10026
  %10509 = vmatprep.subr.bf16.mxu0 %v10035
  %10510 = vmatpush1.bf16.msra.mxu0 %v10034
  %10511 = vmatprep.subr.bf16.mxu0 %v10043
  %10512 = vmatpush1.bf16.msra.mxu0 %v10042
  %10513 = vmatprep.subr.bf16.mxu0 %v10051
  %10514 = vmatpush1.bf16.msra.mxu0 %v10050
  %10515 = vmatprep.subr.bf16.mxu0 %v10059
  %10516 = vmatpush1.bf16.msra.mxu0 %v10058
  %10517 = vmatprep.subr.bf16.mxu0 %v10067
  %10518 = vmatpush1.bf16.msra.mxu0 %v10066
  %10519 = vmatprep.subr.bf16.mxu0 %v10075
  %10520 = vmatpush1.bf16.msra.mxu0 %v10074
  %10521 = vmatprep.subr.bf16.mxu0 %v10083
  %10522 = vmatpush1.bf16.msra.mxu0 %v10082
  %10523 = vmatprep.subr.bf16.mxu0 %v10091
  %10524 = vmatpush1.bf16.msra.mxu0 %v10090
  %10525 = vmatprep.subr.bf16.mxu0 %v10099
  %10526 = vmatpush1.bf16.msra.mxu0 %v10098
  %10527 = vmatprep.subr.bf16.mxu0 %v10107
  %10528 = vmatpush1.bf16.msra.mxu0 %v10106
  %10529 = vmatprep.subr.bf16.mxu0 %v10115
  %10530 = vmatpush1.bf16.msra.mxu0 %v10114
  %10531 = vmatprep.mubr.bf16.mxu0 %v8839
  %10532 = vmatmul.mubr.bf16.gmra.mrb[0].mxu0 %v8838
  %v10533 = vpop.f32.mrb[0].mxu0
  %v10534 = vadd.f32 %v10493, %v10533
  %v10535 = vpop.f32.mrb[0].mxu0
  %v10536 = vadd.f32 %v10495, %v10535
  %v10537 = vpop.f32.mrb[0].mxu0
  %v10538 = vpop.f32.mrb[0].mxu0
  %10539 = vdwg.mxu0
  %10540 = vmatprep.subr.bf16.mxu0 %v9869
  %10541 = vmatpush1.bf16.msra.mxu0 %v9868
  %10542 = vmatprep.subr.bf16.mxu0 %v9877
  %10543 = vmatpush1.bf16.msra.mxu0 %v9876
  %10544 = vmatprep.subr.bf16.mxu0 %v9885
  %10545 = vmatpush1.bf16.msra.mxu0 %v9884
  %10546 = vmatprep.subr.bf16.mxu0 %v9893
  %10547 = vmatpush1.bf16.msra.mxu0 %v9892
  %10548 = vmatprep.subr.bf16.mxu0 %v9901
  %10549 = vmatpush1.bf16.msra.mxu0 %v9900
  %10550 = vmatprep.subr.bf16.mxu0 %v9909
  %10551 = vmatpush1.bf16.msra.mxu0 %v9908
  %10552 = vmatprep.subr.bf16.mxu0 %v9917
  %10553 = vmatpush1.bf16.msra.mxu0 %v9916
  %10554 = vmatprep.subr.bf16.mxu0 %v9925
  %10555 = vmatpush1.bf16.msra.mxu0 %v9924
  %10556 = vmatprep.subr.bf16.mxu0 %v9933
  %10557 = vmatpush1.bf16.msra.mxu0 %v9932
  %10558 = vmatprep.subr.bf16.mxu0 %v9941
  %10559 = vmatpush1.bf16.msra.mxu0 %v9940
  %10560 = vmatprep.subr.bf16.mxu0 %v9949
  %10561 = vmatpush1.bf16.msra.mxu0 %v9948
  %10562 = vmatprep.subr.bf16.mxu0 %v9957
  %10563 = vmatpush1.bf16.msra.mxu0 %v9956
  %10564 = vmatprep.subr.bf16.mxu0 %v9965
  %10565 = vmatpush1.bf16.msra.mxu0 %v9964
  %10566 = vmatprep.subr.bf16.mxu0 %v9973
  %10567 = vmatpush1.bf16.msra.mxu0 %v9972
  %10568 = vmatprep.subr.bf16.mxu0 %v9981
  %10569 = vmatpush1.bf16.msra.mxu0 %v9980
  %10570 = vmatprep.subr.bf16.mxu0 %v9989
  %10571 = vmatpush1.bf16.msra.mxu0 %v9988
  %10572 = vmatprep.mubr.bf16.mxu0 %v8837
  %10573 = vmatmul.mubr.bf16.gmra.mrb[0].mxu0 %v8836
  %v10574 = vpop.f32.mrb[0].mxu0
  %v10575 = vadd.f32 %v327, %v10574
  %v10576 = vpop.f32.mrb[0].mxu0
  %v10577 = vadd.f32 %v331, %v10576
  %v10578 = vpop.f32.mrb[0].mxu0
  %v10579 = vpop.f32.mrb[0].mxu0
  %10580 = vdwg.mxu0
  %10581 = vmatprep.subr.bf16.mxu0 %v9997
  %10582 = vmatpush1.bf16.msra.mxu0 %v9996
  %10583 = vmatprep.subr.bf16.mxu0 %v10005
  %10584 = vmatpush1.bf16.msra.mxu0 %v10004
  %10585 = vmatprep.subr.bf16.mxu0 %v10013
  %10586 = vmatpush1.bf16.msra.mxu0 %v10012
  %10587 = vmatprep.subr.bf16.mxu0 %v10021
  %10588 = vmatpush1.bf16.msra.mxu0 %v10020
  %10589 = vmatprep.subr.bf16.mxu0 %v10029
  %10590 = vmatpush1.bf16.msra.mxu0 %v10028
  %10591 = vmatprep.subr.bf16.mxu0 %v10037
  %10592 = vmatpush1.bf16.msra.mxu0 %v10036
  %10593 = vmatprep.subr.bf16.mxu0 %v10045
  %10594 = vmatpush1.bf16.msra.mxu0 %v10044
  %10595 = vmatprep.subr.bf16.mxu0 %v10053
  %10596 = vmatpush1.bf16.msra.mxu0 %v10052
  %10597 = vmatprep.subr.bf16.mxu0 %v10061
  %10598 = vmatpush1.bf16.msra.mxu0 %v10060
  %10599 = vmatprep.subr.bf16.mxu0 %v10069
  %10600 = vmatpush1.bf16.msra.mxu0 %v10068
  %10601 = vmatprep.subr.bf16.mxu0 %v10077
  %10602 = vmatpush1.bf16.msra.mxu0 %v10076
  %10603 = vmatprep.subr.bf16.mxu0 %v10085
  %10604 = vmatpush1.bf16.msra.mxu0 %v10084
  %10605 = vmatprep.subr.bf16.mxu0 %v10093
  %10606 = vmatpush1.bf16.msra.mxu0 %v10092
  %10607 = vmatprep.subr.bf16.mxu0 %v10101
  %10608 = vmatpush1.bf16.msra.mxu0 %v10100
  %10609 = vmatprep.subr.bf16.mxu0 %v10109
  %10610 = vmatpush1.bf16.msra.mxu0 %v10108
  %10611 = vmatprep.subr.bf16.mxu0 %v10117
  %10612 = vmatpush1.bf16.msra.mxu0 %v10116
  %10613 = vmatprep.mubr.bf16.mxu0 %v8839
  %10614 = vmatmul.mubr.bf16.gmra.mrb[0].mxu0 %v8838
  %v10615 = vpop.f32.mrb[0].mxu0
  %v10616 = vadd.f32 %v10575, %v10615
  %v10617 = vpop.f32.mrb[0].mxu0
  %v10618 = vadd.f32 %v10577, %v10617
  %v10619 = vpop.f32.mrb[0].mxu0
  %v10620 = vpop.f32.mrb[0].mxu0
  %10621 = vdwg.mxu0
  %10622 = vmatprep.subr.bf16.mxu0 %v9871
  %10623 = vmatpush1.bf16.msra.mxu0 %v9870
  %10624 = vmatprep.subr.bf16.mxu0 %v9879
  %10625 = vmatpush1.bf16.msra.mxu0 %v9878
  %10626 = vmatprep.subr.bf16.mxu0 %v9887
  %10627 = vmatpush1.bf16.msra.mxu0 %v9886
  %10628 = vmatprep.subr.bf16.mxu0 %v9895
  %10629 = vmatpush1.bf16.msra.mxu0 %v9894
  %10630 = vmatprep.subr.bf16.mxu0 %v9903
  %10631 = vmatpush1.bf16.msra.mxu0 %v9902
  %10632 = vmatprep.subr.bf16.mxu0 %v9911
  %10633 = vmatpush1.bf16.msra.mxu0 %v9910
  %10634 = vmatprep.subr.bf16.mxu0 %v9919
  %10635 = vmatpush1.bf16.msra.mxu0 %v9918
  %10636 = vmatprep.subr.bf16.mxu0 %v9927
  %10637 = vmatpush1.bf16.msra.mxu0 %v9926
  %10638 = vmatprep.subr.bf16.mxu0 %v9935
  %10639 = vmatpush1.bf16.msra.mxu0 %v9934
  %10640 = vmatprep.subr.bf16.mxu0 %v9943
  %10641 = vmatpush1.bf16.msra.mxu0 %v9942
  %10642 = vmatprep.subr.bf16.mxu0 %v9951
  %10643 = vmatpush1.bf16.msra.mxu0 %v9950
  %10644 = vmatprep.subr.bf16.mxu0 %v9959
  %10645 = vmatpush1.bf16.msra.mxu0 %v9958
  %10646 = vmatprep.subr.bf16.mxu0 %v9967
  %10647 = vmatpush1.bf16.msra.mxu0 %v9966
  %10648 = vmatprep.subr.bf16.mxu0 %v9975
  %10649 = vmatpush1.bf16.msra.mxu0 %v9974
  %10650 = vmatprep.subr.bf16.mxu0 %v9983
  %10651 = vmatpush1.bf16.msra.mxu0 %v9982
  %10652 = vmatprep.subr.bf16.mxu0 %v9991
  %10653 = vmatpush1.bf16.msra.mxu0 %v9990
  %10654 = vmatprep.mubr.bf16.mxu0 %v8837
  %10655 = vmatmul.mubr.bf16.gmra.mrb[0].mxu0 %v8836
  %v10656 = vpop.f32.mrb[0].mxu0
  %v10657 = vadd.f32 %v335, %v10656
  %v10658 = vpop.f32.mrb[0].mxu0
  %v10659 = vadd.f32 %v339, %v10658
  %v10660 = vpop.f32.mrb[0].mxu0
  %v10661 = vpop.f32.mrb[0].mxu0
  %10662 = vdwg.mxu0
  %10663 = vmatprep.subr.bf16.mxu0 %v9999
  %10664 = vmatpush1.bf16.msra.mxu0 %v9998
  %10665 = vmatprep.subr.bf16.mxu0 %v10007
  %10666 = vmatpush1.bf16.msra.mxu0 %v10006
  %10667 = vmatprep.subr.bf16.mxu0 %v10015
  %10668 = vmatpush1.bf16.msra.mxu0 %v10014
  %10669 = vmatprep.subr.bf16.mxu0 %v10023
  %10670 = vmatpush1.bf16.msra.mxu0 %v10022
  %10671 = vmatprep.subr.bf16.mxu0 %v10031
  %10672 = vmatpush1.bf16.msra.mxu0 %v10030
  %10673 = vmatprep.subr.bf16.mxu0 %v10039
  %10674 = vmatpush1.bf16.msra.mxu0 %v10038
  %10675 = vmatprep.subr.bf16.mxu0 %v10047
  %10676 = vmatpush1.bf16.msra.mxu0 %v10046
  %10677 = vmatprep.subr.bf16.mxu0 %v10055
  %10678 = vmatpush1.bf16.msra.mxu0 %v10054
  %10679 = vmatprep.subr.bf16.mxu0 %v10063
  %10680 = vmatpush1.bf16.msra.mxu0 %v10062
  %10681 = vmatprep.subr.bf16.mxu0 %v10071
  %10682 = vmatpush1.bf16.msra.mxu0 %v10070
  %10683 = vmatprep.subr.bf16.mxu0 %v10079
  %10684 = vmatpush1.bf16.msra.mxu0 %v10078
  %10685 = vmatprep.subr.bf16.mxu0 %v10087
  %10686 = vmatpush1.bf16.msra.mxu0 %v10086
  %10687 = vmatprep.subr.bf16.mxu0 %v10095
  %10688 = vmatpush1.bf16.msra.mxu0 %v10094
  %10689 = vmatprep.subr.bf16.mxu0 %v10103
  %10690 = vmatpush1.bf16.msra.mxu0 %v10102
  %10691 = vmatprep.subr.bf16.mxu0 %v10111
  %10692 = vmatpush1.bf16.msra.mxu0 %v10110
  %10693 = vmatprep.subr.bf16.mxu0 %v10119
  %10694 = vmatpush1.bf16.msra.mxu0 %v10118
  %10695 = vmatprep.mubr.bf16.mxu0 %v8839
  %10696 = vmatmul.mubr.bf16.gmra.mrb[0].mxu0 %v8838
  %v10697 = vpop.f32.mrb[0].mxu0
  %v10698 = vadd.f32 %v10657, %v10697
  %v10699 = vpop.f32.mrb[0].mxu0
  %v10700 = vadd.f32 %v10659, %v10699
  %v10701 = vpop.f32.mrb[0].mxu0
  %v10702 = vpop.f32.mrb[0].mxu0
  %10703 = vdwg.mxu0
  %v10708 = vcombine.low %v10452, %v10454
  %v10709 = vcombine.low %v10534, %v10536
  %v10711 = vunpack.c.l.s4 1983009808
  %v10712 = vunpack.c.0.s8 %v10711
  %v10713 = vlaneseq
  %v10714 = vshrl.u32 %v10713, 7
  %v10715 = vsub.s32 %v10712, %v10714
  %v10716 = vrot.slane %v10708, %v10715
  %v10718 = vunpack.c.l.s4 1983009808
  %v10719 = vunpack.c.0.s8 %v10718
  %v10720 = vlaneseq
  %v10721 = vshrl.u32 %v10720, 7
  %v10722 = vsub.s32 %v10719, %v10721
  %v10723 = vrot.slane %v10709, %v10722
  %v10724 = vcombine.low %v10716, %v10723
  %v10726 = vadd.f32 %v8811, %v10724
  %v10727 = vmul.f32 %v10726, 0.5
  %v10728 = vtanh.pop %v10727
  %v10729 = vadd.f32 %v10728, 1.0
  %v10730 = vmul.f32 %v10729, 0.5
  %v10735 = vcombine.low %v10616, %v10618
  %v10736 = vcombine.low %v10698, %v10700
  %v10738 = vunpack.c.l.s4 1983009808
  %v10739 = vunpack.c.0.s8 %v10738
  %v10740 = vlaneseq
  %v10741 = vshrl.u32 %v10740, 7
  %v10742 = vsub.s32 %v10739, %v10741
  %v10743 = vrot.slane %v10735, %v10742
  %v10745 = vunpack.c.l.s4 1983009808
  %v10746 = vunpack.c.0.s8 %v10745
  %v10747 = vlaneseq
  %v10748 = vshrl.u32 %v10747, 7
  %v10749 = vsub.s32 %v10746, %v10748
  %v10750 = vrot.slane %v10736, %v10749
  %v10751 = vcombine.low %v10743, %v10750
  %v10753 = vadd.f32 %v8812, %v10751
  %v10754 = vmul.f32 %v10753, 0.5
  %v10755 = vtanh.pop %v10754
  %v10756 = vadd.f32 %v10755, 1.0
  %v10757 = vmul.f32 %v10756, 0.5
  %v10758 = vld [vmem:[%s1 + $0x20] sm:$0xff]
  %v10759 = vld [vmem:[%s1 + $0x28] sm:$0xff]
  %v10760 = vld [vmem:[%s1 + $0x50] sm:$0xff]
  %v10761 = vld [vmem:[%s1 + $0x58] sm:$0xff]
  %v10762 = vld [vmem:[%s1 + $0x80] sm:$0xff]
  %v10763 = vld [vmem:[%s1 + $0x88] sm:$0xff]
  %v10764 = vld [vmem:[%s1 + $0xb0] sm:$0xff]
  %v10765 = vld [vmem:[%s1 + $0xb8] sm:$0xff]
  %v10766 = vld [vmem:[%s1 + $0xe0] sm:$0xff]
  %v10767 = vld [vmem:[%s1 + $0xe8] sm:$0xff]
  %v10768 = vld [vmem:[%s1 + $0x110] sm:$0xff]
  %v10769 = vld [vmem:[%s1 + $0x118] sm:$0xff]
  %v10770 = vld [vmem:[%s1 + $0x140] sm:$0xff]
  %v10771 = vld [vmem:[%s1 + $0x148] sm:$0xff]
  %v10772 = vld [vmem:[%s1 + $0x170] sm:$0xff]
  %v10773 = vld [vmem:[%s1 + $0x178] sm:$0xff]
  %v10774 = vld [vmem:[%s1 + $0x1a0] sm:$0xff]
  %v10775 = vld [vmem:[%s1 + $0x1a8] sm:$0xff]
  %v10776 = vld [vmem:[%s1 + $0x1d0] sm:$0xff]
  %v10777 = vld [vmem:[%s1 + $0x1d8] sm:$0xff]
  %v10778 = vld [vmem:[%s1 + $0x200] sm:$0xff]
  %v10779 = vld [vmem:[%s1 + $0x208] sm:$0xff]
  %v10780 = vld [vmem:[%s1 + $0x230] sm:$0xff]
  %v10781 = vld [vmem:[%s1 + $0x238] sm:$0xff]
  %v10782 = vld [vmem:[%s1 + $0x260] sm:$0xff]
  %v10783 = vld [vmem:[%s1 + $0x268] sm:$0xff]
  %v10784 = vld [vmem:[%s1 + $0x290] sm:$0xff]
  %v10785 = vld [vmem:[%s1 + $0x298] sm:$0xff]
  %v10786 = vld [vmem:[%s1 + $0x2c0] sm:$0xff]
  %v10787 = vld [vmem:[%s1 + $0x2c8] sm:$0xff]
  %v10788 = vld [vmem:[%s1 + $0x2f0] sm:$0xff]
  %v10789 = vld [vmem:[%s1 + $0x2f8] sm:$0xff]
  %v10790 = vld [vmem:[%s1 + $0x320] sm:$0xff]
  %v10791 = vld [vmem:[%s1 + $0x328] sm:$0xff]
  %v10792 = vld [vmem:[%s1 + $0x350] sm:$0xff]
  %v10793 = vld [vmem:[%s1 + $0x358] sm:$0xff]
  %v10794 = vld [vmem:[%s1 + $0x380] sm:$0xff]
  %v10795 = vld [vmem:[%s1 + $0x388] sm:$0xff]
  %v10796 = vld [vmem:[%s1 + $0x3b0] sm:$0xff]
  %v10797 = vld [vmem:[%s1 + $0x3b8] sm:$0xff]
  %v10798 = vld [vmem:[%s1 + $0x3e0] sm:$0xff]
  %v10799 = vld [vmem:[%s1 + $0x3e8] sm:$0xff]
  %v10800 = vld [vmem:[%s1 + $0x410] sm:$0xff]
  %v10801 = vld [vmem:[%s1 + $0x418] sm:$0xff]
  %v10802 = vld [vmem:[%s1 + $0x440] sm:$0xff]
  %v10803 = vld [vmem:[%s1 + $0x448] sm:$0xff]
  %v10804 = vld [vmem:[%s1 + $0x470] sm:$0xff]
  %v10805 = vld [vmem:[%s1 + $0x478] sm:$0xff]
  %v10806 = vld [vmem:[%s1 + $0x4a0] sm:$0xff]
  %v10807 = vld [vmem:[%s1 + $0x4a8] sm:$0xff]
  %v10808 = vld [vmem:[%s1 + $0x4d0] sm:$0xff]
  %v10809 = vld [vmem:[%s1 + $0x4d8] sm:$0xff]
  %v10810 = vld [vmem:[%s1 + $0x500] sm:$0xff]
  %v10811 = vld [vmem:[%s1 + $0x508] sm:$0xff]
  %v10812 = vld [vmem:[%s1 + $0x530] sm:$0xff]
  %v10813 = vld [vmem:[%s1 + $0x538] sm:$0xff]
  %v10814 = vld [vmem:[%s1 + $0x560] sm:$0xff]
  %v10815 = vld [vmem:[%s1 + $0x568] sm:$0xff]
  %v10816 = vld [vmem:[%s1 + $0x590] sm:$0xff]
  %v10817 = vld [vmem:[%s1 + $0x598] sm:$0xff]
  %v10818 = vld [vmem:[%s1 + $0x5c0] sm:$0xff]
  %v10819 = vld [vmem:[%s1 + $0x5c8] sm:$0xff]
  %v10820 = vld [vmem:[%s1 + $0x5f0] sm:$0xff]
  %v10821 = vld [vmem:[%s1 + $0x5f8] sm:$0xff]
  %v10822 = vld [vmem:[%s1 + $0x620] sm:$0xff]
  %v10823 = vld [vmem:[%s1 + $0x628] sm:$0xff]
  %v10824 = vld [vmem:[%s1 + $0x650] sm:$0xff]
  %v10825 = vld [vmem:[%s1 + $0x658] sm:$0xff]
  %v10826 = vld [vmem:[%s1 + $0x680] sm:$0xff]
  %v10827 = vld [vmem:[%s1 + $0x688] sm:$0xff]
  %v10828 = vld [vmem:[%s1 + $0x6b0] sm:$0xff]
  %v10829 = vld [vmem:[%s1 + $0x6b8] sm:$0xff]
  %v10830 = vld [vmem:[%s1 + $0x6e0] sm:$0xff]
  %v10831 = vld [vmem:[%s1 + $0x6e8] sm:$0xff]
  %v10832 = vld [vmem:[%s1 + $0x710] sm:$0xff]
  %v10833 = vld [vmem:[%s1 + $0x718] sm:$0xff]
  %v10834 = vld [vmem:[%s1 + $0x740] sm:$0xff]
  %v10835 = vld [vmem:[%s1 + $0x748] sm:$0xff]
  %v10836 = vld [vmem:[%s1 + $0x770] sm:$0xff]
  %v10837 = vld [vmem:[%s1 + $0x778] sm:$0xff]
  %v10838 = vld [vmem:[%s1 + $0x7a0] sm:$0xff]
  %v10839 = vld [vmem:[%s1 + $0x7a8] sm:$0xff]
  %v10840 = vld [vmem:[%s1 + $0x7d0] sm:$0xff]
  %v10841 = vld [vmem:[%s1 + $0x7d8] sm:$0xff]
  %v10842 = vld [vmem:[%s1 + $0x800] sm:$0xff]
  %v10843 = vld [vmem:[%s1 + $0x808] sm:$0xff]
  %v10844 = vld [vmem:[%s1 + $0x830] sm:$0xff]
  %v10845 = vld [vmem:[%s1 + $0x838] sm:$0xff]
  %v10846 = vld [vmem:[%s1 + $0x860] sm:$0xff]
  %v10847 = vld [vmem:[%s1 + $0x868] sm:$0xff]
  %v10848 = vld [vmem:[%s1 + $0x890] sm:$0xff]
  %v10849 = vld [vmem:[%s1 + $0x898] sm:$0xff]
  %v10850 = vld [vmem:[%s1 + $0x8c0] sm:$0xff]
  %v10851 = vld [vmem:[%s1 + $0x8c8] sm:$0xff]
  %v10852 = vld [vmem:[%s1 + $0x8f0] sm:$0xff]
  %v10853 = vld [vmem:[%s1 + $0x8f8] sm:$0xff]
  %v10854 = vld [vmem:[%s1 + $0x920] sm:$0xff]
  %v10855 = vld [vmem:[%s1 + $0x928] sm:$0xff]
  %v10856 = vld [vmem:[%s1 + $0x950] sm:$0xff]
  %v10857 = vld [vmem:[%s1 + $0x958] sm:$0xff]
  %v10858 = vld [vmem:[%s1 + $0x980] sm:$0xff]
  %v10859 = vld [vmem:[%s1 + $0x988] sm:$0xff]
  %v10860 = vld [vmem:[%s1 + $0x9b0] sm:$0xff]
  %v10861 = vld [vmem:[%s1 + $0x9b8] sm:$0xff]
  %v10862 = vld [vmem:[%s1 + $0x9e0] sm:$0xff]
  %v10863 = vld [vmem:[%s1 + $0x9e8] sm:$0xff]
  %v10864 = vld [vmem:[%s1 + $0xa10] sm:$0xff]
  %v10865 = vld [vmem:[%s1 + $0xa18] sm:$0xff]
  %v10866 = vld [vmem:[%s1 + $0xa40] sm:$0xff]
  %v10867 = vld [vmem:[%s1 + $0xa48] sm:$0xff]
  %v10868 = vld [vmem:[%s1 + $0xa70] sm:$0xff]
  %v10869 = vld [vmem:[%s1 + $0xa78] sm:$0xff]
  %v10870 = vld [vmem:[%s1 + $0xaa0] sm:$0xff]
  %v10871 = vld [vmem:[%s1 + $0xaa8] sm:$0xff]
  %v10872 = vld [vmem:[%s1 + $0xad0] sm:$0xff]
  %v10873 = vld [vmem:[%s1 + $0xad8] sm:$0xff]
  %v10874 = vld [vmem:[%s1 + $0xb00] sm:$0xff]
  %v10875 = vld [vmem:[%s1 + $0xb08] sm:$0xff]
  %v10876 = vld [vmem:[%s1 + $0xb30] sm:$0xff]
  %v10877 = vld [vmem:[%s1 + $0xb38] sm:$0xff]
  %v10878 = vld [vmem:[%s1 + $0xb60] sm:$0xff]
  %v10879 = vld [vmem:[%s1 + $0xb68] sm:$0xff]
  %v10880 = vld [vmem:[%s1 + $0xb90] sm:$0xff]
  %v10881 = vld [vmem:[%s1 + $0xb98] sm:$0xff]
  %v10882 = vld [vmem:[%s1 + $0xbc0] sm:$0xff]
  %v10883 = vld [vmem:[%s1 + $0xbc8] sm:$0xff]
  %v10884 = vld [vmem:[%s1 + $0xbf0] sm:$0xff]
  %v10885 = vld [vmem:[%s1 + $0xbf8] sm:$0xff]
  %v11014 = vunpack.c.l.b16 %v10758
  %v11015 = vunpack.c.h.b16 %v10758
  %v11016 = vunpack.c.l.b16 %v10759
  %v11017 = vunpack.c.h.b16 %v10759
  %v11018 = vunpack.c.l.b16 %v10760
  %v11019 = vunpack.c.h.b16 %v10760
  %v11020 = vunpack.c.l.b16 %v10761
  %v11021 = vunpack.c.h.b16 %v10761
  %v11022 = vunpack.c.l.b16 %v10762
  %v11023 = vunpack.c.h.b16 %v10762
  %v11024 = vunpack.c.l.b16 %v10763
  %v11025 = vunpack.c.h.b16 %v10763
  %v11026 = vunpack.c.l.b16 %v10764
  %v11027 = vunpack.c.h.b16 %v10764
  %v11028 = vunpack.c.l.b16 %v10765
  %v11029 = vunpack.c.h.b16 %v10765
  %v11030 = vunpack.c.l.b16 %v10766
  %v11031 = vunpack.c.h.b16 %v10766
  %v11032 = vunpack.c.l.b16 %v10767
  %v11033 = vunpack.c.h.b16 %v10767
  %v11034 = vunpack.c.l.b16 %v10768
  %v11035 = vunpack.c.h.b16 %v10768
  %v11036 = vunpack.c.l.b16 %v10769
  %v11037 = vunpack.c.h.b16 %v10769
  %v11038 = vunpack.c.l.b16 %v10770
  %v11039 = vunpack.c.h.b16 %v10770
  %v11040 = vunpack.c.l.b16 %v10771
  %v11041 = vunpack.c.h.b16 %v10771
  %v11042 = vunpack.c.l.b16 %v10772
  %v11043 = vunpack.c.h.b16 %v10772
  %v11044 = vunpack.c.l.b16 %v10773
  %v11045 = vunpack.c.h.b16 %v10773
  %v11046 = vunpack.c.l.b16 %v10774
  %v11047 = vunpack.c.h.b16 %v10774
  %v11048 = vunpack.c.l.b16 %v10775
  %v11049 = vunpack.c.h.b16 %v10775
  %v11050 = vunpack.c.l.b16 %v10776
  %v11051 = vunpack.c.h.b16 %v10776
  %v11052 = vunpack.c.l.b16 %v10777
  %v11053 = vunpack.c.h.b16 %v10777
  %v11054 = vunpack.c.l.b16 %v10778
  %v11055 = vunpack.c.h.b16 %v10778
  %v11056 = vunpack.c.l.b16 %v10779
  %v11057 = vunpack.c.h.b16 %v10779
  %v11058 = vunpack.c.l.b16 %v10780
  %v11059 = vunpack.c.h.b16 %v10780
  %v11060 = vunpack.c.l.b16 %v10781
  %v11061 = vunpack.c.h.b16 %v10781
  %v11062 = vunpack.c.l.b16 %v10782
  %v11063 = vunpack.c.h.b16 %v10782
  %v11064 = vunpack.c.l.b16 %v10783
  %v11065 = vunpack.c.h.b16 %v10783
  %v11066 = vunpack.c.l.b16 %v10784
  %v11067 = vunpack.c.h.b16 %v10784
  %v11068 = vunpack.c.l.b16 %v10785
  %v11069 = vunpack.c.h.b16 %v10785
  %v11070 = vunpack.c.l.b16 %v10786
  %v11071 = vunpack.c.h.b16 %v10786
  %v11072 = vunpack.c.l.b16 %v10787
  %v11073 = vunpack.c.h.b16 %v10787
  %v11074 = vunpack.c.l.b16 %v10788
  %v11075 = vunpack.c.h.b16 %v10788
  %v11076 = vunpack.c.l.b16 %v10789
  %v11077 = vunpack.c.h.b16 %v10789
  %v11078 = vunpack.c.l.b16 %v10790
  %v11079 = vunpack.c.h.b16 %v10790
  %v11080 = vunpack.c.l.b16 %v10791
  %v11081 = vunpack.c.h.b16 %v10791
  %v11082 = vunpack.c.l.b16 %v10792
  %v11083 = vunpack.c.h.b16 %v10792
  %v11084 = vunpack.c.l.b16 %v10793
  %v11085 = vunpack.c.h.b16 %v10793
  %v11086 = vunpack.c.l.b16 %v10794
  %v11087 = vunpack.c.h.b16 %v10794
  %v11088 = vunpack.c.l.b16 %v10795
  %v11089 = vunpack.c.h.b16 %v10795
  %v11090 = vunpack.c.l.b16 %v10796
  %v11091 = vunpack.c.h.b16 %v10796
  %v11092 = vunpack.c.l.b16 %v10797
  %v11093 = vunpack.c.h.b16 %v10797
  %v11094 = vunpack.c.l.b16 %v10798
  %v11095 = vunpack.c.h.b16 %v10798
  %v11096 = vunpack.c.l.b16 %v10799
  %v11097 = vunpack.c.h.b16 %v10799
  %v11098 = vunpack.c.l.b16 %v10800
  %v11099 = vunpack.c.h.b16 %v10800
  %v11100 = vunpack.c.l.b16 %v10801
  %v11101 = vunpack.c.h.b16 %v10801
  %v11102 = vunpack.c.l.b16 %v10802
  %v11103 = vunpack.c.h.b16 %v10802
  %v11104 = vunpack.c.l.b16 %v10803
  %v11105 = vunpack.c.h.b16 %v10803
  %v11106 = vunpack.c.l.b16 %v10804
  %v11107 = vunpack.c.h.b16 %v10804
  %v11108 = vunpack.c.l.b16 %v10805
  %v11109 = vunpack.c.h.b16 %v10805
  %v11110 = vunpack.c.l.b16 %v10806
  %v11111 = vunpack.c.h.b16 %v10806
  %v11112 = vunpack.c.l.b16 %v10807
  %v11113 = vunpack.c.h.b16 %v10807
  %v11114 = vunpack.c.l.b16 %v10808
  %v11115 = vunpack.c.h.b16 %v10808
  %v11116 = vunpack.c.l.b16 %v10809
  %v11117 = vunpack.c.h.b16 %v10809
  %v11118 = vunpack.c.l.b16 %v10810
  %v11119 = vunpack.c.h.b16 %v10810
  %v11120 = vunpack.c.l.b16 %v10811
  %v11121 = vunpack.c.h.b16 %v10811
  %v11122 = vunpack.c.l.b16 %v10812
  %v11123 = vunpack.c.h.b16 %v10812
  %v11124 = vunpack.c.l.b16 %v10813
  %v11125 = vunpack.c.h.b16 %v10813
  %v11126 = vunpack.c.l.b16 %v10814
  %v11127 = vunpack.c.h.b16 %v10814
  %v11128 = vunpack.c.l.b16 %v10815
  %v11129 = vunpack.c.h.b16 %v10815
  %v11130 = vunpack.c.l.b16 %v10816
  %v11131 = vunpack.c.h.b16 %v10816
  %v11132 = vunpack.c.l.b16 %v10817
  %v11133 = vunpack.c.h.b16 %v10817
  %v11134 = vunpack.c.l.b16 %v10818
  %v11135 = vunpack.c.h.b16 %v10818
  %v11136 = vunpack.c.l.b16 %v10819
  %v11137 = vunpack.c.h.b16 %v10819
  %v11138 = vunpack.c.l.b16 %v10820
  %v11139 = vunpack.c.h.b16 %v10820
  %v11140 = vunpack.c.l.b16 %v10821
  %v11141 = vunpack.c.h.b16 %v10821
  %v11142 = vunpack.c.l.b16 %v10822
  %v11143 = vunpack.c.h.b16 %v10822
  %v11144 = vunpack.c.l.b16 %v10823
  %v11145 = vunpack.c.h.b16 %v10823
  %v11146 = vunpack.c.l.b16 %v10824
  %v11147 = vunpack.c.h.b16 %v10824
  %v11148 = vunpack.c.l.b16 %v10825
  %v11149 = vunpack.c.h.b16 %v10825
  %v11150 = vunpack.c.l.b16 %v10826
  %v11151 = vunpack.c.h.b16 %v10826
  %v11152 = vunpack.c.l.b16 %v10827
  %v11153 = vunpack.c.h.b16 %v10827
  %v11154 = vunpack.c.l.b16 %v10828
  %v11155 = vunpack.c.h.b16 %v10828
  %v11156 = vunpack.c.l.b16 %v10829
  %v11157 = vunpack.c.h.b16 %v10829
  %v11158 = vunpack.c.l.b16 %v10830
  %v11159 = vunpack.c.h.b16 %v10830
  %v11160 = vunpack.c.l.b16 %v10831
  %v11161 = vunpack.c.h.b16 %v10831
  %v11162 = vunpack.c.l.b16 %v10832
  %v11163 = vunpack.c.h.b16 %v10832
  %v11164 = vunpack.c.l.b16 %v10833
  %v11165 = vunpack.c.h.b16 %v10833
  %v11166 = vunpack.c.l.b16 %v10834
  %v11167 = vunpack.c.h.b16 %v10834
  %v11168 = vunpack.c.l.b16 %v10835
  %v11169 = vunpack.c.h.b16 %v10835
  %v11170 = vunpack.c.l.b16 %v10836
  %v11171 = vunpack.c.h.b16 %v10836
  %v11172 = vunpack.c.l.b16 %v10837
  %v11173 = vunpack.c.h.b16 %v10837
  %v11174 = vunpack.c.l.b16 %v10838
  %v11175 = vunpack.c.h.b16 %v10838
  %v11176 = vunpack.c.l.b16 %v10839
  %v11177 = vunpack.c.h.b16 %v10839
  %v11178 = vunpack.c.l.b16 %v10840
  %v11179 = vunpack.c.h.b16 %v10840
  %v11180 = vunpack.c.l.b16 %v10841
  %v11181 = vunpack.c.h.b16 %v10841
  %v11182 = vunpack.c.l.b16 %v10842
  %v11183 = vunpack.c.h.b16 %v10842
  %v11184 = vunpack.c.l.b16 %v10843
  %v11185 = vunpack.c.h.b16 %v10843
  %v11186 = vunpack.c.l.b16 %v10844
  %v11187 = vunpack.c.h.b16 %v10844
  %v11188 = vunpack.c.l.b16 %v10845
  %v11189 = vunpack.c.h.b16 %v10845
  %v11190 = vunpack.c.l.b16 %v10846
  %v11191 = vunpack.c.h.b16 %v10846
  %v11192 = vunpack.c.l.b16 %v10847
  %v11193 = vunpack.c.h.b16 %v10847
  %v11194 = vunpack.c.l.b16 %v10848
  %v11195 = vunpack.c.h.b16 %v10848
  %v11196 = vunpack.c.l.b16 %v10849
  %v11197 = vunpack.c.h.b16 %v10849
  %v11198 = vunpack.c.l.b16 %v10850
  %v11199 = vunpack.c.h.b16 %v10850
  %v11200 = vunpack.c.l.b16 %v10851
  %v11201 = vunpack.c.h.b16 %v10851
  %v11202 = vunpack.c.l.b16 %v10852
  %v11203 = vunpack.c.h.b16 %v10852
  %v11204 = vunpack.c.l.b16 %v10853
  %v11205 = vunpack.c.h.b16 %v10853
  %v11206 = vunpack.c.l.b16 %v10854
  %v11207 = vunpack.c.h.b16 %v10854
  %v11208 = vunpack.c.l.b16 %v10855
  %v11209 = vunpack.c.h.b16 %v10855
  %v11210 = vunpack.c.l.b16 %v10856
  %v11211 = vunpack.c.h.b16 %v10856
  %v11212 = vunpack.c.l.b16 %v10857
  %v11213 = vunpack.c.h.b16 %v10857
  %v11214 = vunpack.c.l.b16 %v10858
  %v11215 = vunpack.c.h.b16 %v10858
  %v11216 = vunpack.c.l.b16 %v10859
  %v11217 = vunpack.c.h.b16 %v10859
  %v11218 = vunpack.c.l.b16 %v10860
  %v11219 = vunpack.c.h.b16 %v10860
  %v11220 = vunpack.c.l.b16 %v10861
  %v11221 = vunpack.c.h.b16 %v10861
  %v11222 = vunpack.c.l.b16 %v10862
  %v11223 = vunpack.c.h.b16 %v10862
  %v11224 = vunpack.c.l.b16 %v10863
  %v11225 = vunpack.c.h.b16 %v10863
  %v11226 = vunpack.c.l.b16 %v10864
  %v11227 = vunpack.c.h.b16 %v10864
  %v11228 = vunpack.c.l.b16 %v10865
  %v11229 = vunpack.c.h.b16 %v10865
  %v11230 = vunpack.c.l.b16 %v10866
  %v11231 = vunpack.c.h.b16 %v10866
  %v11232 = vunpack.c.l.b16 %v10867
  %v11233 = vunpack.c.h.b16 %v10867
  %v11234 = vunpack.c.l.b16 %v10868
  %v11235 = vunpack.c.h.b16 %v10868
  %v11236 = vunpack.c.l.b16 %v10869
  %v11237 = vunpack.c.h.b16 %v10869
  %v11238 = vunpack.c.l.b16 %v10870
  %v11239 = vunpack.c.h.b16 %v10870
  %v11240 = vunpack.c.l.b16 %v10871
  %v11241 = vunpack.c.h.b16 %v10871
  %v11242 = vunpack.c.l.b16 %v10872
  %v11243 = vunpack.c.h.b16 %v10872
  %v11244 = vunpack.c.l.b16 %v10873
  %v11245 = vunpack.c.h.b16 %v10873
  %v11246 = vunpack.c.l.b16 %v10874
  %v11247 = vunpack.c.h.b16 %v10874
  %v11248 = vunpack.c.l.b16 %v10875
  %v11249 = vunpack.c.h.b16 %v10875
  %v11250 = vunpack.c.l.b16 %v10876
  %v11251 = vunpack.c.h.b16 %v10876
  %v11252 = vunpack.c.l.b16 %v10877
  %v11253 = vunpack.c.h.b16 %v10877
  %v11254 = vunpack.c.l.b16 %v10878
  %v11255 = vunpack.c.h.b16 %v10878
  %v11256 = vunpack.c.l.b16 %v10879
  %v11257 = vunpack.c.h.b16 %v10879
  %v11258 = vunpack.c.l.b16 %v10880
  %v11259 = vunpack.c.h.b16 %v10880
  %v11260 = vunpack.c.l.b16 %v10881
  %v11261 = vunpack.c.h.b16 %v10881
  %v11262 = vunpack.c.l.b16 %v10882
  %v11263 = vunpack.c.h.b16 %v10882
  %v11264 = vunpack.c.l.b16 %v10883
  %v11265 = vunpack.c.h.b16 %v10883
  %v11266 = vunpack.c.l.b16 %v10884
  %v11267 = vunpack.c.h.b16 %v10884
  %v11268 = vunpack.c.l.b16 %v10885
  %v11269 = vunpack.c.h.b16 %v10885
  %v11270 = vpack.c.b16 %v11018, %v11014
  %v11271 = vpack.c.b16 %v11019, %v11015
  %v11272 = vpack.c.b16 %v11020, %v11016
  %v11273 = vpack.c.b16 %v11021, %v11017
  %v11274 = vpack.c.b16 %v11026, %v11022
  %v11275 = vpack.c.b16 %v11027, %v11023
  %v11276 = vpack.c.b16 %v11028, %v11024
  %v11277 = vpack.c.b16 %v11029, %v11025
  %v11278 = vpack.c.b16 %v11034, %v11030
  %v11279 = vpack.c.b16 %v11035, %v11031
  %v11280 = vpack.c.b16 %v11036, %v11032
  %v11281 = vpack.c.b16 %v11037, %v11033
  %v11282 = vpack.c.b16 %v11042, %v11038
  %v11283 = vpack.c.b16 %v11043, %v11039
  %v11284 = vpack.c.b16 %v11044, %v11040
  %v11285 = vpack.c.b16 %v11045, %v11041
  %v11286 = vpack.c.b16 %v11050, %v11046
  %v11287 = vpack.c.b16 %v11051, %v11047
  %v11288 = vpack.c.b16 %v11052, %v11048
  %v11289 = vpack.c.b16 %v11053, %v11049
  %v11290 = vpack.c.b16 %v11058, %v11054
  %v11291 = vpack.c.b16 %v11059, %v11055
  %v11292 = vpack.c.b16 %v11060, %v11056
  %v11293 = vpack.c.b16 %v11061, %v11057
  %v11294 = vpack.c.b16 %v11066, %v11062
  %v11295 = vpack.c.b16 %v11067, %v11063
  %v11296 = vpack.c.b16 %v11068, %v11064
  %v11297 = vpack.c.b16 %v11069, %v11065
  %v11298 = vpack.c.b16 %v11074, %v11070
  %v11299 = vpack.c.b16 %v11075, %v11071
  %v11300 = vpack.c.b16 %v11076, %v11072
  %v11301 = vpack.c.b16 %v11077, %v11073
  %v11302 = vpack.c.b16 %v11082, %v11078
  %v11303 = vpack.c.b16 %v11083, %v11079
  %v11304 = vpack.c.b16 %v11084, %v11080
  %v11305 = vpack.c.b16 %v11085, %v11081
  %v11306 = vpack.c.b16 %v11090, %v11086
  %v11307 = vpack.c.b16 %v11091, %v11087
  %v11308 = vpack.c.b16 %v11092, %v11088
  %v11309 = vpack.c.b16 %v11093, %v11089
  %v11310 = vpack.c.b16 %v11098, %v11094
  %v11311 = vpack.c.b16 %v11099, %v11095
  %v11312 = vpack.c.b16 %v11100, %v11096
  %v11313 = vpack.c.b16 %v11101, %v11097
  %v11314 = vpack.c.b16 %v11106, %v11102
  %v11315 = vpack.c.b16 %v11107, %v11103
  %v11316 = vpack.c.b16 %v11108, %v11104
  %v11317 = vpack.c.b16 %v11109, %v11105
  %v11318 = vpack.c.b16 %v11114, %v11110
  %v11319 = vpack.c.b16 %v11115, %v11111
  %v11320 = vpack.c.b16 %v11116, %v11112
  %v11321 = vpack.c.b16 %v11117, %v11113
  %v11322 = vpack.c.b16 %v11122, %v11118
  %v11323 = vpack.c.b16 %v11123, %v11119
  %v11324 = vpack.c.b16 %v11124, %v11120
  %v11325 = vpack.c.b16 %v11125, %v11121
  %v11326 = vpack.c.b16 %v11130, %v11126
  %v11327 = vpack.c.b16 %v11131, %v11127
  %v11328 = vpack.c.b16 %v11132, %v11128
  %v11329 = vpack.c.b16 %v11133, %v11129
  %v11330 = vpack.c.b16 %v11138, %v11134
  %v11331 = vpack.c.b16 %v11139, %v11135
  %v11332 = vpack.c.b16 %v11140, %v11136
  %v11333 = vpack.c.b16 %v11141, %v11137
  %v11334 = vpack.c.b16 %v11146, %v11142
  %v11335 = vpack.c.b16 %v11147, %v11143
  %v11336 = vpack.c.b16 %v11148, %v11144
  %v11337 = vpack.c.b16 %v11149, %v11145
  %v11338 = vpack.c.b16 %v11154, %v11150
  %v11339 = vpack.c.b16 %v11155, %v11151
  %v11340 = vpack.c.b16 %v11156, %v11152
  %v11341 = vpack.c.b16 %v11157, %v11153
  %v11342 = vpack.c.b16 %v11162, %v11158
  %v11343 = vpack.c.b16 %v11163, %v11159
  %v11344 = vpack.c.b16 %v11164, %v11160
  %v11345 = vpack.c.b16 %v11165, %v11161
  %v11346 = vpack.c.b16 %v11170, %v11166
  %v11347 = vpack.c.b16 %v11171, %v11167
  %v11348 = vpack.c.b16 %v11172, %v11168
  %v11349 = vpack.c.b16 %v11173, %v11169
  %v11350 = vpack.c.b16 %v11178, %v11174
  %v11351 = vpack.c.b16 %v11179, %v11175
  %v11352 = vpack.c.b16 %v11180, %v11176
  %v11353 = vpack.c.b16 %v11181, %v11177
  %v11354 = vpack.c.b16 %v11186, %v11182
  %v11355 = vpack.c.b16 %v11187, %v11183
  %v11356 = vpack.c.b16 %v11188, %v11184
  %v11357 = vpack.c.b16 %v11189, %v11185
  %v11358 = vpack.c.b16 %v11194, %v11190
  %v11359 = vpack.c.b16 %v11195, %v11191
  %v11360 = vpack.c.b16 %v11196, %v11192
  %v11361 = vpack.c.b16 %v11197, %v11193
  %v11362 = vpack.c.b16 %v11202, %v11198
  %v11363 = vpack.c.b16 %v11203, %v11199
  %v11364 = vpack.c.b16 %v11204, %v11200
  %v11365 = vpack.c.b16 %v11205, %v11201
  %v11366 = vpack.c.b16 %v11210, %v11206
  %v11367 = vpack.c.b16 %v11211, %v11207
  %v11368 = vpack.c.b16 %v11212, %v11208
  %v11369 = vpack.c.b16 %v11213, %v11209
  %v11370 = vpack.c.b16 %v11218, %v11214
  %v11371 = vpack.c.b16 %v11219, %v11215
  %v11372 = vpack.c.b16 %v11220, %v11216
  %v11373 = vpack.c.b16 %v11221, %v11217
  %v11374 = vpack.c.b16 %v11226, %v11222
  %v11375 = vpack.c.b16 %v11227, %v11223
  %v11376 = vpack.c.b16 %v11228, %v11224
  %v11377 = vpack.c.b16 %v11229, %v11225
  %v11378 = vpack.c.b16 %v11234, %v11230
  %v11379 = vpack.c.b16 %v11235, %v11231
  %v11380 = vpack.c.b16 %v11236, %v11232
  %v11381 = vpack.c.b16 %v11237, %v11233
  %v11382 = vpack.c.b16 %v11242, %v11238
  %v11383 = vpack.c.b16 %v11243, %v11239
  %v11384 = vpack.c.b16 %v11244, %v11240
  %v11385 = vpack.c.b16 %v11245, %v11241
  %v11386 = vpack.c.b16 %v11250, %v11246
  %v11387 = vpack.c.b16 %v11251, %v11247
  %v11388 = vpack.c.b16 %v11252, %v11248
  %v11389 = vpack.c.b16 %v11253, %v11249
  %v11390 = vpack.c.b16 %v11258, %v11254
  %v11391 = vpack.c.b16 %v11259, %v11255
  %v11392 = vpack.c.b16 %v11260, %v11256
  %v11393 = vpack.c.b16 %v11261, %v11257
  %v11394 = vpack.c.b16 %v11266, %v11262
  %v11395 = vpack.c.b16 %v11267, %v11263
  %v11396 = vpack.c.b16 %v11268, %v11264
  %v11397 = vpack.c.b16 %v11269, %v11265
  %11526 = vmatprep.subr.bf16.mxu0 %v11271
  %11527 = vmatpush1.bf16.msra.mxu0 %v11270
  %11528 = vmatprep.subr.bf16.mxu0 %v11275
  %11529 = vmatpush1.bf16.msra.mxu0 %v11274
  %11530 = vmatprep.subr.bf16.mxu0 %v11279
  %11531 = vmatpush1.bf16.msra.mxu0 %v11278
  %11532 = vmatprep.subr.bf16.mxu0 %v11283
  %11533 = vmatpush1.bf16.msra.mxu0 %v11282
  %11534 = vmatprep.subr.bf16.mxu0 %v11287
  %11535 = vmatpush1.bf16.msra.mxu0 %v11286
  %11536 = vmatprep.subr.bf16.mxu0 %v11291
  %11537 = vmatpush1.bf16.msra.mxu0 %v11290
  %11538 = vmatprep.subr.bf16.mxu0 %v11295
  %11539 = vmatpush1.bf16.msra.mxu0 %v11294
  %11540 = vmatprep.subr.bf16.mxu0 %v11299
  %11541 = vmatpush1.bf16.msra.mxu0 %v11298
  %11542 = vmatprep.subr.bf16.mxu0 %v11303
  %11543 = vmatpush1.bf16.msra.mxu0 %v11302
  %11544 = vmatprep.subr.bf16.mxu0 %v11307
  %11545 = vmatpush1.bf16.msra.mxu0 %v11306
  %11546 = vmatprep.subr.bf16.mxu0 %v11311
  %11547 = vmatpush1.bf16.msra.mxu0 %v11310
  %11548 = vmatprep.subr.bf16.mxu0 %v11315
  %11549 = vmatpush1.bf16.msra.mxu0 %v11314
  %11550 = vmatprep.subr.bf16.mxu0 %v11319
  %11551 = vmatpush1.bf16.msra.mxu0 %v11318
  %11552 = vmatprep.subr.bf16.mxu0 %v11323
  %11553 = vmatpush1.bf16.msra.mxu0 %v11322
  %11554 = vmatprep.subr.bf16.mxu0 %v11327
  %11555 = vmatpush1.bf16.msra.mxu0 %v11326
  %11556 = vmatprep.subr.bf16.mxu0 %v11331
  %11557 = vmatpush1.bf16.msra.mxu0 %v11330
  %11558 = vmatprep.mubr.bf16.mxu0 %v8837
  %11559 = vmatmul.mubr.bf16.gmra.mrb[0].mxu0 %v8836
  %v11560 = vpop.f32.mrb[0].mxu0
  %v11561 = vadd.f32 %v2142, %v11560
  %v11562 = vpop.f32.mrb[0].mxu0
  %v11563 = vadd.f32 %v2146, %v11562
  %v11564 = vpop.f32.mrb[0].mxu0
  %v11565 = vpop.f32.mrb[0].mxu0
  %11566 = vdwg.mxu0
  %11567 = vmatprep.subr.bf16.mxu0 %v11335
  %11568 = vmatpush1.bf16.msra.mxu0 %v11334
  %11569 = vmatprep.subr.bf16.mxu0 %v11339
  %11570 = vmatpush1.bf16.msra.mxu0 %v11338
  %11571 = vmatprep.subr.bf16.mxu0 %v11343
  %11572 = vmatpush1.bf16.msra.mxu0 %v11342
  %11573 = vmatprep.subr.bf16.mxu0 %v11347
  %11574 = vmatpush1.bf16.msra.mxu0 %v11346
  %11575 = vmatprep.subr.bf16.mxu0 %v11351
  %11576 = vmatpush1.bf16.msra.mxu0 %v11350
  %11577 = vmatprep.subr.bf16.mxu0 %v11355
  %11578 = vmatpush1.bf16.msra.mxu0 %v11354
  %11579 = vmatprep.subr.bf16.mxu0 %v11359
  %11580 = vmatpush1.bf16.msra.mxu0 %v11358
  %11581 = vmatprep.subr.bf16.mxu0 %v11363
  %11582 = vmatpush1.bf16.msra.mxu0 %v11362
  %11583 = vmatprep.subr.bf16.mxu0 %v11367
  %11584 = vmatpush1.bf16.msra.mxu0 %v11366
  %11585 = vmatprep.subr.bf16.mxu0 %v11371
  %11586 = vmatpush1.bf16.msra.mxu0 %v11370
  %11587 = vmatprep.subr.bf16.mxu0 %v11375
  %11588 = vmatpush1.bf16.msra.mxu0 %v11374
  %11589 = vmatprep.subr.bf16.mxu0 %v11379
  %11590 = vmatpush1.bf16.msra.mxu0 %v11378
  %11591 = vmatprep.subr.bf16.mxu0 %v11383
  %11592 = vmatpush1.bf16.msra.mxu0 %v11382
  %11593 = vmatprep.subr.bf16.mxu0 %v11387
  %11594 = vmatpush1.bf16.msra.mxu0 %v11386
  %11595 = vmatprep.subr.bf16.mxu0 %v11391
  %11596 = vmatpush1.bf16.msra.mxu0 %v11390
  %11597 = vmatprep.subr.bf16.mxu0 %v11395
  %11598 = vmatpush1.bf16.msra.mxu0 %v11394
  %11599 = vmatprep.mubr.bf16.mxu0 %v8839
  %11600 = vmatmul.mubr.bf16.gmra.mrb[0].mxu0 %v8838
  %v11601 = vpop.f32.mrb[0].mxu0
  %v11602 = vadd.f32 %v11561, %v11601
  %v11603 = vpop.f32.mrb[0].mxu0
  %v11604 = vadd.f32 %v11563, %v11603
  %v11605 = vpop.f32.mrb[0].mxu0
  %v11606 = vpop.f32.mrb[0].mxu0
  %11607 = vdwg.mxu0
  %11608 = vmatprep.subr.bf16.mxu0 %v11273
  %11609 = vmatpush1.bf16.msra.mxu0 %v11272
  %11610 = vmatprep.subr.bf16.mxu0 %v11277
  %11611 = vmatpush1.bf16.msra.mxu0 %v11276
  %11612 = vmatprep.subr.bf16.mxu0 %v11281
  %11613 = vmatpush1.bf16.msra.mxu0 %v11280
  %11614 = vmatprep.subr.bf16.mxu0 %v11285
  %11615 = vmatpush1.bf16.msra.mxu0 %v11284
  %11616 = vmatprep.subr.bf16.mxu0 %v11289
  %11617 = vmatpush1.bf16.msra.mxu0 %v11288
  %11618 = vmatprep.subr.bf16.mxu0 %v11293
  %11619 = vmatpush1.bf16.msra.mxu0 %v11292
  %11620 = vmatprep.subr.bf16.mxu0 %v11297
  %11621 = vmatpush1.bf16.msra.mxu0 %v11296
  %11622 = vmatprep.subr.bf16.mxu0 %v11301
  %11623 = vmatpush1.bf16.msra.mxu0 %v11300
  %11624 = vmatprep.subr.bf16.mxu0 %v11305
  %11625 = vmatpush1.bf16.msra.mxu0 %v11304
  %11626 = vmatprep.subr.bf16.mxu0 %v11309
  %11627 = vmatpush1.bf16.msra.mxu0 %v11308
  %11628 = vmatprep.subr.bf16.mxu0 %v11313
  %11629 = vmatpush1.bf16.msra.mxu0 %v11312
  %11630 = vmatprep.subr.bf16.mxu0 %v11317
  %11631 = vmatpush1.bf16.msra.mxu0 %v11316
  %11632 = vmatprep.subr.bf16.mxu0 %v11321
  %11633 = vmatpush1.bf16.msra.mxu0 %v11320
  %11634 = vmatprep.subr.bf16.mxu0 %v11325
  %11635 = vmatpush1.bf16.msra.mxu0 %v11324
  %11636 = vmatprep.subr.bf16.mxu0 %v11329
  %11637 = vmatpush1.bf16.msra.mxu0 %v11328
  %11638 = vmatprep.subr.bf16.mxu0 %v11333
  %11639 = vmatpush1.bf16.msra.mxu0 %v11332
  %11640 = vmatprep.mubr.bf16.mxu0 %v8837
  %11641 = vmatmul.mubr.bf16.gmra.mrb[0].mxu0 %v8836
  %v11642 = vpop.f32.mrb[0].mxu0
  %v11643 = vadd.f32 %v2150, %v11642
  %v11644 = vpop.f32.mrb[0].mxu0
  %v11645 = vadd.f32 %v2154, %v11644
  %v11646 = vpop.f32.mrb[0].mxu0
  %v11647 = vpop.f32.mrb[0].mxu0
  %11648 = vdwg.mxu0
  %11649 = vmatprep.subr.bf16.mxu0 %v11337
  %11650 = vmatpush1.bf16.msra.mxu0 %v11336
  %11651 = vmatprep.subr.bf16.mxu0 %v11341
  %11652 = vmatpush1.bf16.msra.mxu0 %v11340
  %11653 = vmatprep.subr.bf16.mxu0 %v11345
  %11654 = vmatpush1.bf16.msra.mxu0 %v11344
  %11655 = vmatprep.subr.bf16.mxu0 %v11349
  %11656 = vmatpush1.bf16.msra.mxu0 %v11348
  %11657 = vmatprep.subr.bf16.mxu0 %v11353
  %11658 = vmatpush1.bf16.msra.mxu0 %v11352
  %11659 = vmatprep.subr.bf16.mxu0 %v11357
  %11660 = vmatpush1.bf16.msra.mxu0 %v11356
  %11661 = vmatprep.subr.bf16.mxu0 %v11361
  %11662 = vmatpush1.bf16.msra.mxu0 %v11360
  %11663 = vmatprep.subr.bf16.mxu0 %v11365
  %11664 = vmatpush1.bf16.msra.mxu0 %v11364
  %11665 = vmatprep.subr.bf16.mxu0 %v11369
  %11666 = vmatpush1.bf16.msra.mxu0 %v11368
  %11667 = vmatprep.subr.bf16.mxu0 %v11373
  %11668 = vmatpush1.bf16.msra.mxu0 %v11372
  %11669 = vmatprep.subr.bf16.mxu0 %v11377
  %11670 = vmatpush1.bf16.msra.mxu0 %v11376
  %11671 = vmatprep.subr.bf16.mxu0 %v11381
  %11672 = vmatpush1.bf16.msra.mxu0 %v11380
  %11673 = vmatprep.subr.bf16.mxu0 %v11385
  %11674 = vmatpush1.bf16.msra.mxu0 %v11384
  %11675 = vmatprep.subr.bf16.mxu0 %v11389
  %11676 = vmatpush1.bf16.msra.mxu0 %v11388
  %11677 = vmatprep.subr.bf16.mxu0 %v11393
  %11678 = vmatpush1.bf16.msra.mxu0 %v11392
  %11679 = vmatprep.subr.bf16.mxu0 %v11397
  %11680 = vmatpush1.bf16.msra.mxu0 %v11396
  %11681 = vmatprep.mubr.bf16.mxu0 %v8839
  %11682 = vmatmul.mubr.bf16.gmra.mrb[0].mxu0 %v8838
  %v11683 = vpop.f32.mrb[0].mxu0
  %v11684 = vadd.f32 %v11643, %v11683
  %v11685 = vpop.f32.mrb[0].mxu0
  %v11686 = vadd.f32 %v11645, %v11685
  %v11687 = vpop.f32.mrb[0].mxu0
  %v11688 = vpop.f32.mrb[0].mxu0
  %11689 = vdwg.mxu0
  %v11694 = vcombine.low %v11602, %v11604
  %v11695 = vcombine.low %v11684, %v11686
  %v11697 = vunpack.c.l.s4 1983009808
  %v11698 = vunpack.c.0.s8 %v11697
  %v11699 = vlaneseq
  %v11700 = vshrl.u32 %v11699, 7
  %v11701 = vsub.s32 %v11698, %v11700
  %v11702 = vrot.slane %v11694, %v11701
  %v11704 = vunpack.c.l.s4 1983009808
  %v11705 = vunpack.c.0.s8 %v11704
  %v11706 = vlaneseq
  %v11707 = vshrl.u32 %v11706, 7
  %v11708 = vsub.s32 %v11705, %v11707
  %v11709 = vrot.slane %v11695, %v11708
  %v11710 = vcombine.low %v11702, %v11709
  %v11712 = vmul.f32 %v10730, %v11710
  %v11713 = vadd.f32 %v8813, %v11712
  %v11714 = vtanh.pop %v11713
  %v11715 = vsub.f32 1.0, %v10757
  %v11716 = vmul.f32 %v11715, %v11714
  %v11717 = vmul.f32 %v10757, %v8809
  %v11718 = vadd.f32 %v11716, %v11717
  %11719 = vst [vmem:[%s3 + $0x18] sm:$0xff] %v11718
  %11720 = vst [vmem:[#allocation2] sm:$0xff] %v11718
  // Predicated region
  $region18: #{motion_encoder_forward.3} parent=0 // pred_check
    _
  $region19: #{motion_encoder_forward.3} parent=0 // pred_check_branch
    %11722 = sbr.rel (0) target = $region21
  $region20: #{motion_encoder_forward.3} parent=0 // pred_region
    _
  $region21: #{motion_encoder_forward.3} parent=0 // pred_fallthru
    _
  // Predicated region
  $region22: #{motion_encoder_forward.3} parent=0 // pred_check
    _
  $region23: #{motion_encoder_forward.3} parent=0 // pred_check_branch
    %11724 = sbr.rel (0) target = $region25
  $region24: #{motion_encoder_forward.3} parent=0 // pred_region
    _
  $region25: #{motion_encoder_forward.3} parent=0 // pred_fallthru
    _

</llo_original>
